<compile_context>
chip_gen: v7x
topology: tpu7x:2x2x1
jax: 0.10.0
libtpu: 0.0.40
codegen_flags: <defaults>
</compile_context>

<pallas_src>
import functools

import numpy as np
import jax
import jax.numpy as jnp
from jax.experimental import pallas as pl
from jax.experimental.pallas import tpu as pltpu

# ----------------------------------------------------------------------------
# Model configuration (the "args" of NHR_Res32).
# ----------------------------------------------------------------------------
N_COLORS = 3
N_FEATS = 16
N_GUIDE = 4                  # channels of the high-res guide `y`
N_RESBLOCKS_FT = 2           # ResBlocks in tail_ft2
SCALE = 2                    # args.scale[0]
RES_SCALE = 1.0
RGB_RANGE = 255.0
RGB_MEAN = (0.4488, 0.4371, 0.4040)

_CFT = N_FEATS + N_GUIDE     # 20 channels of the high-res tail
_S2D = SCALE * SCALE         # 4 sub-lattice phases per channel


# ----------------------------------------------------------------------------
# In-kernel 3x3 "same" conv on a channels-major, lane-flattened activation.
# ----------------------------------------------------------------------------
def _conv3x3_flat(xpad, w9, b, mask_l, mask_r, *, npix, width, relu=False):
    """xpad:   (cin, npix + 2*(width+1)) bf16; image at lane offset width+1,
               zero borders (supply the dy=+-1 vertical halo).
       w9:     (9, cout, cin) bf16, tap index t = (dy+1)*3 + (dx+1).
       b:      (cout, 1) f32 bias.
       mask_l/mask_r: (1, npix) f32 {0,1}; kill the dx=-1 / dx=+1 taps at the
               left/right image edge (horizontal halo).
       Returns (cout, npix) f32.
    """
    base = width + 1
    acc = None
    for dxi, dx in enumerate((-1, 0, 1)):
        part = None
        for dyi, dy in enumerate((-1, 0, 1)):
            start = base + dy * width + dx
            xs = xpad[:, start:start + npix]                 # static lane slice
            m = jnp.dot(w9[dyi * 3 + dxi], xs,
                        preferred_element_type=jnp.float32)  # (cout, npix) f32
            part = m if part is None else part + m
        if dx == -1:
            part = part * mask_l
        elif dx == 1:
            part = part * mask_r
        acc = part if acc is None else acc + part
    out = acc + b
    if relu:
        out = jnp.maximum(out, 0.0)
    return out


# ----------------------------------------------------------------------------
# The fused kernel: head -> upsampler -> (s2d) tail_ft2 ResBlocks -> final conv.
# ----------------------------------------------------------------------------
def _nhr_kernel(x_ref, ys_ref,
                whead_ref, bhead_ref, wup_ref, bup_ref,
                wt1_ref, bt1_ref, wt2_ref, bt2_ref, wout_ref, bout_ref,
                o_ref, *, height, width, res_scale):
    npix = height * width

    # Horizontal-edge masks (cheap VPU constants, shared by all 7 convs).
    col = jax.lax.broadcasted_iota(jnp.int32, (1, npix), 1) % width
    mask_l = (col != 0).astype(jnp.float32)
    mask_r = (col != width - 1).astype(jnp.float32)

    def pad(a):
        # (c, npix) -> (c, npix + 2*(width+1)) bf16 with a flat zero halo,
        # built directly in bf16 (no extra f32 copy).
        zz = jnp.zeros((a.shape[0], width + 1), jnp.bfloat16)
        return jnp.concatenate([zz, a.astype(jnp.bfloat16), zz], axis=1)

    def conv(a, w9, b, relu=False):
        return _conv3x3_flat(pad(a), w9, b, mask_l, mask_r,
                             npix=npix, width=width, relu=relu)

    x = x_ref[0]                                             # (3, npix) bf16
    h = conv(x, whead_ref[...], bhead_ref[...])              # head: (16, npix)
    u = conv(h, wup_ref[...], bup_ref[...])                  # up:   (64, npix)

    # tail_ft1 PixelShuffle(2) + cat((x, y), dim=1), in space-to-depth form:
    # the 64 upsampler channels already ARE s2d channels 0..63 (4c + 2p + q),
    # and ys holds space-to-depth(y) (channels 64..79), so "z" is a plain
    # aligned channel concat and never exists at high resolution / in HBM.
    z = jnp.concatenate([u, ys_ref[0].astype(jnp.float32)], axis=0)  # (80,npix)

    for i in range(N_RESBLOCKS_FT):                          # static unroll
        h1 = conv(z, wt1_ref[i], bt1_ref[i], relu=True)
        r = conv(h1, wt2_ref[i], bt2_ref[i])
        if res_scale != 1.0:                                 # skipped at 1.0
            r = r * jnp.float32(res_scale)
        z = z + r

    # Final conv (s2d 80 -> 12); add_mean is folded into its bias.
    o_ref[0] = conv(z, wout_ref[...], bout_ref[...]).astype(o_ref.dtype)


# ----------------------------------------------------------------------------
# pallas_call wrapper.
# ----------------------------------------------------------------------------
def _nhr_call(x, ys, pk, height, width):
    n = x.shape[0]
    npix = height * width
    kernel = functools.partial(_nhr_kernel, height=height, width=width,
                               res_scale=RES_SCALE)

    def blk(arr):        # per-image activation block (lane-dense: npix last)
        return pl.BlockSpec((1,) + arr.shape[1:], lambda i: (i, 0, 0))

    def rep(arr):        # full array, same block every grid step (no re-DMA)
        zeros = (0,) * arr.ndim
        return pl.BlockSpec(arr.shape, lambda i: zeros)

    weights = (pk["head_w9"], pk["head_b"], pk["up_w9"], pk["up_b"],
               pk["tb1_w9"], pk["tb1_b"], pk["tb2_w9"], pk["tb2_b"],
               pk["out_w9"], pk["out_b"])

    return pl.pallas_call(
        kernel,
        out_shape=jax.ShapeDtypeStruct((n, _S2D * N_COLORS, npix), jnp.float32),
        grid_spec=pltpu.PrefetchScalarGridSpec(
            num_scalar_prefetch=0,
            grid=(n,),
            in_specs=[blk(x), blk(ys)] + [rep(w) for w in weights],
            out_specs=pl.BlockSpec((1, _S2D * N_COLORS, npix),
                                   lambda i: (i, 0, 0)),
        ),
        compiler_params=pltpu.CompilerParams(
            dimension_semantics=("parallel",)),
    )(x, ys, *weights)


# ----------------------------------------------------------------------------
# Parameters: raw OIHW weights (for the reference) + packed kernel weights.
# ----------------------------------------------------------------------------
def init_raw_params(key, w_scale=0.03):
    def conv_p(k, cout, cin):
        kw, kb = jax.random.split(k)
        w = jax.random.normal(kw, (cout, cin, 3, 3), jnp.float32) * w_scale
        b = jax.random.normal(kb, (cout,), jnp.float32) * w_scale
        return w, b

    keys = jax.random.split(key, 3 + 2 * N_RESBLOCKS_FT)
    head_w, head_b = conv_p(keys[0], N_FEATS, N_COLORS)
    up_w, up_b = conv_p(keys[1], _S2D * N_FEATS, N_FEATS)
    tb_w1, tb_b1, tb_w2, tb_b2 = [], [], [], []
    for i in range(N_RESBLOCKS_FT):
        w1, b1 = conv_p(keys[2 + 2 * i], _CFT, _CFT)
        w2, b2 = conv_p(keys[3 + 2 * i], _CFT, _CFT)
        tb_w1.append(w1); tb_b1.append(b1); tb_w2.append(w2); tb_b2.append(b2)
    out_w, out_b = conv_p(keys[2 + 2 * N_RESBLOCKS_FT], N_COLORS, _CFT)
    return {
        "head_w": head_w, "head_b": head_b,
        "up_w": up_w, "up_b": up_b,
        "tb_w1": jnp.stack(tb_w1), "tb_b1": jnp.stack(tb_b1),
        "tb_w2": jnp.stack(tb_w2), "tb_b2": jnp.stack(tb_b2),
        "out_w": out_w, "out_b": out_b,
    }


def _pack_std(wt, b):
    """OIHW (cout,cin,3,3) -> (9, cout, cin) bf16, tap=(dy+1)*3+(dx+1); bias (cout,1)."""
    cout, cin = wt.shape[0], wt.shape[1]
    w9 = jnp.transpose(wt, (2, 3, 0, 1)).reshape(9, cout, cin)
    return w9.astype(jnp.bfloat16), jnp.asarray(b, jnp.float32).reshape(-1, 1)


def _pack_s2d(wt, b, extra_bias=None):
    """Exact space-to-depth(2) re-indexing of a high-res 3x3 conv.

    High-res conv on the (2H,2W) grid == low-res 3x3 conv with 4*cin inputs /
    4*cout outputs (channel order 4*c + 2*p + q; p,q = row/col parity) and
        Ws2d[(ey+1)*3+(ex+1), 4co+2p+q, 4ci+2p'+q'] = W[co, ci, dy+1, dx+1]
        where dy = 2*ey + p' - p, dx = 2*ex + q' - q  (zero if |dy|>1 or |dx|>1).
    Zero padding of the low-res grid reproduces the high-res zero padding.
    """
    wtn = np.asarray(wt, np.float32)
    cout, cin = wtn.shape[0], wtn.shape[1]
    wp = np.zeros((9, _S2D * cout, _S2D * cin), np.float32)
    for p in range(2):
        for q in range(2):
            for pp in range(2):
                for qq in range(2):
                    for ey in (-1, 0, 1):
                        for ex in (-1, 0, 1):
                            dy = 2 * ey + pp - p
                            dx = 2 * ex + qq - q
                            if -1 <= dy <= 1 and -1 <= dx <= 1:
                                wp[(ey + 1) * 3 + (ex + 1),
                                   2 * p + q::4, 2 * pp + qq::4] = \
                                    wtn[:, :, dy + 1, dx + 1]
    bs = np.repeat(np.asarray(b, np.float32), _S2D)
    if extra_bias is not None:
        bs = bs + np.repeat(np.asarray(extra_bias, np.float32), _S2D)
    return (jnp.asarray(wp, jnp.bfloat16),
            jnp.asarray(bs, jnp.float32).reshape(-1, 1))


def pack_params(raw):
    mean = np.asarray(RGB_MEAN, np.float32) * RGB_RANGE     # add_mean fold
    head_w9, head_b = _pack_std(raw["head_w"], raw["head_b"])
    up_w9, up_b = _pack_std(raw["up_w"], raw["up_b"])
    tb1 = [_pack_s2d(raw["tb_w1"][i], raw["tb_b1"][i])
           for i in range(N_RESBLOCKS_FT)]
    tb2 = [_pack_s2d(raw["tb_w2"][i], raw["tb_b2"][i])
           for i in range(N_RESBLOCKS_FT)]
    out_w9, out_b = _pack_s2d(raw["out_w"], raw["out_b"], extra_bias=mean)
    return {
        "head_w9": head_w9, "head_b": head_b,
        "up_w9": up_w9, "up_b": up_b,
        "tb1_w9": jnp.stack([w for w, _ in tb1]),
        "tb1_b": jnp.stack([bb for _, bb in tb1]),
        "tb2_w9": jnp.stack([w for w, _ in tb2]),
        "tb2_b": jnp.stack([bb for _, bb in tb2]),
        "out_w9": out_w9, "out_b": out_b,
    }


# ----------------------------------------------------------------------------
# Forward pass (mirrors NHR_Res32.forward; dead body/body_ft branch dropped).
# ----------------------------------------------------------------------------
def nhr_res32_forward(x_nchw, y_nchw, packed):
    n, _, h, w = x_nchw.shape
    mean = jnp.asarray(RGB_MEAN, jnp.float32).reshape(1, N_COLORS, 1, 1) * RGB_RANGE

    # sub_mean + flatten to the lane-dense (C, H*W) kernel layout, in bf16.
    x = ((x_nchw.astype(jnp.float32) - mean)
         .reshape(n, N_COLORS, h * w).astype(jnp.bfloat16))
    # space-to-depth(2) of the 4-channel guide (tiny XLA reshape/transpose),
    # channel order cy*4 + 2*p + q to match the s2d weight packing.
    ys = (y_nchw.astype(jnp.float32)
          .reshape(n, N_GUIDE, h, 2, w, 2)
          .transpose(0, 1, 3, 5, 2, 4)
          .reshape(n, _S2D * N_GUIDE, h * w)
          .astype(jnp.bfloat16))

    out_s2d = _nhr_call(x, ys, packed, h, w)                 # (n, 12, h*w) f32

    # depth-to-space back to (n, 3, 2h, 2w); add_mean already in the bias.
    return (out_s2d.reshape(n, N_COLORS, 2, 2, h, w)
            .transpose(0, 1, 4, 2, 5, 3)
            .reshape(n, N_COLORS, SCALE * h, SCALE * w))


# ----------------------------------------------------------------------------
# Pure-JAX f32 reference (independent of the s2d re-indexing), for validation.
# ----------------------------------------------------------------------------
def _conv_ref(x, wt, b):
    out = jax.lax.conv_general_dilated(
        x, wt, window_strides=(1, 1), padding=((1, 1), (1, 1)),
        dimension_numbers=("NCHW", "OIHW", "NCHW"))
    return out + b.reshape(1, -1, 1, 1)


def _pixel_shuffle_ref(x, r):
    n, c, h, w = x.shape
    co = c // (r * r)
    x = x.reshape(n, co, r, r, h, w)
    return jnp.transpose(x, (0, 1, 4, 2, 5, 3)).reshape(n, co, h * r, w * r)


def nhr_res32_reference(x_nchw, y_nchw, raw):
    mean = jnp.asarray(RGB_MEAN, jnp.float32).reshape(1, N_COLORS, 1, 1) * RGB_RANGE
    t = x_nchw.astype(jnp.float32) - mean
    t = _conv_ref(t, raw["head_w"], raw["head_b"])
    t = _conv_ref(t, raw["up_w"], raw["up_b"])
    z = jnp.concatenate([_pixel_shuffle_ref(t, SCALE),
                         y_nchw.astype(jnp.float32)], axis=1)
    for i in range(N_RESBLOCKS_FT):
        h1 = jax.nn.relu(_conv_ref(z, raw["tb_w1"][i], raw["tb_b1"][i]))
        z = z + RES_SCALE * _conv_ref(h1, raw["tb_w2"][i], raw["tb_b2"][i])
    return _conv_ref(z, raw["out_w"], raw["out_b"]) + mean


# ----------------------------------------------------------------------------
if __name__ == "__main__":
    key = jax.random.PRNGKey(0)
    kx, ky, kp = jax.random.split(key, 3)

    N, H, W = 2, 16, 16
    # inputs[0]: low-res RGB image (NCHW); inputs[1]: 4-channel high-res guide.
    x = jax.random.uniform(kx, (N, N_COLORS, H, W), jnp.float32) * RGB_RANGE
    y = jax.random.normal(ky, (N, N_GUIDE, H * SCALE, W * SCALE), jnp.float32)

    raw = init_raw_params(kp)
    packed = pack_params(raw)

    fwd = jax.jit(nhr_res32_forward)
    out = jax.block_until_ready(fwd(x, y, packed))
    assert out.shape == (N, N_COLORS, H * SCALE, W * SCALE), out.shape
    assert bool(jnp.all(jnp.isfinite(out)))

    # Validate against the pure-JAX f32 reference (kernel uses bf16 matmul
    # operands with f32 accumulation -> small relative deviation expected).
    ref = jax.block_until_ready(jax.jit(nhr_res32_reference)(x, y, raw))
    err = float(jnp.max(jnp.abs(out - ref)) / (jnp.max(jnp.abs(ref)) + 1e-6))
    assert err < 5e-2, f"kernel/reference mismatch: normalized max err {err:.4f}"

    print("KERNEL_OK")
</pallas_src>

<mosaic_0001>
module attributes {stable_mosaic.version = 11 : i64} {
  func.func @_nhr_kernel(%arg0: i32, %arg1: memref<1x3x256xbf16, #tpu.memory_space<vmem>>, %arg2: memref<1x16x256xbf16, #tpu.memory_space<vmem>>, %arg3: memref<9x16x3xbf16, #tpu.memory_space<vmem>>, %arg4: memref<16x1xf32, #tpu.memory_space<vmem>>, %arg5: memref<9x64x16xbf16, #tpu.memory_space<vmem>>, %arg6: memref<64x1xf32, #tpu.memory_space<vmem>>, %arg7: memref<2x9x80x80xbf16, #tpu.memory_space<vmem>>, %arg8: memref<2x80x1xf32, #tpu.memory_space<vmem>>, %arg9: memref<2x9x80x80xbf16, #tpu.memory_space<vmem>>, %arg10: memref<2x80x1xf32, #tpu.memory_space<vmem>>, %arg11: memref<9x12x80xbf16, #tpu.memory_space<vmem>>, %arg12: memref<12x1xf32, #tpu.memory_space<vmem>>, %arg13: memref<1x12x256xf32, #tpu.memory_space<vmem>>) attributes {dimension_semantics = [#tpu.dimension_semantics<parallel>], iteration_bounds = array<i64: 2>, scalar_prefetch = 0 : i64, scratch_operands = 0 : i64, tpu.core_type = #tpu.core_type<tc>, window_params = [{transform_indices = @transform_0, window_bounds = array<i64: 1, 3, 256>}, {transform_indices = @transform_1, window_bounds = array<i64: 1, 16, 256>}, {pipeline_mode = #tpu.pipeline_mode<synchronous>, transform_indices = @transform_2, window_bounds = array<i64: 9, 16, 3>}, {pipeline_mode = #tpu.pipeline_mode<synchronous>, transform_indices = @transform_3, window_bounds = array<i64: 16, 1>}, {pipeline_mode = #tpu.pipeline_mode<synchronous>, transform_indices = @transform_4, window_bounds = array<i64: 9, 64, 16>}, {pipeline_mode = #tpu.pipeline_mode<synchronous>, transform_indices = @transform_5, window_bounds = array<i64: 64, 1>}, {pipeline_mode = #tpu.pipeline_mode<synchronous>, transform_indices = @transform_6, window_bounds = array<i64: 2, 9, 80, 80>}, {pipeline_mode = #tpu.pipeline_mode<synchronous>, transform_indices = @transform_7, window_bounds = array<i64: 2, 80, 1>}, {pipeline_mode = #tpu.pipeline_mode<synchronous>, transform_indices = @transform_8, window_bounds = array<i64: 2, 9, 80, 80>}, {pipeline_mode = #tpu.pipeline_mode<synchronous>, transform_indices = @transform_9, window_bounds = array<i64: 2, 80, 1>}, {pipeline_mode = #tpu.pipeline_mode<synchronous>, transform_indices = @transform_10, window_bounds = array<i64: 9, 12, 80>}, {pipeline_mode = #tpu.pipeline_mode<synchronous>, transform_indices = @transform_11, window_bounds = array<i64: 12, 1>}, {transform_indices = @transform_12, window_bounds = array<i64: 1, 12, 256>}]} {
    %0 = tpu.iota {dimensions = array<i32: 1>} : vector<1x256xi32>
    %c16_i32 = arith.constant 16 : i32
    %c0_i32 = arith.constant 0 : i32
    %1 = arith.cmpi eq, %c16_i32, %c0_i32 : i32
    %c1_i32 = arith.constant 1 : i32
    %2 = arith.select %1, %c1_i32, %c16_i32 : i32
    %3 = vector.broadcast %2 : i32 to vector<1x256xi32>
    %4 = arith.remsi %0, %3 : vector<1x256xi32>
    %c0_i32_0 = arith.constant 0 : i32
    %5 = vector.broadcast %c0_i32_0 : i32 to vector<1x256xi32>
    %6 = arith.cmpi ne, %4, %5 : vector<1x256xi32>
    %c0_i32_1 = arith.constant 0 : i32
    %7 = vector.broadcast %c0_i32_1 : i32 to vector<1x256xi32>
    %8 = arith.cmpi slt, %4, %7 : vector<1x256xi32>
    %c0_i32_2 = arith.constant 0 : i32
    %9 = arith.cmpi slt, %2, %c0_i32_2 : i32
    %10 = vector.broadcast %9 : i1 to vector<1x256xi1>
    %11 = vector.broadcast %10 : vector<1x256xi1> to vector<1x256xi1>
    %12 = arith.xori %8, %11 : vector<1x256xi1>
    %13 = arith.andi %12, %6 : vector<1x256xi1>
    %14 = vector.broadcast %2 : i32 to vector<1x256xi32>
    %15 = arith.addi %4, %14 : vector<1x256xi32>
    %16 = arith.select %13, %15, %4 : vector<1x256xi1>, vector<1x256xi32>
    %c0_i32_3 = arith.constant 0 : i32
    %17 = vector.broadcast %c0_i32_3 : i32 to vector<1x256xi32>
    %18 = arith.cmpi ne, %16, %17 : vector<1x256xi32>
    %19 = arith.extui %18 : vector<1x256xi1> to vector<1x256xi32>
    %20 = arith.sitofp %19 : vector<1x256xi32> to vector<1x256xf32>
    %c15_i32 = arith.constant 15 : i32
    %21 = vector.broadcast %c15_i32 : i32 to vector<1x256xi32>
    %22 = arith.cmpi ne, %16, %21 : vector<1x256xi32>
    %23 = arith.extui %22 : vector<1x256xi1> to vector<1x256xi32>
    %24 = arith.sitofp %23 : vector<1x256xi32> to vector<1x256xf32>
    %c0 = arith.constant 0 : index
    %c0_4 = arith.constant 0 : index
    %c0_5 = arith.constant 0 : index
    %25 = vector.load %arg1[%c0, %c0_4, %c0_5] : memref<1x3x256xbf16, #tpu.memory_space<vmem>>, vector<1x3x256xbf16>
    %26 = vector.shape_cast %25 : vector<1x3x256xbf16> to vector<3x256xbf16>
    %c0_6 = arith.constant 0 : index
    %c0_7 = arith.constant 0 : index
    %c0_8 = arith.constant 0 : index
    %27 = vector.load %arg3[%c0_6, %c0_7, %c0_8] : memref<9x16x3xbf16, #tpu.memory_space<vmem>>, vector<9x16x3xbf16>
    %c0_9 = arith.constant 0 : index
    %c0_10 = arith.constant 0 : index
    %28 = vector.load %arg4[%c0_9, %c0_10] : memref<16x1xf32, #tpu.memory_space<vmem>>, vector<16x1xf32>
    %cst = arith.constant 0.000000e+00 : bf16
    %29 = vector.broadcast %cst : bf16 to vector<3x17xbf16>
    %30 = tpu.concatenate %29, %26, %29 in 1 : vector<3x17xbf16>, vector<3x256xbf16>, vector<3x17xbf16> -> vector<3x290xbf16>
    %31 = vector.extract_strided_slice %30 {offsets = [0, 0], sizes = [3, 256], strides = [1, 1]} : vector<3x290xbf16> to vector<3x256xbf16>
    %32 = vector.extract_strided_slice %27 {offsets = [0, 0, 0], sizes = [1, 16, 3], strides = [1, 1, 1]} : vector<9x16x3xbf16> to vector<1x16x3xbf16>
    %33 = vector.shape_cast %32 : vector<1x16x3xbf16> to vector<16x3xbf16>
    %cst_11 = arith.constant dense<0.000000e+00> : vector<16x256xf32>
    %34 = tpu.matmul %33, %31, %cst_11 {dimension_numbers = #tpu.dot_dimension_numbers<[1], [0], [0], [1], [0, 0, 1, 1], [], []>} : vector<16x3xbf16>, vector<3x256xbf16>, vector<16x256xf32> -> vector<16x256xf32>
    %35 = vector.extract_strided_slice %30 {offsets = [0, 16], sizes = [3, 256], strides = [1, 1]} : vector<3x290xbf16> to vector<3x256xbf16>
    %36 = vector.extract_strided_slice %27 {offsets = [3, 0, 0], sizes = [1, 16, 3], strides = [1, 1, 1]} : vector<9x16x3xbf16> to vector<1x16x3xbf16>
    %37 = vector.shape_cast %36 : vector<1x16x3xbf16> to vector<16x3xbf16>
    %cst_12 = arith.constant dense<0.000000e+00> : vector<16x256xf32>
    %38 = tpu.matmul %37, %35, %cst_12 {dimension_numbers = #tpu.dot_dimension_numbers<[1], [0], [0], [1], [0, 0, 1, 1], [], []>} : vector<16x3xbf16>, vector<3x256xbf16>, vector<16x256xf32> -> vector<16x256xf32>
    %39 = arith.addf %34, %38 : vector<16x256xf32>
    %40 = vector.extract_strided_slice %30 {offsets = [0, 32], sizes = [3, 256], strides = [1, 1]} : vector<3x290xbf16> to vector<3x256xbf16>
    %41 = vector.extract_strided_slice %27 {offsets = [6, 0, 0], sizes = [1, 16, 3], strides = [1, 1, 1]} : vector<9x16x3xbf16> to vector<1x16x3xbf16>
    %42 = vector.shape_cast %41 : vector<1x16x3xbf16> to vector<16x3xbf16>
    %cst_13 = arith.constant dense<0.000000e+00> : vector<16x256xf32>
    %43 = tpu.matmul %42, %40, %cst_13 {dimension_numbers = #tpu.dot_dimension_numbers<[1], [0], [0], [1], [0, 0, 1, 1], [], []>} : vector<16x3xbf16>, vector<3x256xbf16>, vector<16x256xf32> -> vector<16x256xf32>
    %44 = arith.addf %39, %43 : vector<16x256xf32>
    %45 = vector.broadcast %20 : vector<1x256xf32> to vector<16x256xf32>
    %46 = arith.mulf %44, %45 : vector<16x256xf32>
    %47 = vector.extract_strided_slice %30 {offsets = [0, 1], sizes = [3, 256], strides = [1, 1]} : vector<3x290xbf16> to vector<3x256xbf16>
    %48 = vector.extract_strided_slice %27 {offsets = [1, 0, 0], sizes = [1, 16, 3], strides = [1, 1, 1]} : vector<9x16x3xbf16> to vector<1x16x3xbf16>
    %49 = vector.shape_cast %48 : vector<1x16x3xbf16> to vector<16x3xbf16>
    %cst_14 = arith.constant dense<0.000000e+00> : vector<16x256xf32>
    %50 = tpu.matmul %49, %47, %cst_14 {dimension_numbers = #tpu.dot_dimension_numbers<[1], [0], [0], [1], [0, 0, 1, 1], [], []>} : vector<16x3xbf16>, vector<3x256xbf16>, vector<16x256xf32> -> vector<16x256xf32>
    %51 = vector.extract_strided_slice %30 {offsets = [0, 17], sizes = [3, 256], strides = [1, 1]} : vector<3x290xbf16> to vector<3x256xbf16>
    %52 = vector.extract_strided_slice %27 {offsets = [4, 0, 0], sizes = [1, 16, 3], strides = [1, 1, 1]} : vector<9x16x3xbf16> to vector<1x16x3xbf16>
    %53 = vector.shape_cast %52 : vector<1x16x3xbf16> to vector<16x3xbf16>
    %cst_15 = arith.constant dense<0.000000e+00> : vector<16x256xf32>
    %54 = tpu.matmul %53, %51, %cst_15 {dimension_numbers = #tpu.dot_dimension_numbers<[1], [0], [0], [1], [0, 0, 1, 1], [], []>} : vector<16x3xbf16>, vector<3x256xbf16>, vector<16x256xf32> -> vector<16x256xf32>
    %55 = arith.addf %50, %54 : vector<16x256xf32>
    %56 = vector.extract_strided_slice %30 {offsets = [0, 33], sizes = [3, 256], strides = [1, 1]} : vector<3x290xbf16> to vector<3x256xbf16>
    %57 = vector.extract_strided_slice %27 {offsets = [7, 0, 0], sizes = [1, 16, 3], strides = [1, 1, 1]} : vector<9x16x3xbf16> to vector<1x16x3xbf16>
    %58 = vector.shape_cast %57 : vector<1x16x3xbf16> to vector<16x3xbf16>
    %cst_16 = arith.constant dense<0.000000e+00> : vector<16x256xf32>
    %59 = tpu.matmul %58, %56, %cst_16 {dimension_numbers = #tpu.dot_dimension_numbers<[1], [0], [0], [1], [0, 0, 1, 1], [], []>} : vector<16x3xbf16>, vector<3x256xbf16>, vector<16x256xf32> -> vector<16x256xf32>
    %60 = arith.addf %55, %59 : vector<16x256xf32>
    %61 = arith.addf %46, %60 : vector<16x256xf32>
    %62 = vector.extract_strided_slice %30 {offsets = [0, 2], sizes = [3, 256], strides = [1, 1]} : vector<3x290xbf16> to vector<3x256xbf16>
    %63 = vector.extract_strided_slice %27 {offsets = [2, 0, 0], sizes = [1, 16, 3], strides = [1, 1, 1]} : vector<9x16x3xbf16> to vector<1x16x3xbf16>
    %64 = vector.shape_cast %63 : vector<1x16x3xbf16> to vector<16x3xbf16>
    %cst_17 = arith.constant dense<0.000000e+00> : vector<16x256xf32>
    %65 = tpu.matmul %64, %62, %cst_17 {dimension_numbers = #tpu.dot_dimension_numbers<[1], [0], [0], [1], [0, 0, 1, 1], [], []>} : vector<16x3xbf16>, vector<3x256xbf16>, vector<16x256xf32> -> vector<16x256xf32>
    %66 = vector.extract_strided_slice %30 {offsets = [0, 18], sizes = [3, 256], strides = [1, 1]} : vector<3x290xbf16> to vector<3x256xbf16>
    %67 = vector.extract_strided_slice %27 {offsets = [5, 0, 0], sizes = [1, 16, 3], strides = [1, 1, 1]} : vector<9x16x3xbf16> to vector<1x16x3xbf16>
    %68 = vector.shape_cast %67 : vector<1x16x3xbf16> to vector<16x3xbf16>
    %cst_18 = arith.constant dense<0.000000e+00> : vector<16x256xf32>
    %69 = tpu.matmul %68, %66, %cst_18 {dimension_numbers = #tpu.dot_dimension_numbers<[1], [0], [0], [1], [0, 0, 1, 1], [], []>} : vector<16x3xbf16>, vector<3x256xbf16>, vector<16x256xf32> -> vector<16x256xf32>
    %70 = arith.addf %65, %69 : vector<16x256xf32>
    %71 = vector.extract_strided_slice %30 {offsets = [0, 34], sizes = [3, 256], strides = [1, 1]} : vector<3x290xbf16> to vector<3x256xbf16>
    %72 = vector.extract_strided_slice %27 {offsets = [8, 0, 0], sizes = [1, 16, 3], strides = [1, 1, 1]} : vector<9x16x3xbf16> to vector<1x16x3xbf16>
    %73 = vector.shape_cast %72 : vector<1x16x3xbf16> to vector<16x3xbf16>
    %cst_19 = arith.constant dense<0.000000e+00> : vector<16x256xf32>
    %74 = tpu.matmul %73, %71, %cst_19 {dimension_numbers = #tpu.dot_dimension_numbers<[1], [0], [0], [1], [0, 0, 1, 1], [], []>} : vector<16x3xbf16>, vector<3x256xbf16>, vector<16x256xf32> -> vector<16x256xf32>
    %75 = arith.addf %70, %74 : vector<16x256xf32>
    %76 = vector.broadcast %24 : vector<1x256xf32> to vector<16x256xf32>
    %77 = arith.mulf %75, %76 : vector<16x256xf32>
    %78 = arith.addf %61, %77 : vector<16x256xf32>
    %79 = vector.broadcast %28 : vector<16x1xf32> to vector<16x256xf32>
    %80 = arith.addf %78, %79 : vector<16x256xf32>
    %c0_20 = arith.constant 0 : index
    %c0_21 = arith.constant 0 : index
    %c0_22 = arith.constant 0 : index
    %81 = vector.load %arg5[%c0_20, %c0_21, %c0_22] : memref<9x64x16xbf16, #tpu.memory_space<vmem>>, vector<9x64x16xbf16>
    %c0_23 = arith.constant 0 : index
    %c0_24 = arith.constant 0 : index
    %82 = vector.load %arg6[%c0_23, %c0_24] : memref<64x1xf32, #tpu.memory_space<vmem>>, vector<64x1xf32>
    %cst_25 = arith.constant 0.000000e+00 : bf16
    %83 = vector.broadcast %cst_25 : bf16 to vector<16x17xbf16>
    %84 = arith.truncf %80 : vector<16x256xf32> to vector<16x256xbf16>
    %85 = tpu.concatenate %83, %84, %83 in 1 : vector<16x17xbf16>, vector<16x256xbf16>, vector<16x17xbf16> -> vector<16x290xbf16>
    %86 = vector.extract_strided_slice %85 {offsets = [0, 0], sizes = [16, 256], strides = [1, 1]} : vector<16x290xbf16> to vector<16x256xbf16>
    %87 = vector.extract_strided_slice %81 {offsets = [0, 0, 0], sizes = [1, 64, 16], strides = [1, 1, 1]} : vector<9x64x16xbf16> to vector<1x64x16xbf16>
    %88 = vector.shape_cast %87 : vector<1x64x16xbf16> to vector<64x16xbf16>
    %cst_26 = arith.constant dense<0.000000e+00> : vector<64x256xf32>
    %89 = tpu.matmul %88, %86, %cst_26 {dimension_numbers = #tpu.dot_dimension_numbers<[1], [0], [0], [1], [0, 0, 1, 1], [], []>} : vector<64x16xbf16>, vector<16x256xbf16>, vector<64x256xf32> -> vector<64x256xf32>
    %90 = vector.extract_strided_slice %85 {offsets = [0, 16], sizes = [16, 256], strides = [1, 1]} : vector<16x290xbf16> to vector<16x256xbf16>
    %91 = vector.extract_strided_slice %81 {offsets = [3, 0, 0], sizes = [1, 64, 16], strides = [1, 1, 1]} : vector<9x64x16xbf16> to vector<1x64x16xbf16>
    %92 = vector.shape_cast %91 : vector<1x64x16xbf16> to vector<64x16xbf16>
    %cst_27 = arith.constant dense<0.000000e+00> : vector<64x256xf32>
    %93 = tpu.matmul %92, %90, %cst_27 {dimension_numbers = #tpu.dot_dimension_numbers<[1], [0], [0], [1], [0, 0, 1, 1], [], []>} : vector<64x16xbf16>, vector<16x256xbf16>, vector<64x256xf32> -> vector<64x256xf32>
    %94 = arith.addf %89, %93 : vector<64x256xf32>
    %95 = vector.extract_strided_slice %85 {offsets = [0, 32], sizes = [16, 256], strides = [1, 1]} : vector<16x290xbf16> to vector<16x256xbf16>
    %96 = vector.extract_strided_slice %81 {offsets = [6, 0, 0], sizes = [1, 64, 16], strides = [1, 1, 1]} : vector<9x64x16xbf16> to vector<1x64x16xbf16>
    %97 = vector.shape_cast %96 : vector<1x64x16xbf16> to vector<64x16xbf16>
    %cst_28 = arith.constant dense<0.000000e+00> : vector<64x256xf32>
    %98 = tpu.matmul %97, %95, %cst_28 {dimension_numbers = #tpu.dot_dimension_numbers<[1], [0], [0], [1], [0, 0, 1, 1], [], []>} : vector<64x16xbf16>, vector<16x256xbf16>, vector<64x256xf32> -> vector<64x256xf32>
    %99 = arith.addf %94, %98 : vector<64x256xf32>
    %100 = vector.broadcast %20 : vector<1x256xf32> to vector<64x256xf32>
    %101 = arith.mulf %99, %100 : vector<64x256xf32>
    %102 = vector.extract_strided_slice %85 {offsets = [0, 1], sizes = [16, 256], strides = [1, 1]} : vector<16x290xbf16> to vector<16x256xbf16>
    %103 = vector.extract_strided_slice %81 {offsets = [1, 0, 0], sizes = [1, 64, 16], strides = [1, 1, 1]} : vector<9x64x16xbf16> to vector<1x64x16xbf16>
    %104 = vector.shape_cast %103 : vector<1x64x16xbf16> to vector<64x16xbf16>
    %cst_29 = arith.constant dense<0.000000e+00> : vector<64x256xf32>
    %105 = tpu.matmul %104, %102, %cst_29 {dimension_numbers = #tpu.dot_dimension_numbers<[1], [0], [0], [1], [0, 0, 1, 1], [], []>} : vector<64x16xbf16>, vector<16x256xbf16>, vector<64x256xf32> -> vector<64x256xf32>
    %106 = vector.extract_strided_slice %85 {offsets = [0, 17], sizes = [16, 256], strides = [1, 1]} : vector<16x290xbf16> to vector<16x256xbf16>
    %107 = vector.extract_strided_slice %81 {offsets = [4, 0, 0], sizes = [1, 64, 16], strides = [1, 1, 1]} : vector<9x64x16xbf16> to vector<1x64x16xbf16>
    %108 = vector.shape_cast %107 : vector<1x64x16xbf16> to vector<64x16xbf16>
    %cst_30 = arith.constant dense<0.000000e+00> : vector<64x256xf32>
    %109 = tpu.matmul %108, %106, %cst_30 {dimension_numbers = #tpu.dot_dimension_numbers<[1], [0], [0], [1], [0, 0, 1, 1], [], []>} : vector<64x16xbf16>, vector<16x256xbf16>, vector<64x256xf32> -> vector<64x256xf32>
    %110 = arith.addf %105, %109 : vector<64x256xf32>
    %111 = vector.extract_strided_slice %85 {offsets = [0, 33], sizes = [16, 256], strides = [1, 1]} : vector<16x290xbf16> to vector<16x256xbf16>
    %112 = vector.extract_strided_slice %81 {offsets = [7, 0, 0], sizes = [1, 64, 16], strides = [1, 1, 1]} : vector<9x64x16xbf16> to vector<1x64x16xbf16>
    %113 = vector.shape_cast %112 : vector<1x64x16xbf16> to vector<64x16xbf16>
    %cst_31 = arith.constant dense<0.000000e+00> : vector<64x256xf32>
    %114 = tpu.matmul %113, %111, %cst_31 {dimension_numbers = #tpu.dot_dimension_numbers<[1], [0], [0], [1], [0, 0, 1, 1], [], []>} : vector<64x16xbf16>, vector<16x256xbf16>, vector<64x256xf32> -> vector<64x256xf32>
    %115 = arith.addf %110, %114 : vector<64x256xf32>
    %116 = arith.addf %101, %115 : vector<64x256xf32>
    %117 = vector.extract_strided_slice %85 {offsets = [0, 2], sizes = [16, 256], strides = [1, 1]} : vector<16x290xbf16> to vector<16x256xbf16>
    %118 = vector.extract_strided_slice %81 {offsets = [2, 0, 0], sizes = [1, 64, 16], strides = [1, 1, 1]} : vector<9x64x16xbf16> to vector<1x64x16xbf16>
    %119 = vector.shape_cast %118 : vector<1x64x16xbf16> to vector<64x16xbf16>
    %cst_32 = arith.constant dense<0.000000e+00> : vector<64x256xf32>
    %120 = tpu.matmul %119, %117, %cst_32 {dimension_numbers = #tpu.dot_dimension_numbers<[1], [0], [0], [1], [0, 0, 1, 1], [], []>} : vector<64x16xbf16>, vector<16x256xbf16>, vector<64x256xf32> -> vector<64x256xf32>
    %121 = vector.extract_strided_slice %85 {offsets = [0, 18], sizes = [16, 256], strides = [1, 1]} : vector<16x290xbf16> to vector<16x256xbf16>
    %122 = vector.extract_strided_slice %81 {offsets = [5, 0, 0], sizes = [1, 64, 16], strides = [1, 1, 1]} : vector<9x64x16xbf16> to vector<1x64x16xbf16>
    %123 = vector.shape_cast %122 : vector<1x64x16xbf16> to vector<64x16xbf16>
    %cst_33 = arith.constant dense<0.000000e+00> : vector<64x256xf32>
    %124 = tpu.matmul %123, %121, %cst_33 {dimension_numbers = #tpu.dot_dimension_numbers<[1], [0], [0], [1], [0, 0, 1, 1], [], []>} : vector<64x16xbf16>, vector<16x256xbf16>, vector<64x256xf32> -> vector<64x256xf32>
    %125 = arith.addf %120, %124 : vector<64x256xf32>
    %126 = vector.extract_strided_slice %85 {offsets = [0, 34], sizes = [16, 256], strides = [1, 1]} : vector<16x290xbf16> to vector<16x256xbf16>
    %127 = vector.extract_strided_slice %81 {offsets = [8, 0, 0], sizes = [1, 64, 16], strides = [1, 1, 1]} : vector<9x64x16xbf16> to vector<1x64x16xbf16>
    %128 = vector.shape_cast %127 : vector<1x64x16xbf16> to vector<64x16xbf16>
    %cst_34 = arith.constant dense<0.000000e+00> : vector<64x256xf32>
    %129 = tpu.matmul %128, %126, %cst_34 {dimension_numbers = #tpu.dot_dimension_numbers<[1], [0], [0], [1], [0, 0, 1, 1], [], []>} : vector<64x16xbf16>, vector<16x256xbf16>, vector<64x256xf32> -> vector<64x256xf32>
    %130 = arith.addf %125, %129 : vector<64x256xf32>
    %131 = vector.broadcast %24 : vector<1x256xf32> to vector<64x256xf32>
    %132 = arith.mulf %130, %131 : vector<64x256xf32>
    %133 = arith.addf %116, %132 : vector<64x256xf32>
    %134 = vector.broadcast %82 : vector<64x1xf32> to vector<64x256xf32>
    %135 = arith.addf %133, %134 : vector<64x256xf32>
    %c0_35 = arith.constant 0 : index
    %c0_36 = arith.constant 0 : index
    %c0_37 = arith.constant 0 : index
    %136 = vector.load %arg2[%c0_35, %c0_36, %c0_37] : memref<1x16x256xbf16, #tpu.memory_space<vmem>>, vector<1x16x256xbf16>
    %137 = vector.shape_cast %136 : vector<1x16x256xbf16> to vector<16x256xbf16>
    %138 = arith.extf %137 : vector<16x256xbf16> to vector<16x256xf32>
    %139 = tpu.concatenate %135, %138 in 0 : vector<64x256xf32>, vector<16x256xf32> -> vector<80x256xf32>
    %c0_38 = arith.constant 0 : index
    %c0_39 = arith.constant 0 : index
    %c0_40 = arith.constant 0 : index
    %c0_41 = arith.constant 0 : index
    %140 = vector.load %arg7[%c0_38, %c0_39, %c0_40, %c0_41] : memref<2x9x80x80xbf16, #tpu.memory_space<vmem>>, vector<1x9x80x80xbf16>
    %141 = vector.shape_cast %140 : vector<1x9x80x80xbf16> to vector<9x80x80xbf16>
    %c0_42 = arith.constant 0 : index
    %c0_43 = arith.constant 0 : index
    %c0_44 = arith.constant 0 : index
    %142 = vector.load %arg8[%c0_42, %c0_43, %c0_44] : memref<2x80x1xf32, #tpu.memory_space<vmem>>, vector<1x80x1xf32>
    %143 = vector.shape_cast %142 : vector<1x80x1xf32> to vector<80x1xf32>
    %cst_45 = arith.constant 0.000000e+00 : bf16
    %144 = vector.broadcast %cst_45 : bf16 to vector<80x17xbf16>
    %145 = arith.truncf %139 : vector<80x256xf32> to vector<80x256xbf16>
    %146 = tpu.concatenate %144, %145, %144 in 1 : vector<80x17xbf16>, vector<80x256xbf16>, vector<80x17xbf16> -> vector<80x290xbf16>
    %147 = vector.extract_strided_slice %146 {offsets = [0, 0], sizes = [80, 256], strides = [1, 1]} : vector<80x290xbf16> to vector<80x256xbf16>
    %148 = vector.extract_strided_slice %141 {offsets = [0, 0, 0], sizes = [1, 80, 80], strides = [1, 1, 1]} : vector<9x80x80xbf16> to vector<1x80x80xbf16>
    %149 = vector.shape_cast %148 : vector<1x80x80xbf16> to vector<80x80xbf16>
    %cst_46 = arith.constant dense<0.000000e+00> : vector<80x256xf32>
    %150 = tpu.matmul %149, %147, %cst_46 {dimension_numbers = #tpu.dot_dimension_numbers<[1], [0], [0], [1], [0, 0, 1, 1], [], []>} : vector<80x80xbf16>, vector<80x256xbf16>, vector<80x256xf32> -> vector<80x256xf32>
    %151 = vector.extract_strided_slice %146 {offsets = [0, 16], sizes = [80, 256], strides = [1, 1]} : vector<80x290xbf16> to vector<80x256xbf16>
    %152 = vector.extract_strided_slice %141 {offsets = [3, 0, 0], sizes = [1, 80, 80], strides = [1, 1, 1]} : vector<9x80x80xbf16> to vector<1x80x80xbf16>
    %153 = vector.shape_cast %152 : vector<1x80x80xbf16> to vector<80x80xbf16>
    %cst_47 = arith.constant dense<0.000000e+00> : vector<80x256xf32>
    %154 = tpu.matmul %153, %151, %cst_47 {dimension_numbers = #tpu.dot_dimension_numbers<[1], [0], [0], [1], [0, 0, 1, 1], [], []>} : vector<80x80xbf16>, vector<80x256xbf16>, vector<80x256xf32> -> vector<80x256xf32>
    %155 = arith.addf %150, %154 : vector<80x256xf32>
    %156 = vector.extract_strided_slice %146 {offsets = [0, 32], sizes = [80, 256], strides = [1, 1]} : vector<80x290xbf16> to vector<80x256xbf16>
    %157 = vector.extract_strided_slice %141 {offsets = [6, 0, 0], sizes = [1, 80, 80], strides = [1, 1, 1]} : vector<9x80x80xbf16> to vector<1x80x80xbf16>
    %158 = vector.shape_cast %157 : vector<1x80x80xbf16> to vector<80x80xbf16>
    %cst_48 = arith.constant dense<0.000000e+00> : vector<80x256xf32>
    %159 = tpu.matmul %158, %156, %cst_48 {dimension_numbers = #tpu.dot_dimension_numbers<[1], [0], [0], [1], [0, 0, 1, 1], [], []>} : vector<80x80xbf16>, vector<80x256xbf16>, vector<80x256xf32> -> vector<80x256xf32>
    %160 = arith.addf %155, %159 : vector<80x256xf32>
    %161 = vector.broadcast %20 : vector<1x256xf32> to vector<80x256xf32>
    %162 = arith.mulf %160, %161 : vector<80x256xf32>
    %163 = vector.extract_strided_slice %146 {offsets = [0, 1], sizes = [80, 256], strides = [1, 1]} : vector<80x290xbf16> to vector<80x256xbf16>
    %164 = vector.extract_strided_slice %141 {offsets = [1, 0, 0], sizes = [1, 80, 80], strides = [1, 1, 1]} : vector<9x80x80xbf16> to vector<1x80x80xbf16>
    %165 = vector.shape_cast %164 : vector<1x80x80xbf16> to vector<80x80xbf16>
    %cst_49 = arith.constant dense<0.000000e+00> : vector<80x256xf32>
    %166 = tpu.matmul %165, %163, %cst_49 {dimension_numbers = #tpu.dot_dimension_numbers<[1], [0], [0], [1], [0, 0, 1, 1], [], []>} : vector<80x80xbf16>, vector<80x256xbf16>, vector<80x256xf32> -> vector<80x256xf32>
    %167 = vector.extract_strided_slice %146 {offsets = [0, 17], sizes = [80, 256], strides = [1, 1]} : vector<80x290xbf16> to vector<80x256xbf16>
    %168 = vector.extract_strided_slice %141 {offsets = [4, 0, 0], sizes = [1, 80, 80], strides = [1, 1, 1]} : vector<9x80x80xbf16> to vector<1x80x80xbf16>
    %169 = vector.shape_cast %168 : vector<1x80x80xbf16> to vector<80x80xbf16>
    %cst_50 = arith.constant dense<0.000000e+00> : vector<80x256xf32>
    %170 = tpu.matmul %169, %167, %cst_50 {dimension_numbers = #tpu.dot_dimension_numbers<[1], [0], [0], [1], [0, 0, 1, 1], [], []>} : vector<80x80xbf16>, vector<80x256xbf16>, vector<80x256xf32> -> vector<80x256xf32>
    %171 = arith.addf %166, %170 : vector<80x256xf32>
    %172 = vector.extract_strided_slice %146 {offsets = [0, 33], sizes = [80, 256], strides = [1, 1]} : vector<80x290xbf16> to vector<80x256xbf16>
    %173 = vector.extract_strided_slice %141 {offsets = [7, 0, 0], sizes = [1, 80, 80], strides = [1, 1, 1]} : vector<9x80x80xbf16> to vector<1x80x80xbf16>
    %174 = vector.shape_cast %173 : vector<1x80x80xbf16> to vector<80x80xbf16>
    %cst_51 = arith.constant dense<0.000000e+00> : vector<80x256xf32>
    %175 = tpu.matmul %174, %172, %cst_51 {dimension_numbers = #tpu.dot_dimension_numbers<[1], [0], [0], [1], [0, 0, 1, 1], [], []>} : vector<80x80xbf16>, vector<80x256xbf16>, vector<80x256xf32> -> vector<80x256xf32>
    %176 = arith.addf %171, %175 : vector<80x256xf32>
    %177 = arith.addf %162, %176 : vector<80x256xf32>
    %178 = vector.extract_strided_slice %146 {offsets = [0, 2], sizes = [80, 256], strides = [1, 1]} : vector<80x290xbf16> to vector<80x256xbf16>
    %179 = vector.extract_strided_slice %141 {offsets = [2, 0, 0], sizes = [1, 80, 80], strides = [1, 1, 1]} : vector<9x80x80xbf16> to vector<1x80x80xbf16>
    %180 = vector.shape_cast %179 : vector<1x80x80xbf16> to vector<80x80xbf16>
    %cst_52 = arith.constant dense<0.000000e+00> : vector<80x256xf32>
    %181 = tpu.matmul %180, %178, %cst_52 {dimension_numbers = #tpu.dot_dimension_numbers<[1], [0], [0], [1], [0, 0, 1, 1], [], []>} : vector<80x80xbf16>, vector<80x256xbf16>, vector<80x256xf32> -> vector<80x256xf32>
    %182 = vector.extract_strided_slice %146 {offsets = [0, 18], sizes = [80, 256], strides = [1, 1]} : vector<80x290xbf16> to vector<80x256xbf16>
    %183 = vector.extract_strided_slice %141 {offsets = [5, 0, 0], sizes = [1, 80, 80], strides = [1, 1, 1]} : vector<9x80x80xbf16> to vector<1x80x80xbf16>
    %184 = vector.shape_cast %183 : vector<1x80x80xbf16> to vector<80x80xbf16>
    %cst_53 = arith.constant dense<0.000000e+00> : vector<80x256xf32>
    %185 = tpu.matmul %184, %182, %cst_53 {dimension_numbers = #tpu.dot_dimension_numbers<[1], [0], [0], [1], [0, 0, 1, 1], [], []>} : vector<80x80xbf16>, vector<80x256xbf16>, vector<80x256xf32> -> vector<80x256xf32>
    %186 = arith.addf %181, %185 : vector<80x256xf32>
    %187 = vector.extract_strided_slice %146 {offsets = [0, 34], sizes = [80, 256], strides = [1, 1]} : vector<80x290xbf16> to vector<80x256xbf16>
    %188 = vector.extract_strided_slice %141 {offsets = [8, 0, 0], sizes = [1, 80, 80], strides = [1, 1, 1]} : vector<9x80x80xbf16> to vector<1x80x80xbf16>
    %189 = vector.shape_cast %188 : vector<1x80x80xbf16> to vector<80x80xbf16>
    %cst_54 = arith.constant dense<0.000000e+00> : vector<80x256xf32>
    %190 = tpu.matmul %189, %187, %cst_54 {dimension_numbers = #tpu.dot_dimension_numbers<[1], [0], [0], [1], [0, 0, 1, 1], [], []>} : vector<80x80xbf16>, vector<80x256xbf16>, vector<80x256xf32> -> vector<80x256xf32>
    %191 = arith.addf %186, %190 : vector<80x256xf32>
    %192 = vector.broadcast %24 : vector<1x256xf32> to vector<80x256xf32>
    %193 = arith.mulf %191, %192 : vector<80x256xf32>
    %194 = arith.addf %177, %193 : vector<80x256xf32>
    %195 = vector.broadcast %143 : vector<80x1xf32> to vector<80x256xf32>
    %196 = arith.addf %194, %195 : vector<80x256xf32>
    %cst_55 = arith.constant 0.000000e+00 : f32
    %197 = vector.broadcast %cst_55 : f32 to vector<80x256xf32>
    %198 = arith.maximumf %196, %197 : vector<80x256xf32>
    %c0_56 = arith.constant 0 : index
    %c0_57 = arith.constant 0 : index
    %c0_58 = arith.constant 0 : index
    %c0_59 = arith.constant 0 : index
    %199 = vector.load %arg9[%c0_56, %c0_57, %c0_58, %c0_59] : memref<2x9x80x80xbf16, #tpu.memory_space<vmem>>, vector<1x9x80x80xbf16>
    %200 = vector.shape_cast %199 : vector<1x9x80x80xbf16> to vector<9x80x80xbf16>
    %c0_60 = arith.constant 0 : index
    %c0_61 = arith.constant 0 : index
    %c0_62 = arith.constant 0 : index
    %201 = vector.load %arg10[%c0_60, %c0_61, %c0_62] : memref<2x80x1xf32, #tpu.memory_space<vmem>>, vector<1x80x1xf32>
    %202 = vector.shape_cast %201 : vector<1x80x1xf32> to vector<80x1xf32>
    %cst_63 = arith.constant 0.000000e+00 : bf16
    %203 = vector.broadcast %cst_63 : bf16 to vector<80x17xbf16>
    %204 = arith.truncf %198 : vector<80x256xf32> to vector<80x256xbf16>
    %205 = tpu.concatenate %203, %204, %203 in 1 : vector<80x17xbf16>, vector<80x256xbf16>, vector<80x17xbf16> -> vector<80x290xbf16>
    %206 = vector.extract_strided_slice %205 {offsets = [0, 0], sizes = [80, 256], strides = [1, 1]} : vector<80x290xbf16> to vector<80x256xbf16>
    %207 = vector.extract_strided_slice %200 {offsets = [0, 0, 0], sizes = [1, 80, 80], strides = [1, 1, 1]} : vector<9x80x80xbf16> to vector<1x80x80xbf16>
    %208 = vector.shape_cast %207 : vector<1x80x80xbf16> to vector<80x80xbf16>
    %cst_64 = arith.constant dense<0.000000e+00> : vector<80x256xf32>
    %209 = tpu.matmul %208, %206, %cst_64 {dimension_numbers = #tpu.dot_dimension_numbers<[1], [0], [0], [1], [0, 0, 1, 1], [], []>} : vector<80x80xbf16>, vector<80x256xbf16>, vector<80x256xf32> -> vector<80x256xf32>
    %210 = vector.extract_strided_slice %205 {offsets = [0, 16], sizes = [80, 256], strides = [1, 1]} : vector<80x290xbf16> to vector<80x256xbf16>
    %211 = vector.extract_strided_slice %200 {offsets = [3, 0, 0], sizes = [1, 80, 80], strides = [1, 1, 1]} : vector<9x80x80xbf16> to vector<1x80x80xbf16>
    %212 = vector.shape_cast %211 : vector<1x80x80xbf16> to vector<80x80xbf16>
    %cst_65 = arith.constant dense<0.000000e+00> : vector<80x256xf32>
    %213 = tpu.matmul %212, %210, %cst_65 {dimension_numbers = #tpu.dot_dimension_numbers<[1], [0], [0], [1], [0, 0, 1, 1], [], []>} : vector<80x80xbf16>, vector<80x256xbf16>, vector<80x256xf32> -> vector<80x256xf32>
    %214 = arith.addf %209, %213 : vector<80x256xf32>
    %215 = vector.extract_strided_slice %205 {offsets = [0, 32], sizes = [80, 256], strides = [1, 1]} : vector<80x290xbf16> to vector<80x256xbf16>
    %216 = vector.extract_strided_slice %200 {offsets = [6, 0, 0], sizes = [1, 80, 80], strides = [1, 1, 1]} : vector<9x80x80xbf16> to vector<1x80x80xbf16>
    %217 = vector.shape_cast %216 : vector<1x80x80xbf16> to vector<80x80xbf16>
    %cst_66 = arith.constant dense<0.000000e+00> : vector<80x256xf32>
    %218 = tpu.matmul %217, %215, %cst_66 {dimension_numbers = #tpu.dot_dimension_numbers<[1], [0], [0], [1], [0, 0, 1, 1], [], []>} : vector<80x80xbf16>, vector<80x256xbf16>, vector<80x256xf32> -> vector<80x256xf32>
    %219 = arith.addf %214, %218 : vector<80x256xf32>
    %220 = vector.broadcast %20 : vector<1x256xf32> to vector<80x256xf32>
    %221 = arith.mulf %219, %220 : vector<80x256xf32>
    %222 = vector.extract_strided_slice %205 {offsets = [0, 1], sizes = [80, 256], strides = [1, 1]} : vector<80x290xbf16> to vector<80x256xbf16>
    %223 = vector.extract_strided_slice %200 {offsets = [1, 0, 0], sizes = [1, 80, 80], strides = [1, 1, 1]} : vector<9x80x80xbf16> to vector<1x80x80xbf16>
    %224 = vector.shape_cast %223 : vector<1x80x80xbf16> to vector<80x80xbf16>
    %cst_67 = arith.constant dense<0.000000e+00> : vector<80x256xf32>
    %225 = tpu.matmul %224, %222, %cst_67 {dimension_numbers = #tpu.dot_dimension_numbers<[1], [0], [0], [1], [0, 0, 1, 1], [], []>} : vector<80x80xbf16>, vector<80x256xbf16>, vector<80x256xf32> -> vector<80x256xf32>
    %226 = vector.extract_strided_slice %205 {offsets = [0, 17], sizes = [80, 256], strides = [1, 1]} : vector<80x290xbf16> to vector<80x256xbf16>
    %227 = vector.extract_strided_slice %200 {offsets = [4, 0, 0], sizes = [1, 80, 80], strides = [1, 1, 1]} : vector<9x80x80xbf16> to vector<1x80x80xbf16>
    %228 = vector.shape_cast %227 : vector<1x80x80xbf16> to vector<80x80xbf16>
    %cst_68 = arith.constant dense<0.000000e+00> : vector<80x256xf32>
    %229 = tpu.matmul %228, %226, %cst_68 {dimension_numbers = #tpu.dot_dimension_numbers<[1], [0], [0], [1], [0, 0, 1, 1], [], []>} : vector<80x80xbf16>, vector<80x256xbf16>, vector<80x256xf32> -> vector<80x256xf32>
    %230 = arith.addf %225, %229 : vector<80x256xf32>
    %231 = vector.extract_strided_slice %205 {offsets = [0, 33], sizes = [80, 256], strides = [1, 1]} : vector<80x290xbf16> to vector<80x256xbf16>
    %232 = vector.extract_strided_slice %200 {offsets = [7, 0, 0], sizes = [1, 80, 80], strides = [1, 1, 1]} : vector<9x80x80xbf16> to vector<1x80x80xbf16>
    %233 = vector.shape_cast %232 : vector<1x80x80xbf16> to vector<80x80xbf16>
    %cst_69 = arith.constant dense<0.000000e+00> : vector<80x256xf32>
    %234 = tpu.matmul %233, %231, %cst_69 {dimension_numbers = #tpu.dot_dimension_numbers<[1], [0], [0], [1], [0, 0, 1, 1], [], []>} : vector<80x80xbf16>, vector<80x256xbf16>, vector<80x256xf32> -> vector<80x256xf32>
    %235 = arith.addf %230, %234 : vector<80x256xf32>
    %236 = arith.addf %221, %235 : vector<80x256xf32>
    %237 = vector.extract_strided_slice %205 {offsets = [0, 2], sizes = [80, 256], strides = [1, 1]} : vector<80x290xbf16> to vector<80x256xbf16>
    %238 = vector.extract_strided_slice %200 {offsets = [2, 0, 0], sizes = [1, 80, 80], strides = [1, 1, 1]} : vector<9x80x80xbf16> to vector<1x80x80xbf16>
    %239 = vector.shape_cast %238 : vector<1x80x80xbf16> to vector<80x80xbf16>
    %cst_70 = arith.constant dense<0.000000e+00> : vector<80x256xf32>
    %240 = tpu.matmul %239, %237, %cst_70 {dimension_numbers = #tpu.dot_dimension_numbers<[1], [0], [0], [1], [0, 0, 1, 1], [], []>} : vector<80x80xbf16>, vector<80x256xbf16>, vector<80x256xf32> -> vector<80x256xf32>
    %241 = vector.extract_strided_slice %205 {offsets = [0, 18], sizes = [80, 256], strides = [1, 1]} : vector<80x290xbf16> to vector<80x256xbf16>
    %242 = vector.extract_strided_slice %200 {offsets = [5, 0, 0], sizes = [1, 80, 80], strides = [1, 1, 1]} : vector<9x80x80xbf16> to vector<1x80x80xbf16>
    %243 = vector.shape_cast %242 : vector<1x80x80xbf16> to vector<80x80xbf16>
    %cst_71 = arith.constant dense<0.000000e+00> : vector<80x256xf32>
    %244 = tpu.matmul %243, %241, %cst_71 {dimension_numbers = #tpu.dot_dimension_numbers<[1], [0], [0], [1], [0, 0, 1, 1], [], []>} : vector<80x80xbf16>, vector<80x256xbf16>, vector<80x256xf32> -> vector<80x256xf32>
    %245 = arith.addf %240, %244 : vector<80x256xf32>
    %246 = vector.extract_strided_slice %205 {offsets = [0, 34], sizes = [80, 256], strides = [1, 1]} : vector<80x290xbf16> to vector<80x256xbf16>
    %247 = vector.extract_strided_slice %200 {offsets = [8, 0, 0], sizes = [1, 80, 80], strides = [1, 1, 1]} : vector<9x80x80xbf16> to vector<1x80x80xbf16>
    %248 = vector.shape_cast %247 : vector<1x80x80xbf16> to vector<80x80xbf16>
    %cst_72 = arith.constant dense<0.000000e+00> : vector<80x256xf32>
    %249 = tpu.matmul %248, %246, %cst_72 {dimension_numbers = #tpu.dot_dimension_numbers<[1], [0], [0], [1], [0, 0, 1, 1], [], []>} : vector<80x80xbf16>, vector<80x256xbf16>, vector<80x256xf32> -> vector<80x256xf32>
    %250 = arith.addf %245, %249 : vector<80x256xf32>
    %251 = vector.broadcast %24 : vector<1x256xf32> to vector<80x256xf32>
    %252 = arith.mulf %250, %251 : vector<80x256xf32>
    %253 = arith.addf %236, %252 : vector<80x256xf32>
    %254 = vector.broadcast %202 : vector<80x1xf32> to vector<80x256xf32>
    %255 = arith.addf %253, %254 : vector<80x256xf32>
    %256 = arith.addf %139, %255 : vector<80x256xf32>
    %c1 = arith.constant 1 : index
    %c0_73 = arith.constant 0 : index
    %c0_74 = arith.constant 0 : index
    %c0_75 = arith.constant 0 : index
    %257 = vector.load %arg7[%c1, %c0_73, %c0_74, %c0_75] : memref<2x9x80x80xbf16, #tpu.memory_space<vmem>>, vector<1x9x80x80xbf16>
    %258 = vector.shape_cast %257 : vector<1x9x80x80xbf16> to vector<9x80x80xbf16>
    %c1_76 = arith.constant 1 : index
    %c0_77 = arith.constant 0 : index
    %c0_78 = arith.constant 0 : index
    %259 = vector.load %arg8[%c1_76, %c0_77, %c0_78] : memref<2x80x1xf32, #tpu.memory_space<vmem>>, vector<1x80x1xf32>
    %260 = vector.shape_cast %259 : vector<1x80x1xf32> to vector<80x1xf32>
    %cst_79 = arith.constant 0.000000e+00 : bf16
    %261 = vector.broadcast %cst_79 : bf16 to vector<80x17xbf16>
    %262 = arith.truncf %256 : vector<80x256xf32> to vector<80x256xbf16>
    %263 = tpu.concatenate %261, %262, %261 in 1 : vector<80x17xbf16>, vector<80x256xbf16>, vector<80x17xbf16> -> vector<80x290xbf16>
    %264 = vector.extract_strided_slice %263 {offsets = [0, 0], sizes = [80, 256], strides = [1, 1]} : vector<80x290xbf16> to vector<80x256xbf16>
    %265 = vector.extract_strided_slice %258 {offsets = [0, 0, 0], sizes = [1, 80, 80], strides = [1, 1, 1]} : vector<9x80x80xbf16> to vector<1x80x80xbf16>
    %266 = vector.shape_cast %265 : vector<1x80x80xbf16> to vector<80x80xbf16>
    %cst_80 = arith.constant dense<0.000000e+00> : vector<80x256xf32>
    %267 = tpu.matmul %266, %264, %cst_80 {dimension_numbers = #tpu.dot_dimension_numbers<[1], [0], [0], [1], [0, 0, 1, 1], [], []>} : vector<80x80xbf16>, vector<80x256xbf16>, vector<80x256xf32> -> vector<80x256xf32>
    %268 = vector.extract_strided_slice %263 {offsets = [0, 16], sizes = [80, 256], strides = [1, 1]} : vector<80x290xbf16> to vector<80x256xbf16>
    %269 = vector.extract_strided_slice %258 {offsets = [3, 0, 0], sizes = [1, 80, 80], strides = [1, 1, 1]} : vector<9x80x80xbf16> to vector<1x80x80xbf16>
    %270 = vector.shape_cast %269 : vector<1x80x80xbf16> to vector<80x80xbf16>
    %cst_81 = arith.constant dense<0.000000e+00> : vector<80x256xf32>
    %271 = tpu.matmul %270, %268, %cst_81 {dimension_numbers = #tpu.dot_dimension_numbers<[1], [0], [0], [1], [0, 0, 1, 1], [], []>} : vector<80x80xbf16>, vector<80x256xbf16>, vector<80x256xf32> -> vector<80x256xf32>
    %272 = arith.addf %267, %271 : vector<80x256xf32>
    %273 = vector.extract_strided_slice %263 {offsets = [0, 32], sizes = [80, 256], strides = [1, 1]} : vector<80x290xbf16> to vector<80x256xbf16>
    %274 = vector.extract_strided_slice %258 {offsets = [6, 0, 0], sizes = [1, 80, 80], strides = [1, 1, 1]} : vector<9x80x80xbf16> to vector<1x80x80xbf16>
    %275 = vector.shape_cast %274 : vector<1x80x80xbf16> to vector<80x80xbf16>
    %cst_82 = arith.constant dense<0.000000e+00> : vector<80x256xf32>
    %276 = tpu.matmul %275, %273, %cst_82 {dimension_numbers = #tpu.dot_dimension_numbers<[1], [0], [0], [1], [0, 0, 1, 1], [], []>} : vector<80x80xbf16>, vector<80x256xbf16>, vector<80x256xf32> -> vector<80x256xf32>
    %277 = arith.addf %272, %276 : vector<80x256xf32>
    %278 = vector.broadcast %20 : vector<1x256xf32> to vector<80x256xf32>
    %279 = arith.mulf %277, %278 : vector<80x256xf32>
    %280 = vector.extract_strided_slice %263 {offsets = [0, 1], sizes = [80, 256], strides = [1, 1]} : vector<80x290xbf16> to vector<80x256xbf16>
    %281 = vector.extract_strided_slice %258 {offsets = [1, 0, 0], sizes = [1, 80, 80], strides = [1, 1, 1]} : vector<9x80x80xbf16> to vector<1x80x80xbf16>
    %282 = vector.shape_cast %281 : vector<1x80x80xbf16> to vector<80x80xbf16>
    %cst_83 = arith.constant dense<0.000000e+00> : vector<80x256xf32>
    %283 = tpu.matmul %282, %280, %cst_83 {dimension_numbers = #tpu.dot_dimension_numbers<[1], [0], [0], [1], [0, 0, 1, 1], [], []>} : vector<80x80xbf16>, vector<80x256xbf16>, vector<80x256xf32> -> vector<80x256xf32>
    %284 = vector.extract_strided_slice %263 {offsets = [0, 17], sizes = [80, 256], strides = [1, 1]} : vector<80x290xbf16> to vector<80x256xbf16>
    %285 = vector.extract_strided_slice %258 {offsets = [4, 0, 0], sizes = [1, 80, 80], strides = [1, 1, 1]} : vector<9x80x80xbf16> to vector<1x80x80xbf16>
    %286 = vector.shape_cast %285 : vector<1x80x80xbf16> to vector<80x80xbf16>
    %cst_84 = arith.constant dense<0.000000e+00> : vector<80x256xf32>
    %287 = tpu.matmul %286, %284, %cst_84 {dimension_numbers = #tpu.dot_dimension_numbers<[1], [0], [0], [1], [0, 0, 1, 1], [], []>} : vector<80x80xbf16>, vector<80x256xbf16>, vector<80x256xf32> -> vector<80x256xf32>
    %288 = arith.addf %283, %287 : vector<80x256xf32>
    %289 = vector.extract_strided_slice %263 {offsets = [0, 33], sizes = [80, 256], strides = [1, 1]} : vector<80x290xbf16> to vector<80x256xbf16>
    %290 = vector.extract_strided_slice %258 {offsets = [7, 0, 0], sizes = [1, 80, 80], strides = [1, 1, 1]} : vector<9x80x80xbf16> to vector<1x80x80xbf16>
    %291 = vector.shape_cast %290 : vector<1x80x80xbf16> to vector<80x80xbf16>
    %cst_85 = arith.constant dense<0.000000e+00> : vector<80x256xf32>
    %292 = tpu.matmul %291, %289, %cst_85 {dimension_numbers = #tpu.dot_dimension_numbers<[1], [0], [0], [1], [0, 0, 1, 1], [], []>} : vector<80x80xbf16>, vector<80x256xbf16>, vector<80x256xf32> -> vector<80x256xf32>
    %293 = arith.addf %288, %292 : vector<80x256xf32>
    %294 = arith.addf %279, %293 : vector<80x256xf32>
    %295 = vector.extract_strided_slice %263 {offsets = [0, 2], sizes = [80, 256], strides = [1, 1]} : vector<80x290xbf16> to vector<80x256xbf16>
    %296 = vector.extract_strided_slice %258 {offsets = [2, 0, 0], sizes = [1, 80, 80], strides = [1, 1, 1]} : vector<9x80x80xbf16> to vector<1x80x80xbf16>
    %297 = vector.shape_cast %296 : vector<1x80x80xbf16> to vector<80x80xbf16>
    %cst_86 = arith.constant dense<0.000000e+00> : vector<80x256xf32>
    %298 = tpu.matmul %297, %295, %cst_86 {dimension_numbers = #tpu.dot_dimension_numbers<[1], [0], [0], [1], [0, 0, 1, 1], [], []>} : vector<80x80xbf16>, vector<80x256xbf16>, vector<80x256xf32> -> vector<80x256xf32>
    %299 = vector.extract_strided_slice %263 {offsets = [0, 18], sizes = [80, 256], strides = [1, 1]} : vector<80x290xbf16> to vector<80x256xbf16>
    %300 = vector.extract_strided_slice %258 {offsets = [5, 0, 0], sizes = [1, 80, 80], strides = [1, 1, 1]} : vector<9x80x80xbf16> to vector<1x80x80xbf16>
    %301 = vector.shape_cast %300 : vector<1x80x80xbf16> to vector<80x80xbf16>
    %cst_87 = arith.constant dense<0.000000e+00> : vector<80x256xf32>
    %302 = tpu.matmul %301, %299, %cst_87 {dimension_numbers = #tpu.dot_dimension_numbers<[1], [0], [0], [1], [0, 0, 1, 1], [], []>} : vector<80x80xbf16>, vector<80x256xbf16>, vector<80x256xf32> -> vector<80x256xf32>
    %303 = arith.addf %298, %302 : vector<80x256xf32>
    %304 = vector.extract_strided_slice %263 {offsets = [0, 34], sizes = [80, 256], strides = [1, 1]} : vector<80x290xbf16> to vector<80x256xbf16>
    %305 = vector.extract_strided_slice %258 {offsets = [8, 0, 0], sizes = [1, 80, 80], strides = [1, 1, 1]} : vector<9x80x80xbf16> to vector<1x80x80xbf16>
    %306 = vector.shape_cast %305 : vector<1x80x80xbf16> to vector<80x80xbf16>
    %cst_88 = arith.constant dense<0.000000e+00> : vector<80x256xf32>
    %307 = tpu.matmul %306, %304, %cst_88 {dimension_numbers = #tpu.dot_dimension_numbers<[1], [0], [0], [1], [0, 0, 1, 1], [], []>} : vector<80x80xbf16>, vector<80x256xbf16>, vector<80x256xf32> -> vector<80x256xf32>
    %308 = arith.addf %303, %307 : vector<80x256xf32>
    %309 = vector.broadcast %24 : vector<1x256xf32> to vector<80x256xf32>
    %310 = arith.mulf %308, %309 : vector<80x256xf32>
    %311 = arith.addf %294, %310 : vector<80x256xf32>
    %312 = vector.broadcast %260 : vector<80x1xf32> to vector<80x256xf32>
    %313 = arith.addf %311, %312 : vector<80x256xf32>
    %cst_89 = arith.constant 0.000000e+00 : f32
    %314 = vector.broadcast %cst_89 : f32 to vector<80x256xf32>
    %315 = arith.maximumf %313, %314 : vector<80x256xf32>
    %c1_90 = arith.constant 1 : index
    %c0_91 = arith.constant 0 : index
    %c0_92 = arith.constant 0 : index
    %c0_93 = arith.constant 0 : index
    %316 = vector.load %arg9[%c1_90, %c0_91, %c0_92, %c0_93] : memref<2x9x80x80xbf16, #tpu.memory_space<vmem>>, vector<1x9x80x80xbf16>
    %317 = vector.shape_cast %316 : vector<1x9x80x80xbf16> to vector<9x80x80xbf16>
    %c1_94 = arith.constant 1 : index
    %c0_95 = arith.constant 0 : index
    %c0_96 = arith.constant 0 : index
    %318 = vector.load %arg10[%c1_94, %c0_95, %c0_96] : memref<2x80x1xf32, #tpu.memory_space<vmem>>, vector<1x80x1xf32>
    %319 = vector.shape_cast %318 : vector<1x80x1xf32> to vector<80x1xf32>
    %cst_97 = arith.constant 0.000000e+00 : bf16
    %320 = vector.broadcast %cst_97 : bf16 to vector<80x17xbf16>
    %321 = arith.truncf %315 : vector<80x256xf32> to vector<80x256xbf16>
    %322 = tpu.concatenate %320, %321, %320 in 1 : vector<80x17xbf16>, vector<80x256xbf16>, vector<80x17xbf16> -> vector<80x290xbf16>
    %323 = vector.extract_strided_slice %322 {offsets = [0, 0], sizes = [80, 256], strides = [1, 1]} : vector<80x290xbf16> to vector<80x256xbf16>
    %324 = vector.extract_strided_slice %317 {offsets = [0, 0, 0], sizes = [1, 80, 80], strides = [1, 1, 1]} : vector<9x80x80xbf16> to vector<1x80x80xbf16>
    %325 = vector.shape_cast %324 : vector<1x80x80xbf16> to vector<80x80xbf16>
    %cst_98 = arith.constant dense<0.000000e+00> : vector<80x256xf32>
    %326 = tpu.matmul %325, %323, %cst_98 {dimension_numbers = #tpu.dot_dimension_numbers<[1], [0], [0], [1], [0, 0, 1, 1], [], []>} : vector<80x80xbf16>, vector<80x256xbf16>, vector<80x256xf32> -> vector<80x256xf32>
    %327 = vector.extract_strided_slice %322 {offsets = [0, 16], sizes = [80, 256], strides = [1, 1]} : vector<80x290xbf16> to vector<80x256xbf16>
    %328 = vector.extract_strided_slice %317 {offsets = [3, 0, 0], sizes = [1, 80, 80], strides = [1, 1, 1]} : vector<9x80x80xbf16> to vector<1x80x80xbf16>
    %329 = vector.shape_cast %328 : vector<1x80x80xbf16> to vector<80x80xbf16>
    %cst_99 = arith.constant dense<0.000000e+00> : vector<80x256xf32>
    %330 = tpu.matmul %329, %327, %cst_99 {dimension_numbers = #tpu.dot_dimension_numbers<[1], [0], [0], [1], [0, 0, 1, 1], [], []>} : vector<80x80xbf16>, vector<80x256xbf16>, vector<80x256xf32> -> vector<80x256xf32>
    %331 = arith.addf %326, %330 : vector<80x256xf32>
    %332 = vector.extract_strided_slice %322 {offsets = [0, 32], sizes = [80, 256], strides = [1, 1]} : vector<80x290xbf16> to vector<80x256xbf16>
    %333 = vector.extract_strided_slice %317 {offsets = [6, 0, 0], sizes = [1, 80, 80], strides = [1, 1, 1]} : vector<9x80x80xbf16> to vector<1x80x80xbf16>
    %334 = vector.shape_cast %333 : vector<1x80x80xbf16> to vector<80x80xbf16>
    %cst_100 = arith.constant dense<0.000000e+00> : vector<80x256xf32>
    %335 = tpu.matmul %334, %332, %cst_100 {dimension_numbers = #tpu.dot_dimension_numbers<[1], [0], [0], [1], [0, 0, 1, 1], [], []>} : vector<80x80xbf16>, vector<80x256xbf16>, vector<80x256xf32> -> vector<80x256xf32>
    %336 = arith.addf %331, %335 : vector<80x256xf32>
    %337 = vector.broadcast %20 : vector<1x256xf32> to vector<80x256xf32>
    %338 = arith.mulf %336, %337 : vector<80x256xf32>
    %339 = vector.extract_strided_slice %322 {offsets = [0, 1], sizes = [80, 256], strides = [1, 1]} : vector<80x290xbf16> to vector<80x256xbf16>
    %340 = vector.extract_strided_slice %317 {offsets = [1, 0, 0], sizes = [1, 80, 80], strides = [1, 1, 1]} : vector<9x80x80xbf16> to vector<1x80x80xbf16>
    %341 = vector.shape_cast %340 : vector<1x80x80xbf16> to vector<80x80xbf16>
    %cst_101 = arith.constant dense<0.000000e+00> : vector<80x256xf32>
    %342 = tpu.matmul %341, %339, %cst_101 {dimension_numbers = #tpu.dot_dimension_numbers<[1], [0], [0], [1], [0, 0, 1, 1], [], []>} : vector<80x80xbf16>, vector<80x256xbf16>, vector<80x256xf32> -> vector<80x256xf32>
    %343 = vector.extract_strided_slice %322 {offsets = [0, 17], sizes = [80, 256], strides = [1, 1]} : vector<80x290xbf16> to vector<80x256xbf16>
    %344 = vector.extract_strided_slice %317 {offsets = [4, 0, 0], sizes = [1, 80, 80], strides = [1, 1, 1]} : vector<9x80x80xbf16> to vector<1x80x80xbf16>
    %345 = vector.shape_cast %344 : vector<1x80x80xbf16> to vector<80x80xbf16>
    %cst_102 = arith.constant dense<0.000000e+00> : vector<80x256xf32>
    %346 = tpu.matmul %345, %343, %cst_102 {dimension_numbers = #tpu.dot_dimension_numbers<[1], [0], [0], [1], [0, 0, 1, 1], [], []>} : vector<80x80xbf16>, vector<80x256xbf16>, vector<80x256xf32> -> vector<80x256xf32>
    %347 = arith.addf %342, %346 : vector<80x256xf32>
    %348 = vector.extract_strided_slice %322 {offsets = [0, 33], sizes = [80, 256], strides = [1, 1]} : vector<80x290xbf16> to vector<80x256xbf16>
    %349 = vector.extract_strided_slice %317 {offsets = [7, 0, 0], sizes = [1, 80, 80], strides = [1, 1, 1]} : vector<9x80x80xbf16> to vector<1x80x80xbf16>
    %350 = vector.shape_cast %349 : vector<1x80x80xbf16> to vector<80x80xbf16>
    %cst_103 = arith.constant dense<0.000000e+00> : vector<80x256xf32>
    %351 = tpu.matmul %350, %348, %cst_103 {dimension_numbers = #tpu.dot_dimension_numbers<[1], [0], [0], [1], [0, 0, 1, 1], [], []>} : vector<80x80xbf16>, vector<80x256xbf16>, vector<80x256xf32> -> vector<80x256xf32>
    %352 = arith.addf %347, %351 : vector<80x256xf32>
    %353 = arith.addf %338, %352 : vector<80x256xf32>
    %354 = vector.extract_strided_slice %322 {offsets = [0, 2], sizes = [80, 256], strides = [1, 1]} : vector<80x290xbf16> to vector<80x256xbf16>
    %355 = vector.extract_strided_slice %317 {offsets = [2, 0, 0], sizes = [1, 80, 80], strides = [1, 1, 1]} : vector<9x80x80xbf16> to vector<1x80x80xbf16>
    %356 = vector.shape_cast %355 : vector<1x80x80xbf16> to vector<80x80xbf16>
    %cst_104 = arith.constant dense<0.000000e+00> : vector<80x256xf32>
    %357 = tpu.matmul %356, %354, %cst_104 {dimension_numbers = #tpu.dot_dimension_numbers<[1], [0], [0], [1], [0, 0, 1, 1], [], []>} : vector<80x80xbf16>, vector<80x256xbf16>, vector<80x256xf32> -> vector<80x256xf32>
    %358 = vector.extract_strided_slice %322 {offsets = [0, 18], sizes = [80, 256], strides = [1, 1]} : vector<80x290xbf16> to vector<80x256xbf16>
    %359 = vector.extract_strided_slice %317 {offsets = [5, 0, 0], sizes = [1, 80, 80], strides = [1, 1, 1]} : vector<9x80x80xbf16> to vector<1x80x80xbf16>
    %360 = vector.shape_cast %359 : vector<1x80x80xbf16> to vector<80x80xbf16>
    %cst_105 = arith.constant dense<0.000000e+00> : vector<80x256xf32>
    %361 = tpu.matmul %360, %358, %cst_105 {dimension_numbers = #tpu.dot_dimension_numbers<[1], [0], [0], [1], [0, 0, 1, 1], [], []>} : vector<80x80xbf16>, vector<80x256xbf16>, vector<80x256xf32> -> vector<80x256xf32>
    %362 = arith.addf %357, %361 : vector<80x256xf32>
    %363 = vector.extract_strided_slice %322 {offsets = [0, 34], sizes = [80, 256], strides = [1, 1]} : vector<80x290xbf16> to vector<80x256xbf16>
    %364 = vector.extract_strided_slice %317 {offsets = [8, 0, 0], sizes = [1, 80, 80], strides = [1, 1, 1]} : vector<9x80x80xbf16> to vector<1x80x80xbf16>
    %365 = vector.shape_cast %364 : vector<1x80x80xbf16> to vector<80x80xbf16>
    %cst_106 = arith.constant dense<0.000000e+00> : vector<80x256xf32>
    %366 = tpu.matmul %365, %363, %cst_106 {dimension_numbers = #tpu.dot_dimension_numbers<[1], [0], [0], [1], [0, 0, 1, 1], [], []>} : vector<80x80xbf16>, vector<80x256xbf16>, vector<80x256xf32> -> vector<80x256xf32>
    %367 = arith.addf %362, %366 : vector<80x256xf32>
    %368 = vector.broadcast %24 : vector<1x256xf32> to vector<80x256xf32>
    %369 = arith.mulf %367, %368 : vector<80x256xf32>
    %370 = arith.addf %353, %369 : vector<80x256xf32>
    %371 = vector.broadcast %319 : vector<80x1xf32> to vector<80x256xf32>
    %372 = arith.addf %370, %371 : vector<80x256xf32>
    %373 = arith.addf %256, %372 : vector<80x256xf32>
    %c0_107 = arith.constant 0 : index
    %c0_108 = arith.constant 0 : index
    %c0_109 = arith.constant 0 : index
    %374 = vector.load %arg11[%c0_107, %c0_108, %c0_109] : memref<9x12x80xbf16, #tpu.memory_space<vmem>>, vector<9x12x80xbf16>
    %c0_110 = arith.constant 0 : index
    %c0_111 = arith.constant 0 : index
    %375 = vector.load %arg12[%c0_110, %c0_111] : memref<12x1xf32, #tpu.memory_space<vmem>>, vector<12x1xf32>
    %cst_112 = arith.constant 0.000000e+00 : bf16
    %376 = vector.broadcast %cst_112 : bf16 to vector<80x17xbf16>
    %377 = arith.truncf %373 : vector<80x256xf32> to vector<80x256xbf16>
    %378 = tpu.concatenate %376, %377, %376 in 1 : vector<80x17xbf16>, vector<80x256xbf16>, vector<80x17xbf16> -> vector<80x290xbf16>
    %379 = vector.extract_strided_slice %378 {offsets = [0, 0], sizes = [80, 256], strides = [1, 1]} : vector<80x290xbf16> to vector<80x256xbf16>
    %380 = vector.extract_strided_slice %374 {offsets = [0, 0, 0], sizes = [1, 12, 80], strides = [1, 1, 1]} : vector<9x12x80xbf16> to vector<1x12x80xbf16>
    %381 = vector.shape_cast %380 : vector<1x12x80xbf16> to vector<12x80xbf16>
    %cst_113 = arith.constant dense<0.000000e+00> : vector<12x256xf32>
    %382 = tpu.matmul %381, %379, %cst_113 {dimension_numbers = #tpu.dot_dimension_numbers<[1], [0], [0], [1], [0, 0, 1, 1], [], []>} : vector<12x80xbf16>, vector<80x256xbf16>, vector<12x256xf32> -> vector<12x256xf32>
    %383 = vector.extract_strided_slice %378 {offsets = [0, 16], sizes = [80, 256], strides = [1, 1]} : vector<80x290xbf16> to vector<80x256xbf16>
    %384 = vector.extract_strided_slice %374 {offsets = [3, 0, 0], sizes = [1, 12, 80], strides = [1, 1, 1]} : vector<9x12x80xbf16> to vector<1x12x80xbf16>
    %385 = vector.shape_cast %384 : vector<1x12x80xbf16> to vector<12x80xbf16>
    %cst_114 = arith.constant dense<0.000000e+00> : vector<12x256xf32>
    %386 = tpu.matmul %385, %383, %cst_114 {dimension_numbers = #tpu.dot_dimension_numbers<[1], [0], [0], [1], [0, 0, 1, 1], [], []>} : vector<12x80xbf16>, vector<80x256xbf16>, vector<12x256xf32> -> vector<12x256xf32>
    %387 = arith.addf %382, %386 : vector<12x256xf32>
    %388 = vector.extract_strided_slice %378 {offsets = [0, 32], sizes = [80, 256], strides = [1, 1]} : vector<80x290xbf16> to vector<80x256xbf16>
    %389 = vector.extract_strided_slice %374 {offsets = [6, 0, 0], sizes = [1, 12, 80], strides = [1, 1, 1]} : vector<9x12x80xbf16> to vector<1x12x80xbf16>
    %390 = vector.shape_cast %389 : vector<1x12x80xbf16> to vector<12x80xbf16>
    %cst_115 = arith.constant dense<0.000000e+00> : vector<12x256xf32>
    %391 = tpu.matmul %390, %388, %cst_115 {dimension_numbers = #tpu.dot_dimension_numbers<[1], [0], [0], [1], [0, 0, 1, 1], [], []>} : vector<12x80xbf16>, vector<80x256xbf16>, vector<12x256xf32> -> vector<12x256xf32>
    %392 = arith.addf %387, %391 : vector<12x256xf32>
    %393 = vector.broadcast %20 : vector<1x256xf32> to vector<12x256xf32>
    %394 = arith.mulf %392, %393 : vector<12x256xf32>
    %395 = vector.extract_strided_slice %378 {offsets = [0, 1], sizes = [80, 256], strides = [1, 1]} : vector<80x290xbf16> to vector<80x256xbf16>
    %396 = vector.extract_strided_slice %374 {offsets = [1, 0, 0], sizes = [1, 12, 80], strides = [1, 1, 1]} : vector<9x12x80xbf16> to vector<1x12x80xbf16>
    %397 = vector.shape_cast %396 : vector<1x12x80xbf16> to vector<12x80xbf16>
    %cst_116 = arith.constant dense<0.000000e+00> : vector<12x256xf32>
    %398 = tpu.matmul %397, %395, %cst_116 {dimension_numbers = #tpu.dot_dimension_numbers<[1], [0], [0], [1], [0, 0, 1, 1], [], []>} : vector<12x80xbf16>, vector<80x256xbf16>, vector<12x256xf32> -> vector<12x256xf32>
    %399 = vector.extract_strided_slice %378 {offsets = [0, 17], sizes = [80, 256], strides = [1, 1]} : vector<80x290xbf16> to vector<80x256xbf16>
    %400 = vector.extract_strided_slice %374 {offsets = [4, 0, 0], sizes = [1, 12, 80], strides = [1, 1, 1]} : vector<9x12x80xbf16> to vector<1x12x80xbf16>
    %401 = vector.shape_cast %400 : vector<1x12x80xbf16> to vector<12x80xbf16>
    %cst_117 = arith.constant dense<0.000000e+00> : vector<12x256xf32>
    %402 = tpu.matmul %401, %399, %cst_117 {dimension_numbers = #tpu.dot_dimension_numbers<[1], [0], [0], [1], [0, 0, 1, 1], [], []>} : vector<12x80xbf16>, vector<80x256xbf16>, vector<12x256xf32> -> vector<12x256xf32>
    %403 = arith.addf %398, %402 : vector<12x256xf32>
    %404 = vector.extract_strided_slice %378 {offsets = [0, 33], sizes = [80, 256], strides = [1, 1]} : vector<80x290xbf16> to vector<80x256xbf16>
    %405 = vector.extract_strided_slice %374 {offsets = [7, 0, 0], sizes = [1, 12, 80], strides = [1, 1, 1]} : vector<9x12x80xbf16> to vector<1x12x80xbf16>
    %406 = vector.shape_cast %405 : vector<1x12x80xbf16> to vector<12x80xbf16>
    %cst_118 = arith.constant dense<0.000000e+00> : vector<12x256xf32>
    %407 = tpu.matmul %406, %404, %cst_118 {dimension_numbers = #tpu.dot_dimension_numbers<[1], [0], [0], [1], [0, 0, 1, 1], [], []>} : vector<12x80xbf16>, vector<80x256xbf16>, vector<12x256xf32> -> vector<12x256xf32>
    %408 = arith.addf %403, %407 : vector<12x256xf32>
    %409 = arith.addf %394, %408 : vector<12x256xf32>
    %410 = vector.extract_strided_slice %378 {offsets = [0, 2], sizes = [80, 256], strides = [1, 1]} : vector<80x290xbf16> to vector<80x256xbf16>
    %411 = vector.extract_strided_slice %374 {offsets = [2, 0, 0], sizes = [1, 12, 80], strides = [1, 1, 1]} : vector<9x12x80xbf16> to vector<1x12x80xbf16>
    %412 = vector.shape_cast %411 : vector<1x12x80xbf16> to vector<12x80xbf16>
    %cst_119 = arith.constant dense<0.000000e+00> : vector<12x256xf32>
    %413 = tpu.matmul %412, %410, %cst_119 {dimension_numbers = #tpu.dot_dimension_numbers<[1], [0], [0], [1], [0, 0, 1, 1], [], []>} : vector<12x80xbf16>, vector<80x256xbf16>, vector<12x256xf32> -> vector<12x256xf32>
    %414 = vector.extract_strided_slice %378 {offsets = [0, 18], sizes = [80, 256], strides = [1, 1]} : vector<80x290xbf16> to vector<80x256xbf16>
    %415 = vector.extract_strided_slice %374 {offsets = [5, 0, 0], sizes = [1, 12, 80], strides = [1, 1, 1]} : vector<9x12x80xbf16> to vector<1x12x80xbf16>
    %416 = vector.shape_cast %415 : vector<1x12x80xbf16> to vector<12x80xbf16>
    %cst_120 = arith.constant dense<0.000000e+00> : vector<12x256xf32>
    %417 = tpu.matmul %416, %414, %cst_120 {dimension_numbers = #tpu.dot_dimension_numbers<[1], [0], [0], [1], [0, 0, 1, 1], [], []>} : vector<12x80xbf16>, vector<80x256xbf16>, vector<12x256xf32> -> vector<12x256xf32>
    %418 = arith.addf %413, %417 : vector<12x256xf32>
    %419 = vector.extract_strided_slice %378 {offsets = [0, 34], sizes = [80, 256], strides = [1, 1]} : vector<80x290xbf16> to vector<80x256xbf16>
    %420 = vector.extract_strided_slice %374 {offsets = [8, 0, 0], sizes = [1, 12, 80], strides = [1, 1, 1]} : vector<9x12x80xbf16> to vector<1x12x80xbf16>
    %421 = vector.shape_cast %420 : vector<1x12x80xbf16> to vector<12x80xbf16>
    %cst_121 = arith.constant dense<0.000000e+00> : vector<12x256xf32>
    %422 = tpu.matmul %421, %419, %cst_121 {dimension_numbers = #tpu.dot_dimension_numbers<[1], [0], [0], [1], [0, 0, 1, 1], [], []>} : vector<12x80xbf16>, vector<80x256xbf16>, vector<12x256xf32> -> vector<12x256xf32>
    %423 = arith.addf %418, %422 : vector<12x256xf32>
    %424 = vector.broadcast %24 : vector<1x256xf32> to vector<12x256xf32>
    %425 = arith.mulf %423, %424 : vector<12x256xf32>
    %426 = arith.addf %409, %425 : vector<12x256xf32>
    %427 = vector.broadcast %375 : vector<12x1xf32> to vector<12x256xf32>
    %428 = arith.addf %426, %427 : vector<12x256xf32>
    %c0_122 = arith.constant 0 : index
    %c0_123 = arith.constant 0 : index
    %c0_124 = arith.constant 0 : index
    %429 = vector.load %arg13[%c0_122, %c0_123, %c0_124] : memref<1x12x256xf32, #tpu.memory_space<vmem>>, vector<1x12x256xf32>
    %430 = vector.shape_cast %429 : vector<1x12x256xf32> to vector<12x256xf32>
    %431 = vector.shape_cast %428 : vector<12x256xf32> to vector<1x12x256xf32>
    tpu.vector_store %arg13[%c0_122, %c0_123, %c0_124], %431 {strides = array<i32>} : memref<1x12x256xf32, #tpu.memory_space<vmem>>, vector<1x12x256xf32>,
    return
  }
  func.func @transform_0(%arg0: i32) -> (i32, i32, i32) {
    %c0_i32 = arith.constant 0 : i32
    %c0_i32_0 = arith.constant 0 : i32
    %c0_i32_1 = arith.constant 0 : i32
    return %arg0, %c0_i32, %c0_i32_0 : i32, i32, i32
  }
  func.func @transform_1(%arg0: i32) -> (i32, i32, i32) {
    %c0_i32 = arith.constant 0 : i32
    %c0_i32_0 = arith.constant 0 : i32
    %c0_i32_1 = arith.constant 0 : i32
    return %arg0, %c0_i32, %c0_i32_0 : i32, i32, i32
  }
  func.func @transform_2(%arg0: i32) -> (i32, i32, i32) {
    %c0_i32 = arith.constant 0 : i32
    %c0_i32_0 = arith.constant 0 : i32
    %c0_i32_1 = arith.constant 0 : i32
    %c0_i32_2 = arith.constant 0 : i32
    return %c0_i32, %c0_i32_0, %c0_i32_1 : i32, i32, i32
  }
  func.func @transform_3(%arg0: i32) -> (i32, i32) {
    %c0_i32 = arith.constant 0 : i32
    %c0_i32_0 = arith.constant 0 : i32
    %c0_i32_1 = arith.constant 0 : i32
    return %c0_i32, %c0_i32_0 : i32, i32
  }
  func.func @transform_4(%arg0: i32) -> (i32, i32, i32) {
    %c0_i32 = arith.constant 0 : i32
    %c0_i32_0 = arith.constant 0 : i32
    %c0_i32_1 = arith.constant 0 : i32
    %c0_i32_2 = arith.constant 0 : i32
    return %c0_i32, %c0_i32_0, %c0_i32_1 : i32, i32, i32
  }
  func.func @transform_5(%arg0: i32) -> (i32, i32) {
    %c0_i32 = arith.constant 0 : i32
    %c0_i32_0 = arith.constant 0 : i32
    %c0_i32_1 = arith.constant 0 : i32
    return %c0_i32, %c0_i32_0 : i32, i32
  }
  func.func @transform_6(%arg0: i32) -> (i32, i32, i32, i32) {
    %c0_i32 = arith.constant 0 : i32
    %c0_i32_0 = arith.constant 0 : i32
    %c0_i32_1 = arith.constant 0 : i32
    %c0_i32_2 = arith.constant 0 : i32
    %c0_i32_3 = arith.constant 0 : i32
    return %c0_i32, %c0_i32_0, %c0_i32_1, %c0_i32_2 : i32, i32, i32, i32
  }
  func.func @transform_7(%arg0: i32) -> (i32, i32, i32) {
    %c0_i32 = arith.constant 0 : i32
    %c0_i32_0 = arith.constant 0 : i32
    %c0_i32_1 = arith.constant 0 : i32
    %c0_i32_2 = arith.constant 0 : i32
    return %c0_i32, %c0_i32_0, %c0_i32_1 : i32, i32, i32
  }
  func.func @transform_8(%arg0: i32) -> (i32, i32, i32, i32) {
    %c0_i32 = arith.constant 0 : i32
    %c0_i32_0 = arith.constant 0 : i32
    %c0_i32_1 = arith.constant 0 : i32
    %c0_i32_2 = arith.constant 0 : i32
    %c0_i32_3 = arith.constant 0 : i32
    return %c0_i32, %c0_i32_0, %c0_i32_1, %c0_i32_2 : i32, i32, i32, i32
  }
  func.func @transform_9(%arg0: i32) -> (i32, i32, i32) {
    %c0_i32 = arith.constant 0 : i32
    %c0_i32_0 = arith.constant 0 : i32
    %c0_i32_1 = arith.constant 0 : i32
    %c0_i32_2 = arith.constant 0 : i32
    return %c0_i32, %c0_i32_0, %c0_i32_1 : i32, i32, i32
  }
  func.func @transform_10(%arg0: i32) -> (i32, i32, i32) {
    %c0_i32 = arith.constant 0 : i32
    %c0_i32_0 = arith.constant 0 : i32
    %c0_i32_1 = arith.constant 0 : i32
    %c0_i32_2 = arith.constant 0 : i32
    return %c0_i32, %c0_i32_0, %c0_i32_1 : i32, i32, i32
  }
  func.func @transform_11(%arg0: i32) -> (i32, i32) {
    %c0_i32 = arith.constant 0 : i32
    %c0_i32_0 = arith.constant 0 : i32
    %c0_i32_1 = arith.constant 0 : i32
    return %c0_i32, %c0_i32_0 : i32, i32
  }
  func.func @transform_12(%arg0: i32) -> (i32, i32, i32) {
    %c0_i32 = arith.constant 0 : i32
    %c0_i32_0 = arith.constant 0 : i32
    %c0_i32_1 = arith.constant 0 : i32
    return %arg0, %c0_i32, %c0_i32_0 : i32, i32, i32
  }
}

</mosaic_0001>

<llo_original>
// kernel: nhr_res32_forward.1
$region0: #{nhr_res32_forward.1}
  #allocation0 [shape = 'u32[]', space=smem, size = 0x4, offset = 0x4, fixed_abs, tag = 'smem constant byte address 0x4 - core index']
  #allocation1 [shape = 'u32[144,128]{1,0:T(1,128)}', space=vmem, size = 0x12000, scoped, tag = 'internal scratch']
  %s0 = inlined_call_operand.vmem [shape: bf16[2,3,256], index: 0, kind: input, shape index: {}]
  %s1 = inlined_call_operand.vmem [shape: bf16[2,16,256], index: 1, kind: input, shape index: {}]
  %s2 = inlined_call_operand.vmem [shape: bf16[9,16,3], index: 2, kind: input, shape index: {}]
  %s3 = inlined_call_operand.vmem [shape: f32[16,1], index: 3, kind: input, shape index: {}]
  %s4 = inlined_call_operand.vmem [shape: bf16[9,64,16], index: 4, kind: input, shape index: {}]
  %s5 = inlined_call_operand.vmem [shape: f32[64,1], index: 5, kind: input, shape index: {}]
  %s6 = inlined_call_operand.vmem [shape: bf16[2,9,80,80], index: 6, kind: input, shape index: {}]
  %s7 = inlined_call_operand.vmem [shape: f32[2,80,1], index: 7, kind: input, shape index: {}]
  %s8 = inlined_call_operand.vmem [shape: bf16[2,9,80,80], index: 8, kind: input, shape index: {}]
  %s9 = inlined_call_operand.vmem [shape: f32[2,80,1], index: 9, kind: input, shape index: {}]
  %s10 = inlined_call_operand.vmem [shape: bf16[9,12,80], index: 10, kind: input, shape index: {}]
  %s11 = inlined_call_operand.vmem [shape: f32[12,1], index: 11, kind: input, shape index: {}]
  %s12 = inlined_call_operand.vmem [shape: f32[2,12,256], index: 12, kind: output, shape index: {}]
  %s13 = sld [smem:[#allocation0]]
  $region81: #{nhr_res32_forward.1} parent=0
    _
  %s15 = ssub.s32 1, %s13
  %s16 = scalar_select 0, %s15, %s13
  loop: start=0, step=1, limit=4
  $region2: #{nhr_res32_forward.1} parent=0 // loop_pre_header
    _
  $region3: #{nhr_res32_forward.1} parent=0 // loop_header
    %s18 = sphi 0, %s22
    %p19 = scmp.ge.s32.totalorder %s18, 4
    %s28 = sphi 0, %s30
    %s31 = sphi 0, %s28
    %s32 = sphi 0, %s31
    %s48 = sphi 0, %s32
    %s54 = sphi 0, %s56
    %s57 = sphi 0, %s54
    %s58 = sphi 0, %s57
    %s74 = sphi 0, %s58
    %s78 = sphi 0, %s78
    %s80 = sphi 0, %s78
    %s81 = sphi 0, %s80
    %s95 = sphi 0, %s81
    %s99 = sphi 0, %s99
    %s101 = sphi 0, %s99
    %s102 = sphi 0, %s101
    %s116 = sphi 0, %s102
    %s120 = sphi 0, %s120
    %s122 = sphi 0, %s120
    %s123 = sphi 0, %s122
    %s137 = sphi 0, %s123
    %s141 = sphi 0, %s141
    %s143 = sphi 0, %s141
    %s144 = sphi 0, %s143
    %s158 = sphi 0, %s144
    %s162 = sphi 0, %s162
    %s164 = sphi 0, %s162
    %s165 = sphi 0, %s164
    %s179 = sphi 0, %s165
    %s183 = sphi 0, %s183
    %s185 = sphi 0, %s183
    %s186 = sphi 0, %s185
    %s200 = sphi 0, %s186
    %s204 = sphi 0, %s204
    %s206 = sphi 0, %s204
    %s207 = sphi 0, %s206
    %s221 = sphi 0, %s207
    %s225 = sphi 0, %s225
    %s227 = sphi 0, %s225
    %s228 = sphi 0, %s227
    %s242 = sphi 0, %s228
    %s246 = sphi 0, %s246
    %s248 = sphi 0, %s246
    %s249 = sphi 0, %s248
    %s263 = sphi 0, %s249
    %s267 = sphi 0, %s267
    %s269 = sphi 0, %s267
    %s270 = sphi 0, %s269
    %s284 = sphi 0, %s270
    %s290 = sphi 0, %s292
    %s293 = sphi 0, %s290
    %s294 = sphi 0, %s293
    %s310 = sphi 0, %s294
  $region4: #{nhr_res32_forward.1} parent=0 // loop_header_branch
    %21 = sbr.rel (%p19) target = $region8
  $region5: #{nhr_res32_forward.1} parent=0 // loop_body
    %s23 = ssub.s32 %s18, 1
    %s24 = ssub.s32 %s18, 2
    %s25 = sadd.s32 %s18, 1
    %s26 = ssub.s32 %s18, %s25
    %p27 = scmp.eq.s32.totalorder %s26, 0
    %s29 = sadd.s32 %s28, 1
    %s30 = scalar_select %p27, %s28, %s29
    %p33 = pneg %p27
    %p34 = scmp.eq.s32.totalorder %s18, 1
    %p35 = por %p33, %p34
    %p36 = scmp.ne.s32.totalorder %s28, %s31
    %p37 = scmp.eq.s32.totalorder %s18, 0
    %p38 = por %p36, %p37
    %p39 = scmp.ne.s32.totalorder %s28, %s31
    %p40 = scmp.eq.s32.totalorder %s23, 1
    %p41 = por %p39, %p40
    %p42 = scmp.ne.s32.totalorder %s31, %s32
    %p43 = scmp.eq.s32.totalorder %s23, 0
    %p44 = por %p42, %p43
    %p45 = scmp.ne.s32.totalorder %s31, %s32
    %p46 = scmp.eq.s32.totalorder %s24, 1
    %p47 = por %p45, %p46
    %p49 = scmp.ne.s32.totalorder %s32, %s48
    %p50 = scmp.eq.s32.totalorder %s24, 0
    %p51 = por %p49, %p50
    %s52 = ssub.s32 %s18, %s25
    %p53 = scmp.eq.s32.totalorder %s52, 0
    %s55 = sadd.s32 %s54, 1
    %s56 = scalar_select %p53, %s54, %s55
    %p59 = pneg %p53
    %p60 = scmp.eq.s32.totalorder %s18, 1
    %p61 = por %p59, %p60
    %p62 = scmp.ne.s32.totalorder %s54, %s57
    %p63 = scmp.eq.s32.totalorder %s18, 0
    %p64 = por %p62, %p63
    %p65 = scmp.ne.s32.totalorder %s54, %s57
    %p66 = scmp.eq.s32.totalorder %s23, 1
    %p67 = por %p65, %p66
    %p68 = scmp.ne.s32.totalorder %s57, %s58
    %p69 = scmp.eq.s32.totalorder %s23, 0
    %p70 = por %p68, %p69
    %p71 = scmp.ne.s32.totalorder %s57, %s58
    %p72 = scmp.eq.s32.totalorder %s24, 1
    %p73 = por %p71, %p72
    %p75 = scmp.ne.s32.totalorder %s58, %s74
    %p76 = scmp.eq.s32.totalorder %s24, 0
    %p77 = por %p75, %p76
    %s79 = sadd.s32 %s78, 1
    %p82 = scmp.eq.s32.totalorder %s18, 1
    %p83 = scmp.ne.s32.totalorder %s78, %s80
    %p84 = scmp.eq.s32.totalorder %s18, 0
    %p85 = por %p83, %p84
    %p86 = scmp.ne.s32.totalorder %s78, %s80
    %p87 = scmp.eq.s32.totalorder %s23, 1
    %p88 = por %p86, %p87
    %p89 = scmp.ne.s32.totalorder %s80, %s81
    %p90 = scmp.eq.s32.totalorder %s23, 0
    %p91 = por %p89, %p90
    %p92 = scmp.ne.s32.totalorder %s80, %s81
    %p93 = scmp.eq.s32.totalorder %s24, 1
    %p94 = por %p92, %p93
    %p96 = scmp.ne.s32.totalorder %s81, %s95
    %p97 = scmp.eq.s32.totalorder %s24, 0
    %p98 = por %p96, %p97
    %s100 = sadd.s32 %s99, 1
    %p103 = scmp.eq.s32.totalorder %s18, 1
    %p104 = scmp.ne.s32.totalorder %s99, %s101
    %p105 = scmp.eq.s32.totalorder %s18, 0
    %p106 = por %p104, %p105
    %p107 = scmp.ne.s32.totalorder %s99, %s101
    %p108 = scmp.eq.s32.totalorder %s23, 1
    %p109 = por %p107, %p108
    %p110 = scmp.ne.s32.totalorder %s101, %s102
    %p111 = scmp.eq.s32.totalorder %s23, 0
    %p112 = por %p110, %p111
    %p113 = scmp.ne.s32.totalorder %s101, %s102
    %p114 = scmp.eq.s32.totalorder %s24, 1
    %p115 = por %p113, %p114
    %p117 = scmp.ne.s32.totalorder %s102, %s116
    %p118 = scmp.eq.s32.totalorder %s24, 0
    %p119 = por %p117, %p118
    %s121 = sadd.s32 %s120, 1
    %p124 = scmp.eq.s32.totalorder %s18, 1
    %p125 = scmp.ne.s32.totalorder %s120, %s122
    %p126 = scmp.eq.s32.totalorder %s18, 0
    %p127 = por %p125, %p126
    %p128 = scmp.ne.s32.totalorder %s120, %s122
    %p129 = scmp.eq.s32.totalorder %s23, 1
    %p130 = por %p128, %p129
    %p131 = scmp.ne.s32.totalorder %s122, %s123
    %p132 = scmp.eq.s32.totalorder %s23, 0
    %p133 = por %p131, %p132
    %p134 = scmp.ne.s32.totalorder %s122, %s123
    %p135 = scmp.eq.s32.totalorder %s24, 1
    %p136 = por %p134, %p135
    %p138 = scmp.ne.s32.totalorder %s123, %s137
    %p139 = scmp.eq.s32.totalorder %s24, 0
    %p140 = por %p138, %p139
    %s142 = sadd.s32 %s141, 1
    %p145 = scmp.eq.s32.totalorder %s18, 1
    %p146 = scmp.ne.s32.totalorder %s141, %s143
    %p147 = scmp.eq.s32.totalorder %s18, 0
    %p148 = por %p146, %p147
    %p149 = scmp.ne.s32.totalorder %s141, %s143
    %p150 = scmp.eq.s32.totalorder %s23, 1
    %p151 = por %p149, %p150
    %p152 = scmp.ne.s32.totalorder %s143, %s144
    %p153 = scmp.eq.s32.totalorder %s23, 0
    %p154 = por %p152, %p153
    %p155 = scmp.ne.s32.totalorder %s143, %s144
    %p156 = scmp.eq.s32.totalorder %s24, 1
    %p157 = por %p155, %p156
    %p159 = scmp.ne.s32.totalorder %s144, %s158
    %p160 = scmp.eq.s32.totalorder %s24, 0
    %p161 = por %p159, %p160
    %s163 = sadd.s32 %s162, 1
    %p166 = scmp.eq.s32.totalorder %s18, 1
    %p167 = scmp.ne.s32.totalorder %s162, %s164
    %p168 = scmp.eq.s32.totalorder %s18, 0
    %p169 = por %p167, %p168
    %p170 = scmp.ne.s32.totalorder %s162, %s164
    %p171 = scmp.eq.s32.totalorder %s23, 1
    %p172 = por %p170, %p171
    %p173 = scmp.ne.s32.totalorder %s164, %s165
    %p174 = scmp.eq.s32.totalorder %s23, 0
    %p175 = por %p173, %p174
    %p176 = scmp.ne.s32.totalorder %s164, %s165
    %p177 = scmp.eq.s32.totalorder %s24, 1
    %p178 = por %p176, %p177
    %p180 = scmp.ne.s32.totalorder %s165, %s179
    %p181 = scmp.eq.s32.totalorder %s24, 0
    %p182 = por %p180, %p181
    %s184 = sadd.s32 %s183, 1
    %p187 = scmp.eq.s32.totalorder %s18, 1
    %p188 = scmp.ne.s32.totalorder %s183, %s185
    %p189 = scmp.eq.s32.totalorder %s18, 0
    %p190 = por %p188, %p189
    %p191 = scmp.ne.s32.totalorder %s183, %s185
    %p192 = scmp.eq.s32.totalorder %s23, 1
    %p193 = por %p191, %p192
    %p194 = scmp.ne.s32.totalorder %s185, %s186
    %p195 = scmp.eq.s32.totalorder %s23, 0
    %p196 = por %p194, %p195
    %p197 = scmp.ne.s32.totalorder %s185, %s186
    %p198 = scmp.eq.s32.totalorder %s24, 1
    %p199 = por %p197, %p198
    %p201 = scmp.ne.s32.totalorder %s186, %s200
    %p202 = scmp.eq.s32.totalorder %s24, 0
    %p203 = por %p201, %p202
    %s205 = sadd.s32 %s204, 1
    %p208 = scmp.eq.s32.totalorder %s18, 1
    %p209 = scmp.ne.s32.totalorder %s204, %s206
    %p210 = scmp.eq.s32.totalorder %s18, 0
    %p211 = por %p209, %p210
    %p212 = scmp.ne.s32.totalorder %s204, %s206
    %p213 = scmp.eq.s32.totalorder %s23, 1
    %p214 = por %p212, %p213
    %p215 = scmp.ne.s32.totalorder %s206, %s207
    %p216 = scmp.eq.s32.totalorder %s23, 0
    %p217 = por %p215, %p216
    %p218 = scmp.ne.s32.totalorder %s206, %s207
    %p219 = scmp.eq.s32.totalorder %s24, 1
    %p220 = por %p218, %p219
    %p222 = scmp.ne.s32.totalorder %s207, %s221
    %p223 = scmp.eq.s32.totalorder %s24, 0
    %p224 = por %p222, %p223
    %s226 = sadd.s32 %s225, 1
    %p229 = scmp.eq.s32.totalorder %s18, 1
    %p230 = scmp.ne.s32.totalorder %s225, %s227
    %p231 = scmp.eq.s32.totalorder %s18, 0
    %p232 = por %p230, %p231
    %p233 = scmp.ne.s32.totalorder %s225, %s227
    %p234 = scmp.eq.s32.totalorder %s23, 1
    %p235 = por %p233, %p234
    %p236 = scmp.ne.s32.totalorder %s227, %s228
    %p237 = scmp.eq.s32.totalorder %s23, 0
    %p238 = por %p236, %p237
    %p239 = scmp.ne.s32.totalorder %s227, %s228
    %p240 = scmp.eq.s32.totalorder %s24, 1
    %p241 = por %p239, %p240
    %p243 = scmp.ne.s32.totalorder %s228, %s242
    %p244 = scmp.eq.s32.totalorder %s24, 0
    %p245 = por %p243, %p244
    %s247 = sadd.s32 %s246, 1
    %p250 = scmp.eq.s32.totalorder %s18, 1
    %p251 = scmp.ne.s32.totalorder %s246, %s248
    %p252 = scmp.eq.s32.totalorder %s18, 0
    %p253 = por %p251, %p252
    %p254 = scmp.ne.s32.totalorder %s246, %s248
    %p255 = scmp.eq.s32.totalorder %s23, 1
    %p256 = por %p254, %p255
    %p257 = scmp.ne.s32.totalorder %s248, %s249
    %p258 = scmp.eq.s32.totalorder %s23, 0
    %p259 = por %p257, %p258
    %p260 = scmp.ne.s32.totalorder %s248, %s249
    %p261 = scmp.eq.s32.totalorder %s24, 1
    %p262 = por %p260, %p261
    %p264 = scmp.ne.s32.totalorder %s249, %s263
    %p265 = scmp.eq.s32.totalorder %s24, 0
    %p266 = por %p264, %p265
    %s268 = sadd.s32 %s267, 1
    %p271 = scmp.eq.s32.totalorder %s18, 1
    %p272 = scmp.ne.s32.totalorder %s267, %s269
    %p273 = scmp.eq.s32.totalorder %s18, 0
    %p274 = por %p272, %p273
    %p275 = scmp.ne.s32.totalorder %s267, %s269
    %p276 = scmp.eq.s32.totalorder %s23, 1
    %p277 = por %p275, %p276
    %p278 = scmp.ne.s32.totalorder %s269, %s270
    %p279 = scmp.eq.s32.totalorder %s23, 0
    %p280 = por %p278, %p279
    %p281 = scmp.ne.s32.totalorder %s269, %s270
    %p282 = scmp.eq.s32.totalorder %s24, 1
    %p283 = por %p281, %p282
    %p285 = scmp.ne.s32.totalorder %s270, %s284
    %p286 = scmp.eq.s32.totalorder %s24, 0
    %p287 = por %p285, %p286
    %s288 = ssub.s32 %s18, %s25
    %p289 = scmp.eq.s32.totalorder %s288, 0
    %s291 = sadd.s32 %s290, 1
    %s292 = scalar_select %p289, %s290, %s291
    %p295 = pneg %p289
    %p296 = scmp.eq.s32.totalorder %s18, 1
    %p297 = por %p295, %p296
    %p298 = scmp.ne.s32.totalorder %s290, %s293
    %p299 = scmp.eq.s32.totalorder %s18, 0
    %p300 = por %p298, %p299
    %p301 = scmp.ne.s32.totalorder %s290, %s293
    %p302 = scmp.eq.s32.totalorder %s23, 1
    %p303 = por %p301, %p302
    %p304 = scmp.ne.s32.totalorder %s293, %s294
    %p305 = scmp.eq.s32.totalorder %s23, 0
    %p306 = por %p304, %p305
    %p307 = scmp.ne.s32.totalorder %s293, %s294
    %p308 = scmp.eq.s32.totalorder %s24, 1
    %p309 = por %p307, %p308
    %p311 = scmp.ne.s32.totalorder %s294, %s310
    %p312 = scmp.eq.s32.totalorder %s24, 0
    %p313 = por %p311, %p312
    %p314 = scmp.le.s32.totalorder 1, %s18
    %p315 = scmp.lt.s32.totalorder %s18, 3
    %p316 = pnand %p314, %p315
    %p317 = pneg %p316
    // Predicated region
    $region9: #{nhr_res32_forward.1} parent=5 // pred_check
      _
    $region10: #{nhr_res32_forward.1} parent=5 // pred_check_branch
      %319 = sbr.rel (%p316) target = $region12
    $region11: #{nhr_res32_forward.1} parent=5 // pred_region
      %s320 = ssub.s32 %s18, 1
      // Predicated region
      $region13: #{nhr_res32_forward.1} parent=11 // pred_check
        %p321 = pneg %p91
      $region14: #{nhr_res32_forward.1} parent=11 // pred_check_branch
        %323 = sbr.rel (%p321) target = $region16
      $region15: #{nhr_res32_forward.1} parent=11 // pred_region
        _
      $region16: #{nhr_res32_forward.1} parent=11 // pred_fallthru
        _
      // Predicated region
      $region17: #{nhr_res32_forward.1} parent=11 // pred_check
        %p324 = pneg %p112
      $region18: #{nhr_res32_forward.1} parent=11 // pred_check_branch
        %326 = sbr.rel (%p324) target = $region20
      $region19: #{nhr_res32_forward.1} parent=11 // pred_region
        _
      $region20: #{nhr_res32_forward.1} parent=11 // pred_fallthru
        _
      // Predicated region
      $region21: #{nhr_res32_forward.1} parent=11 // pred_check
        %p327 = pneg %p133
      $region22: #{nhr_res32_forward.1} parent=11 // pred_check_branch
        %329 = sbr.rel (%p327) target = $region24
      $region23: #{nhr_res32_forward.1} parent=11 // pred_region
        _
      $region24: #{nhr_res32_forward.1} parent=11 // pred_fallthru
        _
      // Predicated region
      $region25: #{nhr_res32_forward.1} parent=11 // pred_check
        %p330 = pneg %p154
      $region26: #{nhr_res32_forward.1} parent=11 // pred_check_branch
        %332 = sbr.rel (%p330) target = $region28
      $region27: #{nhr_res32_forward.1} parent=11 // pred_region
        _
      $region28: #{nhr_res32_forward.1} parent=11 // pred_fallthru
        _
      // Predicated region
      $region29: #{nhr_res32_forward.1} parent=11 // pred_check
        %p333 = pneg %p175
      $region30: #{nhr_res32_forward.1} parent=11 // pred_check_branch
        %335 = sbr.rel (%p333) target = $region32
      $region31: #{nhr_res32_forward.1} parent=11 // pred_region
        _
      $region32: #{nhr_res32_forward.1} parent=11 // pred_fallthru
        _
      // Predicated region
      $region33: #{nhr_res32_forward.1} parent=11 // pred_check
        %p336 = pneg %p196
      $region34: #{nhr_res32_forward.1} parent=11 // pred_check_branch
        %338 = sbr.rel (%p336) target = $region36
      $region35: #{nhr_res32_forward.1} parent=11 // pred_region
        _
      $region36: #{nhr_res32_forward.1} parent=11 // pred_fallthru
        _
      // Predicated region
      $region37: #{nhr_res32_forward.1} parent=11 // pred_check
        %p339 = pneg %p217
      $region38: #{nhr_res32_forward.1} parent=11 // pred_check_branch
        %341 = sbr.rel (%p339) target = $region40
      $region39: #{nhr_res32_forward.1} parent=11 // pred_region
        _
      $region40: #{nhr_res32_forward.1} parent=11 // pred_fallthru
        _
      // Predicated region
      $region41: #{nhr_res32_forward.1} parent=11 // pred_check
        %p342 = pneg %p238
      $region42: #{nhr_res32_forward.1} parent=11 // pred_check_branch
        %344 = sbr.rel (%p342) target = $region44
      $region43: #{nhr_res32_forward.1} parent=11 // pred_region
        _
      $region44: #{nhr_res32_forward.1} parent=11 // pred_fallthru
        _
      // Predicated region
      $region45: #{nhr_res32_forward.1} parent=11 // pred_check
        %p345 = pneg %p259
      $region46: #{nhr_res32_forward.1} parent=11 // pred_check_branch
        %347 = sbr.rel (%p345) target = $region48
      $region47: #{nhr_res32_forward.1} parent=11 // pred_region
        _
      $region48: #{nhr_res32_forward.1} parent=11 // pred_fallthru
        _
      // Predicated region
      $region49: #{nhr_res32_forward.1} parent=11 // pred_check
        %p348 = pneg %p280
      $region50: #{nhr_res32_forward.1} parent=11 // pred_check_branch
        %350 = sbr.rel (%p348) target = $region52
      $region51: #{nhr_res32_forward.1} parent=11 // pred_region
        _
      $region52: #{nhr_res32_forward.1} parent=11 // pred_fallthru
        _
    $region12: #{nhr_res32_forward.1} parent=5 // pred_fallthru
      _
    %p351 = scmp.lt.s32.totalorder %s18, 2
    // Predicated region
    $region53: #{nhr_res32_forward.1} parent=5 // pred_check
      %p352 = pneg %p351
    $region54: #{nhr_res32_forward.1} parent=5 // pred_check_branch
      %354 = sbr.rel (%p352) target = $region56
    $region55: #{nhr_res32_forward.1} parent=5 // pred_region
      // Predicated region
      $region57: #{nhr_res32_forward.1} parent=55 // pred_check
        %p355 = pneg %p38
      $region58: #{nhr_res32_forward.1} parent=55 // pred_check_branch
        %357 = sbr.rel (%p355) target = $region60
      $region59: #{nhr_res32_forward.1} parent=55 // pred_region
        %p358 = scmp.lt.s32.totalorder %s18, 1
        %s359 = scalar_select %p358, %s18, 1
        %s360 = smul.addr %s359, 2
        %s361 = smul.addr %s360, 2
        %s362 = scalar_lea.vmem %s0, %s361
      $region60: #{nhr_res32_forward.1} parent=55 // pred_fallthru
        _
      // Predicated region
      $region61: #{nhr_res32_forward.1} parent=55 // pred_check
        %p363 = pneg %p64
      $region62: #{nhr_res32_forward.1} parent=55 // pred_check_branch
        %365 = sbr.rel (%p363) target = $region64
      $region63: #{nhr_res32_forward.1} parent=55 // pred_region
        %p366 = scmp.lt.s32.totalorder %s18, 1
        %s367 = scalar_select %p366, %s18, 1
        %s368 = smul.addr %s367, 4
        %s369 = smul.addr %s368, 4
        %s370 = scalar_lea.vmem %s1, %s369
      $region64: #{nhr_res32_forward.1} parent=55 // pred_fallthru
        _
    $region56: #{nhr_res32_forward.1} parent=5 // pred_fallthru
      _
    %p371 = scmp.le.s32.totalorder 1, %s18
    %p372 = scmp.lt.s32.totalorder %s18, 3
    %p373 = pnand %p371, %p372
    %p374 = pneg %p373
    // Predicated region
    $region65: #{nhr_res32_forward.1} parent=5 // pred_check
      _
    $region66: #{nhr_res32_forward.1} parent=5 // pred_check_branch
      %376 = sbr.rel (%p373) target = $region68
    $region67: #{nhr_res32_forward.1} parent=5 // pred_region
      %s377 = ssub.s32 %s18, 1
      %p378 = scmp.lt.s32.totalorder %s23, 1
      %s379 = scalar_select %p378, %s23, 1
      %s380 = smul.addr %s379, 2
      %s381 = smul.addr %s380, 2
      %s382 = scalar_lea.vmem %s0, %s381
      %p383 = pneg %p44
      %p384 = pneg %p41
      %p385 = scmp.lt.s32.totalorder %s23, 1
      %s386 = scalar_select %p385, %s23, 1
      %s387 = smul.addr %s386, 4
      %s388 = smul.addr %s387, 4
      %s389 = scalar_lea.vmem %s1, %s388
      %p390 = pneg %p70
      %p391 = pneg %p67
      %p392 = pneg %p91
      %p393 = pneg %p88
      %p394 = pneg %p112
      %p395 = pneg %p109
      %p396 = pneg %p133
      %p397 = pneg %p130
      %p398 = pneg %p154
      %p399 = pneg %p151
      %p400 = pneg %p175
      %p401 = pneg %p172
      %p402 = pneg %p196
      %p403 = pneg %p193
      %p404 = pneg %p217
      %p405 = pneg %p214
      %p406 = pneg %p238
      %p407 = pneg %p235
      %p408 = pneg %p259
      %p409 = pneg %p256
      %p410 = pneg %p280
      %p411 = pneg %p277
      %p412 = pneg %p306
      %p413 = pneg %p303
      %p414 = scmp.lt.s32.totalorder %s23, 1
      %s415 = scalar_select %p414, %s23, 1
      %s416 = smul.addr %s415, 4
      %s417 = smul.addr %s416, 8
      %s418 = scalar_lea.vmem %s12, %s417
      %p419 = scmp.lt.s32.totalorder %s23, 1
      %s420 = scalar_select %p419, %s23, 1
      %s421 = smul.addr %s420, 2
      %s422 = smul.addr %s421, 2
      %s423 = scalar_lea.vmem %s0, %s422
      %p424 = scmp.lt.s32.totalorder %s23, 1
      %s425 = scalar_select %p424, %s23, 1
      %s426 = smul.addr %s425, 4
      %s427 = smul.addr %s426, 4
      %s428 = scalar_lea.vmem %s1, %s427
      %p429 = scmp.lt.s32.totalorder %s23, 1
      %s430 = scalar_select %p429, %s23, 1
      %s431 = smul.addr %s430, 4
      %s432 = smul.addr %s431, 8
      %s433 = scalar_lea.vmem %s12, %s432
      %v435 = vlaneseq
      %v436 = vand.u32 %v435, 127
      %v437 = vadd.s32 %v436, 128
      %vm438 = vcmp.lt.s32.totalorder %v436, 0
      %v439 = vsub.s32 0, %v436
      %v440 = vsel %vm438, %v439, %v436
      %v441 = vshrl.u32 %v440, 4
      %v442 = vand.u32 %v440, 15
      %v443 = vsub.s32 0, %v442
      %v444 = vsel %vm438, %v443, %v442
      %vm445 = vcmp.lt.s32.totalorder %v437, 0
      %v446 = vsub.s32 0, %v437
      %v447 = vsel %vm445, %v446, %v437
      %v448 = vshrl.u32 %v447, 4
      %v449 = vand.u32 %v447, 15
      %v450 = vsub.s32 0, %v449
      %v451 = vsel %vm445, %v450, %v449
      %vm452 = vcmp.ne.s32.totalorder %v444, 0
      %vm453 = vcmp.ne.s32.totalorder %v451, 0
      %vm454 = vcmp.lt.s32.totalorder %v444, 0
      %vm455 = vcmp.lt.s32.totalorder %v451, 0
      %vm456 = vmand %vm454, %vm452
      %vm457 = vmand %vm455, %vm453
      %v458 = vadd.s32 %v444, 16
      %v459 = vadd.s32 %v451, 16
      %v460 = vsel %vm456, %v458, %v444
      %v461 = vsel %vm457, %v459, %v451
      %vm462 = vcmp.ne.s32.totalorder %v460, 0
      %vm463 = vcmp.ne.s32.totalorder %v461, 0
      %v464 = vsel %vm462, 1, 0
      %v465 = vsel %vm463, 1, 0
      %v466 = vcvt.s32.f32 %v464
      %v467 = vcvt.s32.f32 %v465
      %vm468 = vcmp.ne.s32.totalorder %v460, 15
      %vm469 = vcmp.ne.s32.totalorder %v461, 15
      %v470 = vsel %vm468, 1, 0
      %v471 = vsel %vm469, 1, 0
      %v472 = vcvt.s32.f32 %v470
      %v473 = vcvt.s32.f32 %v471
      %v474 = vld [vmem:[%s423] sm:$0xf]
      %v475 = vld [vmem:[%s2] sm:$0xf]
      %v476 = vld [vmem:[%s2 + $0x4] sm:$0xf]
      %v477 = vld [vmem:[%s2 + $0x8] sm:$0xf]
      %v478 = vld [vmem:[%s2 + $0xc] sm:$0xf]
      %v479 = vld [vmem:[%s2 + $0x10] sm:$0xf]
      %v480 = vld [vmem:[%s2 + $0x14] sm:$0xf]
      %v481 = vld [vmem:[%s2 + $0x18] sm:$0xf]
      %v482 = vld [vmem:[%s2 + $0x1c] sm:$0xf]
      %v483 = vld [vmem:[%s2 + $0x20] sm:$0xf]
      %v484 = vld [vmem:[%s2 + $0x24] sm:$0xf]
      %v485 = vld [vmem:[%s2 + $0x28] sm:$0xf]
      %v486 = vld [vmem:[%s2 + $0x2c] sm:$0xf]
      %v487 = vld [vmem:[%s2 + $0x30] sm:$0xf]
      %v488 = vld [vmem:[%s2 + $0x34] sm:$0xf]
      %v489 = vld [vmem:[%s2 + $0x38] sm:$0xf]
      %v490 = vld [vmem:[%s2 + $0x3c] sm:$0xf]
      %v491 = vld [vmem:[%s2 + $0x40] sm:$0xf]
      %v492 = vld [vmem:[%s2 + $0x44] sm:$0xf]
      %v493 = vld [vmem:[%s3] sm:$0xff]
      %v494 = vld [vmem:[%s3 + $0x8] sm:$0xff]
      %v497 = vunpack.c.l.s4 1983009808
      %v498 = vunpack.c.0.s8 %v497
      %v499 = vlaneseq
      %v500 = vshrl.u32 %v499, 7
      %v501 = vsub.s32 %v498, %v500
      %v502 = vrot.slane %v474, %v501
      %v503 = vcombine.high %v502, %v502
      %504 = vrot.lane.b32.xlu0 %v502, 17
      %v505 = vpop.permute.xlu0 %504
      %506 = vrot.lane.b32.xlu0 %v503, 17
      %v507 = vpop.permute.xlu0 %506
      %vm508 = vcmask 138240
      %v509 = vsel %vm508, %v505, %v507
      %vm510 = vcmask 138240
      %v513 = vsel %vm510, 0, %v505
      %v515 = vsel %vm510, %v507, 0
      %v518 = vunpack.c.l.b16 %v481
      %v519 = vunpack.c.l.b16 %v482
      %v520 = vpack.c.b16 %v519, %v518
      %523 = vrot.lane.b32.xlu0 %v513, 112
      %v524 = vpop.permute.xlu0 %523
      %525 = vrot.lane.b32.xlu0 %v509, 112
      %v526 = vpop.permute.xlu0 %525
      %527 = vrot.lane.b32.xlu0 %v515, 112
      %v528 = vpop.permute.xlu0 %527
      %vm529 = vcmask 916480
      %v530 = vsel %vm529, %v524, %v526
      %v531 = vsel %vm529, %v526, %v528
      %vm532 = vcmask 23552
      %v534 = vsel %vm532, %v520, 0
      %vm536 = vcmask 1040384
      %vm537 = vcmask 1041408
      %v538 = vsel %vm536, 4294967295, 65535
      %v539 = vsel %vm537, %v538, 0
      %v541 = vand.u32 %v530, %v539
      %v544 = vand.u32 %v531, %v539
      %546 = vmatprep.subr.bf16.mxu0 %v544
      %547 = vmatpush1.bf16.msra.mxu0 %v541
      %548 = vmatprep.subr.bf16.mxu0 0
      %549 = vmatpush1.bf16.msra.mxu0 0
      %550 = vmatprep.subr.bf16.mxu0 0
      %551 = vmatpush1.bf16.msra.mxu0 0
      %552 = vmatprep.subr.bf16.mxu0 0
      %553 = vmatpush1.bf16.msra.mxu0 0
      %554 = vmatprep.subr.bf16.mxu0 0
      %555 = vmatpush1.bf16.msra.mxu0 0
      %556 = vmatprep.subr.bf16.mxu0 0
      %557 = vmatpush1.bf16.msra.mxu0 0
      %558 = vmatprep.subr.bf16.mxu0 0
      %559 = vmatpush1.bf16.msra.mxu0 0
      %560 = vmatprep.subr.bf16.mxu0 0
      %561 = vmatpush1.bf16.msra.mxu0 0
      %562 = vmatprep.subr.bf16.mxu0 0
      %563 = vmatpush1.bf16.msra.mxu0 0
      %564 = vmatprep.subr.bf16.mxu0 0
      %565 = vmatpush1.bf16.msra.mxu0 0
      %566 = vmatprep.subr.bf16.mxu0 0
      %567 = vmatpush1.bf16.msra.mxu0 0
      %568 = vmatprep.subr.bf16.mxu0 0
      %569 = vmatpush1.bf16.msra.mxu0 0
      %570 = vmatprep.subr.bf16.mxu0 0
      %571 = vmatpush1.bf16.msra.mxu0 0
      %572 = vmatprep.subr.bf16.mxu0 0
      %573 = vmatpush1.bf16.msra.mxu0 0
      %574 = vmatprep.subr.bf16.mxu0 0
      %575 = vmatpush1.bf16.msra.mxu0 0
      %576 = vmatprep.subr.bf16.mxu0 0
      %577 = vmatpush1.bf16.msra.mxu0 0
      %578 = vmatprep.mubr.bf16.mxu0 0
      %579 = vmatmul.mubr.bf16.gmra.mrb[0].mxu0 %v534
      %v580 = vpop.f32.mrb[0].mxu0
      %v581 = vadd.f32 0.0, %v580
      %v582 = vpop.f32.mrb[0].mxu0
      %v583 = vadd.f32 0.0, %v582
      %v584 = vpop.f32.mrb[0].mxu0
      %v585 = vadd.f32 0.0, %v584
      %v586 = vpop.f32.mrb[0].mxu0
      %v587 = vadd.f32 0.0, %v586
      %588 = vdwg.mxu0
      %v591 = vunpack.c.l.b16 %v475
      %v592 = vunpack.c.l.b16 %v476
      %v593 = vpack.c.b16 %v592, %v591
      %v595 = vsel %vm532, %v593, 0
      %v597 = vand.u32 %v513, %v539
      %v600 = vand.u32 %v509, %v539
      %602 = vmatprep.subr.bf16.mxu0 %v600
      %603 = vmatpush1.bf16.msra.mxu0 %v597
      %604 = vmatprep.subr.bf16.mxu0 0
      %605 = vmatpush1.bf16.msra.mxu0 0
      %606 = vmatprep.subr.bf16.mxu0 0
      %607 = vmatpush1.bf16.msra.mxu0 0
      %608 = vmatprep.subr.bf16.mxu0 0
      %609 = vmatpush1.bf16.msra.mxu0 0
      %610 = vmatprep.subr.bf16.mxu0 0
      %611 = vmatpush1.bf16.msra.mxu0 0
      %612 = vmatprep.subr.bf16.mxu0 0
      %613 = vmatpush1.bf16.msra.mxu0 0
      %614 = vmatprep.subr.bf16.mxu0 0
      %615 = vmatpush1.bf16.msra.mxu0 0
      %616 = vmatprep.subr.bf16.mxu0 0
      %617 = vmatpush1.bf16.msra.mxu0 0
      %618 = vmatprep.subr.bf16.mxu0 0
      %619 = vmatpush1.bf16.msra.mxu0 0
      %620 = vmatprep.subr.bf16.mxu0 0
      %621 = vmatpush1.bf16.msra.mxu0 0
      %622 = vmatprep.subr.bf16.mxu0 0
      %623 = vmatpush1.bf16.msra.mxu0 0
      %624 = vmatprep.subr.bf16.mxu0 0
      %625 = vmatpush1.bf16.msra.mxu0 0
      %626 = vmatprep.subr.bf16.mxu0 0
      %627 = vmatpush1.bf16.msra.mxu0 0
      %628 = vmatprep.subr.bf16.mxu0 0
      %629 = vmatpush1.bf16.msra.mxu0 0
      %630 = vmatprep.subr.bf16.mxu0 0
      %631 = vmatpush1.bf16.msra.mxu0 0
      %632 = vmatprep.subr.bf16.mxu0 0
      %633 = vmatpush1.bf16.msra.mxu0 0
      %634 = vmatprep.mubr.bf16.mxu0 0
      %635 = vmatmul.mubr.bf16.gmra.mrb[0].mxu0 %v595
      %v636 = vpop.f32.mrb[0].mxu0
      %v637 = vadd.f32 %v581, %v636
      %v638 = vpop.f32.mrb[0].mxu0
      %v639 = vadd.f32 %v583, %v638
      %v640 = vpop.f32.mrb[0].mxu0
      %v641 = vadd.f32 %v585, %v640
      %v642 = vpop.f32.mrb[0].mxu0
      %v643 = vadd.f32 %v587, %v642
      %644 = vdwg.mxu0
      %v647 = vunpack.c.l.b16 %v487
      %v648 = vunpack.c.l.b16 %v488
      %v649 = vpack.c.b16 %v648, %v647
      %650 = vrot.lane.b32.xlu0 %v513, 96
      %v651 = vpop.permute.xlu0 %650
      %652 = vrot.lane.b32.xlu0 %v509, 96
      %v653 = vpop.permute.xlu0 %652
      %654 = vrot.lane.b32.xlu0 %v515, 96
      %v655 = vpop.permute.xlu0 %654
      %vm656 = vcmask 785408
      %v657 = vsel %vm656, %v651, %v653
      %v658 = vsel %vm656, %v653, %v655
      %v660 = vsel %vm532, %v649, 0
      %v663 = vand.u32 %v657, %v539
      %v666 = vand.u32 %v658, %v539
      %668 = vmatprep.subr.bf16.mxu0 %v666
      %669 = vmatpush1.bf16.msra.mxu0 %v663
      %670 = vmatprep.subr.bf16.mxu0 0
      %671 = vmatpush1.bf16.msra.mxu0 0
      %672 = vmatprep.subr.bf16.mxu0 0
      %673 = vmatpush1.bf16.msra.mxu0 0
      %674 = vmatprep.subr.bf16.mxu0 0
      %675 = vmatpush1.bf16.msra.mxu0 0
      %676 = vmatprep.subr.bf16.mxu0 0
      %677 = vmatpush1.bf16.msra.mxu0 0
      %678 = vmatprep.subr.bf16.mxu0 0
      %679 = vmatpush1.bf16.msra.mxu0 0
      %680 = vmatprep.subr.bf16.mxu0 0
      %681 = vmatpush1.bf16.msra.mxu0 0
      %682 = vmatprep.subr.bf16.mxu0 0
      %683 = vmatpush1.bf16.msra.mxu0 0
      %684 = vmatprep.subr.bf16.mxu0 0
      %685 = vmatpush1.bf16.msra.mxu0 0
      %686 = vmatprep.subr.bf16.mxu0 0
      %687 = vmatpush1.bf16.msra.mxu0 0
      %688 = vmatprep.subr.bf16.mxu0 0
      %689 = vmatpush1.bf16.msra.mxu0 0
      %690 = vmatprep.subr.bf16.mxu0 0
      %691 = vmatpush1.bf16.msra.mxu0 0
      %692 = vmatprep.subr.bf16.mxu0 0
      %693 = vmatpush1.bf16.msra.mxu0 0
      %694 = vmatprep.subr.bf16.mxu0 0
      %695 = vmatpush1.bf16.msra.mxu0 0
      %696 = vmatprep.subr.bf16.mxu0 0
      %697 = vmatpush1.bf16.msra.mxu0 0
      %698 = vmatprep.subr.bf16.mxu0 0
      %699 = vmatpush1.bf16.msra.mxu0 0
      %700 = vmatprep.mubr.bf16.mxu0 0
      %701 = vmatmul.mubr.bf16.gmra.mrb[0].mxu0 %v660
      %v702 = vpop.f32.mrb[0].mxu0
      %v703 = vadd.f32 0.0, %v702
      %v704 = vpop.f32.mrb[0].mxu0
      %v705 = vadd.f32 0.0, %v704
      %v706 = vpop.f32.mrb[0].mxu0
      %v707 = vadd.f32 0.0, %v706
      %v708 = vpop.f32.mrb[0].mxu0
      %v709 = vadd.f32 0.0, %v708
      %710 = vdwg.mxu0
      %v711 = vadd.f32 %v637, %v703
      %v712 = vadd.f32 %v639, %v705
      %v713 = vadd.f32 %v641, %v707
      %v714 = vadd.f32 %v643, %v709
      %v715 = vmul.f32 %v711, %v466
      %v716 = vmul.f32 %v712, %v467
      %v717 = vmul.f32 %v713, %v466
      %v718 = vmul.f32 %v714, %v467
      %v721 = vunpack.c.l.b16 %v483
      %v722 = vunpack.c.l.b16 %v484
      %v723 = vpack.c.b16 %v722, %v721
      %724 = vrot.lane.b32.xlu0 %v513, 111
      %v725 = vpop.permute.xlu0 %724
      %726 = vrot.lane.b32.xlu0 %v509, 111
      %v727 = vpop.permute.xlu0 %726
      %728 = vrot.lane.b32.xlu0 %v515, 111
      %v729 = vpop.permute.xlu0 %728
      %vm730 = vcmask 908288
      %v731 = vsel %vm730, %v725, %v727
      %v732 = vsel %vm730, %v727, %v729
      %v734 = vsel %vm532, %v723, 0
      %v737 = vand.u32 %v731, %v539
      %v740 = vand.u32 %v732, %v539
      %742 = vmatprep.subr.bf16.mxu0 %v740
      %743 = vmatpush1.bf16.msra.mxu0 %v737
      %744 = vmatprep.subr.bf16.mxu0 0
      %745 = vmatpush1.bf16.msra.mxu0 0
      %746 = vmatprep.subr.bf16.mxu0 0
      %747 = vmatpush1.bf16.msra.mxu0 0
      %748 = vmatprep.subr.bf16.mxu0 0
      %749 = vmatpush1.bf16.msra.mxu0 0
      %750 = vmatprep.subr.bf16.mxu0 0
      %751 = vmatpush1.bf16.msra.mxu0 0
      %752 = vmatprep.subr.bf16.mxu0 0
      %753 = vmatpush1.bf16.msra.mxu0 0
      %754 = vmatprep.subr.bf16.mxu0 0
      %755 = vmatpush1.bf16.msra.mxu0 0
      %756 = vmatprep.subr.bf16.mxu0 0
      %757 = vmatpush1.bf16.msra.mxu0 0
      %758 = vmatprep.subr.bf16.mxu0 0
      %759 = vmatpush1.bf16.msra.mxu0 0
      %760 = vmatprep.subr.bf16.mxu0 0
      %761 = vmatpush1.bf16.msra.mxu0 0
      %762 = vmatprep.subr.bf16.mxu0 0
      %763 = vmatpush1.bf16.msra.mxu0 0
      %764 = vmatprep.subr.bf16.mxu0 0
      %765 = vmatpush1.bf16.msra.mxu0 0
      %766 = vmatprep.subr.bf16.mxu0 0
      %767 = vmatpush1.bf16.msra.mxu0 0
      %768 = vmatprep.subr.bf16.mxu0 0
      %769 = vmatpush1.bf16.msra.mxu0 0
      %770 = vmatprep.subr.bf16.mxu0 0
      %771 = vmatpush1.bf16.msra.mxu0 0
      %772 = vmatprep.subr.bf16.mxu0 0
      %773 = vmatpush1.bf16.msra.mxu0 0
      %774 = vmatprep.mubr.bf16.mxu0 0
      %775 = vmatmul.mubr.bf16.gmra.mrb[0].mxu0 %v734
      %v776 = vpop.f32.mrb[0].mxu0
      %v777 = vadd.f32 0.0, %v776
      %v778 = vpop.f32.mrb[0].mxu0
      %v779 = vadd.f32 0.0, %v778
      %v780 = vpop.f32.mrb[0].mxu0
      %v781 = vadd.f32 0.0, %v780
      %v782 = vpop.f32.mrb[0].mxu0
      %v783 = vadd.f32 0.0, %v782
      %784 = vdwg.mxu0
      %v787 = vunpack.c.l.b16 %v477
      %v788 = vunpack.c.l.b16 %v478
      %v789 = vpack.c.b16 %v788, %v787
      %790 = vrot.lane.b32.xlu0 %v513, 127
      %v791 = vpop.permute.xlu0 %790
      %792 = vrot.lane.b32.xlu0 %v509, 127
      %v793 = vpop.permute.xlu0 %792
      %794 = vrot.lane.b32.xlu0 %v515, 127
      %v795 = vpop.permute.xlu0 %794
      %vm796 = vcmask 1039360
      %v797 = vsel %vm796, %v791, %v793
      %v798 = vsel %vm796, %v793, %v795
      %v800 = vsel %vm532, %v789, 0
      %v803 = vand.u32 %v797, %v539
      %v806 = vand.u32 %v798, %v539
      %808 = vmatprep.subr.bf16.mxu0 %v806
      %809 = vmatpush1.bf16.msra.mxu0 %v803
      %810 = vmatprep.subr.bf16.mxu0 0
      %811 = vmatpush1.bf16.msra.mxu0 0
      %812 = vmatprep.subr.bf16.mxu0 0
      %813 = vmatpush1.bf16.msra.mxu0 0
      %814 = vmatprep.subr.bf16.mxu0 0
      %815 = vmatpush1.bf16.msra.mxu0 0
      %816 = vmatprep.subr.bf16.mxu0 0
      %817 = vmatpush1.bf16.msra.mxu0 0
      %818 = vmatprep.subr.bf16.mxu0 0
      %819 = vmatpush1.bf16.msra.mxu0 0
      %820 = vmatprep.subr.bf16.mxu0 0
      %821 = vmatpush1.bf16.msra.mxu0 0
      %822 = vmatprep.subr.bf16.mxu0 0
      %823 = vmatpush1.bf16.msra.mxu0 0
      %824 = vmatprep.subr.bf16.mxu0 0
      %825 = vmatpush1.bf16.msra.mxu0 0
      %826 = vmatprep.subr.bf16.mxu0 0
      %827 = vmatpush1.bf16.msra.mxu0 0
      %828 = vmatprep.subr.bf16.mxu0 0
      %829 = vmatpush1.bf16.msra.mxu0 0
      %830 = vmatprep.subr.bf16.mxu0 0
      %831 = vmatpush1.bf16.msra.mxu0 0
      %832 = vmatprep.subr.bf16.mxu0 0
      %833 = vmatpush1.bf16.msra.mxu0 0
      %834 = vmatprep.subr.bf16.mxu0 0
      %835 = vmatpush1.bf16.msra.mxu0 0
      %836 = vmatprep.subr.bf16.mxu0 0
      %837 = vmatpush1.bf16.msra.mxu0 0
      %838 = vmatprep.subr.bf16.mxu0 0
      %839 = vmatpush1.bf16.msra.mxu0 0
      %840 = vmatprep.mubr.bf16.mxu0 0
      %841 = vmatmul.mubr.bf16.gmra.mrb[0].mxu0 %v800
      %v842 = vpop.f32.mrb[0].mxu0
      %v843 = vadd.f32 %v777, %v842
      %v844 = vpop.f32.mrb[0].mxu0
      %v845 = vadd.f32 %v779, %v844
      %v846 = vpop.f32.mrb[0].mxu0
      %v847 = vadd.f32 %v781, %v846
      %v848 = vpop.f32.mrb[0].mxu0
      %v849 = vadd.f32 %v783, %v848
      %850 = vdwg.mxu0
      %v853 = vunpack.c.l.b16 %v489
      %v854 = vunpack.c.l.b16 %v490
      %v855 = vpack.c.b16 %v854, %v853
      %856 = vrot.lane.b32.xlu0 %v513, 95
      %v857 = vpop.permute.xlu0 %856
      %858 = vrot.lane.b32.xlu0 %v509, 95
      %v859 = vpop.permute.xlu0 %858
      %860 = vrot.lane.b32.xlu0 %v515, 95
      %v861 = vpop.permute.xlu0 %860
      %vm862 = vcmask 777216
      %v863 = vsel %vm862, %v857, %v859
      %v864 = vsel %vm862, %v859, %v861
      %v866 = vsel %vm532, %v855, 0
      %v869 = vand.u32 %v863, %v539
      %v872 = vand.u32 %v864, %v539
      %874 = vmatprep.subr.bf16.mxu0 %v872
      %875 = vmatpush1.bf16.msra.mxu0 %v869
      %876 = vmatprep.subr.bf16.mxu0 0
      %877 = vmatpush1.bf16.msra.mxu0 0
      %878 = vmatprep.subr.bf16.mxu0 0
      %879 = vmatpush1.bf16.msra.mxu0 0
      %880 = vmatprep.subr.bf16.mxu0 0
      %881 = vmatpush1.bf16.msra.mxu0 0
      %882 = vmatprep.subr.bf16.mxu0 0
      %883 = vmatpush1.bf16.msra.mxu0 0
      %884 = vmatprep.subr.bf16.mxu0 0
      %885 = vmatpush1.bf16.msra.mxu0 0
      %886 = vmatprep.subr.bf16.mxu0 0
      %887 = vmatpush1.bf16.msra.mxu0 0
      %888 = vmatprep.subr.bf16.mxu0 0
      %889 = vmatpush1.bf16.msra.mxu0 0
      %890 = vmatprep.subr.bf16.mxu0 0
      %891 = vmatpush1.bf16.msra.mxu0 0
      %892 = vmatprep.subr.bf16.mxu0 0
      %893 = vmatpush1.bf16.msra.mxu0 0
      %894 = vmatprep.subr.bf16.mxu0 0
      %895 = vmatpush1.bf16.msra.mxu0 0
      %896 = vmatprep.subr.bf16.mxu0 0
      %897 = vmatpush1.bf16.msra.mxu0 0
      %898 = vmatprep.subr.bf16.mxu0 0
      %899 = vmatpush1.bf16.msra.mxu0 0
      %900 = vmatprep.subr.bf16.mxu0 0
      %901 = vmatpush1.bf16.msra.mxu0 0
      %902 = vmatprep.subr.bf16.mxu0 0
      %903 = vmatpush1.bf16.msra.mxu0 0
      %904 = vmatprep.subr.bf16.mxu0 0
      %905 = vmatpush1.bf16.msra.mxu0 0
      %906 = vmatprep.mubr.bf16.mxu0 0
      %907 = vmatmul.mubr.bf16.gmra.mrb[0].mxu0 %v866
      %v908 = vpop.f32.mrb[0].mxu0
      %v909 = vadd.f32 0.0, %v908
      %v910 = vpop.f32.mrb[0].mxu0
      %v911 = vadd.f32 0.0, %v910
      %v912 = vpop.f32.mrb[0].mxu0
      %v913 = vadd.f32 0.0, %v912
      %v914 = vpop.f32.mrb[0].mxu0
      %v915 = vadd.f32 0.0, %v914
      %916 = vdwg.mxu0
      %v917 = vadd.f32 %v843, %v909
      %v918 = vadd.f32 %v845, %v911
      %v919 = vadd.f32 %v847, %v913
      %v920 = vadd.f32 %v849, %v915
      %v921 = vadd.f32 %v715, %v917
      %v922 = vadd.f32 %v716, %v918
      %v923 = vadd.f32 %v717, %v919
      %v924 = vadd.f32 %v718, %v920
      %v927 = vunpack.c.l.b16 %v485
      %v928 = vunpack.c.l.b16 %v486
      %v929 = vpack.c.b16 %v928, %v927
      %930 = vrot.lane.b32.xlu0 %v513, 110
      %v931 = vpop.permute.xlu0 %930
      %932 = vrot.lane.b32.xlu0 %v509, 110
      %v933 = vpop.permute.xlu0 %932
      %934 = vrot.lane.b32.xlu0 %v515, 110
      %v935 = vpop.permute.xlu0 %934
      %vm936 = vcmask 900096
      %v937 = vsel %vm936, %v931, %v933
      %v938 = vsel %vm936, %v933, %v935
      %v940 = vsel %vm532, %v929, 0
      %v943 = vand.u32 %v937, %v539
      %v946 = vand.u32 %v938, %v539
      %948 = vmatprep.subr.bf16.mxu0 %v946
      %949 = vmatpush1.bf16.msra.mxu0 %v943
      %950 = vmatprep.subr.bf16.mxu0 0
      %951 = vmatpush1.bf16.msra.mxu0 0
      %952 = vmatprep.subr.bf16.mxu0 0
      %953 = vmatpush1.bf16.msra.mxu0 0
      %954 = vmatprep.subr.bf16.mxu0 0
      %955 = vmatpush1.bf16.msra.mxu0 0
      %956 = vmatprep.subr.bf16.mxu0 0
      %957 = vmatpush1.bf16.msra.mxu0 0
      %958 = vmatprep.subr.bf16.mxu0 0
      %959 = vmatpush1.bf16.msra.mxu0 0
      %960 = vmatprep.subr.bf16.mxu0 0
      %961 = vmatpush1.bf16.msra.mxu0 0
      %962 = vmatprep.subr.bf16.mxu0 0
      %963 = vmatpush1.bf16.msra.mxu0 0
      %964 = vmatprep.subr.bf16.mxu0 0
      %965 = vmatpush1.bf16.msra.mxu0 0
      %966 = vmatprep.subr.bf16.mxu0 0
      %967 = vmatpush1.bf16.msra.mxu0 0
      %968 = vmatprep.subr.bf16.mxu0 0
      %969 = vmatpush1.bf16.msra.mxu0 0
      %970 = vmatprep.subr.bf16.mxu0 0
      %971 = vmatpush1.bf16.msra.mxu0 0
      %972 = vmatprep.subr.bf16.mxu0 0
      %973 = vmatpush1.bf16.msra.mxu0 0
      %974 = vmatprep.subr.bf16.mxu0 0
      %975 = vmatpush1.bf16.msra.mxu0 0
      %976 = vmatprep.subr.bf16.mxu0 0
      %977 = vmatpush1.bf16.msra.mxu0 0
      %978 = vmatprep.subr.bf16.mxu0 0
      %979 = vmatpush1.bf16.msra.mxu0 0
      %980 = vmatprep.mubr.bf16.mxu0 0
      %981 = vmatmul.mubr.bf16.gmra.mrb[0].mxu0 %v940
      %v982 = vpop.f32.mrb[0].mxu0
      %v983 = vadd.f32 0.0, %v982
      %v984 = vpop.f32.mrb[0].mxu0
      %v985 = vadd.f32 0.0, %v984
      %v986 = vpop.f32.mrb[0].mxu0
      %v987 = vadd.f32 0.0, %v986
      %v988 = vpop.f32.mrb[0].mxu0
      %v989 = vadd.f32 0.0, %v988
      %990 = vdwg.mxu0
      %v993 = vunpack.c.l.b16 %v479
      %v994 = vunpack.c.l.b16 %v480
      %v995 = vpack.c.b16 %v994, %v993
      %996 = vrot.lane.b32.xlu0 %v513, 126
      %v997 = vpop.permute.xlu0 %996
      %998 = vrot.lane.b32.xlu0 %v509, 126
      %v999 = vpop.permute.xlu0 %998
      %1000 = vrot.lane.b32.xlu0 %v515, 126
      %v1001 = vpop.permute.xlu0 %1000
      %vm1002 = vcmask 1031168
      %v1003 = vsel %vm1002, %v997, %v999
      %v1004 = vsel %vm1002, %v999, %v1001
      %v1006 = vsel %vm532, %v995, 0
      %v1009 = vand.u32 %v1003, %v539
      %v1012 = vand.u32 %v1004, %v539
      %1014 = vmatprep.subr.bf16.mxu0 %v1012
      %1015 = vmatpush1.bf16.msra.mxu0 %v1009
      %1016 = vmatprep.subr.bf16.mxu0 0
      %1017 = vmatpush1.bf16.msra.mxu0 0
      %1018 = vmatprep.subr.bf16.mxu0 0
      %1019 = vmatpush1.bf16.msra.mxu0 0
      %1020 = vmatprep.subr.bf16.mxu0 0
      %1021 = vmatpush1.bf16.msra.mxu0 0
      %1022 = vmatprep.subr.bf16.mxu0 0
      %1023 = vmatpush1.bf16.msra.mxu0 0
      %1024 = vmatprep.subr.bf16.mxu0 0
      %1025 = vmatpush1.bf16.msra.mxu0 0
      %1026 = vmatprep.subr.bf16.mxu0 0
      %1027 = vmatpush1.bf16.msra.mxu0 0
      %1028 = vmatprep.subr.bf16.mxu0 0
      %1029 = vmatpush1.bf16.msra.mxu0 0
      %1030 = vmatprep.subr.bf16.mxu0 0
      %1031 = vmatpush1.bf16.msra.mxu0 0
      %1032 = vmatprep.subr.bf16.mxu0 0
      %1033 = vmatpush1.bf16.msra.mxu0 0
      %1034 = vmatprep.subr.bf16.mxu0 0
      %1035 = vmatpush1.bf16.msra.mxu0 0
      %1036 = vmatprep.subr.bf16.mxu0 0
      %1037 = vmatpush1.bf16.msra.mxu0 0
      %1038 = vmatprep.subr.bf16.mxu0 0
      %1039 = vmatpush1.bf16.msra.mxu0 0
      %1040 = vmatprep.subr.bf16.mxu0 0
      %1041 = vmatpush1.bf16.msra.mxu0 0
      %1042 = vmatprep.subr.bf16.mxu0 0
      %1043 = vmatpush1.bf16.msra.mxu0 0
      %1044 = vmatprep.subr.bf16.mxu0 0
      %1045 = vmatpush1.bf16.msra.mxu0 0
      %1046 = vmatprep.mubr.bf16.mxu0 0
      %1047 = vmatmul.mubr.bf16.gmra.mrb[0].mxu0 %v1006
      %v1048 = vpop.f32.mrb[0].mxu0
      %v1049 = vadd.f32 %v983, %v1048
      %v1050 = vpop.f32.mrb[0].mxu0
      %v1051 = vadd.f32 %v985, %v1050
      %v1052 = vpop.f32.mrb[0].mxu0
      %v1053 = vadd.f32 %v987, %v1052
      %v1054 = vpop.f32.mrb[0].mxu0
      %v1055 = vadd.f32 %v989, %v1054
      %1056 = vdwg.mxu0
      %v1059 = vunpack.c.l.b16 %v491
      %v1060 = vunpack.c.l.b16 %v492
      %v1061 = vpack.c.b16 %v1060, %v1059
      %1062 = vrot.lane.b32.xlu0 %v513, 94
      %v1063 = vpop.permute.xlu0 %1062
      %1064 = vrot.lane.b32.xlu0 %v509, 94
      %v1065 = vpop.permute.xlu0 %1064
      %1066 = vrot.lane.b32.xlu0 %v515, 94
      %v1067 = vpop.permute.xlu0 %1066
      %vm1068 = vcmask 769024
      %v1069 = vsel %vm1068, %v1063, %v1065
      %v1070 = vsel %vm1068, %v1065, %v1067
      %v1072 = vsel %vm532, %v1061, 0
      %v1075 = vand.u32 %v1069, %v539
      %v1078 = vand.u32 %v1070, %v539
      %1080 = vmatprep.subr.bf16.mxu0 %v1078
      %1081 = vmatpush1.bf16.msra.mxu0 %v1075
      %1082 = vmatprep.subr.bf16.mxu0 0
      %1083 = vmatpush1.bf16.msra.mxu0 0
      %1084 = vmatprep.subr.bf16.mxu0 0
      %1085 = vmatpush1.bf16.msra.mxu0 0
      %1086 = vmatprep.subr.bf16.mxu0 0
      %1087 = vmatpush1.bf16.msra.mxu0 0
      %1088 = vmatprep.subr.bf16.mxu0 0
      %1089 = vmatpush1.bf16.msra.mxu0 0
      %1090 = vmatprep.subr.bf16.mxu0 0
      %1091 = vmatpush1.bf16.msra.mxu0 0
      %1092 = vmatprep.subr.bf16.mxu0 0
      %1093 = vmatpush1.bf16.msra.mxu0 0
      %1094 = vmatprep.subr.bf16.mxu0 0
      %1095 = vmatpush1.bf16.msra.mxu0 0
      %1096 = vmatprep.subr.bf16.mxu0 0
      %1097 = vmatpush1.bf16.msra.mxu0 0
      %1098 = vmatprep.subr.bf16.mxu0 0
      %1099 = vmatpush1.bf16.msra.mxu0 0
      %1100 = vmatprep.subr.bf16.mxu0 0
      %1101 = vmatpush1.bf16.msra.mxu0 0
      %1102 = vmatprep.subr.bf16.mxu0 0
      %1103 = vmatpush1.bf16.msra.mxu0 0
      %1104 = vmatprep.subr.bf16.mxu0 0
      %1105 = vmatpush1.bf16.msra.mxu0 0
      %1106 = vmatprep.subr.bf16.mxu0 0
      %1107 = vmatpush1.bf16.msra.mxu0 0
      %1108 = vmatprep.subr.bf16.mxu0 0
      %1109 = vmatpush1.bf16.msra.mxu0 0
      %1110 = vmatprep.subr.bf16.mxu0 0
      %1111 = vmatpush1.bf16.msra.mxu0 0
      %1112 = vmatprep.mubr.bf16.mxu0 0
      %1113 = vmatmul.mubr.bf16.gmra.mrb[0].mxu0 %v1072
      %v1114 = vpop.f32.mrb[0].mxu0
      %v1115 = vadd.f32 0.0, %v1114
      %v1116 = vpop.f32.mrb[0].mxu0
      %v1117 = vadd.f32 0.0, %v1116
      %v1118 = vpop.f32.mrb[0].mxu0
      %v1119 = vadd.f32 0.0, %v1118
      %v1120 = vpop.f32.mrb[0].mxu0
      %v1121 = vadd.f32 0.0, %v1120
      %1122 = vdwg.mxu0
      %v1123 = vadd.f32 %v1049, %v1115
      %v1124 = vadd.f32 %v1051, %v1117
      %v1125 = vadd.f32 %v1053, %v1119
      %v1126 = vadd.f32 %v1055, %v1121
      %v1127 = vmul.f32 %v1123, %v472
      %v1128 = vmul.f32 %v1124, %v473
      %v1129 = vmul.f32 %v1125, %v472
      %v1130 = vmul.f32 %v1126, %v473
      %v1131 = vadd.f32 %v921, %v1127
      %v1132 = vadd.f32 %v922, %v1128
      %v1133 = vadd.f32 %v923, %v1129
      %v1134 = vadd.f32 %v924, %v1130
      %1136 = vset.pattern.permute.xlu0 0
      %1137 = vperm.xlu0 %1136, %v493
      %v1138 = vpop.permute.xlu0 %1137
      %1141 = vset.pattern.permute.xlu0 0
      %1142 = vperm.xlu0 %1141, %v494
      %v1143 = vpop.permute.xlu0 %1142
      %v1145 = vadd.f32 %v1131, %v1138
      %v1146 = vadd.f32 %v1132, %v1138
      %v1147 = vadd.f32 %v1133, %v1143
      %v1148 = vadd.f32 %v1134, %v1143
      %v1149 = vld [vmem:[%s4] sm:$0xf]
      %v1150 = vld [vmem:[%s4 + $0x4] sm:$0xf]
      %v1151 = vld [vmem:[%s4 + $0x8] sm:$0xf]
      %v1152 = vld [vmem:[%s4 + $0xc] sm:$0xf]
      %v1153 = vld [vmem:[%s4 + $0x10] sm:$0xf]
      %v1154 = vld [vmem:[%s4 + $0x14] sm:$0xf]
      %v1155 = vld [vmem:[%s4 + $0x18] sm:$0xf]
      %v1156 = vld [vmem:[%s4 + $0x1c] sm:$0xf]
      %v1157 = vld [vmem:[%s4 + $0x20] sm:$0xf]
      %v1158 = vld [vmem:[%s4 + $0x24] sm:$0xf]
      %v1159 = vld [vmem:[%s4 + $0x28] sm:$0xf]
      %v1160 = vld [vmem:[%s4 + $0x2c] sm:$0xf]
      %v1161 = vld [vmem:[%s4 + $0x30] sm:$0xf]
      %v1162 = vld [vmem:[%s4 + $0x34] sm:$0xf]
      %v1163 = vld [vmem:[%s4 + $0x38] sm:$0xf]
      %v1164 = vld [vmem:[%s4 + $0x3c] sm:$0xf]
      %v1165 = vld [vmem:[%s4 + $0x40] sm:$0xf]
      %v1166 = vld [vmem:[%s4 + $0x44] sm:$0xf]
      %v1167 = vld [vmem:[%s4 + $0x48] sm:$0xf]
      %v1168 = vld [vmem:[%s4 + $0x4c] sm:$0xf]
      %v1169 = vld [vmem:[%s4 + $0x50] sm:$0xf]
      %v1170 = vld [vmem:[%s4 + $0x54] sm:$0xf]
      %v1171 = vld [vmem:[%s4 + $0x58] sm:$0xf]
      %v1172 = vld [vmem:[%s4 + $0x5c] sm:$0xf]
      %v1173 = vld [vmem:[%s4 + $0x60] sm:$0xf]
      %v1174 = vld [vmem:[%s4 + $0x64] sm:$0xf]
      %v1175 = vld [vmem:[%s4 + $0x68] sm:$0xf]
      %v1176 = vld [vmem:[%s4 + $0x6c] sm:$0xf]
      %v1177 = vld [vmem:[%s4 + $0x70] sm:$0xf]
      %v1178 = vld [vmem:[%s4 + $0x74] sm:$0xf]
      %v1179 = vld [vmem:[%s4 + $0x78] sm:$0xf]
      %v1180 = vld [vmem:[%s4 + $0x7c] sm:$0xf]
      %v1181 = vld [vmem:[%s4 + $0x80] sm:$0xf]
      %v1182 = vld [vmem:[%s4 + $0x84] sm:$0xf]
      %v1183 = vld [vmem:[%s4 + $0x88] sm:$0xf]
      %v1184 = vld [vmem:[%s4 + $0x8c] sm:$0xf]
      %v1185 = vld [vmem:[%s4 + $0x90] sm:$0xf]
      %v1186 = vld [vmem:[%s4 + $0x94] sm:$0xf]
      %v1187 = vld [vmem:[%s4 + $0x98] sm:$0xf]
      %v1188 = vld [vmem:[%s4 + $0x9c] sm:$0xf]
      %v1189 = vld [vmem:[%s4 + $0xa0] sm:$0xf]
      %v1190 = vld [vmem:[%s4 + $0xa4] sm:$0xf]
      %v1191 = vld [vmem:[%s4 + $0xa8] sm:$0xf]
      %v1192 = vld [vmem:[%s4 + $0xac] sm:$0xf]
      %v1193 = vld [vmem:[%s4 + $0xb0] sm:$0xf]
      %v1194 = vld [vmem:[%s4 + $0xb4] sm:$0xf]
      %v1195 = vld [vmem:[%s4 + $0xb8] sm:$0xf]
      %v1196 = vld [vmem:[%s4 + $0xbc] sm:$0xf]
      %v1197 = vld [vmem:[%s4 + $0xc0] sm:$0xf]
      %v1198 = vld [vmem:[%s4 + $0xc4] sm:$0xf]
      %v1199 = vld [vmem:[%s4 + $0xc8] sm:$0xf]
      %v1200 = vld [vmem:[%s4 + $0xcc] sm:$0xf]
      %v1201 = vld [vmem:[%s4 + $0xd0] sm:$0xf]
      %v1202 = vld [vmem:[%s4 + $0xd4] sm:$0xf]
      %v1203 = vld [vmem:[%s4 + $0xd8] sm:$0xf]
      %v1204 = vld [vmem:[%s4 + $0xdc] sm:$0xf]
      %v1205 = vld [vmem:[%s4 + $0xe0] sm:$0xf]
      %v1206 = vld [vmem:[%s4 + $0xe4] sm:$0xf]
      %v1207 = vld [vmem:[%s4 + $0xe8] sm:$0xf]
      %v1208 = vld [vmem:[%s4 + $0xec] sm:$0xf]
      %v1209 = vld [vmem:[%s4 + $0xf0] sm:$0xf]
      %v1210 = vld [vmem:[%s4 + $0xf4] sm:$0xf]
      %v1211 = vld [vmem:[%s4 + $0xf8] sm:$0xf]
      %v1212 = vld [vmem:[%s4 + $0xfc] sm:$0xf]
      %v1213 = vld [vmem:[%s4 + $0x100] sm:$0xf]
      %v1214 = vld [vmem:[%s4 + $0x104] sm:$0xf]
      %v1215 = vld [vmem:[%s4 + $0x108] sm:$0xf]
      %v1216 = vld [vmem:[%s4 + $0x10c] sm:$0xf]
      %v1217 = vld [vmem:[%s4 + $0x110] sm:$0xf]
      %v1218 = vld [vmem:[%s4 + $0x114] sm:$0xf]
      %v1219 = vld [vmem:[%s4 + $0x118] sm:$0xf]
      %v1220 = vld [vmem:[%s4 + $0x11c] sm:$0xf]
      %v1221 = vld [vmem:[%s5] sm:$0xff]
      %v1222 = vld [vmem:[%s5 + $0x8] sm:$0xff]
      %v1223 = vld [vmem:[%s5 + $0x10] sm:$0xff]
      %v1224 = vld [vmem:[%s5 + $0x18] sm:$0xff]
      %v1225 = vld [vmem:[%s5 + $0x20] sm:$0xff]
      %v1226 = vld [vmem:[%s5 + $0x28] sm:$0xff]
      %v1227 = vld [vmem:[%s5 + $0x30] sm:$0xff]
      %v1228 = vld [vmem:[%s5 + $0x38] sm:$0xff]
      %v1229 = vpack.c.bf16 %v1147, %v1145
      %v1230 = vpack.c.bf16 %v1148, %v1146
      %1233 = vrot.lane.b32.xlu0 %v1229, 17
      %v1234 = vpop.permute.xlu0 %1233
      %1235 = vrot.lane.b32.xlu0 %v1230, 17
      %v1236 = vpop.permute.xlu0 %1235
      %v1237 = vsel %vm508, %v1234, %v1236
      %v1240 = vsel %vm510, 0, %v1234
      %v1243 = vsel %vm510, %v1236, 0
      %v1252 = vunpack.c.l.b16 %v1173
      %v1253 = vunpack.c.l.b16 %v1174
      %v1254 = vunpack.c.l.b16 %v1175
      %v1255 = vunpack.c.l.b16 %v1176
      %v1256 = vunpack.c.l.b16 %v1177
      %v1257 = vunpack.c.l.b16 %v1178
      %v1258 = vunpack.c.l.b16 %v1179
      %v1259 = vunpack.c.l.b16 %v1180
      %v1260 = vpack.c.b16 %v1253, %v1252
      %v1261 = vpack.c.b16 %v1255, %v1254
      %v1262 = vpack.c.b16 %v1257, %v1256
      %v1263 = vpack.c.b16 %v1259, %v1258
      %1266 = vrot.lane.b32.xlu0 %v1240, 112
      %v1267 = vpop.permute.xlu0 %1266
      %1268 = vrot.lane.b32.xlu0 %v1237, 112
      %v1269 = vpop.permute.xlu0 %1268
      %1270 = vrot.lane.b32.xlu0 %v1243, 112
      %v1271 = vpop.permute.xlu0 %1270
      %v1272 = vsel %vm529, %v1267, %v1269
      %v1273 = vsel %vm529, %v1269, %v1271
      %vm1276 = vcmask 130048
      %v1278 = vsel %vm1276, %v1260, 0
      %v1281 = vsel %vm1276, %v1261, 0
      %v1284 = vsel %vm1276, %v1262, 0
      %v1287 = vsel %vm1276, %v1263, 0
      %1289 = vmatprep.subr.bf16.mxu0 %v1273
      %1290 = vmatpush1.bf16.msra.mxu0 %v1272
      %1291 = vmatprep.subr.bf16.mxu0 0
      %1292 = vmatpush1.bf16.msra.mxu0 0
      %1293 = vmatprep.subr.bf16.mxu0 0
      %1294 = vmatpush1.bf16.msra.mxu0 0
      %1295 = vmatprep.subr.bf16.mxu0 0
      %1296 = vmatpush1.bf16.msra.mxu0 0
      %1297 = vmatprep.subr.bf16.mxu0 0
      %1298 = vmatpush1.bf16.msra.mxu0 0
      %1299 = vmatprep.subr.bf16.mxu0 0
      %1300 = vmatpush1.bf16.msra.mxu0 0
      %1301 = vmatprep.subr.bf16.mxu0 0
      %1302 = vmatpush1.bf16.msra.mxu0 0
      %1303 = vmatprep.subr.bf16.mxu0 0
      %1304 = vmatpush1.bf16.msra.mxu0 0
      %1305 = vmatprep.subr.bf16.mxu0 0
      %1306 = vmatpush1.bf16.msra.mxu0 0
      %1307 = vmatprep.subr.bf16.mxu0 0
      %1308 = vmatpush1.bf16.msra.mxu0 0
      %1309 = vmatprep.subr.bf16.mxu0 0
      %1310 = vmatpush1.bf16.msra.mxu0 0
      %1311 = vmatprep.subr.bf16.mxu0 0
      %1312 = vmatpush1.bf16.msra.mxu0 0
      %1313 = vmatprep.subr.bf16.mxu0 0
      %1314 = vmatpush1.bf16.msra.mxu0 0
      %1315 = vmatprep.subr.bf16.mxu0 0
      %1316 = vmatpush1.bf16.msra.mxu0 0
      %1317 = vmatprep.subr.bf16.mxu0 0
      %1318 = vmatpush1.bf16.msra.mxu0 0
      %1319 = vmatprep.subr.bf16.mxu0 0
      %1320 = vmatpush1.bf16.msra.mxu0 0
      %1321 = vmatprep.mubr.bf16.mxu0 0
      %1322 = vmatmul.mubr.bf16.gmra.mrb[0].mxu0 %v1278
      %v1323 = vpop.f32.mrb[0].mxu0
      %v1324 = vadd.f32 0.0, %v1323
      %v1325 = vpop.f32.mrb[0].mxu0
      %v1326 = vadd.f32 0.0, %v1325
      %v1327 = vpop.f32.mrb[0].mxu0
      %v1328 = vadd.f32 0.0, %v1327
      %v1329 = vpop.f32.mrb[0].mxu0
      %v1330 = vadd.f32 0.0, %v1329
      %1331 = vmatprep.mubr.bf16.mxu0 0
      %1332 = vmatmul.mubr.bf16.gmra.mrb[0].mxu0 %v1281
      %v1333 = vpop.f32.mrb[0].mxu0
      %v1334 = vadd.f32 0.0, %v1333
      %v1335 = vpop.f32.mrb[0].mxu0
      %v1336 = vadd.f32 0.0, %v1335
      %v1337 = vpop.f32.mrb[0].mxu0
      %v1338 = vadd.f32 0.0, %v1337
      %v1339 = vpop.f32.mrb[0].mxu0
      %v1340 = vadd.f32 0.0, %v1339
      %1341 = vmatprep.mubr.bf16.mxu0 0
      %1342 = vmatmul.mubr.bf16.gmra.mrb[0].mxu0 %v1284
      %v1343 = vpop.f32.mrb[0].mxu0
      %v1344 = vadd.f32 0.0, %v1343
      %v1345 = vpop.f32.mrb[0].mxu0
      %v1346 = vadd.f32 0.0, %v1345
      %v1347 = vpop.f32.mrb[0].mxu0
      %v1348 = vadd.f32 0.0, %v1347
      %v1349 = vpop.f32.mrb[0].mxu0
      %v1350 = vadd.f32 0.0, %v1349
      %1351 = vmatprep.mubr.bf16.mxu0 0
      %1352 = vmatmul.mubr.bf16.gmra.mrb[0].mxu0 %v1287
      %v1353 = vpop.f32.mrb[0].mxu0
      %v1354 = vadd.f32 0.0, %v1353
      %v1355 = vpop.f32.mrb[0].mxu0
      %v1356 = vadd.f32 0.0, %v1355
      %v1357 = vpop.f32.mrb[0].mxu0
      %v1358 = vadd.f32 0.0, %v1357
      %v1359 = vpop.f32.mrb[0].mxu0
      %v1360 = vadd.f32 0.0, %v1359
      %1361 = vdwg.mxu0
      %v1370 = vunpack.c.l.b16 %v1149
      %v1371 = vunpack.c.l.b16 %v1150
      %v1372 = vunpack.c.l.b16 %v1151
      %v1373 = vunpack.c.l.b16 %v1152
      %v1374 = vunpack.c.l.b16 %v1153
      %v1375 = vunpack.c.l.b16 %v1154
      %v1376 = vunpack.c.l.b16 %v1155
      %v1377 = vunpack.c.l.b16 %v1156
      %v1378 = vpack.c.b16 %v1371, %v1370
      %v1379 = vpack.c.b16 %v1373, %v1372
      %v1380 = vpack.c.b16 %v1375, %v1374
      %v1381 = vpack.c.b16 %v1377, %v1376
      %v1383 = vsel %vm1276, %v1378, 0
      %v1386 = vsel %vm1276, %v1379, 0
      %v1389 = vsel %vm1276, %v1380, 0
      %v1392 = vsel %vm1276, %v1381, 0
      %1394 = vmatprep.subr.bf16.mxu0 %v1237
      %1395 = vmatpush1.bf16.msra.mxu0 %v1240
      %1396 = vmatprep.subr.bf16.mxu0 0
      %1397 = vmatpush1.bf16.msra.mxu0 0
      %1398 = vmatprep.subr.bf16.mxu0 0
      %1399 = vmatpush1.bf16.msra.mxu0 0
      %1400 = vmatprep.subr.bf16.mxu0 0
      %1401 = vmatpush1.bf16.msra.mxu0 0
      %1402 = vmatprep.subr.bf16.mxu0 0
      %1403 = vmatpush1.bf16.msra.mxu0 0
      %1404 = vmatprep.subr.bf16.mxu0 0
      %1405 = vmatpush1.bf16.msra.mxu0 0
      %1406 = vmatprep.subr.bf16.mxu0 0
      %1407 = vmatpush1.bf16.msra.mxu0 0
      %1408 = vmatprep.subr.bf16.mxu0 0
      %1409 = vmatpush1.bf16.msra.mxu0 0
      %1410 = vmatprep.subr.bf16.mxu0 0
      %1411 = vmatpush1.bf16.msra.mxu0 0
      %1412 = vmatprep.subr.bf16.mxu0 0
      %1413 = vmatpush1.bf16.msra.mxu0 0
      %1414 = vmatprep.subr.bf16.mxu0 0
      %1415 = vmatpush1.bf16.msra.mxu0 0
      %1416 = vmatprep.subr.bf16.mxu0 0
      %1417 = vmatpush1.bf16.msra.mxu0 0
      %1418 = vmatprep.subr.bf16.mxu0 0
      %1419 = vmatpush1.bf16.msra.mxu0 0
      %1420 = vmatprep.subr.bf16.mxu0 0
      %1421 = vmatpush1.bf16.msra.mxu0 0
      %1422 = vmatprep.subr.bf16.mxu0 0
      %1423 = vmatpush1.bf16.msra.mxu0 0
      %1424 = vmatprep.subr.bf16.mxu0 0
      %1425 = vmatpush1.bf16.msra.mxu0 0
      %1426 = vmatprep.mubr.bf16.mxu0 0
      %1427 = vmatmul.mubr.bf16.gmra.mrb[0].mxu0 %v1383
      %v1428 = vpop.f32.mrb[0].mxu0
      %v1429 = vadd.f32 %v1324, %v1428
      %v1430 = vpop.f32.mrb[0].mxu0
      %v1431 = vadd.f32 %v1326, %v1430
      %v1432 = vpop.f32.mrb[0].mxu0
      %v1433 = vadd.f32 %v1328, %v1432
      %v1434 = vpop.f32.mrb[0].mxu0
      %v1435 = vadd.f32 %v1330, %v1434
      %1436 = vmatprep.mubr.bf16.mxu0 0
      %1437 = vmatmul.mubr.bf16.gmra.mrb[0].mxu0 %v1386
      %v1438 = vpop.f32.mrb[0].mxu0
      %v1439 = vadd.f32 %v1334, %v1438
      %v1440 = vpop.f32.mrb[0].mxu0
      %v1441 = vadd.f32 %v1336, %v1440
      %v1442 = vpop.f32.mrb[0].mxu0
      %v1443 = vadd.f32 %v1338, %v1442
      %v1444 = vpop.f32.mrb[0].mxu0
      %v1445 = vadd.f32 %v1340, %v1444
      %1446 = vmatprep.mubr.bf16.mxu0 0
      %1447 = vmatmul.mubr.bf16.gmra.mrb[0].mxu0 %v1389
      %v1448 = vpop.f32.mrb[0].mxu0
      %v1449 = vadd.f32 %v1344, %v1448
      %v1450 = vpop.f32.mrb[0].mxu0
      %v1451 = vadd.f32 %v1346, %v1450
      %v1452 = vpop.f32.mrb[0].mxu0
      %v1453 = vadd.f32 %v1348, %v1452
      %v1454 = vpop.f32.mrb[0].mxu0
      %v1455 = vadd.f32 %v1350, %v1454
      %1456 = vmatprep.mubr.bf16.mxu0 0
      %1457 = vmatmul.mubr.bf16.gmra.mrb[0].mxu0 %v1392
      %v1458 = vpop.f32.mrb[0].mxu0
      %v1459 = vadd.f32 %v1354, %v1458
      %v1460 = vpop.f32.mrb[0].mxu0
      %v1461 = vadd.f32 %v1356, %v1460
      %v1462 = vpop.f32.mrb[0].mxu0
      %v1463 = vadd.f32 %v1358, %v1462
      %v1464 = vpop.f32.mrb[0].mxu0
      %v1465 = vadd.f32 %v1360, %v1464
      %1466 = vdwg.mxu0
      %v1475 = vunpack.c.l.b16 %v1197
      %v1476 = vunpack.c.l.b16 %v1198
      %v1477 = vunpack.c.l.b16 %v1199
      %v1478 = vunpack.c.l.b16 %v1200
      %v1479 = vunpack.c.l.b16 %v1201
      %v1480 = vunpack.c.l.b16 %v1202
      %v1481 = vunpack.c.l.b16 %v1203
      %v1482 = vunpack.c.l.b16 %v1204
      %v1483 = vpack.c.b16 %v1476, %v1475
      %v1484 = vpack.c.b16 %v1478, %v1477
      %v1485 = vpack.c.b16 %v1480, %v1479
      %v1486 = vpack.c.b16 %v1482, %v1481
      %1487 = vrot.lane.b32.xlu0 %v1240, 96
      %v1488 = vpop.permute.xlu0 %1487
      %1489 = vrot.lane.b32.xlu0 %v1237, 96
      %v1490 = vpop.permute.xlu0 %1489
      %1491 = vrot.lane.b32.xlu0 %v1243, 96
      %v1492 = vpop.permute.xlu0 %1491
      %v1493 = vsel %vm656, %v1488, %v1490
      %v1494 = vsel %vm656, %v1490, %v1492
      %v1498 = vsel %vm1276, %v1483, 0
      %v1501 = vsel %vm1276, %v1484, 0
      %v1504 = vsel %vm1276, %v1485, 0
      %v1507 = vsel %vm1276, %v1486, 0
      %1509 = vmatprep.subr.bf16.mxu0 %v1494
      %1510 = vmatpush1.bf16.msra.mxu0 %v1493
      %1511 = vmatprep.subr.bf16.mxu0 0
      %1512 = vmatpush1.bf16.msra.mxu0 0
      %1513 = vmatprep.subr.bf16.mxu0 0
      %1514 = vmatpush1.bf16.msra.mxu0 0
      %1515 = vmatprep.subr.bf16.mxu0 0
      %1516 = vmatpush1.bf16.msra.mxu0 0
      %1517 = vmatprep.subr.bf16.mxu0 0
      %1518 = vmatpush1.bf16.msra.mxu0 0
      %1519 = vmatprep.subr.bf16.mxu0 0
      %1520 = vmatpush1.bf16.msra.mxu0 0
      %1521 = vmatprep.subr.bf16.mxu0 0
      %1522 = vmatpush1.bf16.msra.mxu0 0
      %1523 = vmatprep.subr.bf16.mxu0 0
      %1524 = vmatpush1.bf16.msra.mxu0 0
      %1525 = vmatprep.subr.bf16.mxu0 0
      %1526 = vmatpush1.bf16.msra.mxu0 0
      %1527 = vmatprep.subr.bf16.mxu0 0
      %1528 = vmatpush1.bf16.msra.mxu0 0
      %1529 = vmatprep.subr.bf16.mxu0 0
      %1530 = vmatpush1.bf16.msra.mxu0 0
      %1531 = vmatprep.subr.bf16.mxu0 0
      %1532 = vmatpush1.bf16.msra.mxu0 0
      %1533 = vmatprep.subr.bf16.mxu0 0
      %1534 = vmatpush1.bf16.msra.mxu0 0
      %1535 = vmatprep.subr.bf16.mxu0 0
      %1536 = vmatpush1.bf16.msra.mxu0 0
      %1537 = vmatprep.subr.bf16.mxu0 0
      %1538 = vmatpush1.bf16.msra.mxu0 0
      %1539 = vmatprep.subr.bf16.mxu0 0
      %1540 = vmatpush1.bf16.msra.mxu0 0
      %1541 = vmatprep.mubr.bf16.mxu0 0
      %1542 = vmatmul.mubr.bf16.gmra.mrb[0].mxu0 %v1498
      %v1543 = vpop.f32.mrb[0].mxu0
      %v1544 = vadd.f32 0.0, %v1543
      %v1545 = vpop.f32.mrb[0].mxu0
      %v1546 = vadd.f32 0.0, %v1545
      %v1547 = vpop.f32.mrb[0].mxu0
      %v1548 = vadd.f32 0.0, %v1547
      %v1549 = vpop.f32.mrb[0].mxu0
      %v1550 = vadd.f32 0.0, %v1549
      %1551 = vmatprep.mubr.bf16.mxu0 0
      %1552 = vmatmul.mubr.bf16.gmra.mrb[0].mxu0 %v1501
      %v1553 = vpop.f32.mrb[0].mxu0
      %v1554 = vadd.f32 0.0, %v1553
      %v1555 = vpop.f32.mrb[0].mxu0
      %v1556 = vadd.f32 0.0, %v1555
      %v1557 = vpop.f32.mrb[0].mxu0
      %v1558 = vadd.f32 0.0, %v1557
      %v1559 = vpop.f32.mrb[0].mxu0
      %v1560 = vadd.f32 0.0, %v1559
      %1561 = vmatprep.mubr.bf16.mxu0 0
      %1562 = vmatmul.mubr.bf16.gmra.mrb[0].mxu0 %v1504
      %v1563 = vpop.f32.mrb[0].mxu0
      %v1564 = vadd.f32 0.0, %v1563
      %v1565 = vpop.f32.mrb[0].mxu0
      %v1566 = vadd.f32 0.0, %v1565
      %v1567 = vpop.f32.mrb[0].mxu0
      %v1568 = vadd.f32 0.0, %v1567
      %v1569 = vpop.f32.mrb[0].mxu0
      %v1570 = vadd.f32 0.0, %v1569
      %1571 = vmatprep.mubr.bf16.mxu0 0
      %1572 = vmatmul.mubr.bf16.gmra.mrb[0].mxu0 %v1507
      %v1573 = vpop.f32.mrb[0].mxu0
      %v1574 = vadd.f32 0.0, %v1573
      %v1575 = vpop.f32.mrb[0].mxu0
      %v1576 = vadd.f32 0.0, %v1575
      %v1577 = vpop.f32.mrb[0].mxu0
      %v1578 = vadd.f32 0.0, %v1577
      %v1579 = vpop.f32.mrb[0].mxu0
      %v1580 = vadd.f32 0.0, %v1579
      %1581 = vdwg.mxu0
      %v1582 = vadd.f32 %v1429, %v1544
      %v1583 = vadd.f32 %v1431, %v1546
      %v1584 = vadd.f32 %v1433, %v1548
      %v1585 = vadd.f32 %v1435, %v1550
      %v1586 = vadd.f32 %v1439, %v1554
      %v1587 = vadd.f32 %v1441, %v1556
      %v1588 = vadd.f32 %v1443, %v1558
      %v1589 = vadd.f32 %v1445, %v1560
      %v1590 = vadd.f32 %v1449, %v1564
      %v1591 = vadd.f32 %v1451, %v1566
      %v1592 = vadd.f32 %v1453, %v1568
      %v1593 = vadd.f32 %v1455, %v1570
      %v1594 = vadd.f32 %v1459, %v1574
      %v1595 = vadd.f32 %v1461, %v1576
      %v1596 = vadd.f32 %v1463, %v1578
      %v1597 = vadd.f32 %v1465, %v1580
      %v1598 = vmul.f32 %v1582, %v466
      %v1599 = vmul.f32 %v1583, %v467
      %v1600 = vmul.f32 %v1584, %v466
      %v1601 = vmul.f32 %v1585, %v467
      %v1602 = vmul.f32 %v1586, %v466
      %v1603 = vmul.f32 %v1587, %v467
      %v1604 = vmul.f32 %v1588, %v466
      %v1605 = vmul.f32 %v1589, %v467
      %v1606 = vmul.f32 %v1590, %v466
      %v1607 = vmul.f32 %v1591, %v467
      %v1608 = vmul.f32 %v1592, %v466
      %v1609 = vmul.f32 %v1593, %v467
      %v1610 = vmul.f32 %v1594, %v466
      %v1611 = vmul.f32 %v1595, %v467
      %v1612 = vmul.f32 %v1596, %v466
      %v1613 = vmul.f32 %v1597, %v467
      %v1622 = vunpack.c.l.b16 %v1181
      %v1623 = vunpack.c.l.b16 %v1182
      %v1624 = vunpack.c.l.b16 %v1183
      %v1625 = vunpack.c.l.b16 %v1184
      %v1626 = vunpack.c.l.b16 %v1185
      %v1627 = vunpack.c.l.b16 %v1186
      %v1628 = vunpack.c.l.b16 %v1187
      %v1629 = vunpack.c.l.b16 %v1188
      %v1630 = vpack.c.b16 %v1623, %v1622
      %v1631 = vpack.c.b16 %v1625, %v1624
      %v1632 = vpack.c.b16 %v1627, %v1626
      %v1633 = vpack.c.b16 %v1629, %v1628
      %1634 = vrot.lane.b32.xlu0 %v1240, 111
      %v1635 = vpop.permute.xlu0 %1634
      %1636 = vrot.lane.b32.xlu0 %v1237, 111
      %v1637 = vpop.permute.xlu0 %1636
      %1638 = vrot.lane.b32.xlu0 %v1243, 111
      %v1639 = vpop.permute.xlu0 %1638
      %v1640 = vsel %vm730, %v1635, %v1637
      %v1641 = vsel %vm730, %v1637, %v1639
      %v1645 = vsel %vm1276, %v1630, 0
      %v1648 = vsel %vm1276, %v1631, 0
      %v1651 = vsel %vm1276, %v1632, 0
      %v1654 = vsel %vm1276, %v1633, 0
      %1656 = vmatprep.subr.bf16.mxu0 %v1641
      %1657 = vmatpush1.bf16.msra.mxu0 %v1640
      %1658 = vmatprep.subr.bf16.mxu0 0
      %1659 = vmatpush1.bf16.msra.mxu0 0
      %1660 = vmatprep.subr.bf16.mxu0 0
      %1661 = vmatpush1.bf16.msra.mxu0 0
      %1662 = vmatprep.subr.bf16.mxu0 0
      %1663 = vmatpush1.bf16.msra.mxu0 0
      %1664 = vmatprep.subr.bf16.mxu0 0
      %1665 = vmatpush1.bf16.msra.mxu0 0
      %1666 = vmatprep.subr.bf16.mxu0 0
      %1667 = vmatpush1.bf16.msra.mxu0 0
      %1668 = vmatprep.subr.bf16.mxu0 0
      %1669 = vmatpush1.bf16.msra.mxu0 0
      %1670 = vmatprep.subr.bf16.mxu0 0
      %1671 = vmatpush1.bf16.msra.mxu0 0
      %1672 = vmatprep.subr.bf16.mxu0 0
      %1673 = vmatpush1.bf16.msra.mxu0 0
      %1674 = vmatprep.subr.bf16.mxu0 0
      %1675 = vmatpush1.bf16.msra.mxu0 0
      %1676 = vmatprep.subr.bf16.mxu0 0
      %1677 = vmatpush1.bf16.msra.mxu0 0
      %1678 = vmatprep.subr.bf16.mxu0 0
      %1679 = vmatpush1.bf16.msra.mxu0 0
      %1680 = vmatprep.subr.bf16.mxu0 0
      %1681 = vmatpush1.bf16.msra.mxu0 0
      %1682 = vmatprep.subr.bf16.mxu0 0
      %1683 = vmatpush1.bf16.msra.mxu0 0
      %1684 = vmatprep.subr.bf16.mxu0 0
      %1685 = vmatpush1.bf16.msra.mxu0 0
      %1686 = vmatprep.subr.bf16.mxu0 0
      %1687 = vmatpush1.bf16.msra.mxu0 0
      %1688 = vmatprep.mubr.bf16.mxu0 0
      %1689 = vmatmul.mubr.bf16.gmra.mrb[0].mxu0 %v1645
      %v1690 = vpop.f32.mrb[0].mxu0
      %v1691 = vadd.f32 0.0, %v1690
      %v1692 = vpop.f32.mrb[0].mxu0
      %v1693 = vadd.f32 0.0, %v1692
      %v1694 = vpop.f32.mrb[0].mxu0
      %v1695 = vadd.f32 0.0, %v1694
      %v1696 = vpop.f32.mrb[0].mxu0
      %v1697 = vadd.f32 0.0, %v1696
      %1698 = vmatprep.mubr.bf16.mxu0 0
      %1699 = vmatmul.mubr.bf16.gmra.mrb[0].mxu0 %v1648
      %v1700 = vpop.f32.mrb[0].mxu0
      %v1701 = vadd.f32 0.0, %v1700
      %v1702 = vpop.f32.mrb[0].mxu0
      %v1703 = vadd.f32 0.0, %v1702
      %v1704 = vpop.f32.mrb[0].mxu0
      %v1705 = vadd.f32 0.0, %v1704
      %v1706 = vpop.f32.mrb[0].mxu0
      %v1707 = vadd.f32 0.0, %v1706
      %1708 = vmatprep.mubr.bf16.mxu0 0
      %1709 = vmatmul.mubr.bf16.gmra.mrb[0].mxu0 %v1651
      %v1710 = vpop.f32.mrb[0].mxu0
      %v1711 = vadd.f32 0.0, %v1710
      %v1712 = vpop.f32.mrb[0].mxu0
      %v1713 = vadd.f32 0.0, %v1712
      %v1714 = vpop.f32.mrb[0].mxu0
      %v1715 = vadd.f32 0.0, %v1714
      %v1716 = vpop.f32.mrb[0].mxu0
      %v1717 = vadd.f32 0.0, %v1716
      %1718 = vmatprep.mubr.bf16.mxu0 0
      %1719 = vmatmul.mubr.bf16.gmra.mrb[0].mxu0 %v1654
      %v1720 = vpop.f32.mrb[0].mxu0
      %v1721 = vadd.f32 0.0, %v1720
      %v1722 = vpop.f32.mrb[0].mxu0
      %v1723 = vadd.f32 0.0, %v1722
      %v1724 = vpop.f32.mrb[0].mxu0
      %v1725 = vadd.f32 0.0, %v1724
      %v1726 = vpop.f32.mrb[0].mxu0
      %v1727 = vadd.f32 0.0, %v1726
      %1728 = vdwg.mxu0
      %v1737 = vunpack.c.l.b16 %v1157
      %v1738 = vunpack.c.l.b16 %v1158
      %v1739 = vunpack.c.l.b16 %v1159
      %v1740 = vunpack.c.l.b16 %v1160
      %v1741 = vunpack.c.l.b16 %v1161
      %v1742 = vunpack.c.l.b16 %v1162
      %v1743 = vunpack.c.l.b16 %v1163
      %v1744 = vunpack.c.l.b16 %v1164
      %v1745 = vpack.c.b16 %v1738, %v1737
      %v1746 = vpack.c.b16 %v1740, %v1739
      %v1747 = vpack.c.b16 %v1742, %v1741
      %v1748 = vpack.c.b16 %v1744, %v1743
      %1749 = vrot.lane.b32.xlu0 %v1240, 127
      %v1750 = vpop.permute.xlu0 %1749
      %1751 = vrot.lane.b32.xlu0 %v1237, 127
      %v1752 = vpop.permute.xlu0 %1751
      %1753 = vrot.lane.b32.xlu0 %v1243, 127
      %v1754 = vpop.permute.xlu0 %1753
      %v1755 = vsel %vm796, %v1750, %v1752
      %v1756 = vsel %vm796, %v1752, %v1754
      %v1760 = vsel %vm1276, %v1745, 0
      %v1763 = vsel %vm1276, %v1746, 0
      %v1766 = vsel %vm1276, %v1747, 0
      %v1769 = vsel %vm1276, %v1748, 0
      %1771 = vmatprep.subr.bf16.mxu0 %v1756
      %1772 = vmatpush1.bf16.msra.mxu0 %v1755
      %1773 = vmatprep.subr.bf16.mxu0 0
      %1774 = vmatpush1.bf16.msra.mxu0 0
      %1775 = vmatprep.subr.bf16.mxu0 0
      %1776 = vmatpush1.bf16.msra.mxu0 0
      %1777 = vmatprep.subr.bf16.mxu0 0
      %1778 = vmatpush1.bf16.msra.mxu0 0
      %1779 = vmatprep.subr.bf16.mxu0 0
      %1780 = vmatpush1.bf16.msra.mxu0 0
      %1781 = vmatprep.subr.bf16.mxu0 0
      %1782 = vmatpush1.bf16.msra.mxu0 0
      %1783 = vmatprep.subr.bf16.mxu0 0
      %1784 = vmatpush1.bf16.msra.mxu0 0
      %1785 = vmatprep.subr.bf16.mxu0 0
      %1786 = vmatpush1.bf16.msra.mxu0 0
      %1787 = vmatprep.subr.bf16.mxu0 0
      %1788 = vmatpush1.bf16.msra.mxu0 0
      %1789 = vmatprep.subr.bf16.mxu0 0
      %1790 = vmatpush1.bf16.msra.mxu0 0
      %1791 = vmatprep.subr.bf16.mxu0 0
      %1792 = vmatpush1.bf16.msra.mxu0 0
      %1793 = vmatprep.subr.bf16.mxu0 0
      %1794 = vmatpush1.bf16.msra.mxu0 0
      %1795 = vmatprep.subr.bf16.mxu0 0
      %1796 = vmatpush1.bf16.msra.mxu0 0
      %1797 = vmatprep.subr.bf16.mxu0 0
      %1798 = vmatpush1.bf16.msra.mxu0 0
      %1799 = vmatprep.subr.bf16.mxu0 0
      %1800 = vmatpush1.bf16.msra.mxu0 0
      %1801 = vmatprep.subr.bf16.mxu0 0
      %1802 = vmatpush1.bf16.msra.mxu0 0
      %1803 = vmatprep.mubr.bf16.mxu0 0
      %1804 = vmatmul.mubr.bf16.gmra.mrb[0].mxu0 %v1760
      %v1805 = vpop.f32.mrb[0].mxu0
      %v1806 = vadd.f32 %v1691, %v1805
      %v1807 = vpop.f32.mrb[0].mxu0
      %v1808 = vadd.f32 %v1693, %v1807
      %v1809 = vpop.f32.mrb[0].mxu0
      %v1810 = vadd.f32 %v1695, %v1809
      %v1811 = vpop.f32.mrb[0].mxu0
      %v1812 = vadd.f32 %v1697, %v1811
      %1813 = vmatprep.mubr.bf16.mxu0 0
      %1814 = vmatmul.mubr.bf16.gmra.mrb[0].mxu0 %v1763
      %v1815 = vpop.f32.mrb[0].mxu0
      %v1816 = vadd.f32 %v1701, %v1815
      %v1817 = vpop.f32.mrb[0].mxu0
      %v1818 = vadd.f32 %v1703, %v1817
      %v1819 = vpop.f32.mrb[0].mxu0
      %v1820 = vadd.f32 %v1705, %v1819
      %v1821 = vpop.f32.mrb[0].mxu0
      %v1822 = vadd.f32 %v1707, %v1821
      %1823 = vmatprep.mubr.bf16.mxu0 0
      %1824 = vmatmul.mubr.bf16.gmra.mrb[0].mxu0 %v1766
      %v1825 = vpop.f32.mrb[0].mxu0
      %v1826 = vadd.f32 %v1711, %v1825
      %v1827 = vpop.f32.mrb[0].mxu0
      %v1828 = vadd.f32 %v1713, %v1827
      %v1829 = vpop.f32.mrb[0].mxu0
      %v1830 = vadd.f32 %v1715, %v1829
      %v1831 = vpop.f32.mrb[0].mxu0
      %v1832 = vadd.f32 %v1717, %v1831
      %1833 = vmatprep.mubr.bf16.mxu0 0
      %1834 = vmatmul.mubr.bf16.gmra.mrb[0].mxu0 %v1769
      %v1835 = vpop.f32.mrb[0].mxu0
      %v1836 = vadd.f32 %v1721, %v1835
      %v1837 = vpop.f32.mrb[0].mxu0
      %v1838 = vadd.f32 %v1723, %v1837
      %v1839 = vpop.f32.mrb[0].mxu0
      %v1840 = vadd.f32 %v1725, %v1839
      %v1841 = vpop.f32.mrb[0].mxu0
      %v1842 = vadd.f32 %v1727, %v1841
      %1843 = vdwg.mxu0
      %v1852 = vunpack.c.l.b16 %v1205
      %v1853 = vunpack.c.l.b16 %v1206
      %v1854 = vunpack.c.l.b16 %v1207
      %v1855 = vunpack.c.l.b16 %v1208
      %v1856 = vunpack.c.l.b16 %v1209
      %v1857 = vunpack.c.l.b16 %v1210
      %v1858 = vunpack.c.l.b16 %v1211
      %v1859 = vunpack.c.l.b16 %v1212
      %v1860 = vpack.c.b16 %v1853, %v1852
      %v1861 = vpack.c.b16 %v1855, %v1854
      %v1862 = vpack.c.b16 %v1857, %v1856
      %v1863 = vpack.c.b16 %v1859, %v1858
      %1864 = vrot.lane.b32.xlu0 %v1240, 95
      %v1865 = vpop.permute.xlu0 %1864
      %1866 = vrot.lane.b32.xlu0 %v1237, 95
      %v1867 = vpop.permute.xlu0 %1866
      %1868 = vrot.lane.b32.xlu0 %v1243, 95
      %v1869 = vpop.permute.xlu0 %1868
      %v1870 = vsel %vm862, %v1865, %v1867
      %v1871 = vsel %vm862, %v1867, %v1869
      %v1875 = vsel %vm1276, %v1860, 0
      %v1878 = vsel %vm1276, %v1861, 0
      %v1881 = vsel %vm1276, %v1862, 0
      %v1884 = vsel %vm1276, %v1863, 0
      %1886 = vmatprep.subr.bf16.mxu0 %v1871
      %1887 = vmatpush1.bf16.msra.mxu0 %v1870
      %1888 = vmatprep.subr.bf16.mxu0 0
      %1889 = vmatpush1.bf16.msra.mxu0 0
      %1890 = vmatprep.subr.bf16.mxu0 0
      %1891 = vmatpush1.bf16.msra.mxu0 0
      %1892 = vmatprep.subr.bf16.mxu0 0
      %1893 = vmatpush1.bf16.msra.mxu0 0
      %1894 = vmatprep.subr.bf16.mxu0 0
      %1895 = vmatpush1.bf16.msra.mxu0 0
      %1896 = vmatprep.subr.bf16.mxu0 0
      %1897 = vmatpush1.bf16.msra.mxu0 0
      %1898 = vmatprep.subr.bf16.mxu0 0
      %1899 = vmatpush1.bf16.msra.mxu0 0
      %1900 = vmatprep.subr.bf16.mxu0 0
      %1901 = vmatpush1.bf16.msra.mxu0 0
      %1902 = vmatprep.subr.bf16.mxu0 0
      %1903 = vmatpush1.bf16.msra.mxu0 0
      %1904 = vmatprep.subr.bf16.mxu0 0
      %1905 = vmatpush1.bf16.msra.mxu0 0
      %1906 = vmatprep.subr.bf16.mxu0 0
      %1907 = vmatpush1.bf16.msra.mxu0 0
      %1908 = vmatprep.subr.bf16.mxu0 0
      %1909 = vmatpush1.bf16.msra.mxu0 0
      %1910 = vmatprep.subr.bf16.mxu0 0
      %1911 = vmatpush1.bf16.msra.mxu0 0
      %1912 = vmatprep.subr.bf16.mxu0 0
      %1913 = vmatpush1.bf16.msra.mxu0 0
      %1914 = vmatprep.subr.bf16.mxu0 0
      %1915 = vmatpush1.bf16.msra.mxu0 0
      %1916 = vmatprep.subr.bf16.mxu0 0
      %1917 = vmatpush1.bf16.msra.mxu0 0
      %1918 = vmatprep.mubr.bf16.mxu0 0
      %1919 = vmatmul.mubr.bf16.gmra.mrb[0].mxu0 %v1875
      %v1920 = vpop.f32.mrb[0].mxu0
      %v1921 = vadd.f32 0.0, %v1920
      %v1922 = vpop.f32.mrb[0].mxu0
      %v1923 = vadd.f32 0.0, %v1922
      %v1924 = vpop.f32.mrb[0].mxu0
      %v1925 = vadd.f32 0.0, %v1924
      %v1926 = vpop.f32.mrb[0].mxu0
      %v1927 = vadd.f32 0.0, %v1926
      %1928 = vmatprep.mubr.bf16.mxu0 0
      %1929 = vmatmul.mubr.bf16.gmra.mrb[0].mxu0 %v1878
      %v1930 = vpop.f32.mrb[0].mxu0
      %v1931 = vadd.f32 0.0, %v1930
      %v1932 = vpop.f32.mrb[0].mxu0
      %v1933 = vadd.f32 0.0, %v1932
      %v1934 = vpop.f32.mrb[0].mxu0
      %v1935 = vadd.f32 0.0, %v1934
      %v1936 = vpop.f32.mrb[0].mxu0
      %v1937 = vadd.f32 0.0, %v1936
      %1938 = vmatprep.mubr.bf16.mxu0 0
      %1939 = vmatmul.mubr.bf16.gmra.mrb[0].mxu0 %v1881
      %v1940 = vpop.f32.mrb[0].mxu0
      %v1941 = vadd.f32 0.0, %v1940
      %v1942 = vpop.f32.mrb[0].mxu0
      %v1943 = vadd.f32 0.0, %v1942
      %v1944 = vpop.f32.mrb[0].mxu0
      %v1945 = vadd.f32 0.0, %v1944
      %v1946 = vpop.f32.mrb[0].mxu0
      %v1947 = vadd.f32 0.0, %v1946
      %1948 = vmatprep.mubr.bf16.mxu0 0
      %1949 = vmatmul.mubr.bf16.gmra.mrb[0].mxu0 %v1884
      %v1950 = vpop.f32.mrb[0].mxu0
      %v1951 = vadd.f32 0.0, %v1950
      %v1952 = vpop.f32.mrb[0].mxu0
      %v1953 = vadd.f32 0.0, %v1952
      %v1954 = vpop.f32.mrb[0].mxu0
      %v1955 = vadd.f32 0.0, %v1954
      %v1956 = vpop.f32.mrb[0].mxu0
      %v1957 = vadd.f32 0.0, %v1956
      %1958 = vdwg.mxu0
      %v1959 = vadd.f32 %v1806, %v1921
      %v1960 = vadd.f32 %v1808, %v1923
      %v1961 = vadd.f32 %v1810, %v1925
      %v1962 = vadd.f32 %v1812, %v1927
      %v1963 = vadd.f32 %v1816, %v1931
      %v1964 = vadd.f32 %v1818, %v1933
      %v1965 = vadd.f32 %v1820, %v1935
      %v1966 = vadd.f32 %v1822, %v1937
      %v1967 = vadd.f32 %v1826, %v1941
      %v1968 = vadd.f32 %v1828, %v1943
      %v1969 = vadd.f32 %v1830, %v1945
      %v1970 = vadd.f32 %v1832, %v1947
      %v1971 = vadd.f32 %v1836, %v1951
      %v1972 = vadd.f32 %v1838, %v1953
      %v1973 = vadd.f32 %v1840, %v1955
      %v1974 = vadd.f32 %v1842, %v1957
      %v1975 = vadd.f32 %v1598, %v1959
      %v1976 = vadd.f32 %v1599, %v1960
      %v1977 = vadd.f32 %v1600, %v1961
      %v1978 = vadd.f32 %v1601, %v1962
      %v1979 = vadd.f32 %v1602, %v1963
      %v1980 = vadd.f32 %v1603, %v1964
      %v1981 = vadd.f32 %v1604, %v1965
      %v1982 = vadd.f32 %v1605, %v1966
      %v1983 = vadd.f32 %v1606, %v1967
      %v1984 = vadd.f32 %v1607, %v1968
      %v1985 = vadd.f32 %v1608, %v1969
      %v1986 = vadd.f32 %v1609, %v1970
      %v1987 = vadd.f32 %v1610, %v1971
      %v1988 = vadd.f32 %v1611, %v1972
      %v1989 = vadd.f32 %v1612, %v1973
      %v1990 = vadd.f32 %v1613, %v1974
      %v1999 = vunpack.c.l.b16 %v1189
      %v2000 = vunpack.c.l.b16 %v1190
      %v2001 = vunpack.c.l.b16 %v1191
      %v2002 = vunpack.c.l.b16 %v1192
      %v2003 = vunpack.c.l.b16 %v1193
      %v2004 = vunpack.c.l.b16 %v1194
      %v2005 = vunpack.c.l.b16 %v1195
      %v2006 = vunpack.c.l.b16 %v1196
      %v2007 = vpack.c.b16 %v2000, %v1999
      %v2008 = vpack.c.b16 %v2002, %v2001
      %v2009 = vpack.c.b16 %v2004, %v2003
      %v2010 = vpack.c.b16 %v2006, %v2005
      %2011 = vrot.lane.b32.xlu0 %v1240, 110
      %v2012 = vpop.permute.xlu0 %2011
      %2013 = vrot.lane.b32.xlu0 %v1237, 110
      %v2014 = vpop.permute.xlu0 %2013
      %2015 = vrot.lane.b32.xlu0 %v1243, 110
      %v2016 = vpop.permute.xlu0 %2015
      %v2017 = vsel %vm936, %v2012, %v2014
      %v2018 = vsel %vm936, %v2014, %v2016
      %v2022 = vsel %vm1276, %v2007, 0
      %v2025 = vsel %vm1276, %v2008, 0
      %v2028 = vsel %vm1276, %v2009, 0
      %v2031 = vsel %vm1276, %v2010, 0
      %2033 = vmatprep.subr.bf16.mxu0 %v2018
      %2034 = vmatpush1.bf16.msra.mxu0 %v2017
      %2035 = vmatprep.subr.bf16.mxu0 0
      %2036 = vmatpush1.bf16.msra.mxu0 0
      %2037 = vmatprep.subr.bf16.mxu0 0
      %2038 = vmatpush1.bf16.msra.mxu0 0
      %2039 = vmatprep.subr.bf16.mxu0 0
      %2040 = vmatpush1.bf16.msra.mxu0 0
      %2041 = vmatprep.subr.bf16.mxu0 0
      %2042 = vmatpush1.bf16.msra.mxu0 0
      %2043 = vmatprep.subr.bf16.mxu0 0
      %2044 = vmatpush1.bf16.msra.mxu0 0
      %2045 = vmatprep.subr.bf16.mxu0 0
      %2046 = vmatpush1.bf16.msra.mxu0 0
      %2047 = vmatprep.subr.bf16.mxu0 0
      %2048 = vmatpush1.bf16.msra.mxu0 0
      %2049 = vmatprep.subr.bf16.mxu0 0
      %2050 = vmatpush1.bf16.msra.mxu0 0
      %2051 = vmatprep.subr.bf16.mxu0 0
      %2052 = vmatpush1.bf16.msra.mxu0 0
      %2053 = vmatprep.subr.bf16.mxu0 0
      %2054 = vmatpush1.bf16.msra.mxu0 0
      %2055 = vmatprep.subr.bf16.mxu0 0
      %2056 = vmatpush1.bf16.msra.mxu0 0
      %2057 = vmatprep.subr.bf16.mxu0 0
      %2058 = vmatpush1.bf16.msra.mxu0 0
      %2059 = vmatprep.subr.bf16.mxu0 0
      %2060 = vmatpush1.bf16.msra.mxu0 0
      %2061 = vmatprep.subr.bf16.mxu0 0
      %2062 = vmatpush1.bf16.msra.mxu0 0
      %2063 = vmatprep.subr.bf16.mxu0 0
      %2064 = vmatpush1.bf16.msra.mxu0 0
      %2065 = vmatprep.mubr.bf16.mxu0 0
      %2066 = vmatmul.mubr.bf16.gmra.mrb[0].mxu0 %v2022
      %v2067 = vpop.f32.mrb[0].mxu0
      %v2068 = vadd.f32 0.0, %v2067
      %v2069 = vpop.f32.mrb[0].mxu0
      %v2070 = vadd.f32 0.0, %v2069
      %v2071 = vpop.f32.mrb[0].mxu0
      %v2072 = vadd.f32 0.0, %v2071
      %v2073 = vpop.f32.mrb[0].mxu0
      %v2074 = vadd.f32 0.0, %v2073
      %2075 = vmatprep.mubr.bf16.mxu0 0
      %2076 = vmatmul.mubr.bf16.gmra.mrb[0].mxu0 %v2025
      %v2077 = vpop.f32.mrb[0].mxu0
      %v2078 = vadd.f32 0.0, %v2077
      %v2079 = vpop.f32.mrb[0].mxu0
      %v2080 = vadd.f32 0.0, %v2079
      %v2081 = vpop.f32.mrb[0].mxu0
      %v2082 = vadd.f32 0.0, %v2081
      %v2083 = vpop.f32.mrb[0].mxu0
      %v2084 = vadd.f32 0.0, %v2083
      %2085 = vmatprep.mubr.bf16.mxu0 0
      %2086 = vmatmul.mubr.bf16.gmra.mrb[0].mxu0 %v2028
      %v2087 = vpop.f32.mrb[0].mxu0
      %v2088 = vadd.f32 0.0, %v2087
      %v2089 = vpop.f32.mrb[0].mxu0
      %v2090 = vadd.f32 0.0, %v2089
      %v2091 = vpop.f32.mrb[0].mxu0
      %v2092 = vadd.f32 0.0, %v2091
      %v2093 = vpop.f32.mrb[0].mxu0
      %v2094 = vadd.f32 0.0, %v2093
      %2095 = vmatprep.mubr.bf16.mxu0 0
      %2096 = vmatmul.mubr.bf16.gmra.mrb[0].mxu0 %v2031
      %v2097 = vpop.f32.mrb[0].mxu0
      %v2098 = vadd.f32 0.0, %v2097
      %v2099 = vpop.f32.mrb[0].mxu0
      %v2100 = vadd.f32 0.0, %v2099
      %v2101 = vpop.f32.mrb[0].mxu0
      %v2102 = vadd.f32 0.0, %v2101
      %v2103 = vpop.f32.mrb[0].mxu0
      %v2104 = vadd.f32 0.0, %v2103
      %2105 = vdwg.mxu0
      %v2114 = vunpack.c.l.b16 %v1165
      %v2115 = vunpack.c.l.b16 %v1166
      %v2116 = vunpack.c.l.b16 %v1167
      %v2117 = vunpack.c.l.b16 %v1168
      %v2118 = vunpack.c.l.b16 %v1169
      %v2119 = vunpack.c.l.b16 %v1170
      %v2120 = vunpack.c.l.b16 %v1171
      %v2121 = vunpack.c.l.b16 %v1172
      %v2122 = vpack.c.b16 %v2115, %v2114
      %v2123 = vpack.c.b16 %v2117, %v2116
      %v2124 = vpack.c.b16 %v2119, %v2118
      %v2125 = vpack.c.b16 %v2121, %v2120
      %2126 = vrot.lane.b32.xlu0 %v1240, 126
      %v2127 = vpop.permute.xlu0 %2126
      %2128 = vrot.lane.b32.xlu0 %v1237, 126
      %v2129 = vpop.permute.xlu0 %2128
      %2130 = vrot.lane.b32.xlu0 %v1243, 126
      %v2131 = vpop.permute.xlu0 %2130
      %v2132 = vsel %vm1002, %v2127, %v2129
      %v2133 = vsel %vm1002, %v2129, %v2131
      %v2137 = vsel %vm1276, %v2122, 0
      %v2140 = vsel %vm1276, %v2123, 0
      %v2143 = vsel %vm1276, %v2124, 0
      %v2146 = vsel %vm1276, %v2125, 0
      %2148 = vmatprep.subr.bf16.mxu0 %v2133
      %2149 = vmatpush1.bf16.msra.mxu0 %v2132
      %2150 = vmatprep.subr.bf16.mxu0 0
      %2151 = vmatpush1.bf16.msra.mxu0 0
      %2152 = vmatprep.subr.bf16.mxu0 0
      %2153 = vmatpush1.bf16.msra.mxu0 0
      %2154 = vmatprep.subr.bf16.mxu0 0
      %2155 = vmatpush1.bf16.msra.mxu0 0
      %2156 = vmatprep.subr.bf16.mxu0 0
      %2157 = vmatpush1.bf16.msra.mxu0 0
      %2158 = vmatprep.subr.bf16.mxu0 0
      %2159 = vmatpush1.bf16.msra.mxu0 0
      %2160 = vmatprep.subr.bf16.mxu0 0
      %2161 = vmatpush1.bf16.msra.mxu0 0
      %2162 = vmatprep.subr.bf16.mxu0 0
      %2163 = vmatpush1.bf16.msra.mxu0 0
      %2164 = vmatprep.subr.bf16.mxu0 0
      %2165 = vmatpush1.bf16.msra.mxu0 0
      %2166 = vmatprep.subr.bf16.mxu0 0
      %2167 = vmatpush1.bf16.msra.mxu0 0
      %2168 = vmatprep.subr.bf16.mxu0 0
      %2169 = vmatpush1.bf16.msra.mxu0 0
      %2170 = vmatprep.subr.bf16.mxu0 0
      %2171 = vmatpush1.bf16.msra.mxu0 0
      %2172 = vmatprep.subr.bf16.mxu0 0
      %2173 = vmatpush1.bf16.msra.mxu0 0
      %2174 = vmatprep.subr.bf16.mxu0 0
      %2175 = vmatpush1.bf16.msra.mxu0 0
      %2176 = vmatprep.subr.bf16.mxu0 0
      %2177 = vmatpush1.bf16.msra.mxu0 0
      %2178 = vmatprep.subr.bf16.mxu0 0
      %2179 = vmatpush1.bf16.msra.mxu0 0
      %2180 = vmatprep.mubr.bf16.mxu0 0
      %2181 = vmatmul.mubr.bf16.gmra.mrb[0].mxu0 %v2137
      %v2182 = vpop.f32.mrb[0].mxu0
      %v2183 = vadd.f32 %v2068, %v2182
      %v2184 = vpop.f32.mrb[0].mxu0
      %v2185 = vadd.f32 %v2070, %v2184
      %v2186 = vpop.f32.mrb[0].mxu0
      %v2187 = vadd.f32 %v2072, %v2186
      %v2188 = vpop.f32.mrb[0].mxu0
      %v2189 = vadd.f32 %v2074, %v2188
      %2190 = vmatprep.mubr.bf16.mxu0 0
      %2191 = vmatmul.mubr.bf16.gmra.mrb[0].mxu0 %v2140
      %v2192 = vpop.f32.mrb[0].mxu0
      %v2193 = vadd.f32 %v2078, %v2192
      %v2194 = vpop.f32.mrb[0].mxu0
      %v2195 = vadd.f32 %v2080, %v2194
      %v2196 = vpop.f32.mrb[0].mxu0
      %v2197 = vadd.f32 %v2082, %v2196
      %v2198 = vpop.f32.mrb[0].mxu0
      %v2199 = vadd.f32 %v2084, %v2198
      %2200 = vmatprep.mubr.bf16.mxu0 0
      %2201 = vmatmul.mubr.bf16.gmra.mrb[0].mxu0 %v2143
      %v2202 = vpop.f32.mrb[0].mxu0
      %v2203 = vadd.f32 %v2088, %v2202
      %v2204 = vpop.f32.mrb[0].mxu0
      %v2205 = vadd.f32 %v2090, %v2204
      %v2206 = vpop.f32.mrb[0].mxu0
      %v2207 = vadd.f32 %v2092, %v2206
      %v2208 = vpop.f32.mrb[0].mxu0
      %v2209 = vadd.f32 %v2094, %v2208
      %2210 = vmatprep.mubr.bf16.mxu0 0
      %2211 = vmatmul.mubr.bf16.gmra.mrb[0].mxu0 %v2146
      %v2212 = vpop.f32.mrb[0].mxu0
      %v2213 = vadd.f32 %v2098, %v2212
      %v2214 = vpop.f32.mrb[0].mxu0
      %v2215 = vadd.f32 %v2100, %v2214
      %v2216 = vpop.f32.mrb[0].mxu0
      %v2217 = vadd.f32 %v2102, %v2216
      %v2218 = vpop.f32.mrb[0].mxu0
      %v2219 = vadd.f32 %v2104, %v2218
      %2220 = vdwg.mxu0
      %v2229 = vunpack.c.l.b16 %v1213
      %v2230 = vunpack.c.l.b16 %v1214
      %v2231 = vunpack.c.l.b16 %v1215
      %v2232 = vunpack.c.l.b16 %v1216
      %v2233 = vunpack.c.l.b16 %v1217
      %v2234 = vunpack.c.l.b16 %v1218
      %v2235 = vunpack.c.l.b16 %v1219
      %v2236 = vunpack.c.l.b16 %v1220
      %v2237 = vpack.c.b16 %v2230, %v2229
      %v2238 = vpack.c.b16 %v2232, %v2231
      %v2239 = vpack.c.b16 %v2234, %v2233
      %v2240 = vpack.c.b16 %v2236, %v2235
      %2241 = vrot.lane.b32.xlu0 %v1240, 94
      %v2242 = vpop.permute.xlu0 %2241
      %2243 = vrot.lane.b32.xlu0 %v1237, 94
      %v2244 = vpop.permute.xlu0 %2243
      %2245 = vrot.lane.b32.xlu0 %v1243, 94
      %v2246 = vpop.permute.xlu0 %2245
      %v2247 = vsel %vm1068, %v2242, %v2244
      %v2248 = vsel %vm1068, %v2244, %v2246
      %v2252 = vsel %vm1276, %v2237, 0
      %v2255 = vsel %vm1276, %v2238, 0
      %v2258 = vsel %vm1276, %v2239, 0
      %v2261 = vsel %vm1276, %v2240, 0
      %2263 = vmatprep.subr.bf16.mxu0 %v2248
      %2264 = vmatpush1.bf16.msra.mxu0 %v2247
      %2265 = vmatprep.subr.bf16.mxu0 0
      %2266 = vmatpush1.bf16.msra.mxu0 0
      %2267 = vmatprep.subr.bf16.mxu0 0
      %2268 = vmatpush1.bf16.msra.mxu0 0
      %2269 = vmatprep.subr.bf16.mxu0 0
      %2270 = vmatpush1.bf16.msra.mxu0 0
      %2271 = vmatprep.subr.bf16.mxu0 0
      %2272 = vmatpush1.bf16.msra.mxu0 0
      %2273 = vmatprep.subr.bf16.mxu0 0
      %2274 = vmatpush1.bf16.msra.mxu0 0
      %2275 = vmatprep.subr.bf16.mxu0 0
      %2276 = vmatpush1.bf16.msra.mxu0 0
      %2277 = vmatprep.subr.bf16.mxu0 0
      %2278 = vmatpush1.bf16.msra.mxu0 0
      %2279 = vmatprep.subr.bf16.mxu0 0
      %2280 = vmatpush1.bf16.msra.mxu0 0
      %2281 = vmatprep.subr.bf16.mxu0 0
      %2282 = vmatpush1.bf16.msra.mxu0 0
      %2283 = vmatprep.subr.bf16.mxu0 0
      %2284 = vmatpush1.bf16.msra.mxu0 0
      %2285 = vmatprep.subr.bf16.mxu0 0
      %2286 = vmatpush1.bf16.msra.mxu0 0
      %2287 = vmatprep.subr.bf16.mxu0 0
      %2288 = vmatpush1.bf16.msra.mxu0 0
      %2289 = vmatprep.subr.bf16.mxu0 0
      %2290 = vmatpush1.bf16.msra.mxu0 0
      %2291 = vmatprep.subr.bf16.mxu0 0
      %2292 = vmatpush1.bf16.msra.mxu0 0
      %2293 = vmatprep.subr.bf16.mxu0 0
      %2294 = vmatpush1.bf16.msra.mxu0 0
      %2295 = vmatprep.mubr.bf16.mxu0 0
      %2296 = vmatmul.mubr.bf16.gmra.mrb[0].mxu0 %v2252
      %v2297 = vpop.f32.mrb[0].mxu0
      %v2298 = vadd.f32 0.0, %v2297
      %v2299 = vpop.f32.mrb[0].mxu0
      %v2300 = vadd.f32 0.0, %v2299
      %v2301 = vpop.f32.mrb[0].mxu0
      %v2302 = vadd.f32 0.0, %v2301
      %v2303 = vpop.f32.mrb[0].mxu0
      %v2304 = vadd.f32 0.0, %v2303
      %2305 = vmatprep.mubr.bf16.mxu0 0
      %2306 = vmatmul.mubr.bf16.gmra.mrb[0].mxu0 %v2255
      %v2307 = vpop.f32.mrb[0].mxu0
      %v2308 = vadd.f32 0.0, %v2307
      %v2309 = vpop.f32.mrb[0].mxu0
      %v2310 = vadd.f32 0.0, %v2309
      %v2311 = vpop.f32.mrb[0].mxu0
      %v2312 = vadd.f32 0.0, %v2311
      %v2313 = vpop.f32.mrb[0].mxu0
      %v2314 = vadd.f32 0.0, %v2313
      %2315 = vmatprep.mubr.bf16.mxu0 0
      %2316 = vmatmul.mubr.bf16.gmra.mrb[0].mxu0 %v2258
      %v2317 = vpop.f32.mrb[0].mxu0
      %v2318 = vadd.f32 0.0, %v2317
      %v2319 = vpop.f32.mrb[0].mxu0
      %v2320 = vadd.f32 0.0, %v2319
      %v2321 = vpop.f32.mrb[0].mxu0
      %v2322 = vadd.f32 0.0, %v2321
      %v2323 = vpop.f32.mrb[0].mxu0
      %v2324 = vadd.f32 0.0, %v2323
      %2325 = vmatprep.mubr.bf16.mxu0 0
      %2326 = vmatmul.mubr.bf16.gmra.mrb[0].mxu0 %v2261
      %v2327 = vpop.f32.mrb[0].mxu0
      %v2328 = vadd.f32 0.0, %v2327
      %v2329 = vpop.f32.mrb[0].mxu0
      %v2330 = vadd.f32 0.0, %v2329
      %v2331 = vpop.f32.mrb[0].mxu0
      %v2332 = vadd.f32 0.0, %v2331
      %v2333 = vpop.f32.mrb[0].mxu0
      %v2334 = vadd.f32 0.0, %v2333
      %2335 = vdwg.mxu0
      %v2336 = vadd.f32 %v2183, %v2298
      %v2337 = vadd.f32 %v2185, %v2300
      %v2338 = vadd.f32 %v2187, %v2302
      %v2339 = vadd.f32 %v2189, %v2304
      %v2340 = vadd.f32 %v2193, %v2308
      %v2341 = vadd.f32 %v2195, %v2310
      %v2342 = vadd.f32 %v2197, %v2312
      %v2343 = vadd.f32 %v2199, %v2314
      %v2344 = vadd.f32 %v2203, %v2318
      %v2345 = vadd.f32 %v2205, %v2320
      %v2346 = vadd.f32 %v2207, %v2322
      %v2347 = vadd.f32 %v2209, %v2324
      %v2348 = vadd.f32 %v2213, %v2328
      %v2349 = vadd.f32 %v2215, %v2330
      %v2350 = vadd.f32 %v2217, %v2332
      %v2351 = vadd.f32 %v2219, %v2334
      %v2352 = vmul.f32 %v2336, %v472
      %v2353 = vmul.f32 %v2337, %v473
      %v2354 = vmul.f32 %v2338, %v472
      %v2355 = vmul.f32 %v2339, %v473
      %v2356 = vmul.f32 %v2340, %v472
      %v2357 = vmul.f32 %v2341, %v473
      %v2358 = vmul.f32 %v2342, %v472
      %v2359 = vmul.f32 %v2343, %v473
      %v2360 = vmul.f32 %v2344, %v472
      %v2361 = vmul.f32 %v2345, %v473
      %v2362 = vmul.f32 %v2346, %v472
      %v2363 = vmul.f32 %v2347, %v473
      %v2364 = vmul.f32 %v2348, %v472
      %v2365 = vmul.f32 %v2349, %v473
      %v2366 = vmul.f32 %v2350, %v472
      %v2367 = vmul.f32 %v2351, %v473
      %v2368 = vadd.f32 %v1975, %v2352
      %v2369 = vadd.f32 %v1976, %v2353
      %v2370 = vadd.f32 %v1977, %v2354
      %v2371 = vadd.f32 %v1978, %v2355
      %v2372 = vadd.f32 %v1979, %v2356
      %v2373 = vadd.f32 %v1980, %v2357
      %v2374 = vadd.f32 %v1981, %v2358
      %v2375 = vadd.f32 %v1982, %v2359
      %v2376 = vadd.f32 %v1983, %v2360
      %v2377 = vadd.f32 %v1984, %v2361
      %v2378 = vadd.f32 %v1985, %v2362
      %v2379 = vadd.f32 %v1986, %v2363
      %v2380 = vadd.f32 %v1987, %v2364
      %v2381 = vadd.f32 %v1988, %v2365
      %v2382 = vadd.f32 %v1989, %v2366
      %v2383 = vadd.f32 %v1990, %v2367
      %2385 = vset.pattern.permute.xlu0 0
      %2386 = vperm.xlu0 %2385, %v1221
      %v2387 = vpop.permute.xlu0 %2386
      %2390 = vset.pattern.permute.xlu0 0
      %2391 = vperm.xlu0 %2390, %v1222
      %v2392 = vpop.permute.xlu0 %2391
      %2395 = vset.pattern.permute.xlu0 0
      %2396 = vperm.xlu0 %2395, %v1223
      %v2397 = vpop.permute.xlu0 %2396
      %2400 = vset.pattern.permute.xlu0 0
      %2401 = vperm.xlu0 %2400, %v1224
      %v2402 = vpop.permute.xlu0 %2401
      %2405 = vset.pattern.permute.xlu0 0
      %2406 = vperm.xlu0 %2405, %v1225
      %v2407 = vpop.permute.xlu0 %2406
      %2410 = vset.pattern.permute.xlu0 0
      %2411 = vperm.xlu0 %2410, %v1226
      %v2412 = vpop.permute.xlu0 %2411
      %2415 = vset.pattern.permute.xlu0 0
      %2416 = vperm.xlu0 %2415, %v1227
      %v2417 = vpop.permute.xlu0 %2416
      %2420 = vset.pattern.permute.xlu0 0
      %2421 = vperm.xlu0 %2420, %v1228
      %v2422 = vpop.permute.xlu0 %2421
      %v2424 = vadd.f32 %v2368, %v2387
      %v2425 = vadd.f32 %v2369, %v2387
      %v2426 = vadd.f32 %v2370, %v2392
      %v2427 = vadd.f32 %v2371, %v2392
      %v2428 = vadd.f32 %v2372, %v2397
      %v2429 = vadd.f32 %v2373, %v2397
      %v2430 = vadd.f32 %v2374, %v2402
      %v2431 = vadd.f32 %v2375, %v2402
      %v2432 = vadd.f32 %v2376, %v2407
      %v2433 = vadd.f32 %v2377, %v2407
      %v2434 = vadd.f32 %v2378, %v2412
      %v2435 = vadd.f32 %v2379, %v2412
      %v2436 = vadd.f32 %v2380, %v2417
      %v2437 = vadd.f32 %v2381, %v2417
      %v2438 = vadd.f32 %v2382, %v2422
      %v2439 = vadd.f32 %v2383, %v2422
      %v2440 = vld [vmem:[%s428] sm:$0xff]
      %v2441 = vld [vmem:[%s428 + $0x8] sm:$0xff]
      %v2442 = vunpack.c.l.bf16 %v2440
      %v2443 = vunpack.c.h.bf16 %v2440
      %v2444 = vunpack.c.l.bf16 %v2441
      %v2445 = vunpack.c.h.bf16 %v2441
      %v2446 = vld [vmem:[%s6] sm:$0xf]
      %v2447 = vld [vmem:[%s6 + $0x4] sm:$0xf]
      %v2448 = vld [vmem:[%s6 + $0x8] sm:$0xf]
      %v2449 = vld [vmem:[%s6 + $0xc] sm:$0xf]
      %v2450 = vld [vmem:[%s6 + $0x10] sm:$0xf]
      %v2451 = vld [vmem:[%s6 + $0x14] sm:$0xf]
      %v2452 = vld [vmem:[%s6 + $0x18] sm:$0xf]
      %v2453 = vld [vmem:[%s6 + $0x1c] sm:$0xf]
      %v2454 = vld [vmem:[%s6 + $0x20] sm:$0xf]
      %v2455 = vld [vmem:[%s6 + $0x24] sm:$0xf]
      %v2456 = vld [vmem:[%s6 + $0x28] sm:$0xf]
      %v2457 = vld [vmem:[%s6 + $0x2c] sm:$0xf]
      %v2458 = vld [vmem:[%s6 + $0x30] sm:$0xf]
      %v2459 = vld [vmem:[%s6 + $0x34] sm:$0xf]
      %v2460 = vld [vmem:[%s6 + $0x38] sm:$0xf]
      %v2461 = vld [vmem:[%s6 + $0x3c] sm:$0xf]
      %v2462 = vld [vmem:[%s6 + $0x40] sm:$0xf]
      %v2463 = vld [vmem:[%s6 + $0x44] sm:$0xf]
      %v2464 = vld [vmem:[%s6 + $0x48] sm:$0xf]
      %v2465 = vld [vmem:[%s6 + $0x4c] sm:$0xf]
      %v2466 = vld [vmem:[%s6 + $0x50] sm:$0xf]
      %v2467 = vld [vmem:[%s6 + $0x54] sm:$0xf]
      %v2468 = vld [vmem:[%s6 + $0x58] sm:$0xf]
      %v2469 = vld [vmem:[%s6 + $0x5c] sm:$0xf]
      %v2470 = vld [vmem:[%s6 + $0x60] sm:$0xf]
      %v2471 = vld [vmem:[%s6 + $0x64] sm:$0xf]
      %v2472 = vld [vmem:[%s6 + $0x68] sm:$0xf]
      %v2473 = vld [vmem:[%s6 + $0x6c] sm:$0xf]
      %v2474 = vld [vmem:[%s6 + $0x70] sm:$0xf]
      %v2475 = vld [vmem:[%s6 + $0x74] sm:$0xf]
      %v2476 = vld [vmem:[%s6 + $0x78] sm:$0xf]
      %v2477 = vld [vmem:[%s6 + $0x7c] sm:$0xf]
      %v2478 = vld [vmem:[%s6 + $0x80] sm:$0xf]
      %v2479 = vld [vmem:[%s6 + $0x84] sm:$0xf]
      %v2480 = vld [vmem:[%s6 + $0x88] sm:$0xf]
      %v2481 = vld [vmem:[%s6 + $0x8c] sm:$0xf]
      %v2482 = vld [vmem:[%s6 + $0x90] sm:$0xf]
      %v2483 = vld [vmem:[%s6 + $0x94] sm:$0xf]
      %v2484 = vld [vmem:[%s6 + $0x98] sm:$0xf]
      %v2485 = vld [vmem:[%s6 + $0x9c] sm:$0xf]
      %v2486 = vld [vmem:[%s6 + $0xa0] sm:$0xf]
      %v2487 = vld [vmem:[%s6 + $0xa4] sm:$0xf]
      %v2488 = vld [vmem:[%s6 + $0xa8] sm:$0xf]
      %v2489 = vld [vmem:[%s6 + $0xac] sm:$0xf]
      %v2490 = vld [vmem:[%s6 + $0xb0] sm:$0xf]
      %v2491 = vld [vmem:[%s6 + $0xb4] sm:$0xf]
      %v2492 = vld [vmem:[%s6 + $0xb8] sm:$0xf]
      %v2493 = vld [vmem:[%s6 + $0xbc] sm:$0xf]
      %v2494 = vld [vmem:[%s6 + $0xc0] sm:$0xf]
      %v2495 = vld [vmem:[%s6 + $0xc4] sm:$0xf]
      %v2496 = vld [vmem:[%s6 + $0xc8] sm:$0xf]
      %v2497 = vld [vmem:[%s6 + $0xcc] sm:$0xf]
      %v2498 = vld [vmem:[%s6 + $0xd0] sm:$0xf]
      %v2499 = vld [vmem:[%s6 + $0xd4] sm:$0xf]
      %v2500 = vld [vmem:[%s6 + $0xd8] sm:$0xf]
      %v2501 = vld [vmem:[%s6 + $0xdc] sm:$0xf]
      %v2502 = vld [vmem:[%s6 + $0xe0] sm:$0xf]
      %v2503 = vld [vmem:[%s6 + $0xe4] sm:$0xf]
      %v2504 = vld [vmem:[%s6 + $0xe8] sm:$0xf]
      %v2505 = vld [vmem:[%s6 + $0xec] sm:$0xf]
      %v2506 = vld [vmem:[%s6 + $0xf0] sm:$0xf]
      %v2507 = vld [vmem:[%s6 + $0xf4] sm:$0xf]
      %v2508 = vld [vmem:[%s6 + $0xf8] sm:$0xf]
      %v2509 = vld [vmem:[%s6 + $0xfc] sm:$0xf]
      %v2510 = vld [vmem:[%s6 + $0x100] sm:$0xf]
      %v2511 = vld [vmem:[%s6 + $0x104] sm:$0xf]
      %v2512 = vld [vmem:[%s6 + $0x108] sm:$0xf]
      %v2513 = vld [vmem:[%s6 + $0x10c] sm:$0xf]
      %v2514 = vld [vmem:[%s6 + $0x110] sm:$0xf]
      %v2515 = vld [vmem:[%s6 + $0x114] sm:$0xf]
      %v2516 = vld [vmem:[%s6 + $0x118] sm:$0xf]
      %v2517 = vld [vmem:[%s6 + $0x11c] sm:$0xf]
      %v2518 = vld [vmem:[%s6 + $0x120] sm:$0xf]
      %v2519 = vld [vmem:[%s6 + $0x124] sm:$0xf]
      %v2520 = vld [vmem:[%s6 + $0x128] sm:$0xf]
      %v2521 = vld [vmem:[%s6 + $0x12c] sm:$0xf]
      %v2522 = vld [vmem:[%s6 + $0x130] sm:$0xf]
      %v2523 = vld [vmem:[%s6 + $0x134] sm:$0xf]
      %v2524 = vld [vmem:[%s6 + $0x138] sm:$0xf]
      %v2525 = vld [vmem:[%s6 + $0x13c] sm:$0xf]
      %v2526 = vld [vmem:[%s6 + $0x140] sm:$0xf]
      %v2527 = vld [vmem:[%s6 + $0x144] sm:$0xf]
      %v2528 = vld [vmem:[%s6 + $0x148] sm:$0xf]
      %v2529 = vld [vmem:[%s6 + $0x14c] sm:$0xf]
      %v2530 = vld [vmem:[%s6 + $0x150] sm:$0xf]
      %v2531 = vld [vmem:[%s6 + $0x154] sm:$0xf]
      %v2532 = vld [vmem:[%s6 + $0x158] sm:$0xf]
      %v2533 = vld [vmem:[%s6 + $0x15c] sm:$0xf]
      %v2534 = vld [vmem:[%s6 + $0x160] sm:$0xf]
      %v2535 = vld [vmem:[%s6 + $0x164] sm:$0xf]
      %v2536 = vld [vmem:[%s7] sm:$0xff]
      %v2537 = vld [vmem:[%s7 + $0x8] sm:$0xff]
      %v2538 = vld [vmem:[%s7 + $0x10] sm:$0xff]
      %v2539 = vld [vmem:[%s7 + $0x18] sm:$0xff]
      %v2540 = vld [vmem:[%s7 + $0x20] sm:$0xff]
      %v2541 = vld [vmem:[%s7 + $0x28] sm:$0xff]
      %v2542 = vld [vmem:[%s7 + $0x30] sm:$0xff]
      %v2543 = vld [vmem:[%s7 + $0x38] sm:$0xff]
      %v2544 = vld [vmem:[%s7 + $0x40] sm:$0xff]
      %v2545 = vld [vmem:[%s7 + $0x48] sm:$0xff]
      %v2546 = vpack.c.bf16 %v2426, %v2424
      %v2547 = vpack.c.bf16 %v2427, %v2425
      %v2548 = vpack.c.bf16 %v2430, %v2428
      %v2549 = vpack.c.bf16 %v2431, %v2429
      %v2550 = vpack.c.bf16 %v2434, %v2432
      %v2551 = vpack.c.bf16 %v2435, %v2433
      %v2552 = vpack.c.bf16 %v2438, %v2436
      %v2553 = vpack.c.bf16 %v2439, %v2437
      %v2554 = vpack.c.bf16 %v2444, %v2442
      %v2555 = vpack.c.bf16 %v2445, %v2443
      %2566 = vrot.lane.b32.xlu0 %v2546, 17
      %v2567 = vpop.permute.xlu0 %2566
      %2568 = vrot.lane.b32.xlu0 %v2547, 17
      %v2569 = vpop.permute.xlu0 %2568
      %2570 = vrot.lane.b32.xlu0 %v2548, 17
      %v2571 = vpop.permute.xlu0 %2570
      %2572 = vrot.lane.b32.xlu0 %v2549, 17
      %v2573 = vpop.permute.xlu0 %2572
      %2574 = vrot.lane.b32.xlu0 %v2550, 17
      %v2575 = vpop.permute.xlu0 %2574
      %2576 = vrot.lane.b32.xlu0 %v2551, 17
      %v2577 = vpop.permute.xlu0 %2576
      %2578 = vrot.lane.b32.xlu0 %v2552, 17
      %v2579 = vpop.permute.xlu0 %2578
      %2580 = vrot.lane.b32.xlu0 %v2553, 17
      %v2581 = vpop.permute.xlu0 %2580
      %2582 = vrot.lane.b32.xlu0 %v2554, 17
      %v2583 = vpop.permute.xlu0 %2582
      %2584 = vrot.lane.b32.xlu0 %v2555, 17
      %v2585 = vpop.permute.xlu0 %2584
      %v2586 = vsel %vm508, %v2567, %v2569
      %v2587 = vsel %vm508, %v2571, %v2573
      %v2588 = vsel %vm508, %v2575, %v2577
      %v2589 = vsel %vm508, %v2579, %v2581
      %v2590 = vsel %vm508, %v2583, %v2585
      %v2597 = vsel %vm510, 0, %v2567
      %v2600 = vsel %vm510, 0, %v2571
      %v2603 = vsel %vm510, 0, %v2575
      %v2606 = vsel %vm510, 0, %v2579
      %v2609 = vsel %vm510, 0, %v2583
      %v2612 = vsel %vm510, %v2569, 0
      %v2614 = vsel %vm510, %v2573, 0
      %v2616 = vsel %vm510, %v2577, 0
      %v2618 = vsel %vm510, %v2581, 0
      %v2620 = vsel %vm510, %v2585, 0
      %v2631 = vunpack.c.l.b16 %v2476
      %v2632 = vunpack.c.l.b16 %v2477
      %v2633 = vunpack.c.l.b16 %v2478
      %v2634 = vunpack.c.l.b16 %v2479
      %v2635 = vunpack.c.l.b16 %v2480
      %v2636 = vunpack.c.l.b16 %v2481
      %v2637 = vunpack.c.l.b16 %v2482
      %v2638 = vunpack.c.l.b16 %v2483
      %v2639 = vunpack.c.l.b16 %v2484
      %v2640 = vunpack.c.l.b16 %v2485
      %v2641 = vpack.c.b16 %v2632, %v2631
      %v2642 = vpack.c.b16 %v2634, %v2633
      %v2643 = vpack.c.b16 %v2636, %v2635
      %v2644 = vpack.c.b16 %v2638, %v2637
      %v2645 = vpack.c.b16 %v2640, %v2639
      %2656 = vrot.lane.b32.xlu0 %v2597, 112
      %v2657 = vpop.permute.xlu0 %2656
      %2658 = vrot.lane.b32.xlu0 %v2586, 112
      %v2659 = vpop.permute.xlu0 %2658
      %2660 = vrot.lane.b32.xlu0 %v2612, 112
      %v2661 = vpop.permute.xlu0 %2660
      %2662 = vrot.lane.b32.xlu0 %v2600, 112
      %v2663 = vpop.permute.xlu0 %2662
      %2664 = vrot.lane.b32.xlu0 %v2587, 112
      %v2665 = vpop.permute.xlu0 %2664
      %2666 = vrot.lane.b32.xlu0 %v2614, 112
      %v2667 = vpop.permute.xlu0 %2666
      %2668 = vrot.lane.b32.xlu0 %v2603, 112
      %v2669 = vpop.permute.xlu0 %2668
      %2670 = vrot.lane.b32.xlu0 %v2588, 112
      %v2671 = vpop.permute.xlu0 %2670
      %2672 = vrot.lane.b32.xlu0 %v2616, 112
      %v2673 = vpop.permute.xlu0 %2672
      %2674 = vrot.lane.b32.xlu0 %v2606, 112
      %v2675 = vpop.permute.xlu0 %2674
      %2676 = vrot.lane.b32.xlu0 %v2589, 112
      %v2677 = vpop.permute.xlu0 %2676
      %2678 = vrot.lane.b32.xlu0 %v2618, 112
      %v2679 = vpop.permute.xlu0 %2678
      %2680 = vrot.lane.b32.xlu0 %v2609, 112
      %v2681 = vpop.permute.xlu0 %2680
      %2682 = vrot.lane.b32.xlu0 %v2590, 112
      %v2683 = vpop.permute.xlu0 %2682
      %2684 = vrot.lane.b32.xlu0 %v2620, 112
      %v2685 = vpop.permute.xlu0 %2684
      %v2686 = vsel %vm529, %v2657, %v2659
      %v2687 = vsel %vm529, %v2659, %v2661
      %v2688 = vsel %vm529, %v2663, %v2665
      %v2689 = vsel %vm529, %v2665, %v2667
      %v2690 = vsel %vm529, %v2669, %v2671
      %v2691 = vsel %vm529, %v2671, %v2673
      %v2692 = vsel %vm529, %v2675, %v2677
      %v2693 = vsel %vm529, %v2677, %v2679
      %v2694 = vsel %vm529, %v2681, %v2683
      %v2695 = vsel %vm529, %v2683, %v2685
      %vm2706 = vcmask 654336
      %v2708 = vsel %vm2706, %v2641, 0
      %v2711 = vsel %vm2706, %v2642, 0
      %v2714 = vsel %vm2706, %v2643, 0
      %v2717 = vsel %vm2706, %v2644, 0
      %v2720 = vsel %vm2706, %v2645, 0
      %2722 = vmatprep.subr.bf16.mxu0 %v2687
      %2723 = vmatpush1.bf16.msra.mxu0 %v2686
      %2724 = vmatprep.subr.bf16.mxu0 %v2689
      %2725 = vmatpush1.bf16.msra.mxu0 %v2688
      %2726 = vmatprep.subr.bf16.mxu0 %v2691
      %2727 = vmatpush1.bf16.msra.mxu0 %v2690
      %2728 = vmatprep.subr.bf16.mxu0 %v2693
      %2729 = vmatpush1.bf16.msra.mxu0 %v2692
      %2730 = vmatprep.subr.bf16.mxu0 %v2695
      %2731 = vmatpush1.bf16.msra.mxu0 %v2694
      %2732 = vmatprep.subr.bf16.mxu0 0
      %2733 = vmatpush1.bf16.msra.mxu0 0
      %2734 = vmatprep.subr.bf16.mxu0 0
      %2735 = vmatpush1.bf16.msra.mxu0 0
      %2736 = vmatprep.subr.bf16.mxu0 0
      %2737 = vmatpush1.bf16.msra.mxu0 0
      %2738 = vmatprep.subr.bf16.mxu0 0
      %2739 = vmatpush1.bf16.msra.mxu0 0
      %2740 = vmatprep.subr.bf16.mxu0 0
      %2741 = vmatpush1.bf16.msra.mxu0 0
      %2742 = vmatprep.subr.bf16.mxu0 0
      %2743 = vmatpush1.bf16.msra.mxu0 0
      %2744 = vmatprep.subr.bf16.mxu0 0
      %2745 = vmatpush1.bf16.msra.mxu0 0
      %2746 = vmatprep.subr.bf16.mxu0 0
      %2747 = vmatpush1.bf16.msra.mxu0 0
      %2748 = vmatprep.subr.bf16.mxu0 0
      %2749 = vmatpush1.bf16.msra.mxu0 0
      %2750 = vmatprep.subr.bf16.mxu0 0
      %2751 = vmatpush1.bf16.msra.mxu0 0
      %2752 = vmatprep.subr.bf16.mxu0 0
      %2753 = vmatpush1.bf16.msra.mxu0 0
      %2754 = vmatprep.mubr.bf16.mxu0 0
      %2755 = vmatmul.mubr.bf16.gmra.mrb[0].mxu0 %v2708
      %v2756 = vpop.f32.mrb[0].mxu0
      %v2757 = vadd.f32 0.0, %v2756
      %v2758 = vpop.f32.mrb[0].mxu0
      %v2759 = vadd.f32 0.0, %v2758
      %v2760 = vpop.f32.mrb[0].mxu0
      %v2761 = vadd.f32 0.0, %v2760
      %v2762 = vpop.f32.mrb[0].mxu0
      %v2763 = vadd.f32 0.0, %v2762
      %2764 = vmatprep.mubr.bf16.mxu0 0
      %2765 = vmatmul.mubr.bf16.gmra.mrb[0].mxu0 %v2711
      %v2766 = vpop.f32.mrb[0].mxu0
      %v2767 = vadd.f32 0.0, %v2766
      %v2768 = vpop.f32.mrb[0].mxu0
      %v2769 = vadd.f32 0.0, %v2768
      %v2770 = vpop.f32.mrb[0].mxu0
      %v2771 = vadd.f32 0.0, %v2770
      %v2772 = vpop.f32.mrb[0].mxu0
      %v2773 = vadd.f32 0.0, %v2772
      %2774 = vmatprep.mubr.bf16.mxu0 0
      %2775 = vmatmul.mubr.bf16.gmra.mrb[0].mxu0 %v2714
      %v2776 = vpop.f32.mrb[0].mxu0
      %v2777 = vadd.f32 0.0, %v2776
      %v2778 = vpop.f32.mrb[0].mxu0
      %v2779 = vadd.f32 0.0, %v2778
      %v2780 = vpop.f32.mrb[0].mxu0
      %v2781 = vadd.f32 0.0, %v2780
      %v2782 = vpop.f32.mrb[0].mxu0
      %v2783 = vadd.f32 0.0, %v2782
      %2784 = vmatprep.mubr.bf16.mxu0 0
      %2785 = vmatmul.mubr.bf16.gmra.mrb[0].mxu0 %v2717
      %v2786 = vpop.f32.mrb[0].mxu0
      %v2787 = vadd.f32 0.0, %v2786
      %v2788 = vpop.f32.mrb[0].mxu0
      %v2789 = vadd.f32 0.0, %v2788
      %v2790 = vpop.f32.mrb[0].mxu0
      %v2791 = vadd.f32 0.0, %v2790
      %v2792 = vpop.f32.mrb[0].mxu0
      %v2793 = vadd.f32 0.0, %v2792
      %2794 = vmatprep.mubr.bf16.mxu0 0
      %2795 = vmatmul.mubr.bf16.gmra.mrb[0].mxu0 %v2720
      %v2796 = vpop.f32.mrb[0].mxu0
      %v2797 = vadd.f32 0.0, %v2796
      %v2798 = vpop.f32.mrb[0].mxu0
      %v2799 = vadd.f32 0.0, %v2798
      %v2800 = vpop.f32.mrb[0].mxu0
      %v2801 = vadd.f32 0.0, %v2800
      %v2802 = vpop.f32.mrb[0].mxu0
      %v2803 = vadd.f32 0.0, %v2802
      %2804 = vdwg.mxu0
      %v2815 = vunpack.c.l.b16 %v2446
      %v2816 = vunpack.c.l.b16 %v2447
      %v2817 = vunpack.c.l.b16 %v2448
      %v2818 = vunpack.c.l.b16 %v2449
      %v2819 = vunpack.c.l.b16 %v2450
      %v2820 = vunpack.c.l.b16 %v2451
      %v2821 = vunpack.c.l.b16 %v2452
      %v2822 = vunpack.c.l.b16 %v2453
      %v2823 = vunpack.c.l.b16 %v2454
      %v2824 = vunpack.c.l.b16 %v2455
      %v2825 = vpack.c.b16 %v2816, %v2815
      %v2826 = vpack.c.b16 %v2818, %v2817
      %v2827 = vpack.c.b16 %v2820, %v2819
      %v2828 = vpack.c.b16 %v2822, %v2821
      %v2829 = vpack.c.b16 %v2824, %v2823
      %v2831 = vsel %vm2706, %v2825, 0
      %v2834 = vsel %vm2706, %v2826, 0
      %v2837 = vsel %vm2706, %v2827, 0
      %v2840 = vsel %vm2706, %v2828, 0
      %v2843 = vsel %vm2706, %v2829, 0
      %2845 = vmatprep.subr.bf16.mxu0 %v2586
      %2846 = vmatpush1.bf16.msra.mxu0 %v2597
      %2847 = vmatprep.subr.bf16.mxu0 %v2587
      %2848 = vmatpush1.bf16.msra.mxu0 %v2600
      %2849 = vmatprep.subr.bf16.mxu0 %v2588
      %2850 = vmatpush1.bf16.msra.mxu0 %v2603
      %2851 = vmatprep.subr.bf16.mxu0 %v2589
      %2852 = vmatpush1.bf16.msra.mxu0 %v2606
      %2853 = vmatprep.subr.bf16.mxu0 %v2590
      %2854 = vmatpush1.bf16.msra.mxu0 %v2609
      %2855 = vmatprep.subr.bf16.mxu0 0
      %2856 = vmatpush1.bf16.msra.mxu0 0
      %2857 = vmatprep.subr.bf16.mxu0 0
      %2858 = vmatpush1.bf16.msra.mxu0 0
      %2859 = vmatprep.subr.bf16.mxu0 0
      %2860 = vmatpush1.bf16.msra.mxu0 0
      %2861 = vmatprep.subr.bf16.mxu0 0
      %2862 = vmatpush1.bf16.msra.mxu0 0
      %2863 = vmatprep.subr.bf16.mxu0 0
      %2864 = vmatpush1.bf16.msra.mxu0 0
      %2865 = vmatprep.subr.bf16.mxu0 0
      %2866 = vmatpush1.bf16.msra.mxu0 0
      %2867 = vmatprep.subr.bf16.mxu0 0
      %2868 = vmatpush1.bf16.msra.mxu0 0
      %2869 = vmatprep.subr.bf16.mxu0 0
      %2870 = vmatpush1.bf16.msra.mxu0 0
      %2871 = vmatprep.subr.bf16.mxu0 0
      %2872 = vmatpush1.bf16.msra.mxu0 0
      %2873 = vmatprep.subr.bf16.mxu0 0
      %2874 = vmatpush1.bf16.msra.mxu0 0
      %2875 = vmatprep.subr.bf16.mxu0 0
      %2876 = vmatpush1.bf16.msra.mxu0 0
      %2877 = vmatprep.mubr.bf16.mxu0 0
      %2878 = vmatmul.mubr.bf16.gmra.mrb[0].mxu0 %v2831
      %v2879 = vpop.f32.mrb[0].mxu0
      %v2880 = vadd.f32 %v2757, %v2879
      %v2881 = vpop.f32.mrb[0].mxu0
      %v2882 = vadd.f32 %v2759, %v2881
      %v2883 = vpop.f32.mrb[0].mxu0
      %v2884 = vadd.f32 %v2761, %v2883
      %v2885 = vpop.f32.mrb[0].mxu0
      %v2886 = vadd.f32 %v2763, %v2885
      %2887 = vmatprep.mubr.bf16.mxu0 0
      %2888 = vmatmul.mubr.bf16.gmra.mrb[0].mxu0 %v2834
      %v2889 = vpop.f32.mrb[0].mxu0
      %v2890 = vadd.f32 %v2767, %v2889
      %v2891 = vpop.f32.mrb[0].mxu0
      %v2892 = vadd.f32 %v2769, %v2891
      %v2893 = vpop.f32.mrb[0].mxu0
      %v2894 = vadd.f32 %v2771, %v2893
      %v2895 = vpop.f32.mrb[0].mxu0
      %v2896 = vadd.f32 %v2773, %v2895
      %2897 = vmatprep.mubr.bf16.mxu0 0
      %2898 = vmatmul.mubr.bf16.gmra.mrb[0].mxu0 %v2837
      %v2899 = vpop.f32.mrb[0].mxu0
      %v2900 = vadd.f32 %v2777, %v2899
      %v2901 = vpop.f32.mrb[0].mxu0
      %v2902 = vadd.f32 %v2779, %v2901
      %v2903 = vpop.f32.mrb[0].mxu0
      %v2904 = vadd.f32 %v2781, %v2903
      %v2905 = vpop.f32.mrb[0].mxu0
      %v2906 = vadd.f32 %v2783, %v2905
      %2907 = vmatprep.mubr.bf16.mxu0 0
      %2908 = vmatmul.mubr.bf16.gmra.mrb[0].mxu0 %v2840
      %v2909 = vpop.f32.mrb[0].mxu0
      %v2910 = vadd.f32 %v2787, %v2909
      %v2911 = vpop.f32.mrb[0].mxu0
      %v2912 = vadd.f32 %v2789, %v2911
      %v2913 = vpop.f32.mrb[0].mxu0
      %v2914 = vadd.f32 %v2791, %v2913
      %v2915 = vpop.f32.mrb[0].mxu0
      %v2916 = vadd.f32 %v2793, %v2915
      %2917 = vmatprep.mubr.bf16.mxu0 0
      %2918 = vmatmul.mubr.bf16.gmra.mrb[0].mxu0 %v2843
      %v2919 = vpop.f32.mrb[0].mxu0
      %v2920 = vadd.f32 %v2797, %v2919
      %v2921 = vpop.f32.mrb[0].mxu0
      %v2922 = vadd.f32 %v2799, %v2921
      %v2923 = vpop.f32.mrb[0].mxu0
      %v2924 = vadd.f32 %v2801, %v2923
      %v2925 = vpop.f32.mrb[0].mxu0
      %v2926 = vadd.f32 %v2803, %v2925
      %2927 = vdwg.mxu0
      %v2938 = vunpack.c.l.b16 %v2506
      %v2939 = vunpack.c.l.b16 %v2507
      %v2940 = vunpack.c.l.b16 %v2508
      %v2941 = vunpack.c.l.b16 %v2509
      %v2942 = vunpack.c.l.b16 %v2510
      %v2943 = vunpack.c.l.b16 %v2511
      %v2944 = vunpack.c.l.b16 %v2512
      %v2945 = vunpack.c.l.b16 %v2513
      %v2946 = vunpack.c.l.b16 %v2514
      %v2947 = vunpack.c.l.b16 %v2515
      %v2948 = vpack.c.b16 %v2939, %v2938
      %v2949 = vpack.c.b16 %v2941, %v2940
      %v2950 = vpack.c.b16 %v2943, %v2942
      %v2951 = vpack.c.b16 %v2945, %v2944
      %v2952 = vpack.c.b16 %v2947, %v2946
      %2953 = vrot.lane.b32.xlu0 %v2597, 96
      %v2954 = vpop.permute.xlu0 %2953
      %2955 = vrot.lane.b32.xlu0 %v2586, 96
      %v2956 = vpop.permute.xlu0 %2955
      %2957 = vrot.lane.b32.xlu0 %v2612, 96
      %v2958 = vpop.permute.xlu0 %2957
      %2959 = vrot.lane.b32.xlu0 %v2600, 96
      %v2960 = vpop.permute.xlu0 %2959
      %2961 = vrot.lane.b32.xlu0 %v2587, 96
      %v2962 = vpop.permute.xlu0 %2961
      %2963 = vrot.lane.b32.xlu0 %v2614, 96
      %v2964 = vpop.permute.xlu0 %2963
      %2965 = vrot.lane.b32.xlu0 %v2603, 96
      %v2966 = vpop.permute.xlu0 %2965
      %2967 = vrot.lane.b32.xlu0 %v2588, 96
      %v2968 = vpop.permute.xlu0 %2967
      %2969 = vrot.lane.b32.xlu0 %v2616, 96
      %v2970 = vpop.permute.xlu0 %2969
      %2971 = vrot.lane.b32.xlu0 %v2606, 96
      %v2972 = vpop.permute.xlu0 %2971
      %2973 = vrot.lane.b32.xlu0 %v2589, 96
      %v2974 = vpop.permute.xlu0 %2973
      %2975 = vrot.lane.b32.xlu0 %v2618, 96
      %v2976 = vpop.permute.xlu0 %2975
      %2977 = vrot.lane.b32.xlu0 %v2609, 96
      %v2978 = vpop.permute.xlu0 %2977
      %2979 = vrot.lane.b32.xlu0 %v2590, 96
      %v2980 = vpop.permute.xlu0 %2979
      %2981 = vrot.lane.b32.xlu0 %v2620, 96
      %v2982 = vpop.permute.xlu0 %2981
      %v2983 = vsel %vm656, %v2954, %v2956
      %v2984 = vsel %vm656, %v2956, %v2958
      %v2985 = vsel %vm656, %v2960, %v2962
      %v2986 = vsel %vm656, %v2962, %v2964
      %v2987 = vsel %vm656, %v2966, %v2968
      %v2988 = vsel %vm656, %v2968, %v2970
      %v2989 = vsel %vm656, %v2972, %v2974
      %v2990 = vsel %vm656, %v2974, %v2976
      %v2991 = vsel %vm656, %v2978, %v2980
      %v2992 = vsel %vm656, %v2980, %v2982
      %v3004 = vsel %vm2706, %v2948, 0
      %v3007 = vsel %vm2706, %v2949, 0
      %v3010 = vsel %vm2706, %v2950, 0
      %v3013 = vsel %vm2706, %v2951, 0
      %v3016 = vsel %vm2706, %v2952, 0
      %3018 = vmatprep.subr.bf16.mxu0 %v2984
      %3019 = vmatpush1.bf16.msra.mxu0 %v2983
      %3020 = vmatprep.subr.bf16.mxu0 %v2986
      %3021 = vmatpush1.bf16.msra.mxu0 %v2985
      %3022 = vmatprep.subr.bf16.mxu0 %v2988
      %3023 = vmatpush1.bf16.msra.mxu0 %v2987
      %3024 = vmatprep.subr.bf16.mxu0 %v2990
      %3025 = vmatpush1.bf16.msra.mxu0 %v2989
      %3026 = vmatprep.subr.bf16.mxu0 %v2992
      %3027 = vmatpush1.bf16.msra.mxu0 %v2991
      %3028 = vmatprep.subr.bf16.mxu0 0
      %3029 = vmatpush1.bf16.msra.mxu0 0
      %3030 = vmatprep.subr.bf16.mxu0 0
      %3031 = vmatpush1.bf16.msra.mxu0 0
      %3032 = vmatprep.subr.bf16.mxu0 0
      %3033 = vmatpush1.bf16.msra.mxu0 0
      %3034 = vmatprep.subr.bf16.mxu0 0
      %3035 = vmatpush1.bf16.msra.mxu0 0
      %3036 = vmatprep.subr.bf16.mxu0 0
      %3037 = vmatpush1.bf16.msra.mxu0 0
      %3038 = vmatprep.subr.bf16.mxu0 0
      %3039 = vmatpush1.bf16.msra.mxu0 0
      %3040 = vmatprep.subr.bf16.mxu0 0
      %3041 = vmatpush1.bf16.msra.mxu0 0
      %3042 = vmatprep.subr.bf16.mxu0 0
      %3043 = vmatpush1.bf16.msra.mxu0 0
      %3044 = vmatprep.subr.bf16.mxu0 0
      %3045 = vmatpush1.bf16.msra.mxu0 0
      %3046 = vmatprep.subr.bf16.mxu0 0
      %3047 = vmatpush1.bf16.msra.mxu0 0
      %3048 = vmatprep.subr.bf16.mxu0 0
      %3049 = vmatpush1.bf16.msra.mxu0 0
      %3050 = vmatprep.mubr.bf16.mxu0 0
      %3051 = vmatmul.mubr.bf16.gmra.mrb[0].mxu0 %v3004
      %v3052 = vpop.f32.mrb[0].mxu0
      %v3053 = vadd.f32 0.0, %v3052
      %v3054 = vpop.f32.mrb[0].mxu0
      %v3055 = vadd.f32 0.0, %v3054
      %v3056 = vpop.f32.mrb[0].mxu0
      %v3057 = vadd.f32 0.0, %v3056
      %v3058 = vpop.f32.mrb[0].mxu0
      %v3059 = vadd.f32 0.0, %v3058
      %3060 = vmatprep.mubr.bf16.mxu0 0
      %3061 = vmatmul.mubr.bf16.gmra.mrb[0].mxu0 %v3007
      %v3062 = vpop.f32.mrb[0].mxu0
      %v3063 = vadd.f32 0.0, %v3062
      %v3064 = vpop.f32.mrb[0].mxu0
      %v3065 = vadd.f32 0.0, %v3064
      %v3066 = vpop.f32.mrb[0].mxu0
      %v3067 = vadd.f32 0.0, %v3066
      %v3068 = vpop.f32.mrb[0].mxu0
      %v3069 = vadd.f32 0.0, %v3068
      %3070 = vmatprep.mubr.bf16.mxu0 0
      %3071 = vmatmul.mubr.bf16.gmra.mrb[0].mxu0 %v3010
      %v3072 = vpop.f32.mrb[0].mxu0
      %v3073 = vadd.f32 0.0, %v3072
      %v3074 = vpop.f32.mrb[0].mxu0
      %v3075 = vadd.f32 0.0, %v3074
      %v3076 = vpop.f32.mrb[0].mxu0
      %v3077 = vadd.f32 0.0, %v3076
      %v3078 = vpop.f32.mrb[0].mxu0
      %v3079 = vadd.f32 0.0, %v3078
      %3080 = vmatprep.mubr.bf16.mxu0 0
      %3081 = vmatmul.mubr.bf16.gmra.mrb[0].mxu0 %v3013
      %v3082 = vpop.f32.mrb[0].mxu0
      %v3083 = vadd.f32 0.0, %v3082
      %v3084 = vpop.f32.mrb[0].mxu0
      %v3085 = vadd.f32 0.0, %v3084
      %v3086 = vpop.f32.mrb[0].mxu0
      %v3087 = vadd.f32 0.0, %v3086
      %v3088 = vpop.f32.mrb[0].mxu0
      %v3089 = vadd.f32 0.0, %v3088
      %3090 = vmatprep.mubr.bf16.mxu0 0
      %3091 = vmatmul.mubr.bf16.gmra.mrb[0].mxu0 %v3016
      %v3092 = vpop.f32.mrb[0].mxu0
      %v3093 = vadd.f32 0.0, %v3092
      %v3094 = vpop.f32.mrb[0].mxu0
      %v3095 = vadd.f32 0.0, %v3094
      %v3096 = vpop.f32.mrb[0].mxu0
      %v3097 = vadd.f32 0.0, %v3096
      %v3098 = vpop.f32.mrb[0].mxu0
      %v3099 = vadd.f32 0.0, %v3098
      %3100 = vdwg.mxu0
      %v3101 = vadd.f32 %v2880, %v3053
      %v3102 = vadd.f32 %v2882, %v3055
      %v3103 = vadd.f32 %v2884, %v3057
      %v3104 = vadd.f32 %v2886, %v3059
      %v3105 = vadd.f32 %v2890, %v3063
      %v3106 = vadd.f32 %v2892, %v3065
      %v3107 = vadd.f32 %v2894, %v3067
      %v3108 = vadd.f32 %v2896, %v3069
      %v3109 = vadd.f32 %v2900, %v3073
      %v3110 = vadd.f32 %v2902, %v3075
      %v3111 = vadd.f32 %v2904, %v3077
      %v3112 = vadd.f32 %v2906, %v3079
      %v3113 = vadd.f32 %v2910, %v3083
      %v3114 = vadd.f32 %v2912, %v3085
      %v3115 = vadd.f32 %v2914, %v3087
      %v3116 = vadd.f32 %v2916, %v3089
      %v3117 = vadd.f32 %v2920, %v3093
      %v3118 = vadd.f32 %v2922, %v3095
      %v3119 = vadd.f32 %v2924, %v3097
      %v3120 = vadd.f32 %v2926, %v3099
      %v3121 = vmul.f32 %v3101, %v466
      %v3122 = vmul.f32 %v3102, %v467
      %v3123 = vmul.f32 %v3103, %v466
      %v3124 = vmul.f32 %v3104, %v467
      %v3125 = vmul.f32 %v3105, %v466
      %v3126 = vmul.f32 %v3106, %v467
      %v3127 = vmul.f32 %v3107, %v466
      %v3128 = vmul.f32 %v3108, %v467
      %v3129 = vmul.f32 %v3109, %v466
      %v3130 = vmul.f32 %v3110, %v467
      %v3131 = vmul.f32 %v3111, %v466
      %v3132 = vmul.f32 %v3112, %v467
      %v3133 = vmul.f32 %v3113, %v466
      %v3134 = vmul.f32 %v3114, %v467
      %v3135 = vmul.f32 %v3115, %v466
      %v3136 = vmul.f32 %v3116, %v467
      %v3137 = vmul.f32 %v3117, %v466
      %v3138 = vmul.f32 %v3118, %v467
      %v3139 = vmul.f32 %v3119, %v466
      %v3140 = vmul.f32 %v3120, %v467
      %v3151 = vunpack.c.l.b16 %v2486
      %v3152 = vunpack.c.l.b16 %v2487
      %v3153 = vunpack.c.l.b16 %v2488
      %v3154 = vunpack.c.l.b16 %v2489
      %v3155 = vunpack.c.l.b16 %v2490
      %v3156 = vunpack.c.l.b16 %v2491
      %v3157 = vunpack.c.l.b16 %v2492
      %v3158 = vunpack.c.l.b16 %v2493
      %v3159 = vunpack.c.l.b16 %v2494
      %v3160 = vunpack.c.l.b16 %v2495
      %v3161 = vpack.c.b16 %v3152, %v3151
      %v3162 = vpack.c.b16 %v3154, %v3153
      %v3163 = vpack.c.b16 %v3156, %v3155
      %v3164 = vpack.c.b16 %v3158, %v3157
      %v3165 = vpack.c.b16 %v3160, %v3159
      %3166 = vrot.lane.b32.xlu0 %v2597, 111
      %v3167 = vpop.permute.xlu0 %3166
      %3168 = vrot.lane.b32.xlu0 %v2586, 111
      %v3169 = vpop.permute.xlu0 %3168
      %3170 = vrot.lane.b32.xlu0 %v2612, 111
      %v3171 = vpop.permute.xlu0 %3170
      %3172 = vrot.lane.b32.xlu0 %v2600, 111
      %v3173 = vpop.permute.xlu0 %3172
      %3174 = vrot.lane.b32.xlu0 %v2587, 111
      %v3175 = vpop.permute.xlu0 %3174
      %3176 = vrot.lane.b32.xlu0 %v2614, 111
      %v3177 = vpop.permute.xlu0 %3176
      %3178 = vrot.lane.b32.xlu0 %v2603, 111
      %v3179 = vpop.permute.xlu0 %3178
      %3180 = vrot.lane.b32.xlu0 %v2588, 111
      %v3181 = vpop.permute.xlu0 %3180
      %3182 = vrot.lane.b32.xlu0 %v2616, 111
      %v3183 = vpop.permute.xlu0 %3182
      %3184 = vrot.lane.b32.xlu0 %v2606, 111
      %v3185 = vpop.permute.xlu0 %3184
      %3186 = vrot.lane.b32.xlu0 %v2589, 111
      %v3187 = vpop.permute.xlu0 %3186
      %3188 = vrot.lane.b32.xlu0 %v2618, 111
      %v3189 = vpop.permute.xlu0 %3188
      %3190 = vrot.lane.b32.xlu0 %v2609, 111
      %v3191 = vpop.permute.xlu0 %3190
      %3192 = vrot.lane.b32.xlu0 %v2590, 111
      %v3193 = vpop.permute.xlu0 %3192
      %3194 = vrot.lane.b32.xlu0 %v2620, 111
      %v3195 = vpop.permute.xlu0 %3194
      %v3196 = vsel %vm730, %v3167, %v3169
      %v3197 = vsel %vm730, %v3169, %v3171
      %v3198 = vsel %vm730, %v3173, %v3175
      %v3199 = vsel %vm730, %v3175, %v3177
      %v3200 = vsel %vm730, %v3179, %v3181
      %v3201 = vsel %vm730, %v3181, %v3183
      %v3202 = vsel %vm730, %v3185, %v3187
      %v3203 = vsel %vm730, %v3187, %v3189
      %v3204 = vsel %vm730, %v3191, %v3193
      %v3205 = vsel %vm730, %v3193, %v3195
      %v3217 = vsel %vm2706, %v3161, 0
      %v3220 = vsel %vm2706, %v3162, 0
      %v3223 = vsel %vm2706, %v3163, 0
      %v3226 = vsel %vm2706, %v3164, 0
      %v3229 = vsel %vm2706, %v3165, 0
      %3231 = vmatprep.subr.bf16.mxu0 %v3197
      %3232 = vmatpush1.bf16.msra.mxu0 %v3196
      %3233 = vmatprep.subr.bf16.mxu0 %v3199
      %3234 = vmatpush1.bf16.msra.mxu0 %v3198
      %3235 = vmatprep.subr.bf16.mxu0 %v3201
      %3236 = vmatpush1.bf16.msra.mxu0 %v3200
      %3237 = vmatprep.subr.bf16.mxu0 %v3203
      %3238 = vmatpush1.bf16.msra.mxu0 %v3202
      %3239 = vmatprep.subr.bf16.mxu0 %v3205
      %3240 = vmatpush1.bf16.msra.mxu0 %v3204
      %3241 = vmatprep.subr.bf16.mxu0 0
      %3242 = vmatpush1.bf16.msra.mxu0 0
      %3243 = vmatprep.subr.bf16.mxu0 0
      %3244 = vmatpush1.bf16.msra.mxu0 0
      %3245 = vmatprep.subr.bf16.mxu0 0
      %3246 = vmatpush1.bf16.msra.mxu0 0
      %3247 = vmatprep.subr.bf16.mxu0 0
      %3248 = vmatpush1.bf16.msra.mxu0 0
      %3249 = vmatprep.subr.bf16.mxu0 0
      %3250 = vmatpush1.bf16.msra.mxu0 0
      %3251 = vmatprep.subr.bf16.mxu0 0
      %3252 = vmatpush1.bf16.msra.mxu0 0
      %3253 = vmatprep.subr.bf16.mxu0 0
      %3254 = vmatpush1.bf16.msra.mxu0 0
      %3255 = vmatprep.subr.bf16.mxu0 0
      %3256 = vmatpush1.bf16.msra.mxu0 0
      %3257 = vmatprep.subr.bf16.mxu0 0
      %3258 = vmatpush1.bf16.msra.mxu0 0
      %3259 = vmatprep.subr.bf16.mxu0 0
      %3260 = vmatpush1.bf16.msra.mxu0 0
      %3261 = vmatprep.subr.bf16.mxu0 0
      %3262 = vmatpush1.bf16.msra.mxu0 0
      %3263 = vmatprep.mubr.bf16.mxu0 0
      %3264 = vmatmul.mubr.bf16.gmra.mrb[0].mxu0 %v3217
      %v3265 = vpop.f32.mrb[0].mxu0
      %v3266 = vadd.f32 0.0, %v3265
      %v3267 = vpop.f32.mrb[0].mxu0
      %v3268 = vadd.f32 0.0, %v3267
      %v3269 = vpop.f32.mrb[0].mxu0
      %v3270 = vadd.f32 0.0, %v3269
      %v3271 = vpop.f32.mrb[0].mxu0
      %v3272 = vadd.f32 0.0, %v3271
      %3273 = vmatprep.mubr.bf16.mxu0 0
      %3274 = vmatmul.mubr.bf16.gmra.mrb[0].mxu0 %v3220
      %v3275 = vpop.f32.mrb[0].mxu0
      %v3276 = vadd.f32 0.0, %v3275
      %v3277 = vpop.f32.mrb[0].mxu0
      %v3278 = vadd.f32 0.0, %v3277
      %v3279 = vpop.f32.mrb[0].mxu0
      %v3280 = vadd.f32 0.0, %v3279
      %v3281 = vpop.f32.mrb[0].mxu0
      %v3282 = vadd.f32 0.0, %v3281
      %3283 = vmatprep.mubr.bf16.mxu0 0
      %3284 = vmatmul.mubr.bf16.gmra.mrb[0].mxu0 %v3223
      %v3285 = vpop.f32.mrb[0].mxu0
      %v3286 = vadd.f32 0.0, %v3285
      %v3287 = vpop.f32.mrb[0].mxu0
      %v3288 = vadd.f32 0.0, %v3287
      %v3289 = vpop.f32.mrb[0].mxu0
      %v3290 = vadd.f32 0.0, %v3289
      %v3291 = vpop.f32.mrb[0].mxu0
      %v3292 = vadd.f32 0.0, %v3291
      %3293 = vmatprep.mubr.bf16.mxu0 0
      %3294 = vmatmul.mubr.bf16.gmra.mrb[0].mxu0 %v3226
      %v3295 = vpop.f32.mrb[0].mxu0
      %v3296 = vadd.f32 0.0, %v3295
      %v3297 = vpop.f32.mrb[0].mxu0
      %v3298 = vadd.f32 0.0, %v3297
      %v3299 = vpop.f32.mrb[0].mxu0
      %v3300 = vadd.f32 0.0, %v3299
      %v3301 = vpop.f32.mrb[0].mxu0
      %v3302 = vadd.f32 0.0, %v3301
      %3303 = vmatprep.mubr.bf16.mxu0 0
      %3304 = vmatmul.mubr.bf16.gmra.mrb[0].mxu0 %v3229
      %v3305 = vpop.f32.mrb[0].mxu0
      %v3306 = vadd.f32 0.0, %v3305
      %v3307 = vpop.f32.mrb[0].mxu0
      %v3308 = vadd.f32 0.0, %v3307
      %v3309 = vpop.f32.mrb[0].mxu0
      %v3310 = vadd.f32 0.0, %v3309
      %v3311 = vpop.f32.mrb[0].mxu0
      %v3312 = vadd.f32 0.0, %v3311
      %3313 = vdwg.mxu0
      %v3324 = vunpack.c.l.b16 %v2456
      %v3325 = vunpack.c.l.b16 %v2457
      %v3326 = vunpack.c.l.b16 %v2458
      %v3327 = vunpack.c.l.b16 %v2459
      %v3328 = vunpack.c.l.b16 %v2460
      %v3329 = vunpack.c.l.b16 %v2461
      %v3330 = vunpack.c.l.b16 %v2462
      %v3331 = vunpack.c.l.b16 %v2463
      %v3332 = vunpack.c.l.b16 %v2464
      %v3333 = vunpack.c.l.b16 %v2465
      %v3334 = vpack.c.b16 %v3325, %v3324
      %v3335 = vpack.c.b16 %v3327, %v3326
      %v3336 = vpack.c.b16 %v3329, %v3328
      %v3337 = vpack.c.b16 %v3331, %v3330
      %v3338 = vpack.c.b16 %v3333, %v3332
      %3339 = vrot.lane.b32.xlu0 %v2597, 127
      %v3340 = vpop.permute.xlu0 %3339
      %3341 = vrot.lane.b32.xlu0 %v2586, 127
      %v3342 = vpop.permute.xlu0 %3341
      %3343 = vrot.lane.b32.xlu0 %v2612, 127
      %v3344 = vpop.permute.xlu0 %3343
      %3345 = vrot.lane.b32.xlu0 %v2600, 127
      %v3346 = vpop.permute.xlu0 %3345
      %3347 = vrot.lane.b32.xlu0 %v2587, 127
      %v3348 = vpop.permute.xlu0 %3347
      %3349 = vrot.lane.b32.xlu0 %v2614, 127
      %v3350 = vpop.permute.xlu0 %3349
      %3351 = vrot.lane.b32.xlu0 %v2603, 127
      %v3352 = vpop.permute.xlu0 %3351
      %3353 = vrot.lane.b32.xlu0 %v2588, 127
      %v3354 = vpop.permute.xlu0 %3353
      %3355 = vrot.lane.b32.xlu0 %v2616, 127
      %v3356 = vpop.permute.xlu0 %3355
      %3357 = vrot.lane.b32.xlu0 %v2606, 127
      %v3358 = vpop.permute.xlu0 %3357
      %3359 = vrot.lane.b32.xlu0 %v2589, 127
      %v3360 = vpop.permute.xlu0 %3359
      %3361 = vrot.lane.b32.xlu0 %v2618, 127
      %v3362 = vpop.permute.xlu0 %3361
      %3363 = vrot.lane.b32.xlu0 %v2609, 127
      %v3364 = vpop.permute.xlu0 %3363
      %3365 = vrot.lane.b32.xlu0 %v2590, 127
      %v3366 = vpop.permute.xlu0 %3365
      %3367 = vrot.lane.b32.xlu0 %v2620, 127
      %v3368 = vpop.permute.xlu0 %3367
      %v3369 = vsel %vm796, %v3340, %v3342
      %v3370 = vsel %vm796, %v3342, %v3344
      %v3371 = vsel %vm796, %v3346, %v3348
      %v3372 = vsel %vm796, %v3348, %v3350
      %v3373 = vsel %vm796, %v3352, %v3354
      %v3374 = vsel %vm796, %v3354, %v3356
      %v3375 = vsel %vm796, %v3358, %v3360
      %v3376 = vsel %vm796, %v3360, %v3362
      %v3377 = vsel %vm796, %v3364, %v3366
      %v3378 = vsel %vm796, %v3366, %v3368
      %v3390 = vsel %vm2706, %v3334, 0
      %v3393 = vsel %vm2706, %v3335, 0
      %v3396 = vsel %vm2706, %v3336, 0
      %v3399 = vsel %vm2706, %v3337, 0
      %v3402 = vsel %vm2706, %v3338, 0
      %3404 = vmatprep.subr.bf16.mxu0 %v3370
      %3405 = vmatpush1.bf16.msra.mxu0 %v3369
      %3406 = vmatprep.subr.bf16.mxu0 %v3372
      %3407 = vmatpush1.bf16.msra.mxu0 %v3371
      %3408 = vmatprep.subr.bf16.mxu0 %v3374
      %3409 = vmatpush1.bf16.msra.mxu0 %v3373
      %3410 = vmatprep.subr.bf16.mxu0 %v3376
      %3411 = vmatpush1.bf16.msra.mxu0 %v3375
      %3412 = vmatprep.subr.bf16.mxu0 %v3378
      %3413 = vmatpush1.bf16.msra.mxu0 %v3377
      %3414 = vmatprep.subr.bf16.mxu0 0
      %3415 = vmatpush1.bf16.msra.mxu0 0
      %3416 = vmatprep.subr.bf16.mxu0 0
      %3417 = vmatpush1.bf16.msra.mxu0 0
      %3418 = vmatprep.subr.bf16.mxu0 0
      %3419 = vmatpush1.bf16.msra.mxu0 0
      %3420 = vmatprep.subr.bf16.mxu0 0
      %3421 = vmatpush1.bf16.msra.mxu0 0
      %3422 = vmatprep.subr.bf16.mxu0 0
      %3423 = vmatpush1.bf16.msra.mxu0 0
      %3424 = vmatprep.subr.bf16.mxu0 0
      %3425 = vmatpush1.bf16.msra.mxu0 0
      %3426 = vmatprep.subr.bf16.mxu0 0
      %3427 = vmatpush1.bf16.msra.mxu0 0
      %3428 = vmatprep.subr.bf16.mxu0 0
      %3429 = vmatpush1.bf16.msra.mxu0 0
      %3430 = vmatprep.subr.bf16.mxu0 0
      %3431 = vmatpush1.bf16.msra.mxu0 0
      %3432 = vmatprep.subr.bf16.mxu0 0
      %3433 = vmatpush1.bf16.msra.mxu0 0
      %3434 = vmatprep.subr.bf16.mxu0 0
      %3435 = vmatpush1.bf16.msra.mxu0 0
      %3436 = vmatprep.mubr.bf16.mxu0 0
      %3437 = vmatmul.mubr.bf16.gmra.mrb[0].mxu0 %v3390
      %v3438 = vpop.f32.mrb[0].mxu0
      %v3439 = vadd.f32 %v3266, %v3438
      %v3440 = vpop.f32.mrb[0].mxu0
      %v3441 = vadd.f32 %v3268, %v3440
      %v3442 = vpop.f32.mrb[0].mxu0
      %v3443 = vadd.f32 %v3270, %v3442
      %v3444 = vpop.f32.mrb[0].mxu0
      %v3445 = vadd.f32 %v3272, %v3444
      %3446 = vmatprep.mubr.bf16.mxu0 0
      %3447 = vmatmul.mubr.bf16.gmra.mrb[0].mxu0 %v3393
      %v3448 = vpop.f32.mrb[0].mxu0
      %v3449 = vadd.f32 %v3276, %v3448
      %v3450 = vpop.f32.mrb[0].mxu0
      %v3451 = vadd.f32 %v3278, %v3450
      %v3452 = vpop.f32.mrb[0].mxu0
      %v3453 = vadd.f32 %v3280, %v3452
      %v3454 = vpop.f32.mrb[0].mxu0
      %v3455 = vadd.f32 %v3282, %v3454
      %3456 = vmatprep.mubr.bf16.mxu0 0
      %3457 = vmatmul.mubr.bf16.gmra.mrb[0].mxu0 %v3396
      %v3458 = vpop.f32.mrb[0].mxu0
      %v3459 = vadd.f32 %v3286, %v3458
      %v3460 = vpop.f32.mrb[0].mxu0
      %v3461 = vadd.f32 %v3288, %v3460
      %v3462 = vpop.f32.mrb[0].mxu0
      %v3463 = vadd.f32 %v3290, %v3462
      %v3464 = vpop.f32.mrb[0].mxu0
      %v3465 = vadd.f32 %v3292, %v3464
      %3466 = vmatprep.mubr.bf16.mxu0 0
      %3467 = vmatmul.mubr.bf16.gmra.mrb[0].mxu0 %v3399
      %v3468 = vpop.f32.mrb[0].mxu0
      %v3469 = vadd.f32 %v3296, %v3468
      %v3470 = vpop.f32.mrb[0].mxu0
      %v3471 = vadd.f32 %v3298, %v3470
      %v3472 = vpop.f32.mrb[0].mxu0
      %v3473 = vadd.f32 %v3300, %v3472
      %v3474 = vpop.f32.mrb[0].mxu0
      %v3475 = vadd.f32 %v3302, %v3474
      %3476 = vmatprep.mubr.bf16.mxu0 0
      %3477 = vmatmul.mubr.bf16.gmra.mrb[0].mxu0 %v3402
      %v3478 = vpop.f32.mrb[0].mxu0
      %v3479 = vadd.f32 %v3306, %v3478
      %v3480 = vpop.f32.mrb[0].mxu0
      %v3481 = vadd.f32 %v3308, %v3480
      %v3482 = vpop.f32.mrb[0].mxu0
      %v3483 = vadd.f32 %v3310, %v3482
      %v3484 = vpop.f32.mrb[0].mxu0
      %v3485 = vadd.f32 %v3312, %v3484
      %3486 = vdwg.mxu0
      %v3497 = vunpack.c.l.b16 %v2516
      %v3498 = vunpack.c.l.b16 %v2517
      %v3499 = vunpack.c.l.b16 %v2518
      %v3500 = vunpack.c.l.b16 %v2519
      %v3501 = vunpack.c.l.b16 %v2520
      %v3502 = vunpack.c.l.b16 %v2521
      %v3503 = vunpack.c.l.b16 %v2522
      %v3504 = vunpack.c.l.b16 %v2523
      %v3505 = vunpack.c.l.b16 %v2524
      %v3506 = vunpack.c.l.b16 %v2525
      %v3507 = vpack.c.b16 %v3498, %v3497
      %v3508 = vpack.c.b16 %v3500, %v3499
      %v3509 = vpack.c.b16 %v3502, %v3501
      %v3510 = vpack.c.b16 %v3504, %v3503
      %v3511 = vpack.c.b16 %v3506, %v3505
      %3512 = vrot.lane.b32.xlu0 %v2597, 95
      %v3513 = vpop.permute.xlu0 %3512
      %3514 = vrot.lane.b32.xlu0 %v2586, 95
      %v3515 = vpop.permute.xlu0 %3514
      %3516 = vrot.lane.b32.xlu0 %v2612, 95
      %v3517 = vpop.permute.xlu0 %3516
      %3518 = vrot.lane.b32.xlu0 %v2600, 95
      %v3519 = vpop.permute.xlu0 %3518
      %3520 = vrot.lane.b32.xlu0 %v2587, 95
      %v3521 = vpop.permute.xlu0 %3520
      %3522 = vrot.lane.b32.xlu0 %v2614, 95
      %v3523 = vpop.permute.xlu0 %3522
      %3524 = vrot.lane.b32.xlu0 %v2603, 95
      %v3525 = vpop.permute.xlu0 %3524
      %3526 = vrot.lane.b32.xlu0 %v2588, 95
      %v3527 = vpop.permute.xlu0 %3526
      %3528 = vrot.lane.b32.xlu0 %v2616, 95
      %v3529 = vpop.permute.xlu0 %3528
      %3530 = vrot.lane.b32.xlu0 %v2606, 95
      %v3531 = vpop.permute.xlu0 %3530
      %3532 = vrot.lane.b32.xlu0 %v2589, 95
      %v3533 = vpop.permute.xlu0 %3532
      %3534 = vrot.lane.b32.xlu0 %v2618, 95
      %v3535 = vpop.permute.xlu0 %3534
      %3536 = vrot.lane.b32.xlu0 %v2609, 95
      %v3537 = vpop.permute.xlu0 %3536
      %3538 = vrot.lane.b32.xlu0 %v2590, 95
      %v3539 = vpop.permute.xlu0 %3538
      %3540 = vrot.lane.b32.xlu0 %v2620, 95
      %v3541 = vpop.permute.xlu0 %3540
      %v3542 = vsel %vm862, %v3513, %v3515
      %v3543 = vsel %vm862, %v3515, %v3517
      %v3544 = vsel %vm862, %v3519, %v3521
      %v3545 = vsel %vm862, %v3521, %v3523
      %v3546 = vsel %vm862, %v3525, %v3527
      %v3547 = vsel %vm862, %v3527, %v3529
      %v3548 = vsel %vm862, %v3531, %v3533
      %v3549 = vsel %vm862, %v3533, %v3535
      %v3550 = vsel %vm862, %v3537, %v3539
      %v3551 = vsel %vm862, %v3539, %v3541
      %v3563 = vsel %vm2706, %v3507, 0
      %v3566 = vsel %vm2706, %v3508, 0
      %v3569 = vsel %vm2706, %v3509, 0
      %v3572 = vsel %vm2706, %v3510, 0
      %v3575 = vsel %vm2706, %v3511, 0
      %3577 = vmatprep.subr.bf16.mxu0 %v3543
      %3578 = vmatpush1.bf16.msra.mxu0 %v3542
      %3579 = vmatprep.subr.bf16.mxu0 %v3545
      %3580 = vmatpush1.bf16.msra.mxu0 %v3544
      %3581 = vmatprep.subr.bf16.mxu0 %v3547
      %3582 = vmatpush1.bf16.msra.mxu0 %v3546
      %3583 = vmatprep.subr.bf16.mxu0 %v3549
      %3584 = vmatpush1.bf16.msra.mxu0 %v3548
      %3585 = vmatprep.subr.bf16.mxu0 %v3551
      %3586 = vmatpush1.bf16.msra.mxu0 %v3550
      %3587 = vmatprep.subr.bf16.mxu0 0
      %3588 = vmatpush1.bf16.msra.mxu0 0
      %3589 = vmatprep.subr.bf16.mxu0 0
      %3590 = vmatpush1.bf16.msra.mxu0 0
      %3591 = vmatprep.subr.bf16.mxu0 0
      %3592 = vmatpush1.bf16.msra.mxu0 0
      %3593 = vmatprep.subr.bf16.mxu0 0
      %3594 = vmatpush1.bf16.msra.mxu0 0
      %3595 = vmatprep.subr.bf16.mxu0 0
      %3596 = vmatpush1.bf16.msra.mxu0 0
      %3597 = vmatprep.subr.bf16.mxu0 0
      %3598 = vmatpush1.bf16.msra.mxu0 0
      %3599 = vmatprep.subr.bf16.mxu0 0
      %3600 = vmatpush1.bf16.msra.mxu0 0
      %3601 = vmatprep.subr.bf16.mxu0 0
      %3602 = vmatpush1.bf16.msra.mxu0 0
      %3603 = vmatprep.subr.bf16.mxu0 0
      %3604 = vmatpush1.bf16.msra.mxu0 0
      %3605 = vmatprep.subr.bf16.mxu0 0
      %3606 = vmatpush1.bf16.msra.mxu0 0
      %3607 = vmatprep.subr.bf16.mxu0 0
      %3608 = vmatpush1.bf16.msra.mxu0 0
      %3609 = vmatprep.mubr.bf16.mxu0 0
      %3610 = vmatmul.mubr.bf16.gmra.mrb[0].mxu0 %v3563
      %v3611 = vpop.f32.mrb[0].mxu0
      %v3612 = vadd.f32 0.0, %v3611
      %v3613 = vpop.f32.mrb[0].mxu0
      %v3614 = vadd.f32 0.0, %v3613
      %v3615 = vpop.f32.mrb[0].mxu0
      %v3616 = vadd.f32 0.0, %v3615
      %v3617 = vpop.f32.mrb[0].mxu0
      %v3618 = vadd.f32 0.0, %v3617
      %3619 = vmatprep.mubr.bf16.mxu0 0
      %3620 = vmatmul.mubr.bf16.gmra.mrb[0].mxu0 %v3566
      %v3621 = vpop.f32.mrb[0].mxu0
      %v3622 = vadd.f32 0.0, %v3621
      %v3623 = vpop.f32.mrb[0].mxu0
      %v3624 = vadd.f32 0.0, %v3623
      %v3625 = vpop.f32.mrb[0].mxu0
      %v3626 = vadd.f32 0.0, %v3625
      %v3627 = vpop.f32.mrb[0].mxu0
      %v3628 = vadd.f32 0.0, %v3627
      %3629 = vmatprep.mubr.bf16.mxu0 0
      %3630 = vmatmul.mubr.bf16.gmra.mrb[0].mxu0 %v3569
      %v3631 = vpop.f32.mrb[0].mxu0
      %v3632 = vadd.f32 0.0, %v3631
      %v3633 = vpop.f32.mrb[0].mxu0
      %v3634 = vadd.f32 0.0, %v3633
      %v3635 = vpop.f32.mrb[0].mxu0
      %v3636 = vadd.f32 0.0, %v3635
      %v3637 = vpop.f32.mrb[0].mxu0
      %v3638 = vadd.f32 0.0, %v3637
      %3639 = vmatprep.mubr.bf16.mxu0 0
      %3640 = vmatmul.mubr.bf16.gmra.mrb[0].mxu0 %v3572
      %v3641 = vpop.f32.mrb[0].mxu0
      %v3642 = vadd.f32 0.0, %v3641
      %v3643 = vpop.f32.mrb[0].mxu0
      %v3644 = vadd.f32 0.0, %v3643
      %v3645 = vpop.f32.mrb[0].mxu0
      %v3646 = vadd.f32 0.0, %v3645
      %v3647 = vpop.f32.mrb[0].mxu0
      %v3648 = vadd.f32 0.0, %v3647
      %3649 = vmatprep.mubr.bf16.mxu0 0
      %3650 = vmatmul.mubr.bf16.gmra.mrb[0].mxu0 %v3575
      %v3651 = vpop.f32.mrb[0].mxu0
      %v3652 = vadd.f32 0.0, %v3651
      %v3653 = vpop.f32.mrb[0].mxu0
      %v3654 = vadd.f32 0.0, %v3653
      %v3655 = vpop.f32.mrb[0].mxu0
      %v3656 = vadd.f32 0.0, %v3655
      %v3657 = vpop.f32.mrb[0].mxu0
      %v3658 = vadd.f32 0.0, %v3657
      %3659 = vdwg.mxu0
      %v3660 = vadd.f32 %v3439, %v3612
      %v3661 = vadd.f32 %v3441, %v3614
      %v3662 = vadd.f32 %v3443, %v3616
      %v3663 = vadd.f32 %v3445, %v3618
      %v3664 = vadd.f32 %v3449, %v3622
      %v3665 = vadd.f32 %v3451, %v3624
      %v3666 = vadd.f32 %v3453, %v3626
      %v3667 = vadd.f32 %v3455, %v3628
      %v3668 = vadd.f32 %v3459, %v3632
      %v3669 = vadd.f32 %v3461, %v3634
      %v3670 = vadd.f32 %v3463, %v3636
      %v3671 = vadd.f32 %v3465, %v3638
      %v3672 = vadd.f32 %v3469, %v3642
      %v3673 = vadd.f32 %v3471, %v3644
      %v3674 = vadd.f32 %v3473, %v3646
      %v3675 = vadd.f32 %v3475, %v3648
      %v3676 = vadd.f32 %v3479, %v3652
      %v3677 = vadd.f32 %v3481, %v3654
      %v3678 = vadd.f32 %v3483, %v3656
      %v3679 = vadd.f32 %v3485, %v3658
      %v3680 = vadd.f32 %v3121, %v3660
      %v3681 = vadd.f32 %v3122, %v3661
      %v3682 = vadd.f32 %v3123, %v3662
      %v3683 = vadd.f32 %v3124, %v3663
      %v3684 = vadd.f32 %v3125, %v3664
      %v3685 = vadd.f32 %v3126, %v3665
      %v3686 = vadd.f32 %v3127, %v3666
      %v3687 = vadd.f32 %v3128, %v3667
      %v3688 = vadd.f32 %v3129, %v3668
      %v3689 = vadd.f32 %v3130, %v3669
      %v3690 = vadd.f32 %v3131, %v3670
      %v3691 = vadd.f32 %v3132, %v3671
      %v3692 = vadd.f32 %v3133, %v3672
      %v3693 = vadd.f32 %v3134, %v3673
      %v3694 = vadd.f32 %v3135, %v3674
      %v3695 = vadd.f32 %v3136, %v3675
      %v3696 = vadd.f32 %v3137, %v3676
      %v3697 = vadd.f32 %v3138, %v3677
      %v3698 = vadd.f32 %v3139, %v3678
      %v3699 = vadd.f32 %v3140, %v3679
      %v3710 = vunpack.c.l.b16 %v2496
      %v3711 = vunpack.c.l.b16 %v2497
      %v3712 = vunpack.c.l.b16 %v2498
      %v3713 = vunpack.c.l.b16 %v2499
      %v3714 = vunpack.c.l.b16 %v2500
      %v3715 = vunpack.c.l.b16 %v2501
      %v3716 = vunpack.c.l.b16 %v2502
      %v3717 = vunpack.c.l.b16 %v2503
      %v3718 = vunpack.c.l.b16 %v2504
      %v3719 = vunpack.c.l.b16 %v2505
      %v3720 = vpack.c.b16 %v3711, %v3710
      %v3721 = vpack.c.b16 %v3713, %v3712
      %v3722 = vpack.c.b16 %v3715, %v3714
      %v3723 = vpack.c.b16 %v3717, %v3716
      %v3724 = vpack.c.b16 %v3719, %v3718
      %3725 = vrot.lane.b32.xlu0 %v2597, 110
      %v3726 = vpop.permute.xlu0 %3725
      %3727 = vrot.lane.b32.xlu0 %v2586, 110
      %v3728 = vpop.permute.xlu0 %3727
      %3729 = vrot.lane.b32.xlu0 %v2612, 110
      %v3730 = vpop.permute.xlu0 %3729
      %3731 = vrot.lane.b32.xlu0 %v2600, 110
      %v3732 = vpop.permute.xlu0 %3731
      %3733 = vrot.lane.b32.xlu0 %v2587, 110
      %v3734 = vpop.permute.xlu0 %3733
      %3735 = vrot.lane.b32.xlu0 %v2614, 110
      %v3736 = vpop.permute.xlu0 %3735
      %3737 = vrot.lane.b32.xlu0 %v2603, 110
      %v3738 = vpop.permute.xlu0 %3737
      %3739 = vrot.lane.b32.xlu0 %v2588, 110
      %v3740 = vpop.permute.xlu0 %3739
      %3741 = vrot.lane.b32.xlu0 %v2616, 110
      %v3742 = vpop.permute.xlu0 %3741
      %3743 = vrot.lane.b32.xlu0 %v2606, 110
      %v3744 = vpop.permute.xlu0 %3743
      %3745 = vrot.lane.b32.xlu0 %v2589, 110
      %v3746 = vpop.permute.xlu0 %3745
      %3747 = vrot.lane.b32.xlu0 %v2618, 110
      %v3748 = vpop.permute.xlu0 %3747
      %3749 = vrot.lane.b32.xlu0 %v2609, 110
      %v3750 = vpop.permute.xlu0 %3749
      %3751 = vrot.lane.b32.xlu0 %v2590, 110
      %v3752 = vpop.permute.xlu0 %3751
      %3753 = vrot.lane.b32.xlu0 %v2620, 110
      %v3754 = vpop.permute.xlu0 %3753
      %v3755 = vsel %vm936, %v3726, %v3728
      %v3756 = vsel %vm936, %v3728, %v3730
      %v3757 = vsel %vm936, %v3732, %v3734
      %v3758 = vsel %vm936, %v3734, %v3736
      %v3759 = vsel %vm936, %v3738, %v3740
      %v3760 = vsel %vm936, %v3740, %v3742
      %v3761 = vsel %vm936, %v3744, %v3746
      %v3762 = vsel %vm936, %v3746, %v3748
      %v3763 = vsel %vm936, %v3750, %v3752
      %v3764 = vsel %vm936, %v3752, %v3754
      %v3776 = vsel %vm2706, %v3720, 0
      %v3779 = vsel %vm2706, %v3721, 0
      %v3782 = vsel %vm2706, %v3722, 0
      %v3785 = vsel %vm2706, %v3723, 0
      %v3788 = vsel %vm2706, %v3724, 0
      %3790 = vmatprep.subr.bf16.mxu0 %v3756
      %3791 = vmatpush1.bf16.msra.mxu0 %v3755
      %3792 = vmatprep.subr.bf16.mxu0 %v3758
      %3793 = vmatpush1.bf16.msra.mxu0 %v3757
      %3794 = vmatprep.subr.bf16.mxu0 %v3760
      %3795 = vmatpush1.bf16.msra.mxu0 %v3759
      %3796 = vmatprep.subr.bf16.mxu0 %v3762
      %3797 = vmatpush1.bf16.msra.mxu0 %v3761
      %3798 = vmatprep.subr.bf16.mxu0 %v3764
      %3799 = vmatpush1.bf16.msra.mxu0 %v3763
      %3800 = vmatprep.subr.bf16.mxu0 0
      %3801 = vmatpush1.bf16.msra.mxu0 0
      %3802 = vmatprep.subr.bf16.mxu0 0
      %3803 = vmatpush1.bf16.msra.mxu0 0
      %3804 = vmatprep.subr.bf16.mxu0 0
      %3805 = vmatpush1.bf16.msra.mxu0 0
      %3806 = vmatprep.subr.bf16.mxu0 0
      %3807 = vmatpush1.bf16.msra.mxu0 0
      %3808 = vmatprep.subr.bf16.mxu0 0
      %3809 = vmatpush1.bf16.msra.mxu0 0
      %3810 = vmatprep.subr.bf16.mxu0 0
      %3811 = vmatpush1.bf16.msra.mxu0 0
      %3812 = vmatprep.subr.bf16.mxu0 0
      %3813 = vmatpush1.bf16.msra.mxu0 0
      %3814 = vmatprep.subr.bf16.mxu0 0
      %3815 = vmatpush1.bf16.msra.mxu0 0
      %3816 = vmatprep.subr.bf16.mxu0 0
      %3817 = vmatpush1.bf16.msra.mxu0 0
      %3818 = vmatprep.subr.bf16.mxu0 0
      %3819 = vmatpush1.bf16.msra.mxu0 0
      %3820 = vmatprep.subr.bf16.mxu0 0
      %3821 = vmatpush1.bf16.msra.mxu0 0
      %3822 = vmatprep.mubr.bf16.mxu0 0
      %3823 = vmatmul.mubr.bf16.gmra.mrb[0].mxu0 %v3776
      %v3824 = vpop.f32.mrb[0].mxu0
      %v3825 = vadd.f32 0.0, %v3824
      %v3826 = vpop.f32.mrb[0].mxu0
      %v3827 = vadd.f32 0.0, %v3826
      %v3828 = vpop.f32.mrb[0].mxu0
      %v3829 = vadd.f32 0.0, %v3828
      %v3830 = vpop.f32.mrb[0].mxu0
      %v3831 = vadd.f32 0.0, %v3830
      %3832 = vmatprep.mubr.bf16.mxu0 0
      %3833 = vmatmul.mubr.bf16.gmra.mrb[0].mxu0 %v3779
      %v3834 = vpop.f32.mrb[0].mxu0
      %v3835 = vadd.f32 0.0, %v3834
      %v3836 = vpop.f32.mrb[0].mxu0
      %v3837 = vadd.f32 0.0, %v3836
      %v3838 = vpop.f32.mrb[0].mxu0
      %v3839 = vadd.f32 0.0, %v3838
      %v3840 = vpop.f32.mrb[0].mxu0
      %v3841 = vadd.f32 0.0, %v3840
      %3842 = vmatprep.mubr.bf16.mxu0 0
      %3843 = vmatmul.mubr.bf16.gmra.mrb[0].mxu0 %v3782
      %v3844 = vpop.f32.mrb[0].mxu0
      %v3845 = vadd.f32 0.0, %v3844
      %v3846 = vpop.f32.mrb[0].mxu0
      %v3847 = vadd.f32 0.0, %v3846
      %v3848 = vpop.f32.mrb[0].mxu0
      %v3849 = vadd.f32 0.0, %v3848
      %v3850 = vpop.f32.mrb[0].mxu0
      %v3851 = vadd.f32 0.0, %v3850
      %3852 = vmatprep.mubr.bf16.mxu0 0
      %3853 = vmatmul.mubr.bf16.gmra.mrb[0].mxu0 %v3785
      %v3854 = vpop.f32.mrb[0].mxu0
      %v3855 = vadd.f32 0.0, %v3854
      %v3856 = vpop.f32.mrb[0].mxu0
      %v3857 = vadd.f32 0.0, %v3856
      %v3858 = vpop.f32.mrb[0].mxu0
      %v3859 = vadd.f32 0.0, %v3858
      %v3860 = vpop.f32.mrb[0].mxu0
      %v3861 = vadd.f32 0.0, %v3860
      %3862 = vmatprep.mubr.bf16.mxu0 0
      %3863 = vmatmul.mubr.bf16.gmra.mrb[0].mxu0 %v3788
      %v3864 = vpop.f32.mrb[0].mxu0
      %v3865 = vadd.f32 0.0, %v3864
      %v3866 = vpop.f32.mrb[0].mxu0
      %v3867 = vadd.f32 0.0, %v3866
      %v3868 = vpop.f32.mrb[0].mxu0
      %v3869 = vadd.f32 0.0, %v3868
      %v3870 = vpop.f32.mrb[0].mxu0
      %v3871 = vadd.f32 0.0, %v3870
      %3872 = vdwg.mxu0
      %v3883 = vunpack.c.l.b16 %v2466
      %v3884 = vunpack.c.l.b16 %v2467
      %v3885 = vunpack.c.l.b16 %v2468
      %v3886 = vunpack.c.l.b16 %v2469
      %v3887 = vunpack.c.l.b16 %v2470
      %v3888 = vunpack.c.l.b16 %v2471
      %v3889 = vunpack.c.l.b16 %v2472
      %v3890 = vunpack.c.l.b16 %v2473
      %v3891 = vunpack.c.l.b16 %v2474
      %v3892 = vunpack.c.l.b16 %v2475
      %v3893 = vpack.c.b16 %v3884, %v3883
      %v3894 = vpack.c.b16 %v3886, %v3885
      %v3895 = vpack.c.b16 %v3888, %v3887
      %v3896 = vpack.c.b16 %v3890, %v3889
      %v3897 = vpack.c.b16 %v3892, %v3891
      %3898 = vrot.lane.b32.xlu0 %v2597, 126
      %v3899 = vpop.permute.xlu0 %3898
      %3900 = vrot.lane.b32.xlu0 %v2586, 126
      %v3901 = vpop.permute.xlu0 %3900
      %3902 = vrot.lane.b32.xlu0 %v2612, 126
      %v3903 = vpop.permute.xlu0 %3902
      %3904 = vrot.lane.b32.xlu0 %v2600, 126
      %v3905 = vpop.permute.xlu0 %3904
      %3906 = vrot.lane.b32.xlu0 %v2587, 126
      %v3907 = vpop.permute.xlu0 %3906
      %3908 = vrot.lane.b32.xlu0 %v2614, 126
      %v3909 = vpop.permute.xlu0 %3908
      %3910 = vrot.lane.b32.xlu0 %v2603, 126
      %v3911 = vpop.permute.xlu0 %3910
      %3912 = vrot.lane.b32.xlu0 %v2588, 126
      %v3913 = vpop.permute.xlu0 %3912
      %3914 = vrot.lane.b32.xlu0 %v2616, 126
      %v3915 = vpop.permute.xlu0 %3914
      %3916 = vrot.lane.b32.xlu0 %v2606, 126
      %v3917 = vpop.permute.xlu0 %3916
      %3918 = vrot.lane.b32.xlu0 %v2589, 126
      %v3919 = vpop.permute.xlu0 %3918
      %3920 = vrot.lane.b32.xlu0 %v2618, 126
      %v3921 = vpop.permute.xlu0 %3920
      %3922 = vrot.lane.b32.xlu0 %v2609, 126
      %v3923 = vpop.permute.xlu0 %3922
      %3924 = vrot.lane.b32.xlu0 %v2590, 126
      %v3925 = vpop.permute.xlu0 %3924
      %3926 = vrot.lane.b32.xlu0 %v2620, 126
      %v3927 = vpop.permute.xlu0 %3926
      %v3928 = vsel %vm1002, %v3899, %v3901
      %v3929 = vsel %vm1002, %v3901, %v3903
      %v3930 = vsel %vm1002, %v3905, %v3907
      %v3931 = vsel %vm1002, %v3907, %v3909
      %v3932 = vsel %vm1002, %v3911, %v3913
      %v3933 = vsel %vm1002, %v3913, %v3915
      %v3934 = vsel %vm1002, %v3917, %v3919
      %v3935 = vsel %vm1002, %v3919, %v3921
      %v3936 = vsel %vm1002, %v3923, %v3925
      %v3937 = vsel %vm1002, %v3925, %v3927
      %v3949 = vsel %vm2706, %v3893, 0
      %v3952 = vsel %vm2706, %v3894, 0
      %v3955 = vsel %vm2706, %v3895, 0
      %v3958 = vsel %vm2706, %v3896, 0
      %v3961 = vsel %vm2706, %v3897, 0
      %3963 = vmatprep.subr.bf16.mxu0 %v3929
      %3964 = vmatpush1.bf16.msra.mxu0 %v3928
      %3965 = vmatprep.subr.bf16.mxu0 %v3931
      %3966 = vmatpush1.bf16.msra.mxu0 %v3930
      %3967 = vmatprep.subr.bf16.mxu0 %v3933
      %3968 = vmatpush1.bf16.msra.mxu0 %v3932
      %3969 = vmatprep.subr.bf16.mxu0 %v3935
      %3970 = vmatpush1.bf16.msra.mxu0 %v3934
      %3971 = vmatprep.subr.bf16.mxu0 %v3937
      %3972 = vmatpush1.bf16.msra.mxu0 %v3936
      %3973 = vmatprep.subr.bf16.mxu0 0
      %3974 = vmatpush1.bf16.msra.mxu0 0
      %3975 = vmatprep.subr.bf16.mxu0 0
      %3976 = vmatpush1.bf16.msra.mxu0 0
      %3977 = vmatprep.subr.bf16.mxu0 0
      %3978 = vmatpush1.bf16.msra.mxu0 0
      %3979 = vmatprep.subr.bf16.mxu0 0
      %3980 = vmatpush1.bf16.msra.mxu0 0
      %3981 = vmatprep.subr.bf16.mxu0 0
      %3982 = vmatpush1.bf16.msra.mxu0 0
      %3983 = vmatprep.subr.bf16.mxu0 0
      %3984 = vmatpush1.bf16.msra.mxu0 0
      %3985 = vmatprep.subr.bf16.mxu0 0
      %3986 = vmatpush1.bf16.msra.mxu0 0
      %3987 = vmatprep.subr.bf16.mxu0 0
      %3988 = vmatpush1.bf16.msra.mxu0 0
      %3989 = vmatprep.subr.bf16.mxu0 0
      %3990 = vmatpush1.bf16.msra.mxu0 0
      %3991 = vmatprep.subr.bf16.mxu0 0
      %3992 = vmatpush1.bf16.msra.mxu0 0
      %3993 = vmatprep.subr.bf16.mxu0 0
      %3994 = vmatpush1.bf16.msra.mxu0 0
      %3995 = vmatprep.mubr.bf16.mxu0 0
      %3996 = vmatmul.mubr.bf16.gmra.mrb[0].mxu0 %v3949
      %v3997 = vpop.f32.mrb[0].mxu0
      %v3998 = vadd.f32 %v3825, %v3997
      %v3999 = vpop.f32.mrb[0].mxu0
      %v4000 = vadd.f32 %v3827, %v3999
      %v4001 = vpop.f32.mrb[0].mxu0
      %v4002 = vadd.f32 %v3829, %v4001
      %v4003 = vpop.f32.mrb[0].mxu0
      %v4004 = vadd.f32 %v3831, %v4003
      %4005 = vmatprep.mubr.bf16.mxu0 0
      %4006 = vmatmul.mubr.bf16.gmra.mrb[0].mxu0 %v3952
      %v4007 = vpop.f32.mrb[0].mxu0
      %v4008 = vadd.f32 %v3835, %v4007
      %v4009 = vpop.f32.mrb[0].mxu0
      %v4010 = vadd.f32 %v3837, %v4009
      %v4011 = vpop.f32.mrb[0].mxu0
      %v4012 = vadd.f32 %v3839, %v4011
      %v4013 = vpop.f32.mrb[0].mxu0
      %v4014 = vadd.f32 %v3841, %v4013
      %4015 = vmatprep.mubr.bf16.mxu0 0
      %4016 = vmatmul.mubr.bf16.gmra.mrb[0].mxu0 %v3955
      %v4017 = vpop.f32.mrb[0].mxu0
      %v4018 = vadd.f32 %v3845, %v4017
      %v4019 = vpop.f32.mrb[0].mxu0
      %v4020 = vadd.f32 %v3847, %v4019
      %v4021 = vpop.f32.mrb[0].mxu0
      %v4022 = vadd.f32 %v3849, %v4021
      %v4023 = vpop.f32.mrb[0].mxu0
      %v4024 = vadd.f32 %v3851, %v4023
      %4025 = vmatprep.mubr.bf16.mxu0 0
      %4026 = vmatmul.mubr.bf16.gmra.mrb[0].mxu0 %v3958
      %v4027 = vpop.f32.mrb[0].mxu0
      %v4028 = vadd.f32 %v3855, %v4027
      %v4029 = vpop.f32.mrb[0].mxu0
      %v4030 = vadd.f32 %v3857, %v4029
      %v4031 = vpop.f32.mrb[0].mxu0
      %v4032 = vadd.f32 %v3859, %v4031
      %v4033 = vpop.f32.mrb[0].mxu0
      %v4034 = vadd.f32 %v3861, %v4033
      %4035 = vmatprep.mubr.bf16.mxu0 0
      %4036 = vmatmul.mubr.bf16.gmra.mrb[0].mxu0 %v3961
      %v4037 = vpop.f32.mrb[0].mxu0
      %v4038 = vadd.f32 %v3865, %v4037
      %v4039 = vpop.f32.mrb[0].mxu0
      %v4040 = vadd.f32 %v3867, %v4039
      %v4041 = vpop.f32.mrb[0].mxu0
      %v4042 = vadd.f32 %v3869, %v4041
      %v4043 = vpop.f32.mrb[0].mxu0
      %v4044 = vadd.f32 %v3871, %v4043
      %4045 = vdwg.mxu0
      %v4056 = vunpack.c.l.b16 %v2526
      %v4057 = vunpack.c.l.b16 %v2527
      %v4058 = vunpack.c.l.b16 %v2528
      %v4059 = vunpack.c.l.b16 %v2529
      %v4060 = vunpack.c.l.b16 %v2530
      %v4061 = vunpack.c.l.b16 %v2531
      %v4062 = vunpack.c.l.b16 %v2532
      %v4063 = vunpack.c.l.b16 %v2533
      %v4064 = vunpack.c.l.b16 %v2534
      %v4065 = vunpack.c.l.b16 %v2535
      %v4066 = vpack.c.b16 %v4057, %v4056
      %v4067 = vpack.c.b16 %v4059, %v4058
      %v4068 = vpack.c.b16 %v4061, %v4060
      %v4069 = vpack.c.b16 %v4063, %v4062
      %v4070 = vpack.c.b16 %v4065, %v4064
      %4071 = vrot.lane.b32.xlu0 %v2597, 94
      %v4072 = vpop.permute.xlu0 %4071
      %4073 = vrot.lane.b32.xlu0 %v2586, 94
      %v4074 = vpop.permute.xlu0 %4073
      %4075 = vrot.lane.b32.xlu0 %v2612, 94
      %v4076 = vpop.permute.xlu0 %4075
      %4077 = vrot.lane.b32.xlu0 %v2600, 94
      %v4078 = vpop.permute.xlu0 %4077
      %4079 = vrot.lane.b32.xlu0 %v2587, 94
      %v4080 = vpop.permute.xlu0 %4079
      %4081 = vrot.lane.b32.xlu0 %v2614, 94
      %v4082 = vpop.permute.xlu0 %4081
      %4083 = vrot.lane.b32.xlu0 %v2603, 94
      %v4084 = vpop.permute.xlu0 %4083
      %4085 = vrot.lane.b32.xlu0 %v2588, 94
      %v4086 = vpop.permute.xlu0 %4085
      %4087 = vrot.lane.b32.xlu0 %v2616, 94
      %v4088 = vpop.permute.xlu0 %4087
      %4089 = vrot.lane.b32.xlu0 %v2606, 94
      %v4090 = vpop.permute.xlu0 %4089
      %4091 = vrot.lane.b32.xlu0 %v2589, 94
      %v4092 = vpop.permute.xlu0 %4091
      %4093 = vrot.lane.b32.xlu0 %v2618, 94
      %v4094 = vpop.permute.xlu0 %4093
      %4095 = vrot.lane.b32.xlu0 %v2609, 94
      %v4096 = vpop.permute.xlu0 %4095
      %4097 = vrot.lane.b32.xlu0 %v2590, 94
      %v4098 = vpop.permute.xlu0 %4097
      %4099 = vrot.lane.b32.xlu0 %v2620, 94
      %v4100 = vpop.permute.xlu0 %4099
      %v4101 = vsel %vm1068, %v4072, %v4074
      %v4102 = vsel %vm1068, %v4074, %v4076
      %v4103 = vsel %vm1068, %v4078, %v4080
      %v4104 = vsel %vm1068, %v4080, %v4082
      %v4105 = vsel %vm1068, %v4084, %v4086
      %v4106 = vsel %vm1068, %v4086, %v4088
      %v4107 = vsel %vm1068, %v4090, %v4092
      %v4108 = vsel %vm1068, %v4092, %v4094
      %v4109 = vsel %vm1068, %v4096, %v4098
      %v4110 = vsel %vm1068, %v4098, %v4100
      %v4122 = vsel %vm2706, %v4066, 0
      %v4125 = vsel %vm2706, %v4067, 0
      %v4128 = vsel %vm2706, %v4068, 0
      %v4131 = vsel %vm2706, %v4069, 0
      %v4134 = vsel %vm2706, %v4070, 0
      %4136 = vmatprep.subr.bf16.mxu0 %v4102
      %4137 = vmatpush1.bf16.msra.mxu0 %v4101
      %4138 = vmatprep.subr.bf16.mxu0 %v4104
      %4139 = vmatpush1.bf16.msra.mxu0 %v4103
      %4140 = vmatprep.subr.bf16.mxu0 %v4106
      %4141 = vmatpush1.bf16.msra.mxu0 %v4105
      %4142 = vmatprep.subr.bf16.mxu0 %v4108
      %4143 = vmatpush1.bf16.msra.mxu0 %v4107
      %4144 = vmatprep.subr.bf16.mxu0 %v4110
      %4145 = vmatpush1.bf16.msra.mxu0 %v4109
      %4146 = vmatprep.subr.bf16.mxu0 0
      %4147 = vmatpush1.bf16.msra.mxu0 0
      %4148 = vmatprep.subr.bf16.mxu0 0
      %4149 = vmatpush1.bf16.msra.mxu0 0
      %4150 = vmatprep.subr.bf16.mxu0 0
      %4151 = vmatpush1.bf16.msra.mxu0 0
      %4152 = vmatprep.subr.bf16.mxu0 0
      %4153 = vmatpush1.bf16.msra.mxu0 0
      %4154 = vmatprep.subr.bf16.mxu0 0
      %4155 = vmatpush1.bf16.msra.mxu0 0
      %4156 = vmatprep.subr.bf16.mxu0 0
      %4157 = vmatpush1.bf16.msra.mxu0 0
      %4158 = vmatprep.subr.bf16.mxu0 0
      %4159 = vmatpush1.bf16.msra.mxu0 0
      %4160 = vmatprep.subr.bf16.mxu0 0
      %4161 = vmatpush1.bf16.msra.mxu0 0
      %4162 = vmatprep.subr.bf16.mxu0 0
      %4163 = vmatpush1.bf16.msra.mxu0 0
      %4164 = vmatprep.subr.bf16.mxu0 0
      %4165 = vmatpush1.bf16.msra.mxu0 0
      %4166 = vmatprep.subr.bf16.mxu0 0
      %4167 = vmatpush1.bf16.msra.mxu0 0
      %4168 = vmatprep.mubr.bf16.mxu0 0
      %4169 = vmatmul.mubr.bf16.gmra.mrb[0].mxu0 %v4122
      %v4170 = vpop.f32.mrb[0].mxu0
      %v4171 = vadd.f32 0.0, %v4170
      %v4172 = vpop.f32.mrb[0].mxu0
      %v4173 = vadd.f32 0.0, %v4172
      %v4174 = vpop.f32.mrb[0].mxu0
      %v4175 = vadd.f32 0.0, %v4174
      %v4176 = vpop.f32.mrb[0].mxu0
      %v4177 = vadd.f32 0.0, %v4176
      %4178 = vmatprep.mubr.bf16.mxu0 0
      %4179 = vmatmul.mubr.bf16.gmra.mrb[0].mxu0 %v4125
      %v4180 = vpop.f32.mrb[0].mxu0
      %v4181 = vadd.f32 0.0, %v4180
      %v4182 = vpop.f32.mrb[0].mxu0
      %v4183 = vadd.f32 0.0, %v4182
      %v4184 = vpop.f32.mrb[0].mxu0
      %v4185 = vadd.f32 0.0, %v4184
      %v4186 = vpop.f32.mrb[0].mxu0
      %v4187 = vadd.f32 0.0, %v4186
      %4188 = vmatprep.mubr.bf16.mxu0 0
      %4189 = vmatmul.mubr.bf16.gmra.mrb[0].mxu0 %v4128
      %v4190 = vpop.f32.mrb[0].mxu0
      %v4191 = vadd.f32 0.0, %v4190
      %v4192 = vpop.f32.mrb[0].mxu0
      %v4193 = vadd.f32 0.0, %v4192
      %v4194 = vpop.f32.mrb[0].mxu0
      %v4195 = vadd.f32 0.0, %v4194
      %v4196 = vpop.f32.mrb[0].mxu0
      %v4197 = vadd.f32 0.0, %v4196
      %4198 = vmatprep.mubr.bf16.mxu0 0
      %4199 = vmatmul.mubr.bf16.gmra.mrb[0].mxu0 %v4131
      %v4200 = vpop.f32.mrb[0].mxu0
      %v4201 = vadd.f32 0.0, %v4200
      %v4202 = vpop.f32.mrb[0].mxu0
      %v4203 = vadd.f32 0.0, %v4202
      %v4204 = vpop.f32.mrb[0].mxu0
      %v4205 = vadd.f32 0.0, %v4204
      %v4206 = vpop.f32.mrb[0].mxu0
      %v4207 = vadd.f32 0.0, %v4206
      %4208 = vmatprep.mubr.bf16.mxu0 0
      %4209 = vmatmul.mubr.bf16.gmra.mrb[0].mxu0 %v4134
      %v4210 = vpop.f32.mrb[0].mxu0
      %v4211 = vadd.f32 0.0, %v4210
      %v4212 = vpop.f32.mrb[0].mxu0
      %v4213 = vadd.f32 0.0, %v4212
      %v4214 = vpop.f32.mrb[0].mxu0
      %v4215 = vadd.f32 0.0, %v4214
      %v4216 = vpop.f32.mrb[0].mxu0
      %v4217 = vadd.f32 0.0, %v4216
      %4218 = vdwg.mxu0
      %v4219 = vadd.f32 %v3998, %v4171
      %v4220 = vadd.f32 %v4000, %v4173
      %v4221 = vadd.f32 %v4002, %v4175
      %v4222 = vadd.f32 %v4004, %v4177
      %v4223 = vadd.f32 %v4008, %v4181
      %v4224 = vadd.f32 %v4010, %v4183
      %v4225 = vadd.f32 %v4012, %v4185
      %v4226 = vadd.f32 %v4014, %v4187
      %v4227 = vadd.f32 %v4018, %v4191
      %v4228 = vadd.f32 %v4020, %v4193
      %v4229 = vadd.f32 %v4022, %v4195
      %v4230 = vadd.f32 %v4024, %v4197
      %v4231 = vadd.f32 %v4028, %v4201
      %v4232 = vadd.f32 %v4030, %v4203
      %v4233 = vadd.f32 %v4032, %v4205
      %v4234 = vadd.f32 %v4034, %v4207
      %v4235 = vadd.f32 %v4038, %v4211
      %v4236 = vadd.f32 %v4040, %v4213
      %v4237 = vadd.f32 %v4042, %v4215
      %v4238 = vadd.f32 %v4044, %v4217
      %v4239 = vmul.f32 %v4219, %v472
      %v4240 = vmul.f32 %v4220, %v473
      %v4241 = vmul.f32 %v4221, %v472
      %v4242 = vmul.f32 %v4222, %v473
      %v4243 = vmul.f32 %v4223, %v472
      %v4244 = vmul.f32 %v4224, %v473
      %v4245 = vmul.f32 %v4225, %v472
      %v4246 = vmul.f32 %v4226, %v473
      %v4247 = vmul.f32 %v4227, %v472
      %v4248 = vmul.f32 %v4228, %v473
      %v4249 = vmul.f32 %v4229, %v472
      %v4250 = vmul.f32 %v4230, %v473
      %v4251 = vmul.f32 %v4231, %v472
      %v4252 = vmul.f32 %v4232, %v473
      %v4253 = vmul.f32 %v4233, %v472
      %v4254 = vmul.f32 %v4234, %v473
      %v4255 = vmul.f32 %v4235, %v472
      %v4256 = vmul.f32 %v4236, %v473
      %v4257 = vmul.f32 %v4237, %v472
      %v4258 = vmul.f32 %v4238, %v473
      %v4259 = vadd.f32 %v3680, %v4239
      %v4260 = vadd.f32 %v3681, %v4240
      %v4261 = vadd.f32 %v3682, %v4241
      %v4262 = vadd.f32 %v3683, %v4242
      %v4263 = vadd.f32 %v3684, %v4243
      %v4264 = vadd.f32 %v3685, %v4244
      %v4265 = vadd.f32 %v3686, %v4245
      %v4266 = vadd.f32 %v3687, %v4246
      %v4267 = vadd.f32 %v3688, %v4247
      %v4268 = vadd.f32 %v3689, %v4248
      %v4269 = vadd.f32 %v3690, %v4249
      %v4270 = vadd.f32 %v3691, %v4250
      %v4271 = vadd.f32 %v3692, %v4251
      %v4272 = vadd.f32 %v3693, %v4252
      %v4273 = vadd.f32 %v3694, %v4253
      %v4274 = vadd.f32 %v3695, %v4254
      %v4275 = vadd.f32 %v3696, %v4255
      %v4276 = vadd.f32 %v3697, %v4256
      %v4277 = vadd.f32 %v3698, %v4257
      %v4278 = vadd.f32 %v3699, %v4258
      %4280 = vset.pattern.permute.xlu0 0
      %4281 = vperm.xlu0 %4280, %v2536
      %v4282 = vpop.permute.xlu0 %4281
      %4285 = vset.pattern.permute.xlu0 0
      %4286 = vperm.xlu0 %4285, %v2537
      %v4287 = vpop.permute.xlu0 %4286
      %4290 = vset.pattern.permute.xlu0 0
      %4291 = vperm.xlu0 %4290, %v2538
      %v4292 = vpop.permute.xlu0 %4291
      %4295 = vset.pattern.permute.xlu0 0
      %4296 = vperm.xlu0 %4295, %v2539
      %v4297 = vpop.permute.xlu0 %4296
      %4300 = vset.pattern.permute.xlu0 0
      %4301 = vperm.xlu0 %4300, %v2540
      %v4302 = vpop.permute.xlu0 %4301
      %4305 = vset.pattern.permute.xlu0 0
      %4306 = vperm.xlu0 %4305, %v2541
      %v4307 = vpop.permute.xlu0 %4306
      %4310 = vset.pattern.permute.xlu0 0
      %4311 = vperm.xlu0 %4310, %v2542
      %v4312 = vpop.permute.xlu0 %4311
      %4315 = vset.pattern.permute.xlu0 0
      %4316 = vperm.xlu0 %4315, %v2543
      %v4317 = vpop.permute.xlu0 %4316
      %4320 = vset.pattern.permute.xlu0 0
      %4321 = vperm.xlu0 %4320, %v2544
      %v4322 = vpop.permute.xlu0 %4321
      %4325 = vset.pattern.permute.xlu0 0
      %4326 = vperm.xlu0 %4325, %v2545
      %v4327 = vpop.permute.xlu0 %4326
      %v4329 = vadd.f32 %v4259, %v4282
      %v4330 = vadd.f32 %v4260, %v4282
      %v4331 = vadd.f32 %v4261, %v4287
      %v4332 = vadd.f32 %v4262, %v4287
      %v4333 = vadd.f32 %v4263, %v4292
      %v4334 = vadd.f32 %v4264, %v4292
      %v4335 = vadd.f32 %v4265, %v4297
      %v4336 = vadd.f32 %v4266, %v4297
      %v4337 = vadd.f32 %v4267, %v4302
      %v4338 = vadd.f32 %v4268, %v4302
      %v4339 = vadd.f32 %v4269, %v4307
      %v4340 = vadd.f32 %v4270, %v4307
      %v4341 = vadd.f32 %v4271, %v4312
      %v4342 = vadd.f32 %v4272, %v4312
      %v4343 = vadd.f32 %v4273, %v4317
      %v4344 = vadd.f32 %v4274, %v4317
      %v4345 = vadd.f32 %v4275, %v4322
      %v4346 = vadd.f32 %v4276, %v4322
      %v4347 = vadd.f32 %v4277, %v4327
      %v4348 = vadd.f32 %v4278, %v4327
      %v4349 = vmax.f32 %v4329, 0.0
      %v4350 = vmax.f32 %v4330, 0.0
      %v4351 = vmax.f32 %v4331, 0.0
      %v4352 = vmax.f32 %v4332, 0.0
      %v4353 = vmax.f32 %v4333, 0.0
      %v4354 = vmax.f32 %v4334, 0.0
      %v4355 = vmax.f32 %v4335, 0.0
      %v4356 = vmax.f32 %v4336, 0.0
      %v4357 = vmax.f32 %v4337, 0.0
      %v4358 = vmax.f32 %v4338, 0.0
      %v4359 = vmax.f32 %v4339, 0.0
      %v4360 = vmax.f32 %v4340, 0.0
      %v4361 = vmax.f32 %v4341, 0.0
      %v4362 = vmax.f32 %v4342, 0.0
      %v4363 = vmax.f32 %v4343, 0.0
      %v4364 = vmax.f32 %v4344, 0.0
      %v4365 = vmax.f32 %v4345, 0.0
      %v4366 = vmax.f32 %v4346, 0.0
      %v4367 = vmax.f32 %v4347, 0.0
      %v4368 = vmax.f32 %v4348, 0.0
      %v4369 = vld [vmem:[%s8] sm:$0xf]
      %v4370 = vld [vmem:[%s8 + $0x4] sm:$0xf]
      %v4371 = vld [vmem:[%s8 + $0x8] sm:$0xf]
      %v4372 = vld [vmem:[%s8 + $0xc] sm:$0xf]
      %v4373 = vld [vmem:[%s8 + $0x10] sm:$0xf]
      %v4374 = vld [vmem:[%s8 + $0x14] sm:$0xf]
      %v4375 = vld [vmem:[%s8 + $0x18] sm:$0xf]
      %v4376 = vld [vmem:[%s8 + $0x1c] sm:$0xf]
      %v4377 = vld [vmem:[%s8 + $0x20] sm:$0xf]
      %v4378 = vld [vmem:[%s8 + $0x24] sm:$0xf]
      %v4379 = vld [vmem:[%s8 + $0x28] sm:$0xf]
      %v4380 = vld [vmem:[%s8 + $0x2c] sm:$0xf]
      %v4381 = vld [vmem:[%s8 + $0x30] sm:$0xf]
      %v4382 = vld [vmem:[%s8 + $0x34] sm:$0xf]
      %v4383 = vld [vmem:[%s8 + $0x38] sm:$0xf]
      %v4384 = vld [vmem:[%s8 + $0x3c] sm:$0xf]
      %v4385 = vld [vmem:[%s8 + $0x40] sm:$0xf]
      %v4386 = vld [vmem:[%s8 + $0x44] sm:$0xf]
      %v4387 = vld [vmem:[%s8 + $0x48] sm:$0xf]
      %v4388 = vld [vmem:[%s8 + $0x4c] sm:$0xf]
      %v4389 = vld [vmem:[%s8 + $0x50] sm:$0xf]
      %v4390 = vld [vmem:[%s8 + $0x54] sm:$0xf]
      %v4391 = vld [vmem:[%s8 + $0x58] sm:$0xf]
      %v4392 = vld [vmem:[%s8 + $0x5c] sm:$0xf]
      %v4393 = vld [vmem:[%s8 + $0x60] sm:$0xf]
      %v4394 = vld [vmem:[%s8 + $0x64] sm:$0xf]
      %v4395 = vld [vmem:[%s8 + $0x68] sm:$0xf]
      %v4396 = vld [vmem:[%s8 + $0x6c] sm:$0xf]
      %v4397 = vld [vmem:[%s8 + $0x70] sm:$0xf]
      %v4398 = vld [vmem:[%s8 + $0x74] sm:$0xf]
      %v4399 = vld [vmem:[%s8 + $0x78] sm:$0xf]
      %v4400 = vld [vmem:[%s8 + $0x7c] sm:$0xf]
      %v4401 = vld [vmem:[%s8 + $0x80] sm:$0xf]
      %v4402 = vld [vmem:[%s8 + $0x84] sm:$0xf]
      %v4403 = vld [vmem:[%s8 + $0x88] sm:$0xf]
      %v4404 = vld [vmem:[%s8 + $0x8c] sm:$0xf]
      %v4405 = vld [vmem:[%s8 + $0x90] sm:$0xf]
      %v4406 = vld [vmem:[%s8 + $0x94] sm:$0xf]
      %v4407 = vld [vmem:[%s8 + $0x98] sm:$0xf]
      %v4408 = vld [vmem:[%s8 + $0x9c] sm:$0xf]
      %v4409 = vld [vmem:[%s8 + $0xa0] sm:$0xf]
      %v4410 = vld [vmem:[%s8 + $0xa4] sm:$0xf]
      %v4411 = vld [vmem:[%s8 + $0xa8] sm:$0xf]
      %v4412 = vld [vmem:[%s8 + $0xac] sm:$0xf]
      %v4413 = vld [vmem:[%s8 + $0xb0] sm:$0xf]
      %v4414 = vld [vmem:[%s8 + $0xb4] sm:$0xf]
      %v4415 = vld [vmem:[%s8 + $0xb8] sm:$0xf]
      %v4416 = vld [vmem:[%s8 + $0xbc] sm:$0xf]
      %v4417 = vld [vmem:[%s8 + $0xc0] sm:$0xf]
      %v4418 = vld [vmem:[%s8 + $0xc4] sm:$0xf]
      %v4419 = vld [vmem:[%s8 + $0xc8] sm:$0xf]
      %v4420 = vld [vmem:[%s8 + $0xcc] sm:$0xf]
      %v4421 = vld [vmem:[%s8 + $0xd0] sm:$0xf]
      %v4422 = vld [vmem:[%s8 + $0xd4] sm:$0xf]
      %v4423 = vld [vmem:[%s8 + $0xd8] sm:$0xf]
      %v4424 = vld [vmem:[%s8 + $0xdc] sm:$0xf]
      %v4425 = vld [vmem:[%s8 + $0xe0] sm:$0xf]
      %v4426 = vld [vmem:[%s8 + $0xe4] sm:$0xf]
      %v4427 = vld [vmem:[%s8 + $0xe8] sm:$0xf]
      %v4428 = vld [vmem:[%s8 + $0xec] sm:$0xf]
      %v4429 = vld [vmem:[%s8 + $0xf0] sm:$0xf]
      %v4430 = vld [vmem:[%s8 + $0xf4] sm:$0xf]
      %v4431 = vld [vmem:[%s8 + $0xf8] sm:$0xf]
      %v4432 = vld [vmem:[%s8 + $0xfc] sm:$0xf]
      %v4433 = vld [vmem:[%s8 + $0x100] sm:$0xf]
      %v4434 = vld [vmem:[%s8 + $0x104] sm:$0xf]
      %v4435 = vld [vmem:[%s8 + $0x108] sm:$0xf]
      %v4436 = vld [vmem:[%s8 + $0x10c] sm:$0xf]
      %v4437 = vld [vmem:[%s8 + $0x110] sm:$0xf]
      %v4438 = vld [vmem:[%s8 + $0x114] sm:$0xf]
      %v4439 = vld [vmem:[%s8 + $0x118] sm:$0xf]
      %v4440 = vld [vmem:[%s8 + $0x11c] sm:$0xf]
      %v4441 = vld [vmem:[%s8 + $0x120] sm:$0xf]
      %v4442 = vld [vmem:[%s8 + $0x124] sm:$0xf]
      %v4443 = vld [vmem:[%s8 + $0x128] sm:$0xf]
      %v4444 = vld [vmem:[%s8 + $0x12c] sm:$0xf]
      %v4445 = vld [vmem:[%s8 + $0x130] sm:$0xf]
      %v4446 = vld [vmem:[%s8 + $0x134] sm:$0xf]
      %v4447 = vld [vmem:[%s8 + $0x138] sm:$0xf]
      %v4448 = vld [vmem:[%s8 + $0x13c] sm:$0xf]
      %v4449 = vld [vmem:[%s8 + $0x140] sm:$0xf]
      %v4450 = vld [vmem:[%s8 + $0x144] sm:$0xf]
      %v4451 = vld [vmem:[%s8 + $0x148] sm:$0xf]
      %v4452 = vld [vmem:[%s8 + $0x14c] sm:$0xf]
      %v4453 = vld [vmem:[%s8 + $0x150] sm:$0xf]
      %v4454 = vld [vmem:[%s8 + $0x154] sm:$0xf]
      %v4455 = vld [vmem:[%s8 + $0x158] sm:$0xf]
      %v4456 = vld [vmem:[%s8 + $0x15c] sm:$0xf]
      %v4457 = vld [vmem:[%s8 + $0x160] sm:$0xf]
      %v4458 = vld [vmem:[%s8 + $0x164] sm:$0xf]
      %v4459 = vld [vmem:[%s9] sm:$0xff]
      %v4460 = vld [vmem:[%s9 + $0x8] sm:$0xff]
      %v4461 = vld [vmem:[%s9 + $0x10] sm:$0xff]
      %v4462 = vld [vmem:[%s9 + $0x18] sm:$0xff]
      %v4463 = vld [vmem:[%s9 + $0x20] sm:$0xff]
      %v4464 = vld [vmem:[%s9 + $0x28] sm:$0xff]
      %v4465 = vld [vmem:[%s9 + $0x30] sm:$0xff]
      %v4466 = vld [vmem:[%s9 + $0x38] sm:$0xff]
      %v4467 = vld [vmem:[%s9 + $0x40] sm:$0xff]
      %v4468 = vld [vmem:[%s9 + $0x48] sm:$0xff]
      %v4469 = vpack.c.bf16 %v4351, %v4349
      %v4470 = vpack.c.bf16 %v4352, %v4350
      %v4471 = vpack.c.bf16 %v4355, %v4353
      %v4472 = vpack.c.bf16 %v4356, %v4354
      %v4473 = vpack.c.bf16 %v4359, %v4357
      %v4474 = vpack.c.bf16 %v4360, %v4358
      %v4475 = vpack.c.bf16 %v4363, %v4361
      %v4476 = vpack.c.bf16 %v4364, %v4362
      %v4477 = vpack.c.bf16 %v4367, %v4365
      %v4478 = vpack.c.bf16 %v4368, %v4366
      %4489 = vrot.lane.b32.xlu0 %v4469, 17
      %v4490 = vpop.permute.xlu0 %4489
      %4491 = vrot.lane.b32.xlu0 %v4470, 17
      %v4492 = vpop.permute.xlu0 %4491
      %4493 = vrot.lane.b32.xlu0 %v4471, 17
      %v4494 = vpop.permute.xlu0 %4493
      %4495 = vrot.lane.b32.xlu0 %v4472, 17
      %v4496 = vpop.permute.xlu0 %4495
      %4497 = vrot.lane.b32.xlu0 %v4473, 17
      %v4498 = vpop.permute.xlu0 %4497
      %4499 = vrot.lane.b32.xlu0 %v4474, 17
      %v4500 = vpop.permute.xlu0 %4499
      %4501 = vrot.lane.b32.xlu0 %v4475, 17
      %v4502 = vpop.permute.xlu0 %4501
      %4503 = vrot.lane.b32.xlu0 %v4476, 17
      %v4504 = vpop.permute.xlu0 %4503
      %4505 = vrot.lane.b32.xlu0 %v4477, 17
      %v4506 = vpop.permute.xlu0 %4505
      %4507 = vrot.lane.b32.xlu0 %v4478, 17
      %v4508 = vpop.permute.xlu0 %4507
      %v4509 = vsel %vm508, %v4490, %v4492
      %v4510 = vsel %vm508, %v4494, %v4496
      %v4511 = vsel %vm508, %v4498, %v4500
      %v4512 = vsel %vm508, %v4502, %v4504
      %v4513 = vsel %vm508, %v4506, %v4508
      %v4520 = vsel %vm510, 0, %v4490
      %v4523 = vsel %vm510, 0, %v4494
      %v4526 = vsel %vm510, 0, %v4498
      %v4529 = vsel %vm510, 0, %v4502
      %v4532 = vsel %vm510, 0, %v4506
      %v4535 = vsel %vm510, %v4492, 0
      %v4537 = vsel %vm510, %v4496, 0
      %v4539 = vsel %vm510, %v4500, 0
      %v4541 = vsel %vm510, %v4504, 0
      %v4543 = vsel %vm510, %v4508, 0
      %v4554 = vunpack.c.l.b16 %v4399
      %v4555 = vunpack.c.l.b16 %v4400
      %v4556 = vunpack.c.l.b16 %v4401
      %v4557 = vunpack.c.l.b16 %v4402
      %v4558 = vunpack.c.l.b16 %v4403
      %v4559 = vunpack.c.l.b16 %v4404
      %v4560 = vunpack.c.l.b16 %v4405
      %v4561 = vunpack.c.l.b16 %v4406
      %v4562 = vunpack.c.l.b16 %v4407
      %v4563 = vunpack.c.l.b16 %v4408
      %v4564 = vpack.c.b16 %v4555, %v4554
      %v4565 = vpack.c.b16 %v4557, %v4556
      %v4566 = vpack.c.b16 %v4559, %v4558
      %v4567 = vpack.c.b16 %v4561, %v4560
      %v4568 = vpack.c.b16 %v4563, %v4562
      %4579 = vrot.lane.b32.xlu0 %v4520, 112
      %v4580 = vpop.permute.xlu0 %4579
      %4581 = vrot.lane.b32.xlu0 %v4509, 112
      %v4582 = vpop.permute.xlu0 %4581
      %4583 = vrot.lane.b32.xlu0 %v4535, 112
      %v4584 = vpop.permute.xlu0 %4583
      %4585 = vrot.lane.b32.xlu0 %v4523, 112
      %v4586 = vpop.permute.xlu0 %4585
      %4587 = vrot.lane.b32.xlu0 %v4510, 112
      %v4588 = vpop.permute.xlu0 %4587
      %4589 = vrot.lane.b32.xlu0 %v4537, 112
      %v4590 = vpop.permute.xlu0 %4589
      %4591 = vrot.lane.b32.xlu0 %v4526, 112
      %v4592 = vpop.permute.xlu0 %4591
      %4593 = vrot.lane.b32.xlu0 %v4511, 112
      %v4594 = vpop.permute.xlu0 %4593
      %4595 = vrot.lane.b32.xlu0 %v4539, 112
      %v4596 = vpop.permute.xlu0 %4595
      %4597 = vrot.lane.b32.xlu0 %v4529, 112
      %v4598 = vpop.permute.xlu0 %4597
      %4599 = vrot.lane.b32.xlu0 %v4512, 112
      %v4600 = vpop.permute.xlu0 %4599
      %4601 = vrot.lane.b32.xlu0 %v4541, 112
      %v4602 = vpop.permute.xlu0 %4601
      %4603 = vrot.lane.b32.xlu0 %v4532, 112
      %v4604 = vpop.permute.xlu0 %4603
      %4605 = vrot.lane.b32.xlu0 %v4513, 112
      %v4606 = vpop.permute.xlu0 %4605
      %4607 = vrot.lane.b32.xlu0 %v4543, 112
      %v4608 = vpop.permute.xlu0 %4607
      %v4609 = vsel %vm529, %v4580, %v4582
      %v4610 = vsel %vm529, %v4582, %v4584
      %v4611 = vsel %vm529, %v4586, %v4588
      %v4612 = vsel %vm529, %v4588, %v4590
      %v4613 = vsel %vm529, %v4592, %v4594
      %v4614 = vsel %vm529, %v4594, %v4596
      %v4615 = vsel %vm529, %v4598, %v4600
      %v4616 = vsel %vm529, %v4600, %v4602
      %v4617 = vsel %vm529, %v4604, %v4606
      %v4618 = vsel %vm529, %v4606, %v4608
      %v4630 = vsel %vm2706, %v4564, 0
      %v4633 = vsel %vm2706, %v4565, 0
      %v4636 = vsel %vm2706, %v4566, 0
      %v4639 = vsel %vm2706, %v4567, 0
      %v4642 = vsel %vm2706, %v4568, 0
      %4644 = vmatprep.subr.bf16.mxu0 %v4610
      %4645 = vmatpush1.bf16.msra.mxu0 %v4609
      %4646 = vmatprep.subr.bf16.mxu0 %v4612
      %4647 = vmatpush1.bf16.msra.mxu0 %v4611
      %4648 = vmatprep.subr.bf16.mxu0 %v4614
      %4649 = vmatpush1.bf16.msra.mxu0 %v4613
      %4650 = vmatprep.subr.bf16.mxu0 %v4616
      %4651 = vmatpush1.bf16.msra.mxu0 %v4615
      %4652 = vmatprep.subr.bf16.mxu0 %v4618
      %4653 = vmatpush1.bf16.msra.mxu0 %v4617
      %4654 = vmatprep.subr.bf16.mxu0 0
      %4655 = vmatpush1.bf16.msra.mxu0 0
      %4656 = vmatprep.subr.bf16.mxu0 0
      %4657 = vmatpush1.bf16.msra.mxu0 0
      %4658 = vmatprep.subr.bf16.mxu0 0
      %4659 = vmatpush1.bf16.msra.mxu0 0
      %4660 = vmatprep.subr.bf16.mxu0 0
      %4661 = vmatpush1.bf16.msra.mxu0 0
      %4662 = vmatprep.subr.bf16.mxu0 0
      %4663 = vmatpush1.bf16.msra.mxu0 0
      %4664 = vmatprep.subr.bf16.mxu0 0
      %4665 = vmatpush1.bf16.msra.mxu0 0
      %4666 = vmatprep.subr.bf16.mxu0 0
      %4667 = vmatpush1.bf16.msra.mxu0 0
      %4668 = vmatprep.subr.bf16.mxu0 0
      %4669 = vmatpush1.bf16.msra.mxu0 0
      %4670 = vmatprep.subr.bf16.mxu0 0
      %4671 = vmatpush1.bf16.msra.mxu0 0
      %4672 = vmatprep.subr.bf16.mxu0 0
      %4673 = vmatpush1.bf16.msra.mxu0 0
      %4674 = vmatprep.subr.bf16.mxu0 0
      %4675 = vmatpush1.bf16.msra.mxu0 0
      %4676 = vmatprep.mubr.bf16.mxu0 0
      %4677 = vmatmul.mubr.bf16.gmra.mrb[0].mxu0 %v4630
      %v4678 = vpop.f32.mrb[0].mxu0
      %v4679 = vadd.f32 0.0, %v4678
      %v4680 = vpop.f32.mrb[0].mxu0
      %v4681 = vadd.f32 0.0, %v4680
      %v4682 = vpop.f32.mrb[0].mxu0
      %v4683 = vadd.f32 0.0, %v4682
      %v4684 = vpop.f32.mrb[0].mxu0
      %v4685 = vadd.f32 0.0, %v4684
      %4686 = vmatprep.mubr.bf16.mxu0 0
      %4687 = vmatmul.mubr.bf16.gmra.mrb[0].mxu0 %v4633
      %v4688 = vpop.f32.mrb[0].mxu0
      %v4689 = vadd.f32 0.0, %v4688
      %v4690 = vpop.f32.mrb[0].mxu0
      %v4691 = vadd.f32 0.0, %v4690
      %v4692 = vpop.f32.mrb[0].mxu0
      %v4693 = vadd.f32 0.0, %v4692
      %v4694 = vpop.f32.mrb[0].mxu0
      %v4695 = vadd.f32 0.0, %v4694
      %4696 = vmatprep.mubr.bf16.mxu0 0
      %4697 = vmatmul.mubr.bf16.gmra.mrb[0].mxu0 %v4636
      %v4698 = vpop.f32.mrb[0].mxu0
      %v4699 = vadd.f32 0.0, %v4698
      %v4700 = vpop.f32.mrb[0].mxu0
      %v4701 = vadd.f32 0.0, %v4700
      %v4702 = vpop.f32.mrb[0].mxu0
      %v4703 = vadd.f32 0.0, %v4702
      %v4704 = vpop.f32.mrb[0].mxu0
      %v4705 = vadd.f32 0.0, %v4704
      %4706 = vmatprep.mubr.bf16.mxu0 0
      %4707 = vmatmul.mubr.bf16.gmra.mrb[0].mxu0 %v4639
      %v4708 = vpop.f32.mrb[0].mxu0
      %v4709 = vadd.f32 0.0, %v4708
      %v4710 = vpop.f32.mrb[0].mxu0
      %v4711 = vadd.f32 0.0, %v4710
      %v4712 = vpop.f32.mrb[0].mxu0
      %v4713 = vadd.f32 0.0, %v4712
      %v4714 = vpop.f32.mrb[0].mxu0
      %v4715 = vadd.f32 0.0, %v4714
      %4716 = vmatprep.mubr.bf16.mxu0 0
      %4717 = vmatmul.mubr.bf16.gmra.mrb[0].mxu0 %v4642
      %v4718 = vpop.f32.mrb[0].mxu0
      %v4719 = vadd.f32 0.0, %v4718
      %v4720 = vpop.f32.mrb[0].mxu0
      %v4721 = vadd.f32 0.0, %v4720
      %v4722 = vpop.f32.mrb[0].mxu0
      %v4723 = vadd.f32 0.0, %v4722
      %v4724 = vpop.f32.mrb[0].mxu0
      %v4725 = vadd.f32 0.0, %v4724
      %4726 = vdwg.mxu0
      %v4737 = vunpack.c.l.b16 %v4369
      %v4738 = vunpack.c.l.b16 %v4370
      %v4739 = vunpack.c.l.b16 %v4371
      %v4740 = vunpack.c.l.b16 %v4372
      %v4741 = vunpack.c.l.b16 %v4373
      %v4742 = vunpack.c.l.b16 %v4374
      %v4743 = vunpack.c.l.b16 %v4375
      %v4744 = vunpack.c.l.b16 %v4376
      %v4745 = vunpack.c.l.b16 %v4377
      %v4746 = vunpack.c.l.b16 %v4378
      %v4747 = vpack.c.b16 %v4738, %v4737
      %v4748 = vpack.c.b16 %v4740, %v4739
      %v4749 = vpack.c.b16 %v4742, %v4741
      %v4750 = vpack.c.b16 %v4744, %v4743
      %v4751 = vpack.c.b16 %v4746, %v4745
      %v4753 = vsel %vm2706, %v4747, 0
      %v4756 = vsel %vm2706, %v4748, 0
      %v4759 = vsel %vm2706, %v4749, 0
      %v4762 = vsel %vm2706, %v4750, 0
      %v4765 = vsel %vm2706, %v4751, 0
      %4767 = vmatprep.subr.bf16.mxu0 %v4509
      %4768 = vmatpush1.bf16.msra.mxu0 %v4520
      %4769 = vmatprep.subr.bf16.mxu0 %v4510
      %4770 = vmatpush1.bf16.msra.mxu0 %v4523
      %4771 = vmatprep.subr.bf16.mxu0 %v4511
      %4772 = vmatpush1.bf16.msra.mxu0 %v4526
      %4773 = vmatprep.subr.bf16.mxu0 %v4512
      %4774 = vmatpush1.bf16.msra.mxu0 %v4529
      %4775 = vmatprep.subr.bf16.mxu0 %v4513
      %4776 = vmatpush1.bf16.msra.mxu0 %v4532
      %4777 = vmatprep.subr.bf16.mxu0 0
      %4778 = vmatpush1.bf16.msra.mxu0 0
      %4779 = vmatprep.subr.bf16.mxu0 0
      %4780 = vmatpush1.bf16.msra.mxu0 0
      %4781 = vmatprep.subr.bf16.mxu0 0
      %4782 = vmatpush1.bf16.msra.mxu0 0
      %4783 = vmatprep.subr.bf16.mxu0 0
      %4784 = vmatpush1.bf16.msra.mxu0 0
      %4785 = vmatprep.subr.bf16.mxu0 0
      %4786 = vmatpush1.bf16.msra.mxu0 0
      %4787 = vmatprep.subr.bf16.mxu0 0
      %4788 = vmatpush1.bf16.msra.mxu0 0
      %4789 = vmatprep.subr.bf16.mxu0 0
      %4790 = vmatpush1.bf16.msra.mxu0 0
      %4791 = vmatprep.subr.bf16.mxu0 0
      %4792 = vmatpush1.bf16.msra.mxu0 0
      %4793 = vmatprep.subr.bf16.mxu0 0
      %4794 = vmatpush1.bf16.msra.mxu0 0
      %4795 = vmatprep.subr.bf16.mxu0 0
      %4796 = vmatpush1.bf16.msra.mxu0 0
      %4797 = vmatprep.subr.bf16.mxu0 0
      %4798 = vmatpush1.bf16.msra.mxu0 0
      %4799 = vmatprep.mubr.bf16.mxu0 0
      %4800 = vmatmul.mubr.bf16.gmra.mrb[0].mxu0 %v4753
      %v4801 = vpop.f32.mrb[0].mxu0
      %v4802 = vadd.f32 %v4679, %v4801
      %v4803 = vpop.f32.mrb[0].mxu0
      %v4804 = vadd.f32 %v4681, %v4803
      %v4805 = vpop.f32.mrb[0].mxu0
      %v4806 = vadd.f32 %v4683, %v4805
      %v4807 = vpop.f32.mrb[0].mxu0
      %v4808 = vadd.f32 %v4685, %v4807
      %4809 = vmatprep.mubr.bf16.mxu0 0
      %4810 = vmatmul.mubr.bf16.gmra.mrb[0].mxu0 %v4756
      %v4811 = vpop.f32.mrb[0].mxu0
      %v4812 = vadd.f32 %v4689, %v4811
      %v4813 = vpop.f32.mrb[0].mxu0
      %v4814 = vadd.f32 %v4691, %v4813
      %v4815 = vpop.f32.mrb[0].mxu0
      %v4816 = vadd.f32 %v4693, %v4815
      %v4817 = vpop.f32.mrb[0].mxu0
      %v4818 = vadd.f32 %v4695, %v4817
      %4819 = vmatprep.mubr.bf16.mxu0 0
      %4820 = vmatmul.mubr.bf16.gmra.mrb[0].mxu0 %v4759
      %v4821 = vpop.f32.mrb[0].mxu0
      %v4822 = vadd.f32 %v4699, %v4821
      %v4823 = vpop.f32.mrb[0].mxu0
      %v4824 = vadd.f32 %v4701, %v4823
      %v4825 = vpop.f32.mrb[0].mxu0
      %v4826 = vadd.f32 %v4703, %v4825
      %v4827 = vpop.f32.mrb[0].mxu0
      %v4828 = vadd.f32 %v4705, %v4827
      %4829 = vmatprep.mubr.bf16.mxu0 0
      %4830 = vmatmul.mubr.bf16.gmra.mrb[0].mxu0 %v4762
      %v4831 = vpop.f32.mrb[0].mxu0
      %v4832 = vadd.f32 %v4709, %v4831
      %v4833 = vpop.f32.mrb[0].mxu0
      %v4834 = vadd.f32 %v4711, %v4833
      %v4835 = vpop.f32.mrb[0].mxu0
      %v4836 = vadd.f32 %v4713, %v4835
      %v4837 = vpop.f32.mrb[0].mxu0
      %v4838 = vadd.f32 %v4715, %v4837
      %4839 = vmatprep.mubr.bf16.mxu0 0
      %4840 = vmatmul.mubr.bf16.gmra.mrb[0].mxu0 %v4765
      %v4841 = vpop.f32.mrb[0].mxu0
      %v4842 = vadd.f32 %v4719, %v4841
      %v4843 = vpop.f32.mrb[0].mxu0
      %v4844 = vadd.f32 %v4721, %v4843
      %v4845 = vpop.f32.mrb[0].mxu0
      %v4846 = vadd.f32 %v4723, %v4845
      %v4847 = vpop.f32.mrb[0].mxu0
      %v4848 = vadd.f32 %v4725, %v4847
      %4849 = vdwg.mxu0
      %v4860 = vunpack.c.l.b16 %v4429
      %v4861 = vunpack.c.l.b16 %v4430
      %v4862 = vunpack.c.l.b16 %v4431
      %v4863 = vunpack.c.l.b16 %v4432
      %v4864 = vunpack.c.l.b16 %v4433
      %v4865 = vunpack.c.l.b16 %v4434
      %v4866 = vunpack.c.l.b16 %v4435
      %v4867 = vunpack.c.l.b16 %v4436
      %v4868 = vunpack.c.l.b16 %v4437
      %v4869 = vunpack.c.l.b16 %v4438
      %v4870 = vpack.c.b16 %v4861, %v4860
      %v4871 = vpack.c.b16 %v4863, %v4862
      %v4872 = vpack.c.b16 %v4865, %v4864
      %v4873 = vpack.c.b16 %v4867, %v4866
      %v4874 = vpack.c.b16 %v4869, %v4868
      %4875 = vrot.lane.b32.xlu0 %v4520, 96
      %v4876 = vpop.permute.xlu0 %4875
      %4877 = vrot.lane.b32.xlu0 %v4509, 96
      %v4878 = vpop.permute.xlu0 %4877
      %4879 = vrot.lane.b32.xlu0 %v4535, 96
      %v4880 = vpop.permute.xlu0 %4879
      %4881 = vrot.lane.b32.xlu0 %v4523, 96
      %v4882 = vpop.permute.xlu0 %4881
      %4883 = vrot.lane.b32.xlu0 %v4510, 96
      %v4884 = vpop.permute.xlu0 %4883
      %4885 = vrot.lane.b32.xlu0 %v4537, 96
      %v4886 = vpop.permute.xlu0 %4885
      %4887 = vrot.lane.b32.xlu0 %v4526, 96
      %v4888 = vpop.permute.xlu0 %4887
      %4889 = vrot.lane.b32.xlu0 %v4511, 96
      %v4890 = vpop.permute.xlu0 %4889
      %4891 = vrot.lane.b32.xlu0 %v4539, 96
      %v4892 = vpop.permute.xlu0 %4891
      %4893 = vrot.lane.b32.xlu0 %v4529, 96
      %v4894 = vpop.permute.xlu0 %4893
      %4895 = vrot.lane.b32.xlu0 %v4512, 96
      %v4896 = vpop.permute.xlu0 %4895
      %4897 = vrot.lane.b32.xlu0 %v4541, 96
      %v4898 = vpop.permute.xlu0 %4897
      %4899 = vrot.lane.b32.xlu0 %v4532, 96
      %v4900 = vpop.permute.xlu0 %4899
      %4901 = vrot.lane.b32.xlu0 %v4513, 96
      %v4902 = vpop.permute.xlu0 %4901
      %4903 = vrot.lane.b32.xlu0 %v4543, 96
      %v4904 = vpop.permute.xlu0 %4903
      %v4905 = vsel %vm656, %v4876, %v4878
      %v4906 = vsel %vm656, %v4878, %v4880
      %v4907 = vsel %vm656, %v4882, %v4884
      %v4908 = vsel %vm656, %v4884, %v4886
      %v4909 = vsel %vm656, %v4888, %v4890
      %v4910 = vsel %vm656, %v4890, %v4892
      %v4911 = vsel %vm656, %v4894, %v4896
      %v4912 = vsel %vm656, %v4896, %v4898
      %v4913 = vsel %vm656, %v4900, %v4902
      %v4914 = vsel %vm656, %v4902, %v4904
      %v4926 = vsel %vm2706, %v4870, 0
      %v4929 = vsel %vm2706, %v4871, 0
      %v4932 = vsel %vm2706, %v4872, 0
      %v4935 = vsel %vm2706, %v4873, 0
      %v4938 = vsel %vm2706, %v4874, 0
      %4940 = vmatprep.subr.bf16.mxu0 %v4906
      %4941 = vmatpush1.bf16.msra.mxu0 %v4905
      %4942 = vmatprep.subr.bf16.mxu0 %v4908
      %4943 = vmatpush1.bf16.msra.mxu0 %v4907
      %4944 = vmatprep.subr.bf16.mxu0 %v4910
      %4945 = vmatpush1.bf16.msra.mxu0 %v4909
      %4946 = vmatprep.subr.bf16.mxu0 %v4912
      %4947 = vmatpush1.bf16.msra.mxu0 %v4911
      %4948 = vmatprep.subr.bf16.mxu0 %v4914
      %4949 = vmatpush1.bf16.msra.mxu0 %v4913
      %4950 = vmatprep.subr.bf16.mxu0 0
      %4951 = vmatpush1.bf16.msra.mxu0 0
      %4952 = vmatprep.subr.bf16.mxu0 0
      %4953 = vmatpush1.bf16.msra.mxu0 0
      %4954 = vmatprep.subr.bf16.mxu0 0
      %4955 = vmatpush1.bf16.msra.mxu0 0
      %4956 = vmatprep.subr.bf16.mxu0 0
      %4957 = vmatpush1.bf16.msra.mxu0 0
      %4958 = vmatprep.subr.bf16.mxu0 0
      %4959 = vmatpush1.bf16.msra.mxu0 0
      %4960 = vmatprep.subr.bf16.mxu0 0
      %4961 = vmatpush1.bf16.msra.mxu0 0
      %4962 = vmatprep.subr.bf16.mxu0 0
      %4963 = vmatpush1.bf16.msra.mxu0 0
      %4964 = vmatprep.subr.bf16.mxu0 0
      %4965 = vmatpush1.bf16.msra.mxu0 0
      %4966 = vmatprep.subr.bf16.mxu0 0
      %4967 = vmatpush1.bf16.msra.mxu0 0
      %4968 = vmatprep.subr.bf16.mxu0 0
      %4969 = vmatpush1.bf16.msra.mxu0 0
      %4970 = vmatprep.subr.bf16.mxu0 0
      %4971 = vmatpush1.bf16.msra.mxu0 0
      %4972 = vmatprep.mubr.bf16.mxu0 0
      %4973 = vmatmul.mubr.bf16.gmra.mrb[0].mxu0 %v4926
      %v4974 = vpop.f32.mrb[0].mxu0
      %v4975 = vadd.f32 0.0, %v4974
      %v4976 = vpop.f32.mrb[0].mxu0
      %v4977 = vadd.f32 0.0, %v4976
      %v4978 = vpop.f32.mrb[0].mxu0
      %v4979 = vadd.f32 0.0, %v4978
      %v4980 = vpop.f32.mrb[0].mxu0
      %v4981 = vadd.f32 0.0, %v4980
      %4982 = vmatprep.mubr.bf16.mxu0 0
      %4983 = vmatmul.mubr.bf16.gmra.mrb[0].mxu0 %v4929
      %v4984 = vpop.f32.mrb[0].mxu0
      %v4985 = vadd.f32 0.0, %v4984
      %v4986 = vpop.f32.mrb[0].mxu0
      %v4987 = vadd.f32 0.0, %v4986
      %v4988 = vpop.f32.mrb[0].mxu0
      %v4989 = vadd.f32 0.0, %v4988
      %v4990 = vpop.f32.mrb[0].mxu0
      %v4991 = vadd.f32 0.0, %v4990
      %4992 = vmatprep.mubr.bf16.mxu0 0
      %4993 = vmatmul.mubr.bf16.gmra.mrb[0].mxu0 %v4932
      %v4994 = vpop.f32.mrb[0].mxu0
      %v4995 = vadd.f32 0.0, %v4994
      %v4996 = vpop.f32.mrb[0].mxu0
      %v4997 = vadd.f32 0.0, %v4996
      %v4998 = vpop.f32.mrb[0].mxu0
      %v4999 = vadd.f32 0.0, %v4998
      %v5000 = vpop.f32.mrb[0].mxu0
      %v5001 = vadd.f32 0.0, %v5000
      %5002 = vmatprep.mubr.bf16.mxu0 0
      %5003 = vmatmul.mubr.bf16.gmra.mrb[0].mxu0 %v4935
      %v5004 = vpop.f32.mrb[0].mxu0
      %v5005 = vadd.f32 0.0, %v5004
      %v5006 = vpop.f32.mrb[0].mxu0
      %v5007 = vadd.f32 0.0, %v5006
      %v5008 = vpop.f32.mrb[0].mxu0
      %v5009 = vadd.f32 0.0, %v5008
      %v5010 = vpop.f32.mrb[0].mxu0
      %v5011 = vadd.f32 0.0, %v5010
      %5012 = vmatprep.mubr.bf16.mxu0 0
      %5013 = vmatmul.mubr.bf16.gmra.mrb[0].mxu0 %v4938
      %v5014 = vpop.f32.mrb[0].mxu0
      %v5015 = vadd.f32 0.0, %v5014
      %v5016 = vpop.f32.mrb[0].mxu0
      %v5017 = vadd.f32 0.0, %v5016
      %v5018 = vpop.f32.mrb[0].mxu0
      %v5019 = vadd.f32 0.0, %v5018
      %v5020 = vpop.f32.mrb[0].mxu0
      %v5021 = vadd.f32 0.0, %v5020
      %5022 = vdwg.mxu0
      %v5023 = vadd.f32 %v4802, %v4975
      %v5024 = vadd.f32 %v4804, %v4977
      %v5025 = vadd.f32 %v4806, %v4979
      %v5026 = vadd.f32 %v4808, %v4981
      %v5027 = vadd.f32 %v4812, %v4985
      %v5028 = vadd.f32 %v4814, %v4987
      %v5029 = vadd.f32 %v4816, %v4989
      %v5030 = vadd.f32 %v4818, %v4991
      %v5031 = vadd.f32 %v4822, %v4995
      %v5032 = vadd.f32 %v4824, %v4997
      %v5033 = vadd.f32 %v4826, %v4999
      %v5034 = vadd.f32 %v4828, %v5001
      %v5035 = vadd.f32 %v4832, %v5005
      %v5036 = vadd.f32 %v4834, %v5007
      %v5037 = vadd.f32 %v4836, %v5009
      %v5038 = vadd.f32 %v4838, %v5011
      %v5039 = vadd.f32 %v4842, %v5015
      %v5040 = vadd.f32 %v4844, %v5017
      %v5041 = vadd.f32 %v4846, %v5019
      %v5042 = vadd.f32 %v4848, %v5021
      %v5043 = vmul.f32 %v5023, %v466
      %v5044 = vmul.f32 %v5024, %v467
      %v5045 = vmul.f32 %v5025, %v466
      %v5046 = vmul.f32 %v5026, %v467
      %v5047 = vmul.f32 %v5027, %v466
      %v5048 = vmul.f32 %v5028, %v467
      %v5049 = vmul.f32 %v5029, %v466
      %v5050 = vmul.f32 %v5030, %v467
      %v5051 = vmul.f32 %v5031, %v466
      %v5052 = vmul.f32 %v5032, %v467
      %v5053 = vmul.f32 %v5033, %v466
      %v5054 = vmul.f32 %v5034, %v467
      %v5055 = vmul.f32 %v5035, %v466
      %v5056 = vmul.f32 %v5036, %v467
      %v5057 = vmul.f32 %v5037, %v466
      %v5058 = vmul.f32 %v5038, %v467
      %v5059 = vmul.f32 %v5039, %v466
      %v5060 = vmul.f32 %v5040, %v467
      %v5061 = vmul.f32 %v5041, %v466
      %v5062 = vmul.f32 %v5042, %v467
      %v5073 = vunpack.c.l.b16 %v4409
      %v5074 = vunpack.c.l.b16 %v4410
      %v5075 = vunpack.c.l.b16 %v4411
      %v5076 = vunpack.c.l.b16 %v4412
      %v5077 = vunpack.c.l.b16 %v4413
      %v5078 = vunpack.c.l.b16 %v4414
      %v5079 = vunpack.c.l.b16 %v4415
      %v5080 = vunpack.c.l.b16 %v4416
      %v5081 = vunpack.c.l.b16 %v4417
      %v5082 = vunpack.c.l.b16 %v4418
      %v5083 = vpack.c.b16 %v5074, %v5073
      %v5084 = vpack.c.b16 %v5076, %v5075
      %v5085 = vpack.c.b16 %v5078, %v5077
      %v5086 = vpack.c.b16 %v5080, %v5079
      %v5087 = vpack.c.b16 %v5082, %v5081
      %5088 = vrot.lane.b32.xlu0 %v4520, 111
      %v5089 = vpop.permute.xlu0 %5088
      %5090 = vrot.lane.b32.xlu0 %v4509, 111
      %v5091 = vpop.permute.xlu0 %5090
      %5092 = vrot.lane.b32.xlu0 %v4535, 111
      %v5093 = vpop.permute.xlu0 %5092
      %5094 = vrot.lane.b32.xlu0 %v4523, 111
      %v5095 = vpop.permute.xlu0 %5094
      %5096 = vrot.lane.b32.xlu0 %v4510, 111
      %v5097 = vpop.permute.xlu0 %5096
      %5098 = vrot.lane.b32.xlu0 %v4537, 111
      %v5099 = vpop.permute.xlu0 %5098
      %5100 = vrot.lane.b32.xlu0 %v4526, 111
      %v5101 = vpop.permute.xlu0 %5100
      %5102 = vrot.lane.b32.xlu0 %v4511, 111
      %v5103 = vpop.permute.xlu0 %5102
      %5104 = vrot.lane.b32.xlu0 %v4539, 111
      %v5105 = vpop.permute.xlu0 %5104
      %5106 = vrot.lane.b32.xlu0 %v4529, 111
      %v5107 = vpop.permute.xlu0 %5106
      %5108 = vrot.lane.b32.xlu0 %v4512, 111
      %v5109 = vpop.permute.xlu0 %5108
      %5110 = vrot.lane.b32.xlu0 %v4541, 111
      %v5111 = vpop.permute.xlu0 %5110
      %5112 = vrot.lane.b32.xlu0 %v4532, 111
      %v5113 = vpop.permute.xlu0 %5112
      %5114 = vrot.lane.b32.xlu0 %v4513, 111
      %v5115 = vpop.permute.xlu0 %5114
      %5116 = vrot.lane.b32.xlu0 %v4543, 111
      %v5117 = vpop.permute.xlu0 %5116
      %v5118 = vsel %vm730, %v5089, %v5091
      %v5119 = vsel %vm730, %v5091, %v5093
      %v5120 = vsel %vm730, %v5095, %v5097
      %v5121 = vsel %vm730, %v5097, %v5099
      %v5122 = vsel %vm730, %v5101, %v5103
      %v5123 = vsel %vm730, %v5103, %v5105
      %v5124 = vsel %vm730, %v5107, %v5109
      %v5125 = vsel %vm730, %v5109, %v5111
      %v5126 = vsel %vm730, %v5113, %v5115
      %v5127 = vsel %vm730, %v5115, %v5117
      %v5139 = vsel %vm2706, %v5083, 0
      %v5142 = vsel %vm2706, %v5084, 0
      %v5145 = vsel %vm2706, %v5085, 0
      %v5148 = vsel %vm2706, %v5086, 0
      %v5151 = vsel %vm2706, %v5087, 0
      %5153 = vmatprep.subr.bf16.mxu0 %v5119
      %5154 = vmatpush1.bf16.msra.mxu0 %v5118
      %5155 = vmatprep.subr.bf16.mxu0 %v5121
      %5156 = vmatpush1.bf16.msra.mxu0 %v5120
      %5157 = vmatprep.subr.bf16.mxu0 %v5123
      %5158 = vmatpush1.bf16.msra.mxu0 %v5122
      %5159 = vmatprep.subr.bf16.mxu0 %v5125
      %5160 = vmatpush1.bf16.msra.mxu0 %v5124
      %5161 = vmatprep.subr.bf16.mxu0 %v5127
      %5162 = vmatpush1.bf16.msra.mxu0 %v5126
      %5163 = vmatprep.subr.bf16.mxu0 0
      %5164 = vmatpush1.bf16.msra.mxu0 0
      %5165 = vmatprep.subr.bf16.mxu0 0
      %5166 = vmatpush1.bf16.msra.mxu0 0
      %5167 = vmatprep.subr.bf16.mxu0 0
      %5168 = vmatpush1.bf16.msra.mxu0 0
      %5169 = vmatprep.subr.bf16.mxu0 0
      %5170 = vmatpush1.bf16.msra.mxu0 0
      %5171 = vmatprep.subr.bf16.mxu0 0
      %5172 = vmatpush1.bf16.msra.mxu0 0
      %5173 = vmatprep.subr.bf16.mxu0 0
      %5174 = vmatpush1.bf16.msra.mxu0 0
      %5175 = vmatprep.subr.bf16.mxu0 0
      %5176 = vmatpush1.bf16.msra.mxu0 0
      %5177 = vmatprep.subr.bf16.mxu0 0
      %5178 = vmatpush1.bf16.msra.mxu0 0
      %5179 = vmatprep.subr.bf16.mxu0 0
      %5180 = vmatpush1.bf16.msra.mxu0 0
      %5181 = vmatprep.subr.bf16.mxu0 0
      %5182 = vmatpush1.bf16.msra.mxu0 0
      %5183 = vmatprep.subr.bf16.mxu0 0
      %5184 = vmatpush1.bf16.msra.mxu0 0
      %5185 = vmatprep.mubr.bf16.mxu0 0
      %5186 = vmatmul.mubr.bf16.gmra.mrb[0].mxu0 %v5139
      %v5187 = vpop.f32.mrb[0].mxu0
      %v5188 = vadd.f32 0.0, %v5187
      %v5189 = vpop.f32.mrb[0].mxu0
      %v5190 = vadd.f32 0.0, %v5189
      %v5191 = vpop.f32.mrb[0].mxu0
      %v5192 = vadd.f32 0.0, %v5191
      %v5193 = vpop.f32.mrb[0].mxu0
      %v5194 = vadd.f32 0.0, %v5193
      %5195 = vmatprep.mubr.bf16.mxu0 0
      %5196 = vmatmul.mubr.bf16.gmra.mrb[0].mxu0 %v5142
      %v5197 = vpop.f32.mrb[0].mxu0
      %v5198 = vadd.f32 0.0, %v5197
      %v5199 = vpop.f32.mrb[0].mxu0
      %v5200 = vadd.f32 0.0, %v5199
      %v5201 = vpop.f32.mrb[0].mxu0
      %v5202 = vadd.f32 0.0, %v5201
      %v5203 = vpop.f32.mrb[0].mxu0
      %v5204 = vadd.f32 0.0, %v5203
      %5205 = vmatprep.mubr.bf16.mxu0 0
      %5206 = vmatmul.mubr.bf16.gmra.mrb[0].mxu0 %v5145
      %v5207 = vpop.f32.mrb[0].mxu0
      %v5208 = vadd.f32 0.0, %v5207
      %v5209 = vpop.f32.mrb[0].mxu0
      %v5210 = vadd.f32 0.0, %v5209
      %v5211 = vpop.f32.mrb[0].mxu0
      %v5212 = vadd.f32 0.0, %v5211
      %v5213 = vpop.f32.mrb[0].mxu0
      %v5214 = vadd.f32 0.0, %v5213
      %5215 = vmatprep.mubr.bf16.mxu0 0
      %5216 = vmatmul.mubr.bf16.gmra.mrb[0].mxu0 %v5148
      %v5217 = vpop.f32.mrb[0].mxu0
      %v5218 = vadd.f32 0.0, %v5217
      %v5219 = vpop.f32.mrb[0].mxu0
      %v5220 = vadd.f32 0.0, %v5219
      %v5221 = vpop.f32.mrb[0].mxu0
      %v5222 = vadd.f32 0.0, %v5221
      %v5223 = vpop.f32.mrb[0].mxu0
      %v5224 = vadd.f32 0.0, %v5223
      %5225 = vmatprep.mubr.bf16.mxu0 0
      %5226 = vmatmul.mubr.bf16.gmra.mrb[0].mxu0 %v5151
      %v5227 = vpop.f32.mrb[0].mxu0
      %v5228 = vadd.f32 0.0, %v5227
      %v5229 = vpop.f32.mrb[0].mxu0
      %v5230 = vadd.f32 0.0, %v5229
      %v5231 = vpop.f32.mrb[0].mxu0
      %v5232 = vadd.f32 0.0, %v5231
      %v5233 = vpop.f32.mrb[0].mxu0
      %v5234 = vadd.f32 0.0, %v5233
      %5235 = vdwg.mxu0
      %v5246 = vunpack.c.l.b16 %v4379
      %v5247 = vunpack.c.l.b16 %v4380
      %v5248 = vunpack.c.l.b16 %v4381
      %v5249 = vunpack.c.l.b16 %v4382
      %v5250 = vunpack.c.l.b16 %v4383
      %v5251 = vunpack.c.l.b16 %v4384
      %v5252 = vunpack.c.l.b16 %v4385
      %v5253 = vunpack.c.l.b16 %v4386
      %v5254 = vunpack.c.l.b16 %v4387
      %v5255 = vunpack.c.l.b16 %v4388
      %v5256 = vpack.c.b16 %v5247, %v5246
      %v5257 = vpack.c.b16 %v5249, %v5248
      %v5258 = vpack.c.b16 %v5251, %v5250
      %v5259 = vpack.c.b16 %v5253, %v5252
      %v5260 = vpack.c.b16 %v5255, %v5254
      %5261 = vrot.lane.b32.xlu0 %v4520, 127
      %v5262 = vpop.permute.xlu0 %5261
      %5263 = vrot.lane.b32.xlu0 %v4509, 127
      %v5264 = vpop.permute.xlu0 %5263
      %5265 = vrot.lane.b32.xlu0 %v4535, 127
      %v5266 = vpop.permute.xlu0 %5265
      %5267 = vrot.lane.b32.xlu0 %v4523, 127
      %v5268 = vpop.permute.xlu0 %5267
      %5269 = vrot.lane.b32.xlu0 %v4510, 127
      %v5270 = vpop.permute.xlu0 %5269
      %5271 = vrot.lane.b32.xlu0 %v4537, 127
      %v5272 = vpop.permute.xlu0 %5271
      %5273 = vrot.lane.b32.xlu0 %v4526, 127
      %v5274 = vpop.permute.xlu0 %5273
      %5275 = vrot.lane.b32.xlu0 %v4511, 127
      %v5276 = vpop.permute.xlu0 %5275
      %5277 = vrot.lane.b32.xlu0 %v4539, 127
      %v5278 = vpop.permute.xlu0 %5277
      %5279 = vrot.lane.b32.xlu0 %v4529, 127
      %v5280 = vpop.permute.xlu0 %5279
      %5281 = vrot.lane.b32.xlu0 %v4512, 127
      %v5282 = vpop.permute.xlu0 %5281
      %5283 = vrot.lane.b32.xlu0 %v4541, 127
      %v5284 = vpop.permute.xlu0 %5283
      %5285 = vrot.lane.b32.xlu0 %v4532, 127
      %v5286 = vpop.permute.xlu0 %5285
      %5287 = vrot.lane.b32.xlu0 %v4513, 127
      %v5288 = vpop.permute.xlu0 %5287
      %5289 = vrot.lane.b32.xlu0 %v4543, 127
      %v5290 = vpop.permute.xlu0 %5289
      %v5291 = vsel %vm796, %v5262, %v5264
      %v5292 = vsel %vm796, %v5264, %v5266
      %v5293 = vsel %vm796, %v5268, %v5270
      %v5294 = vsel %vm796, %v5270, %v5272
      %v5295 = vsel %vm796, %v5274, %v5276
      %v5296 = vsel %vm796, %v5276, %v5278
      %v5297 = vsel %vm796, %v5280, %v5282
      %v5298 = vsel %vm796, %v5282, %v5284
      %v5299 = vsel %vm796, %v5286, %v5288
      %v5300 = vsel %vm796, %v5288, %v5290
      %v5312 = vsel %vm2706, %v5256, 0
      %v5315 = vsel %vm2706, %v5257, 0
      %v5318 = vsel %vm2706, %v5258, 0
      %v5321 = vsel %vm2706, %v5259, 0
      %v5324 = vsel %vm2706, %v5260, 0
      %5326 = vmatprep.subr.bf16.mxu0 %v5292
      %5327 = vmatpush1.bf16.msra.mxu0 %v5291
      %5328 = vmatprep.subr.bf16.mxu0 %v5294
      %5329 = vmatpush1.bf16.msra.mxu0 %v5293
      %5330 = vmatprep.subr.bf16.mxu0 %v5296
      %5331 = vmatpush1.bf16.msra.mxu0 %v5295
      %5332 = vmatprep.subr.bf16.mxu0 %v5298
      %5333 = vmatpush1.bf16.msra.mxu0 %v5297
      %5334 = vmatprep.subr.bf16.mxu0 %v5300
      %5335 = vmatpush1.bf16.msra.mxu0 %v5299
      %5336 = vmatprep.subr.bf16.mxu0 0
      %5337 = vmatpush1.bf16.msra.mxu0 0
      %5338 = vmatprep.subr.bf16.mxu0 0
      %5339 = vmatpush1.bf16.msra.mxu0 0
      %5340 = vmatprep.subr.bf16.mxu0 0
      %5341 = vmatpush1.bf16.msra.mxu0 0
      %5342 = vmatprep.subr.bf16.mxu0 0
      %5343 = vmatpush1.bf16.msra.mxu0 0
      %5344 = vmatprep.subr.bf16.mxu0 0
      %5345 = vmatpush1.bf16.msra.mxu0 0
      %5346 = vmatprep.subr.bf16.mxu0 0
      %5347 = vmatpush1.bf16.msra.mxu0 0
      %5348 = vmatprep.subr.bf16.mxu0 0
      %5349 = vmatpush1.bf16.msra.mxu0 0
      %5350 = vmatprep.subr.bf16.mxu0 0
      %5351 = vmatpush1.bf16.msra.mxu0 0
      %5352 = vmatprep.subr.bf16.mxu0 0
      %5353 = vmatpush1.bf16.msra.mxu0 0
      %5354 = vmatprep.subr.bf16.mxu0 0
      %5355 = vmatpush1.bf16.msra.mxu0 0
      %5356 = vmatprep.subr.bf16.mxu0 0
      %5357 = vmatpush1.bf16.msra.mxu0 0
      %5358 = vmatprep.mubr.bf16.mxu0 0
      %5359 = vmatmul.mubr.bf16.gmra.mrb[0].mxu0 %v5312
      %v5360 = vpop.f32.mrb[0].mxu0
      %v5361 = vadd.f32 %v5188, %v5360
      %v5362 = vpop.f32.mrb[0].mxu0
      %v5363 = vadd.f32 %v5190, %v5362
      %v5364 = vpop.f32.mrb[0].mxu0
      %v5365 = vadd.f32 %v5192, %v5364
      %v5366 = vpop.f32.mrb[0].mxu0
      %v5367 = vadd.f32 %v5194, %v5366
      %5368 = vmatprep.mubr.bf16.mxu0 0
      %5369 = vmatmul.mubr.bf16.gmra.mrb[0].mxu0 %v5315
      %v5370 = vpop.f32.mrb[0].mxu0
      %v5371 = vadd.f32 %v5198, %v5370
      %v5372 = vpop.f32.mrb[0].mxu0
      %v5373 = vadd.f32 %v5200, %v5372
      %v5374 = vpop.f32.mrb[0].mxu0
      %v5375 = vadd.f32 %v5202, %v5374
      %v5376 = vpop.f32.mrb[0].mxu0
      %v5377 = vadd.f32 %v5204, %v5376
      %5378 = vmatprep.mubr.bf16.mxu0 0
      %5379 = vmatmul.mubr.bf16.gmra.mrb[0].mxu0 %v5318
      %v5380 = vpop.f32.mrb[0].mxu0
      %v5381 = vadd.f32 %v5208, %v5380
      %v5382 = vpop.f32.mrb[0].mxu0
      %v5383 = vadd.f32 %v5210, %v5382
      %v5384 = vpop.f32.mrb[0].mxu0
      %v5385 = vadd.f32 %v5212, %v5384
      %v5386 = vpop.f32.mrb[0].mxu0
      %v5387 = vadd.f32 %v5214, %v5386
      %5388 = vmatprep.mubr.bf16.mxu0 0
      %5389 = vmatmul.mubr.bf16.gmra.mrb[0].mxu0 %v5321
      %v5390 = vpop.f32.mrb[0].mxu0
      %v5391 = vadd.f32 %v5218, %v5390
      %v5392 = vpop.f32.mrb[0].mxu0
      %v5393 = vadd.f32 %v5220, %v5392
      %v5394 = vpop.f32.mrb[0].mxu0
      %v5395 = vadd.f32 %v5222, %v5394
      %v5396 = vpop.f32.mrb[0].mxu0
      %v5397 = vadd.f32 %v5224, %v5396
      %5398 = vmatprep.mubr.bf16.mxu0 0
      %5399 = vmatmul.mubr.bf16.gmra.mrb[0].mxu0 %v5324
      %v5400 = vpop.f32.mrb[0].mxu0
      %v5401 = vadd.f32 %v5228, %v5400
      %v5402 = vpop.f32.mrb[0].mxu0
      %v5403 = vadd.f32 %v5230, %v5402
      %v5404 = vpop.f32.mrb[0].mxu0
      %v5405 = vadd.f32 %v5232, %v5404
      %v5406 = vpop.f32.mrb[0].mxu0
      %v5407 = vadd.f32 %v5234, %v5406
      %5408 = vdwg.mxu0
      %v5419 = vunpack.c.l.b16 %v4439
      %v5420 = vunpack.c.l.b16 %v4440
      %v5421 = vunpack.c.l.b16 %v4441
      %v5422 = vunpack.c.l.b16 %v4442
      %v5423 = vunpack.c.l.b16 %v4443
      %v5424 = vunpack.c.l.b16 %v4444
      %v5425 = vunpack.c.l.b16 %v4445
      %v5426 = vunpack.c.l.b16 %v4446
      %v5427 = vunpack.c.l.b16 %v4447
      %v5428 = vunpack.c.l.b16 %v4448
      %v5429 = vpack.c.b16 %v5420, %v5419
      %v5430 = vpack.c.b16 %v5422, %v5421
      %v5431 = vpack.c.b16 %v5424, %v5423
      %v5432 = vpack.c.b16 %v5426, %v5425
      %v5433 = vpack.c.b16 %v5428, %v5427
      %5434 = vrot.lane.b32.xlu0 %v4520, 95
      %v5435 = vpop.permute.xlu0 %5434
      %5436 = vrot.lane.b32.xlu0 %v4509, 95
      %v5437 = vpop.permute.xlu0 %5436
      %5438 = vrot.lane.b32.xlu0 %v4535, 95
      %v5439 = vpop.permute.xlu0 %5438
      %5440 = vrot.lane.b32.xlu0 %v4523, 95
      %v5441 = vpop.permute.xlu0 %5440
      %5442 = vrot.lane.b32.xlu0 %v4510, 95
      %v5443 = vpop.permute.xlu0 %5442
      %5444 = vrot.lane.b32.xlu0 %v4537, 95
      %v5445 = vpop.permute.xlu0 %5444
      %5446 = vrot.lane.b32.xlu0 %v4526, 95
      %v5447 = vpop.permute.xlu0 %5446
      %5448 = vrot.lane.b32.xlu0 %v4511, 95
      %v5449 = vpop.permute.xlu0 %5448
      %5450 = vrot.lane.b32.xlu0 %v4539, 95
      %v5451 = vpop.permute.xlu0 %5450
      %5452 = vrot.lane.b32.xlu0 %v4529, 95
      %v5453 = vpop.permute.xlu0 %5452
      %5454 = vrot.lane.b32.xlu0 %v4512, 95
      %v5455 = vpop.permute.xlu0 %5454
      %5456 = vrot.lane.b32.xlu0 %v4541, 95
      %v5457 = vpop.permute.xlu0 %5456
      %5458 = vrot.lane.b32.xlu0 %v4532, 95
      %v5459 = vpop.permute.xlu0 %5458
      %5460 = vrot.lane.b32.xlu0 %v4513, 95
      %v5461 = vpop.permute.xlu0 %5460
      %5462 = vrot.lane.b32.xlu0 %v4543, 95
      %v5463 = vpop.permute.xlu0 %5462
      %v5464 = vsel %vm862, %v5435, %v5437
      %v5465 = vsel %vm862, %v5437, %v5439
      %v5466 = vsel %vm862, %v5441, %v5443
      %v5467 = vsel %vm862, %v5443, %v5445
      %v5468 = vsel %vm862, %v5447, %v5449
      %v5469 = vsel %vm862, %v5449, %v5451
      %v5470 = vsel %vm862, %v5453, %v5455
      %v5471 = vsel %vm862, %v5455, %v5457
      %v5472 = vsel %vm862, %v5459, %v5461
      %v5473 = vsel %vm862, %v5461, %v5463
      %v5485 = vsel %vm2706, %v5429, 0
      %v5488 = vsel %vm2706, %v5430, 0
      %v5491 = vsel %vm2706, %v5431, 0
      %v5494 = vsel %vm2706, %v5432, 0
      %v5497 = vsel %vm2706, %v5433, 0
      %5499 = vmatprep.subr.bf16.mxu0 %v5465
      %5500 = vmatpush1.bf16.msra.mxu0 %v5464
      %5501 = vmatprep.subr.bf16.mxu0 %v5467
      %5502 = vmatpush1.bf16.msra.mxu0 %v5466
      %5503 = vmatprep.subr.bf16.mxu0 %v5469
      %5504 = vmatpush1.bf16.msra.mxu0 %v5468
      %5505 = vmatprep.subr.bf16.mxu0 %v5471
      %5506 = vmatpush1.bf16.msra.mxu0 %v5470
      %5507 = vmatprep.subr.bf16.mxu0 %v5473
      %5508 = vmatpush1.bf16.msra.mxu0 %v5472
      %5509 = vmatprep.subr.bf16.mxu0 0
      %5510 = vmatpush1.bf16.msra.mxu0 0
      %5511 = vmatprep.subr.bf16.mxu0 0
      %5512 = vmatpush1.bf16.msra.mxu0 0
      %5513 = vmatprep.subr.bf16.mxu0 0
      %5514 = vmatpush1.bf16.msra.mxu0 0
      %5515 = vmatprep.subr.bf16.mxu0 0
      %5516 = vmatpush1.bf16.msra.mxu0 0
      %5517 = vmatprep.subr.bf16.mxu0 0
      %5518 = vmatpush1.bf16.msra.mxu0 0
      %5519 = vmatprep.subr.bf16.mxu0 0
      %5520 = vmatpush1.bf16.msra.mxu0 0
      %5521 = vmatprep.subr.bf16.mxu0 0
      %5522 = vmatpush1.bf16.msra.mxu0 0
      %5523 = vmatprep.subr.bf16.mxu0 0
      %5524 = vmatpush1.bf16.msra.mxu0 0
      %5525 = vmatprep.subr.bf16.mxu0 0
      %5526 = vmatpush1.bf16.msra.mxu0 0
      %5527 = vmatprep.subr.bf16.mxu0 0
      %5528 = vmatpush1.bf16.msra.mxu0 0
      %5529 = vmatprep.subr.bf16.mxu0 0
      %5530 = vmatpush1.bf16.msra.mxu0 0
      %5531 = vmatprep.mubr.bf16.mxu0 0
      %5532 = vmatmul.mubr.bf16.gmra.mrb[0].mxu0 %v5485
      %v5533 = vpop.f32.mrb[0].mxu0
      %v5534 = vadd.f32 0.0, %v5533
      %v5535 = vpop.f32.mrb[0].mxu0
      %v5536 = vadd.f32 0.0, %v5535
      %v5537 = vpop.f32.mrb[0].mxu0
      %v5538 = vadd.f32 0.0, %v5537
      %v5539 = vpop.f32.mrb[0].mxu0
      %v5540 = vadd.f32 0.0, %v5539
      %5541 = vmatprep.mubr.bf16.mxu0 0
      %5542 = vmatmul.mubr.bf16.gmra.mrb[0].mxu0 %v5488
      %v5543 = vpop.f32.mrb[0].mxu0
      %v5544 = vadd.f32 0.0, %v5543
      %v5545 = vpop.f32.mrb[0].mxu0
      %v5546 = vadd.f32 0.0, %v5545
      %v5547 = vpop.f32.mrb[0].mxu0
      %v5548 = vadd.f32 0.0, %v5547
      %v5549 = vpop.f32.mrb[0].mxu0
      %v5550 = vadd.f32 0.0, %v5549
      %5551 = vmatprep.mubr.bf16.mxu0 0
      %5552 = vmatmul.mubr.bf16.gmra.mrb[0].mxu0 %v5491
      %v5553 = vpop.f32.mrb[0].mxu0
      %v5554 = vadd.f32 0.0, %v5553
      %v5555 = vpop.f32.mrb[0].mxu0
      %v5556 = vadd.f32 0.0, %v5555
      %v5557 = vpop.f32.mrb[0].mxu0
      %v5558 = vadd.f32 0.0, %v5557
      %v5559 = vpop.f32.mrb[0].mxu0
      %v5560 = vadd.f32 0.0, %v5559
      %5561 = vmatprep.mubr.bf16.mxu0 0
      %5562 = vmatmul.mubr.bf16.gmra.mrb[0].mxu0 %v5494
      %v5563 = vpop.f32.mrb[0].mxu0
      %v5564 = vadd.f32 0.0, %v5563
      %v5565 = vpop.f32.mrb[0].mxu0
      %v5566 = vadd.f32 0.0, %v5565
      %v5567 = vpop.f32.mrb[0].mxu0
      %v5568 = vadd.f32 0.0, %v5567
      %v5569 = vpop.f32.mrb[0].mxu0
      %v5570 = vadd.f32 0.0, %v5569
      %5571 = vmatprep.mubr.bf16.mxu0 0
      %5572 = vmatmul.mubr.bf16.gmra.mrb[0].mxu0 %v5497
      %v5573 = vpop.f32.mrb[0].mxu0
      %v5574 = vadd.f32 0.0, %v5573
      %v5575 = vpop.f32.mrb[0].mxu0
      %v5576 = vadd.f32 0.0, %v5575
      %v5577 = vpop.f32.mrb[0].mxu0
      %v5578 = vadd.f32 0.0, %v5577
      %v5579 = vpop.f32.mrb[0].mxu0
      %v5580 = vadd.f32 0.0, %v5579
      %5581 = vdwg.mxu0
      %v5582 = vadd.f32 %v5361, %v5534
      %v5583 = vadd.f32 %v5363, %v5536
      %v5584 = vadd.f32 %v5365, %v5538
      %v5585 = vadd.f32 %v5367, %v5540
      %v5586 = vadd.f32 %v5371, %v5544
      %v5587 = vadd.f32 %v5373, %v5546
      %v5588 = vadd.f32 %v5375, %v5548
      %v5589 = vadd.f32 %v5377, %v5550
      %v5590 = vadd.f32 %v5381, %v5554
      %v5591 = vadd.f32 %v5383, %v5556
      %v5592 = vadd.f32 %v5385, %v5558
      %v5593 = vadd.f32 %v5387, %v5560
      %v5594 = vadd.f32 %v5391, %v5564
      %v5595 = vadd.f32 %v5393, %v5566
      %v5596 = vadd.f32 %v5395, %v5568
      %v5597 = vadd.f32 %v5397, %v5570
      %v5598 = vadd.f32 %v5401, %v5574
      %v5599 = vadd.f32 %v5403, %v5576
      %v5600 = vadd.f32 %v5405, %v5578
      %v5601 = vadd.f32 %v5407, %v5580
      %v5602 = vadd.f32 %v5043, %v5582
      %v5603 = vadd.f32 %v5044, %v5583
      %v5604 = vadd.f32 %v5045, %v5584
      %v5605 = vadd.f32 %v5046, %v5585
      %v5606 = vadd.f32 %v5047, %v5586
      %v5607 = vadd.f32 %v5048, %v5587
      %v5608 = vadd.f32 %v5049, %v5588
      %v5609 = vadd.f32 %v5050, %v5589
      %v5610 = vadd.f32 %v5051, %v5590
      %v5611 = vadd.f32 %v5052, %v5591
      %v5612 = vadd.f32 %v5053, %v5592
      %v5613 = vadd.f32 %v5054, %v5593
      %v5614 = vadd.f32 %v5055, %v5594
      %v5615 = vadd.f32 %v5056, %v5595
      %v5616 = vadd.f32 %v5057, %v5596
      %v5617 = vadd.f32 %v5058, %v5597
      %v5618 = vadd.f32 %v5059, %v5598
      %v5619 = vadd.f32 %v5060, %v5599
      %v5620 = vadd.f32 %v5061, %v5600
      %v5621 = vadd.f32 %v5062, %v5601
      %v5632 = vunpack.c.l.b16 %v4419
      %v5633 = vunpack.c.l.b16 %v4420
      %v5634 = vunpack.c.l.b16 %v4421
      %v5635 = vunpack.c.l.b16 %v4422
      %v5636 = vunpack.c.l.b16 %v4423
      %v5637 = vunpack.c.l.b16 %v4424
      %v5638 = vunpack.c.l.b16 %v4425
      %v5639 = vunpack.c.l.b16 %v4426
      %v5640 = vunpack.c.l.b16 %v4427
      %v5641 = vunpack.c.l.b16 %v4428
      %v5642 = vpack.c.b16 %v5633, %v5632
      %v5643 = vpack.c.b16 %v5635, %v5634
      %v5644 = vpack.c.b16 %v5637, %v5636
      %v5645 = vpack.c.b16 %v5639, %v5638
      %v5646 = vpack.c.b16 %v5641, %v5640
      %5647 = vrot.lane.b32.xlu0 %v4520, 110
      %v5648 = vpop.permute.xlu0 %5647
      %5649 = vrot.lane.b32.xlu0 %v4509, 110
      %v5650 = vpop.permute.xlu0 %5649
      %5651 = vrot.lane.b32.xlu0 %v4535, 110
      %v5652 = vpop.permute.xlu0 %5651
      %5653 = vrot.lane.b32.xlu0 %v4523, 110
      %v5654 = vpop.permute.xlu0 %5653
      %5655 = vrot.lane.b32.xlu0 %v4510, 110
      %v5656 = vpop.permute.xlu0 %5655
      %5657 = vrot.lane.b32.xlu0 %v4537, 110
      %v5658 = vpop.permute.xlu0 %5657
      %5659 = vrot.lane.b32.xlu0 %v4526, 110
      %v5660 = vpop.permute.xlu0 %5659
      %5661 = vrot.lane.b32.xlu0 %v4511, 110
      %v5662 = vpop.permute.xlu0 %5661
      %5663 = vrot.lane.b32.xlu0 %v4539, 110
      %v5664 = vpop.permute.xlu0 %5663
      %5665 = vrot.lane.b32.xlu0 %v4529, 110
      %v5666 = vpop.permute.xlu0 %5665
      %5667 = vrot.lane.b32.xlu0 %v4512, 110
      %v5668 = vpop.permute.xlu0 %5667
      %5669 = vrot.lane.b32.xlu0 %v4541, 110
      %v5670 = vpop.permute.xlu0 %5669
      %5671 = vrot.lane.b32.xlu0 %v4532, 110
      %v5672 = vpop.permute.xlu0 %5671
      %5673 = vrot.lane.b32.xlu0 %v4513, 110
      %v5674 = vpop.permute.xlu0 %5673
      %5675 = vrot.lane.b32.xlu0 %v4543, 110
      %v5676 = vpop.permute.xlu0 %5675
      %v5677 = vsel %vm936, %v5648, %v5650
      %v5678 = vsel %vm936, %v5650, %v5652
      %v5679 = vsel %vm936, %v5654, %v5656
      %v5680 = vsel %vm936, %v5656, %v5658
      %v5681 = vsel %vm936, %v5660, %v5662
      %v5682 = vsel %vm936, %v5662, %v5664
      %v5683 = vsel %vm936, %v5666, %v5668
      %v5684 = vsel %vm936, %v5668, %v5670
      %v5685 = vsel %vm936, %v5672, %v5674
      %v5686 = vsel %vm936, %v5674, %v5676
      %v5698 = vsel %vm2706, %v5642, 0
      %v5701 = vsel %vm2706, %v5643, 0
      %v5704 = vsel %vm2706, %v5644, 0
      %v5707 = vsel %vm2706, %v5645, 0
      %v5710 = vsel %vm2706, %v5646, 0
      %5712 = vmatprep.subr.bf16.mxu0 %v5678
      %5713 = vmatpush1.bf16.msra.mxu0 %v5677
      %5714 = vmatprep.subr.bf16.mxu0 %v5680
      %5715 = vmatpush1.bf16.msra.mxu0 %v5679
      %5716 = vmatprep.subr.bf16.mxu0 %v5682
      %5717 = vmatpush1.bf16.msra.mxu0 %v5681
      %5718 = vmatprep.subr.bf16.mxu0 %v5684
      %5719 = vmatpush1.bf16.msra.mxu0 %v5683
      %5720 = vmatprep.subr.bf16.mxu0 %v5686
      %5721 = vmatpush1.bf16.msra.mxu0 %v5685
      %5722 = vmatprep.subr.bf16.mxu0 0
      %5723 = vmatpush1.bf16.msra.mxu0 0
      %5724 = vmatprep.subr.bf16.mxu0 0
      %5725 = vmatpush1.bf16.msra.mxu0 0
      %5726 = vmatprep.subr.bf16.mxu0 0
      %5727 = vmatpush1.bf16.msra.mxu0 0
      %5728 = vmatprep.subr.bf16.mxu0 0
      %5729 = vmatpush1.bf16.msra.mxu0 0
      %5730 = vmatprep.subr.bf16.mxu0 0
      %5731 = vmatpush1.bf16.msra.mxu0 0
      %5732 = vmatprep.subr.bf16.mxu0 0
      %5733 = vmatpush1.bf16.msra.mxu0 0
      %5734 = vmatprep.subr.bf16.mxu0 0
      %5735 = vmatpush1.bf16.msra.mxu0 0
      %5736 = vmatprep.subr.bf16.mxu0 0
      %5737 = vmatpush1.bf16.msra.mxu0 0
      %5738 = vmatprep.subr.bf16.mxu0 0
      %5739 = vmatpush1.bf16.msra.mxu0 0
      %5740 = vmatprep.subr.bf16.mxu0 0
      %5741 = vmatpush1.bf16.msra.mxu0 0
      %5742 = vmatprep.subr.bf16.mxu0 0
      %5743 = vmatpush1.bf16.msra.mxu0 0
      %5744 = vmatprep.mubr.bf16.mxu0 0
      %5745 = vmatmul.mubr.bf16.gmra.mrb[0].mxu0 %v5698
      %v5746 = vpop.f32.mrb[0].mxu0
      %v5747 = vadd.f32 0.0, %v5746
      %v5748 = vpop.f32.mrb[0].mxu0
      %v5749 = vadd.f32 0.0, %v5748
      %v5750 = vpop.f32.mrb[0].mxu0
      %v5751 = vadd.f32 0.0, %v5750
      %v5752 = vpop.f32.mrb[0].mxu0
      %v5753 = vadd.f32 0.0, %v5752
      %5754 = vmatprep.mubr.bf16.mxu0 0
      %5755 = vmatmul.mubr.bf16.gmra.mrb[0].mxu0 %v5701
      %v5756 = vpop.f32.mrb[0].mxu0
      %v5757 = vadd.f32 0.0, %v5756
      %v5758 = vpop.f32.mrb[0].mxu0
      %v5759 = vadd.f32 0.0, %v5758
      %v5760 = vpop.f32.mrb[0].mxu0
      %v5761 = vadd.f32 0.0, %v5760
      %v5762 = vpop.f32.mrb[0].mxu0
      %v5763 = vadd.f32 0.0, %v5762
      %5764 = vmatprep.mubr.bf16.mxu0 0
      %5765 = vmatmul.mubr.bf16.gmra.mrb[0].mxu0 %v5704
      %v5766 = vpop.f32.mrb[0].mxu0
      %v5767 = vadd.f32 0.0, %v5766
      %v5768 = vpop.f32.mrb[0].mxu0
      %v5769 = vadd.f32 0.0, %v5768
      %v5770 = vpop.f32.mrb[0].mxu0
      %v5771 = vadd.f32 0.0, %v5770
      %v5772 = vpop.f32.mrb[0].mxu0
      %v5773 = vadd.f32 0.0, %v5772
      %5774 = vmatprep.mubr.bf16.mxu0 0
      %5775 = vmatmul.mubr.bf16.gmra.mrb[0].mxu0 %v5707
      %v5776 = vpop.f32.mrb[0].mxu0
      %v5777 = vadd.f32 0.0, %v5776
      %v5778 = vpop.f32.mrb[0].mxu0
      %v5779 = vadd.f32 0.0, %v5778
      %v5780 = vpop.f32.mrb[0].mxu0
      %v5781 = vadd.f32 0.0, %v5780
      %v5782 = vpop.f32.mrb[0].mxu0
      %v5783 = vadd.f32 0.0, %v5782
      %5784 = vmatprep.mubr.bf16.mxu0 0
      %5785 = vmatmul.mubr.bf16.gmra.mrb[0].mxu0 %v5710
      %v5786 = vpop.f32.mrb[0].mxu0
      %v5787 = vadd.f32 0.0, %v5786
      %v5788 = vpop.f32.mrb[0].mxu0
      %v5789 = vadd.f32 0.0, %v5788
      %v5790 = vpop.f32.mrb[0].mxu0
      %v5791 = vadd.f32 0.0, %v5790
      %v5792 = vpop.f32.mrb[0].mxu0
      %v5793 = vadd.f32 0.0, %v5792
      %5794 = vdwg.mxu0
      %v5805 = vunpack.c.l.b16 %v4389
      %v5806 = vunpack.c.l.b16 %v4390
      %v5807 = vunpack.c.l.b16 %v4391
      %v5808 = vunpack.c.l.b16 %v4392
      %v5809 = vunpack.c.l.b16 %v4393
      %v5810 = vunpack.c.l.b16 %v4394
      %v5811 = vunpack.c.l.b16 %v4395
      %v5812 = vunpack.c.l.b16 %v4396
      %v5813 = vunpack.c.l.b16 %v4397
      %v5814 = vunpack.c.l.b16 %v4398
      %v5815 = vpack.c.b16 %v5806, %v5805
      %v5816 = vpack.c.b16 %v5808, %v5807
      %v5817 = vpack.c.b16 %v5810, %v5809
      %v5818 = vpack.c.b16 %v5812, %v5811
      %v5819 = vpack.c.b16 %v5814, %v5813
      %5820 = vrot.lane.b32.xlu0 %v4520, 126
      %v5821 = vpop.permute.xlu0 %5820
      %5822 = vrot.lane.b32.xlu0 %v4509, 126
      %v5823 = vpop.permute.xlu0 %5822
      %5824 = vrot.lane.b32.xlu0 %v4535, 126
      %v5825 = vpop.permute.xlu0 %5824
      %5826 = vrot.lane.b32.xlu0 %v4523, 126
      %v5827 = vpop.permute.xlu0 %5826
      %5828 = vrot.lane.b32.xlu0 %v4510, 126
      %v5829 = vpop.permute.xlu0 %5828
      %5830 = vrot.lane.b32.xlu0 %v4537, 126
      %v5831 = vpop.permute.xlu0 %5830
      %5832 = vrot.lane.b32.xlu0 %v4526, 126
      %v5833 = vpop.permute.xlu0 %5832
      %5834 = vrot.lane.b32.xlu0 %v4511, 126
      %v5835 = vpop.permute.xlu0 %5834
      %5836 = vrot.lane.b32.xlu0 %v4539, 126
      %v5837 = vpop.permute.xlu0 %5836
      %5838 = vrot.lane.b32.xlu0 %v4529, 126
      %v5839 = vpop.permute.xlu0 %5838
      %5840 = vrot.lane.b32.xlu0 %v4512, 126
      %v5841 = vpop.permute.xlu0 %5840
      %5842 = vrot.lane.b32.xlu0 %v4541, 126
      %v5843 = vpop.permute.xlu0 %5842
      %5844 = vrot.lane.b32.xlu0 %v4532, 126
      %v5845 = vpop.permute.xlu0 %5844
      %5846 = vrot.lane.b32.xlu0 %v4513, 126
      %v5847 = vpop.permute.xlu0 %5846
      %5848 = vrot.lane.b32.xlu0 %v4543, 126
      %v5849 = vpop.permute.xlu0 %5848
      %v5850 = vsel %vm1002, %v5821, %v5823
      %v5851 = vsel %vm1002, %v5823, %v5825
      %v5852 = vsel %vm1002, %v5827, %v5829
      %v5853 = vsel %vm1002, %v5829, %v5831
      %v5854 = vsel %vm1002, %v5833, %v5835
      %v5855 = vsel %vm1002, %v5835, %v5837
      %v5856 = vsel %vm1002, %v5839, %v5841
      %v5857 = vsel %vm1002, %v5841, %v5843
      %v5858 = vsel %vm1002, %v5845, %v5847
      %v5859 = vsel %vm1002, %v5847, %v5849
      %v5871 = vsel %vm2706, %v5815, 0
      %v5874 = vsel %vm2706, %v5816, 0
      %v5877 = vsel %vm2706, %v5817, 0
      %v5880 = vsel %vm2706, %v5818, 0
      %v5883 = vsel %vm2706, %v5819, 0
      %5885 = vmatprep.subr.bf16.mxu0 %v5851
      %5886 = vmatpush1.bf16.msra.mxu0 %v5850
      %5887 = vmatprep.subr.bf16.mxu0 %v5853
      %5888 = vmatpush1.bf16.msra.mxu0 %v5852
      %5889 = vmatprep.subr.bf16.mxu0 %v5855
      %5890 = vmatpush1.bf16.msra.mxu0 %v5854
      %5891 = vmatprep.subr.bf16.mxu0 %v5857
      %5892 = vmatpush1.bf16.msra.mxu0 %v5856
      %5893 = vmatprep.subr.bf16.mxu0 %v5859
      %5894 = vmatpush1.bf16.msra.mxu0 %v5858
      %5895 = vmatprep.subr.bf16.mxu0 0
      %5896 = vmatpush1.bf16.msra.mxu0 0
      %5897 = vmatprep.subr.bf16.mxu0 0
      %5898 = vmatpush1.bf16.msra.mxu0 0
      %5899 = vmatprep.subr.bf16.mxu0 0
      %5900 = vmatpush1.bf16.msra.mxu0 0
      %5901 = vmatprep.subr.bf16.mxu0 0
      %5902 = vmatpush1.bf16.msra.mxu0 0
      %5903 = vmatprep.subr.bf16.mxu0 0
      %5904 = vmatpush1.bf16.msra.mxu0 0
      %5905 = vmatprep.subr.bf16.mxu0 0
      %5906 = vmatpush1.bf16.msra.mxu0 0
      %5907 = vmatprep.subr.bf16.mxu0 0
      %5908 = vmatpush1.bf16.msra.mxu0 0
      %5909 = vmatprep.subr.bf16.mxu0 0
      %5910 = vmatpush1.bf16.msra.mxu0 0
      %5911 = vmatprep.subr.bf16.mxu0 0
      %5912 = vmatpush1.bf16.msra.mxu0 0
      %5913 = vmatprep.subr.bf16.mxu0 0
      %5914 = vmatpush1.bf16.msra.mxu0 0
      %5915 = vmatprep.subr.bf16.mxu0 0
      %5916 = vmatpush1.bf16.msra.mxu0 0
      %5917 = vmatprep.mubr.bf16.mxu0 0
      %5918 = vmatmul.mubr.bf16.gmra.mrb[0].mxu0 %v5871
      %v5919 = vpop.f32.mrb[0].mxu0
      %v5920 = vadd.f32 %v5747, %v5919
      %v5921 = vpop.f32.mrb[0].mxu0
      %v5922 = vadd.f32 %v5749, %v5921
      %v5923 = vpop.f32.mrb[0].mxu0
      %v5924 = vadd.f32 %v5751, %v5923
      %v5925 = vpop.f32.mrb[0].mxu0
      %v5926 = vadd.f32 %v5753, %v5925
      %5927 = vmatprep.mubr.bf16.mxu0 0
      %5928 = vmatmul.mubr.bf16.gmra.mrb[0].mxu0 %v5874
      %v5929 = vpop.f32.mrb[0].mxu0
      %v5930 = vadd.f32 %v5757, %v5929
      %v5931 = vpop.f32.mrb[0].mxu0
      %v5932 = vadd.f32 %v5759, %v5931
      %v5933 = vpop.f32.mrb[0].mxu0
      %v5934 = vadd.f32 %v5761, %v5933
      %v5935 = vpop.f32.mrb[0].mxu0
      %v5936 = vadd.f32 %v5763, %v5935
      %5937 = vmatprep.mubr.bf16.mxu0 0
      %5938 = vmatmul.mubr.bf16.gmra.mrb[0].mxu0 %v5877
      %v5939 = vpop.f32.mrb[0].mxu0
      %v5940 = vadd.f32 %v5767, %v5939
      %v5941 = vpop.f32.mrb[0].mxu0
      %v5942 = vadd.f32 %v5769, %v5941
      %v5943 = vpop.f32.mrb[0].mxu0
      %v5944 = vadd.f32 %v5771, %v5943
      %v5945 = vpop.f32.mrb[0].mxu0
      %v5946 = vadd.f32 %v5773, %v5945
      %5947 = vmatprep.mubr.bf16.mxu0 0
      %5948 = vmatmul.mubr.bf16.gmra.mrb[0].mxu0 %v5880
      %v5949 = vpop.f32.mrb[0].mxu0
      %v5950 = vadd.f32 %v5777, %v5949
      %v5951 = vpop.f32.mrb[0].mxu0
      %v5952 = vadd.f32 %v5779, %v5951
      %v5953 = vpop.f32.mrb[0].mxu0
      %v5954 = vadd.f32 %v5781, %v5953
      %v5955 = vpop.f32.mrb[0].mxu0
      %v5956 = vadd.f32 %v5783, %v5955
      %5957 = vmatprep.mubr.bf16.mxu0 0
      %5958 = vmatmul.mubr.bf16.gmra.mrb[0].mxu0 %v5883
      %v5959 = vpop.f32.mrb[0].mxu0
      %v5960 = vadd.f32 %v5787, %v5959
      %v5961 = vpop.f32.mrb[0].mxu0
      %v5962 = vadd.f32 %v5789, %v5961
      %v5963 = vpop.f32.mrb[0].mxu0
      %v5964 = vadd.f32 %v5791, %v5963
      %v5965 = vpop.f32.mrb[0].mxu0
      %v5966 = vadd.f32 %v5793, %v5965
      %5967 = vdwg.mxu0
      %v5978 = vunpack.c.l.b16 %v4449
      %v5979 = vunpack.c.l.b16 %v4450
      %v5980 = vunpack.c.l.b16 %v4451
      %v5981 = vunpack.c.l.b16 %v4452
      %v5982 = vunpack.c.l.b16 %v4453
      %v5983 = vunpack.c.l.b16 %v4454
      %v5984 = vunpack.c.l.b16 %v4455
      %v5985 = vunpack.c.l.b16 %v4456
      %v5986 = vunpack.c.l.b16 %v4457
      %v5987 = vunpack.c.l.b16 %v4458
      %v5988 = vpack.c.b16 %v5979, %v5978
      %v5989 = vpack.c.b16 %v5981, %v5980
      %v5990 = vpack.c.b16 %v5983, %v5982
      %v5991 = vpack.c.b16 %v5985, %v5984
      %v5992 = vpack.c.b16 %v5987, %v5986
      %5993 = vrot.lane.b32.xlu0 %v4520, 94
      %v5994 = vpop.permute.xlu0 %5993
      %5995 = vrot.lane.b32.xlu0 %v4509, 94
      %v5996 = vpop.permute.xlu0 %5995
      %5997 = vrot.lane.b32.xlu0 %v4535, 94
      %v5998 = vpop.permute.xlu0 %5997
      %5999 = vrot.lane.b32.xlu0 %v4523, 94
      %v6000 = vpop.permute.xlu0 %5999
      %6001 = vrot.lane.b32.xlu0 %v4510, 94
      %v6002 = vpop.permute.xlu0 %6001
      %6003 = vrot.lane.b32.xlu0 %v4537, 94
      %v6004 = vpop.permute.xlu0 %6003
      %6005 = vrot.lane.b32.xlu0 %v4526, 94
      %v6006 = vpop.permute.xlu0 %6005
      %6007 = vrot.lane.b32.xlu0 %v4511, 94
      %v6008 = vpop.permute.xlu0 %6007
      %6009 = vrot.lane.b32.xlu0 %v4539, 94
      %v6010 = vpop.permute.xlu0 %6009
      %6011 = vrot.lane.b32.xlu0 %v4529, 94
      %v6012 = vpop.permute.xlu0 %6011
      %6013 = vrot.lane.b32.xlu0 %v4512, 94
      %v6014 = vpop.permute.xlu0 %6013
      %6015 = vrot.lane.b32.xlu0 %v4541, 94
      %v6016 = vpop.permute.xlu0 %6015
      %6017 = vrot.lane.b32.xlu0 %v4532, 94
      %v6018 = vpop.permute.xlu0 %6017
      %6019 = vrot.lane.b32.xlu0 %v4513, 94
      %v6020 = vpop.permute.xlu0 %6019
      %6021 = vrot.lane.b32.xlu0 %v4543, 94
      %v6022 = vpop.permute.xlu0 %6021
      %v6023 = vsel %vm1068, %v5994, %v5996
      %v6024 = vsel %vm1068, %v5996, %v5998
      %v6025 = vsel %vm1068, %v6000, %v6002
      %v6026 = vsel %vm1068, %v6002, %v6004
      %v6027 = vsel %vm1068, %v6006, %v6008
      %v6028 = vsel %vm1068, %v6008, %v6010
      %v6029 = vsel %vm1068, %v6012, %v6014
      %v6030 = vsel %vm1068, %v6014, %v6016
      %v6031 = vsel %vm1068, %v6018, %v6020
      %v6032 = vsel %vm1068, %v6020, %v6022
      %v6044 = vsel %vm2706, %v5988, 0
      %v6047 = vsel %vm2706, %v5989, 0
      %v6050 = vsel %vm2706, %v5990, 0
      %v6053 = vsel %vm2706, %v5991, 0
      %v6056 = vsel %vm2706, %v5992, 0
      %6058 = vmatprep.subr.bf16.mxu0 %v6024
      %6059 = vmatpush1.bf16.msra.mxu0 %v6023
      %6060 = vmatprep.subr.bf16.mxu0 %v6026
      %6061 = vmatpush1.bf16.msra.mxu0 %v6025
      %6062 = vmatprep.subr.bf16.mxu0 %v6028
      %6063 = vmatpush1.bf16.msra.mxu0 %v6027
      %6064 = vmatprep.subr.bf16.mxu0 %v6030
      %6065 = vmatpush1.bf16.msra.mxu0 %v6029
      %6066 = vmatprep.subr.bf16.mxu0 %v6032
      %6067 = vmatpush1.bf16.msra.mxu0 %v6031
      %6068 = vmatprep.subr.bf16.mxu0 0
      %6069 = vmatpush1.bf16.msra.mxu0 0
      %6070 = vmatprep.subr.bf16.mxu0 0
      %6071 = vmatpush1.bf16.msra.mxu0 0
      %6072 = vmatprep.subr.bf16.mxu0 0
      %6073 = vmatpush1.bf16.msra.mxu0 0
      %6074 = vmatprep.subr.bf16.mxu0 0
      %6075 = vmatpush1.bf16.msra.mxu0 0
      %6076 = vmatprep.subr.bf16.mxu0 0
      %6077 = vmatpush1.bf16.msra.mxu0 0
      %6078 = vmatprep.subr.bf16.mxu0 0
      %6079 = vmatpush1.bf16.msra.mxu0 0
      %6080 = vmatprep.subr.bf16.mxu0 0
      %6081 = vmatpush1.bf16.msra.mxu0 0
      %6082 = vmatprep.subr.bf16.mxu0 0
      %6083 = vmatpush1.bf16.msra.mxu0 0
      %6084 = vmatprep.subr.bf16.mxu0 0
      %6085 = vmatpush1.bf16.msra.mxu0 0
      %6086 = vmatprep.subr.bf16.mxu0 0
      %6087 = vmatpush1.bf16.msra.mxu0 0
      %6088 = vmatprep.subr.bf16.mxu0 0
      %6089 = vmatpush1.bf16.msra.mxu0 0
      %6090 = vmatprep.mubr.bf16.mxu0 0
      %6091 = vmatmul.mubr.bf16.gmra.mrb[0].mxu0 %v6044
      %v6092 = vpop.f32.mrb[0].mxu0
      %v6093 = vadd.f32 0.0, %v6092
      %v6094 = vpop.f32.mrb[0].mxu0
      %v6095 = vadd.f32 0.0, %v6094
      %v6096 = vpop.f32.mrb[0].mxu0
      %v6097 = vadd.f32 0.0, %v6096
      %v6098 = vpop.f32.mrb[0].mxu0
      %v6099 = vadd.f32 0.0, %v6098
      %6100 = vmatprep.mubr.bf16.mxu0 0
      %6101 = vmatmul.mubr.bf16.gmra.mrb[0].mxu0 %v6047
      %v6102 = vpop.f32.mrb[0].mxu0
      %v6103 = vadd.f32 0.0, %v6102
      %v6104 = vpop.f32.mrb[0].mxu0
      %v6105 = vadd.f32 0.0, %v6104
      %v6106 = vpop.f32.mrb[0].mxu0
      %v6107 = vadd.f32 0.0, %v6106
      %v6108 = vpop.f32.mrb[0].mxu0
      %v6109 = vadd.f32 0.0, %v6108
      %6110 = vmatprep.mubr.bf16.mxu0 0
      %6111 = vmatmul.mubr.bf16.gmra.mrb[0].mxu0 %v6050
      %v6112 = vpop.f32.mrb[0].mxu0
      %v6113 = vadd.f32 0.0, %v6112
      %v6114 = vpop.f32.mrb[0].mxu0
      %v6115 = vadd.f32 0.0, %v6114
      %v6116 = vpop.f32.mrb[0].mxu0
      %v6117 = vadd.f32 0.0, %v6116
      %v6118 = vpop.f32.mrb[0].mxu0
      %v6119 = vadd.f32 0.0, %v6118
      %6120 = vmatprep.mubr.bf16.mxu0 0
      %6121 = vmatmul.mubr.bf16.gmra.mrb[0].mxu0 %v6053
      %v6122 = vpop.f32.mrb[0].mxu0
      %v6123 = vadd.f32 0.0, %v6122
      %v6124 = vpop.f32.mrb[0].mxu0
      %v6125 = vadd.f32 0.0, %v6124
      %v6126 = vpop.f32.mrb[0].mxu0
      %v6127 = vadd.f32 0.0, %v6126
      %v6128 = vpop.f32.mrb[0].mxu0
      %v6129 = vadd.f32 0.0, %v6128
      %6130 = vmatprep.mubr.bf16.mxu0 0
      %6131 = vmatmul.mubr.bf16.gmra.mrb[0].mxu0 %v6056
      %v6132 = vpop.f32.mrb[0].mxu0
      %v6133 = vadd.f32 0.0, %v6132
      %v6134 = vpop.f32.mrb[0].mxu0
      %v6135 = vadd.f32 0.0, %v6134
      %v6136 = vpop.f32.mrb[0].mxu0
      %v6137 = vadd.f32 0.0, %v6136
      %v6138 = vpop.f32.mrb[0].mxu0
      %v6139 = vadd.f32 0.0, %v6138
      %6140 = vdwg.mxu0
      %v6141 = vadd.f32 %v5920, %v6093
      %v6142 = vadd.f32 %v5922, %v6095
      %v6143 = vadd.f32 %v5924, %v6097
      %v6144 = vadd.f32 %v5926, %v6099
      %v6145 = vadd.f32 %v5930, %v6103
      %v6146 = vadd.f32 %v5932, %v6105
      %v6147 = vadd.f32 %v5934, %v6107
      %v6148 = vadd.f32 %v5936, %v6109
      %v6149 = vadd.f32 %v5940, %v6113
      %v6150 = vadd.f32 %v5942, %v6115
      %v6151 = vadd.f32 %v5944, %v6117
      %v6152 = vadd.f32 %v5946, %v6119
      %v6153 = vadd.f32 %v5950, %v6123
      %v6154 = vadd.f32 %v5952, %v6125
      %v6155 = vadd.f32 %v5954, %v6127
      %v6156 = vadd.f32 %v5956, %v6129
      %v6157 = vadd.f32 %v5960, %v6133
      %v6158 = vadd.f32 %v5962, %v6135
      %v6159 = vadd.f32 %v5964, %v6137
      %v6160 = vadd.f32 %v5966, %v6139
      %v6161 = vmul.f32 %v6141, %v472
      %v6162 = vmul.f32 %v6142, %v473
      %v6163 = vmul.f32 %v6143, %v472
      %v6164 = vmul.f32 %v6144, %v473
      %v6165 = vmul.f32 %v6145, %v472
      %v6166 = vmul.f32 %v6146, %v473
      %v6167 = vmul.f32 %v6147, %v472
      %v6168 = vmul.f32 %v6148, %v473
      %v6169 = vmul.f32 %v6149, %v472
      %v6170 = vmul.f32 %v6150, %v473
      %v6171 = vmul.f32 %v6151, %v472
      %v6172 = vmul.f32 %v6152, %v473
      %v6173 = vmul.f32 %v6153, %v472
      %v6174 = vmul.f32 %v6154, %v473
      %v6175 = vmul.f32 %v6155, %v472
      %v6176 = vmul.f32 %v6156, %v473
      %v6177 = vmul.f32 %v6157, %v472
      %v6178 = vmul.f32 %v6158, %v473
      %v6179 = vmul.f32 %v6159, %v472
      %v6180 = vmul.f32 %v6160, %v473
      %v6181 = vadd.f32 %v5602, %v6161
      %v6182 = vadd.f32 %v5603, %v6162
      %v6183 = vadd.f32 %v5604, %v6163
      %v6184 = vadd.f32 %v5605, %v6164
      %v6185 = vadd.f32 %v5606, %v6165
      %v6186 = vadd.f32 %v5607, %v6166
      %v6187 = vadd.f32 %v5608, %v6167
      %v6188 = vadd.f32 %v5609, %v6168
      %v6189 = vadd.f32 %v5610, %v6169
      %v6190 = vadd.f32 %v5611, %v6170
      %v6191 = vadd.f32 %v5612, %v6171
      %v6192 = vadd.f32 %v5613, %v6172
      %v6193 = vadd.f32 %v5614, %v6173
      %v6194 = vadd.f32 %v5615, %v6174
      %v6195 = vadd.f32 %v5616, %v6175
      %v6196 = vadd.f32 %v5617, %v6176
      %v6197 = vadd.f32 %v5618, %v6177
      %v6198 = vadd.f32 %v5619, %v6178
      %v6199 = vadd.f32 %v5620, %v6179
      %v6200 = vadd.f32 %v5621, %v6180
      %6202 = vset.pattern.permute.xlu0 0
      %6203 = vperm.xlu0 %6202, %v4459
      %v6204 = vpop.permute.xlu0 %6203
      %6207 = vset.pattern.permute.xlu0 0
      %6208 = vperm.xlu0 %6207, %v4460
      %v6209 = vpop.permute.xlu0 %6208
      %6212 = vset.pattern.permute.xlu0 0
      %6213 = vperm.xlu0 %6212, %v4461
      %v6214 = vpop.permute.xlu0 %6213
      %6217 = vset.pattern.permute.xlu0 0
      %6218 = vperm.xlu0 %6217, %v4462
      %v6219 = vpop.permute.xlu0 %6218
      %6222 = vset.pattern.permute.xlu0 0
      %6223 = vperm.xlu0 %6222, %v4463
      %v6224 = vpop.permute.xlu0 %6223
      %6227 = vset.pattern.permute.xlu0 0
      %6228 = vperm.xlu0 %6227, %v4464
      %v6229 = vpop.permute.xlu0 %6228
      %6232 = vset.pattern.permute.xlu0 0
      %6233 = vperm.xlu0 %6232, %v4465
      %v6234 = vpop.permute.xlu0 %6233
      %6237 = vset.pattern.permute.xlu0 0
      %6238 = vperm.xlu0 %6237, %v4466
      %v6239 = vpop.permute.xlu0 %6238
      %6242 = vset.pattern.permute.xlu0 0
      %6243 = vperm.xlu0 %6242, %v4467
      %v6244 = vpop.permute.xlu0 %6243
      %6247 = vset.pattern.permute.xlu0 0
      %6248 = vperm.xlu0 %6247, %v4468
      %v6249 = vpop.permute.xlu0 %6248
      %v6251 = vadd.f32 %v6181, %v6204
      %v6252 = vadd.f32 %v6182, %v6204
      %v6253 = vadd.f32 %v6183, %v6209
      %v6254 = vadd.f32 %v6184, %v6209
      %v6255 = vadd.f32 %v6185, %v6214
      %v6256 = vadd.f32 %v6186, %v6214
      %v6257 = vadd.f32 %v6187, %v6219
      %v6258 = vadd.f32 %v6188, %v6219
      %v6259 = vadd.f32 %v6189, %v6224
      %v6260 = vadd.f32 %v6190, %v6224
      %v6261 = vadd.f32 %v6191, %v6229
      %v6262 = vadd.f32 %v6192, %v6229
      %v6263 = vadd.f32 %v6193, %v6234
      %v6264 = vadd.f32 %v6194, %v6234
      %v6265 = vadd.f32 %v6195, %v6239
      %v6266 = vadd.f32 %v6196, %v6239
      %v6267 = vadd.f32 %v6197, %v6244
      %v6268 = vadd.f32 %v6198, %v6244
      %v6269 = vadd.f32 %v6199, %v6249
      %v6270 = vadd.f32 %v6200, %v6249
      %v6271 = vadd.f32 %v2424, %v6251
      %v6272 = vadd.f32 %v2425, %v6252
      %v6273 = vadd.f32 %v2426, %v6253
      %v6274 = vadd.f32 %v2427, %v6254
      %v6275 = vadd.f32 %v2428, %v6255
      %v6276 = vadd.f32 %v2429, %v6256
      %v6277 = vadd.f32 %v2430, %v6257
      %v6278 = vadd.f32 %v2431, %v6258
      %v6279 = vadd.f32 %v2432, %v6259
      %v6280 = vadd.f32 %v2433, %v6260
      %v6281 = vadd.f32 %v2434, %v6261
      %v6282 = vadd.f32 %v2435, %v6262
      %v6283 = vadd.f32 %v2436, %v6263
      %v6284 = vadd.f32 %v2437, %v6264
      %v6285 = vadd.f32 %v2438, %v6265
      %v6286 = vadd.f32 %v2439, %v6266
      %v6287 = vadd.f32 %v2442, %v6267
      %v6288 = vadd.f32 %v2443, %v6268
      %v6289 = vadd.f32 %v2444, %v6269
      %v6290 = vadd.f32 %v2445, %v6270
      %s6291 = scalar_lea.vmem %s6, 360
      %v6292 = vld [vmem:[%s6291] sm:$0xf]
      %v6293 = vld [vmem:[%s6291 + $0x4] sm:$0xf]
      %v6294 = vld [vmem:[%s6291 + $0x8] sm:$0xf]
      %v6295 = vld [vmem:[%s6291 + $0xc] sm:$0xf]
      %v6296 = vld [vmem:[%s6291 + $0x10] sm:$0xf]
      %v6297 = vld [vmem:[%s6291 + $0x14] sm:$0xf]
      %v6298 = vld [vmem:[%s6291 + $0x18] sm:$0xf]
      %v6299 = vld [vmem:[%s6291 + $0x1c] sm:$0xf]
      %v6300 = vld [vmem:[%s6291 + $0x20] sm:$0xf]
      %v6301 = vld [vmem:[%s6291 + $0x24] sm:$0xf]
      %v6302 = vld [vmem:[%s6291 + $0x28] sm:$0xf]
      %v6303 = vld [vmem:[%s6291 + $0x2c] sm:$0xf]
      %v6304 = vld [vmem:[%s6291 + $0x30] sm:$0xf]
      %v6305 = vld [vmem:[%s6291 + $0x34] sm:$0xf]
      %v6306 = vld [vmem:[%s6291 + $0x38] sm:$0xf]
      %v6307 = vld [vmem:[%s6291 + $0x3c] sm:$0xf]
      %v6308 = vld [vmem:[%s6291 + $0x40] sm:$0xf]
      %v6309 = vld [vmem:[%s6291 + $0x44] sm:$0xf]
      %v6310 = vld [vmem:[%s6291 + $0x48] sm:$0xf]
      %v6311 = vld [vmem:[%s6291 + $0x4c] sm:$0xf]
      %v6312 = vld [vmem:[%s6291 + $0x50] sm:$0xf]
      %v6313 = vld [vmem:[%s6291 + $0x54] sm:$0xf]
      %v6314 = vld [vmem:[%s6291 + $0x58] sm:$0xf]
      %v6315 = vld [vmem:[%s6291 + $0x5c] sm:$0xf]
      %v6316 = vld [vmem:[%s6291 + $0x60] sm:$0xf]
      %v6317 = vld [vmem:[%s6291 + $0x64] sm:$0xf]
      %v6318 = vld [vmem:[%s6291 + $0x68] sm:$0xf]
      %v6319 = vld [vmem:[%s6291 + $0x6c] sm:$0xf]
      %v6320 = vld [vmem:[%s6291 + $0x70] sm:$0xf]
      %v6321 = vld [vmem:[%s6291 + $0x74] sm:$0xf]
      %v6322 = vld [vmem:[%s6291 + $0x78] sm:$0xf]
      %v6323 = vld [vmem:[%s6291 + $0x7c] sm:$0xf]
      %v6324 = vld [vmem:[%s6291 + $0x80] sm:$0xf]
      %v6325 = vld [vmem:[%s6291 + $0x84] sm:$0xf]
      %v6326 = vld [vmem:[%s6291 + $0x88] sm:$0xf]
      %v6327 = vld [vmem:[%s6291 + $0x8c] sm:$0xf]
      %v6328 = vld [vmem:[%s6291 + $0x90] sm:$0xf]
      %v6329 = vld [vmem:[%s6291 + $0x94] sm:$0xf]
      %v6330 = vld [vmem:[%s6291 + $0x98] sm:$0xf]
      %v6331 = vld [vmem:[%s6291 + $0x9c] sm:$0xf]
      %v6332 = vld [vmem:[%s6291 + $0xa0] sm:$0xf]
      %v6333 = vld [vmem:[%s6291 + $0xa4] sm:$0xf]
      %v6334 = vld [vmem:[%s6291 + $0xa8] sm:$0xf]
      %v6335 = vld [vmem:[%s6291 + $0xac] sm:$0xf]
      %v6336 = vld [vmem:[%s6291 + $0xb0] sm:$0xf]
      %v6337 = vld [vmem:[%s6291 + $0xb4] sm:$0xf]
      %v6338 = vld [vmem:[%s6291 + $0xb8] sm:$0xf]
      %v6339 = vld [vmem:[%s6291 + $0xbc] sm:$0xf]
      %v6340 = vld [vmem:[%s6291 + $0xc0] sm:$0xf]
      %v6341 = vld [vmem:[%s6291 + $0xc4] sm:$0xf]
      %v6342 = vld [vmem:[%s6291 + $0xc8] sm:$0xf]
      %v6343 = vld [vmem:[%s6291 + $0xcc] sm:$0xf]
      %v6344 = vld [vmem:[%s6291 + $0xd0] sm:$0xf]
      %v6345 = vld [vmem:[%s6291 + $0xd4] sm:$0xf]
      %v6346 = vld [vmem:[%s6291 + $0xd8] sm:$0xf]
      %v6347 = vld [vmem:[%s6291 + $0xdc] sm:$0xf]
      %v6348 = vld [vmem:[%s6291 + $0xe0] sm:$0xf]
      %v6349 = vld [vmem:[%s6291 + $0xe4] sm:$0xf]
      %v6350 = vld [vmem:[%s6291 + $0xe8] sm:$0xf]
      %v6351 = vld [vmem:[%s6291 + $0xec] sm:$0xf]
      %v6352 = vld [vmem:[%s6291 + $0xf0] sm:$0xf]
      %v6353 = vld [vmem:[%s6291 + $0xf4] sm:$0xf]
      %v6354 = vld [vmem:[%s6291 + $0xf8] sm:$0xf]
      %v6355 = vld [vmem:[%s6291 + $0xfc] sm:$0xf]
      %v6356 = vld [vmem:[%s6291 + $0x100] sm:$0xf]
      %v6357 = vld [vmem:[%s6291 + $0x104] sm:$0xf]
      %v6358 = vld [vmem:[%s6291 + $0x108] sm:$0xf]
      %v6359 = vld [vmem:[%s6291 + $0x10c] sm:$0xf]
      %v6360 = vld [vmem:[%s6291 + $0x110] sm:$0xf]
      %v6361 = vld [vmem:[%s6291 + $0x114] sm:$0xf]
      %v6362 = vld [vmem:[%s6291 + $0x118] sm:$0xf]
      %v6363 = vld [vmem:[%s6291 + $0x11c] sm:$0xf]
      %v6364 = vld [vmem:[%s6291 + $0x120] sm:$0xf]
      %v6365 = vld [vmem:[%s6291 + $0x124] sm:$0xf]
      %v6366 = vld [vmem:[%s6291 + $0x128] sm:$0xf]
      %v6367 = vld [vmem:[%s6291 + $0x12c] sm:$0xf]
      %v6368 = vld [vmem:[%s6291 + $0x130] sm:$0xf]
      %v6369 = vld [vmem:[%s6291 + $0x134] sm:$0xf]
      %v6370 = vld [vmem:[%s6291 + $0x138] sm:$0xf]
      %v6371 = vld [vmem:[%s6291 + $0x13c] sm:$0xf]
      %v6372 = vld [vmem:[%s6291 + $0x140] sm:$0xf]
      %v6373 = vld [vmem:[%s6291 + $0x144] sm:$0xf]
      %v6374 = vld [vmem:[%s6291 + $0x148] sm:$0xf]
      %v6375 = vld [vmem:[%s6291 + $0x14c] sm:$0xf]
      %v6376 = vld [vmem:[%s6291 + $0x150] sm:$0xf]
      %v6377 = vld [vmem:[%s6291 + $0x154] sm:$0xf]
      %v6378 = vld [vmem:[%s6291 + $0x158] sm:$0xf]
      %v6379 = vld [vmem:[%s6291 + $0x15c] sm:$0xf]
      %v6380 = vld [vmem:[%s6291 + $0x160] sm:$0xf]
      %v6381 = vld [vmem:[%s6291 + $0x164] sm:$0xf]
      %s6382 = scalar_lea.vmem %s7, 80
      %v6383 = vld [vmem:[%s6382] sm:$0xff]
      %v6384 = vld [vmem:[%s6382 + $0x8] sm:$0xff]
      %v6385 = vld [vmem:[%s6382 + $0x10] sm:$0xff]
      %v6386 = vld [vmem:[%s6382 + $0x18] sm:$0xff]
      %v6387 = vld [vmem:[%s6382 + $0x20] sm:$0xff]
      %v6388 = vld [vmem:[%s6382 + $0x28] sm:$0xff]
      %v6389 = vld [vmem:[%s6382 + $0x30] sm:$0xff]
      %v6390 = vld [vmem:[%s6382 + $0x38] sm:$0xff]
      %v6391 = vld [vmem:[%s6382 + $0x40] sm:$0xff]
      %v6392 = vld [vmem:[%s6382 + $0x48] sm:$0xff]
      %v6393 = vpack.c.bf16 %v6273, %v6271
      %v6394 = vpack.c.bf16 %v6274, %v6272
      %v6395 = vpack.c.bf16 %v6277, %v6275
      %v6396 = vpack.c.bf16 %v6278, %v6276
      %v6397 = vpack.c.bf16 %v6281, %v6279
      %v6398 = vpack.c.bf16 %v6282, %v6280
      %v6399 = vpack.c.bf16 %v6285, %v6283
      %v6400 = vpack.c.bf16 %v6286, %v6284
      %v6401 = vpack.c.bf16 %v6289, %v6287
      %v6402 = vpack.c.bf16 %v6290, %v6288
      %6413 = vrot.lane.b32.xlu0 %v6393, 17
      %v6414 = vpop.permute.xlu0 %6413
      %6415 = vrot.lane.b32.xlu0 %v6394, 17
      %v6416 = vpop.permute.xlu0 %6415
      %6417 = vrot.lane.b32.xlu0 %v6395, 17
      %v6418 = vpop.permute.xlu0 %6417
      %6419 = vrot.lane.b32.xlu0 %v6396, 17
      %v6420 = vpop.permute.xlu0 %6419
      %6421 = vrot.lane.b32.xlu0 %v6397, 17
      %v6422 = vpop.permute.xlu0 %6421
      %6423 = vrot.lane.b32.xlu0 %v6398, 17
      %v6424 = vpop.permute.xlu0 %6423
      %6425 = vrot.lane.b32.xlu0 %v6399, 17
      %v6426 = vpop.permute.xlu0 %6425
      %6427 = vrot.lane.b32.xlu0 %v6400, 17
      %v6428 = vpop.permute.xlu0 %6427
      %6429 = vrot.lane.b32.xlu0 %v6401, 17
      %v6430 = vpop.permute.xlu0 %6429
      %6431 = vrot.lane.b32.xlu0 %v6402, 17
      %v6432 = vpop.permute.xlu0 %6431
      %v6433 = vsel %vm508, %v6414, %v6416
      %v6434 = vsel %vm508, %v6418, %v6420
      %v6435 = vsel %vm508, %v6422, %v6424
      %v6436 = vsel %vm508, %v6426, %v6428
      %v6437 = vsel %vm508, %v6430, %v6432
      %v6444 = vsel %vm510, 0, %v6414
      %v6447 = vsel %vm510, 0, %v6418
      %v6450 = vsel %vm510, 0, %v6422
      %v6453 = vsel %vm510, 0, %v6426
      %v6456 = vsel %vm510, 0, %v6430
      %v6459 = vsel %vm510, %v6416, 0
      %v6461 = vsel %vm510, %v6420, 0
      %v6463 = vsel %vm510, %v6424, 0
      %v6465 = vsel %vm510, %v6428, 0
      %v6467 = vsel %vm510, %v6432, 0
      %v6478 = vunpack.c.l.b16 %v6322
      %v6479 = vunpack.c.l.b16 %v6323
      %v6480 = vunpack.c.l.b16 %v6324
      %v6481 = vunpack.c.l.b16 %v6325
      %v6482 = vunpack.c.l.b16 %v6326
      %v6483 = vunpack.c.l.b16 %v6327
      %v6484 = vunpack.c.l.b16 %v6328
      %v6485 = vunpack.c.l.b16 %v6329
      %v6486 = vunpack.c.l.b16 %v6330
      %v6487 = vunpack.c.l.b16 %v6331
      %v6488 = vpack.c.b16 %v6479, %v6478
      %v6489 = vpack.c.b16 %v6481, %v6480
      %v6490 = vpack.c.b16 %v6483, %v6482
      %v6491 = vpack.c.b16 %v6485, %v6484
      %v6492 = vpack.c.b16 %v6487, %v6486
      %6503 = vrot.lane.b32.xlu0 %v6444, 112
      %v6504 = vpop.permute.xlu0 %6503
      %6505 = vrot.lane.b32.xlu0 %v6433, 112
      %v6506 = vpop.permute.xlu0 %6505
      %6507 = vrot.lane.b32.xlu0 %v6459, 112
      %v6508 = vpop.permute.xlu0 %6507
      %6509 = vrot.lane.b32.xlu0 %v6447, 112
      %v6510 = vpop.permute.xlu0 %6509
      %6511 = vrot.lane.b32.xlu0 %v6434, 112
      %v6512 = vpop.permute.xlu0 %6511
      %6513 = vrot.lane.b32.xlu0 %v6461, 112
      %v6514 = vpop.permute.xlu0 %6513
      %6515 = vrot.lane.b32.xlu0 %v6450, 112
      %v6516 = vpop.permute.xlu0 %6515
      %6517 = vrot.lane.b32.xlu0 %v6435, 112
      %v6518 = vpop.permute.xlu0 %6517
      %6519 = vrot.lane.b32.xlu0 %v6463, 112
      %v6520 = vpop.permute.xlu0 %6519
      %6521 = vrot.lane.b32.xlu0 %v6453, 112
      %v6522 = vpop.permute.xlu0 %6521
      %6523 = vrot.lane.b32.xlu0 %v6436, 112
      %v6524 = vpop.permute.xlu0 %6523
      %6525 = vrot.lane.b32.xlu0 %v6465, 112
      %v6526 = vpop.permute.xlu0 %6525
      %6527 = vrot.lane.b32.xlu0 %v6456, 112
      %v6528 = vpop.permute.xlu0 %6527
      %6529 = vrot.lane.b32.xlu0 %v6437, 112
      %v6530 = vpop.permute.xlu0 %6529
      %6531 = vrot.lane.b32.xlu0 %v6467, 112
      %v6532 = vpop.permute.xlu0 %6531
      %v6533 = vsel %vm529, %v6504, %v6506
      %v6534 = vsel %vm529, %v6506, %v6508
      %v6535 = vsel %vm529, %v6510, %v6512
      %v6536 = vsel %vm529, %v6512, %v6514
      %v6537 = vsel %vm529, %v6516, %v6518
      %v6538 = vsel %vm529, %v6518, %v6520
      %v6539 = vsel %vm529, %v6522, %v6524
      %v6540 = vsel %vm529, %v6524, %v6526
      %v6541 = vsel %vm529, %v6528, %v6530
      %v6542 = vsel %vm529, %v6530, %v6532
      %v6554 = vsel %vm2706, %v6488, 0
      %v6557 = vsel %vm2706, %v6489, 0
      %v6560 = vsel %vm2706, %v6490, 0
      %v6563 = vsel %vm2706, %v6491, 0
      %v6566 = vsel %vm2706, %v6492, 0
      %6568 = vmatprep.subr.bf16.mxu0 %v6534
      %6569 = vmatpush1.bf16.msra.mxu0 %v6533
      %6570 = vmatprep.subr.bf16.mxu0 %v6536
      %6571 = vmatpush1.bf16.msra.mxu0 %v6535
      %6572 = vmatprep.subr.bf16.mxu0 %v6538
      %6573 = vmatpush1.bf16.msra.mxu0 %v6537
      %6574 = vmatprep.subr.bf16.mxu0 %v6540
      %6575 = vmatpush1.bf16.msra.mxu0 %v6539
      %6576 = vmatprep.subr.bf16.mxu0 %v6542
      %6577 = vmatpush1.bf16.msra.mxu0 %v6541
      %6578 = vmatprep.subr.bf16.mxu0 0
      %6579 = vmatpush1.bf16.msra.mxu0 0
      %6580 = vmatprep.subr.bf16.mxu0 0
      %6581 = vmatpush1.bf16.msra.mxu0 0
      %6582 = vmatprep.subr.bf16.mxu0 0
      %6583 = vmatpush1.bf16.msra.mxu0 0
      %6584 = vmatprep.subr.bf16.mxu0 0
      %6585 = vmatpush1.bf16.msra.mxu0 0
      %6586 = vmatprep.subr.bf16.mxu0 0
      %6587 = vmatpush1.bf16.msra.mxu0 0
      %6588 = vmatprep.subr.bf16.mxu0 0
      %6589 = vmatpush1.bf16.msra.mxu0 0
      %6590 = vmatprep.subr.bf16.mxu0 0
      %6591 = vmatpush1.bf16.msra.mxu0 0
      %6592 = vmatprep.subr.bf16.mxu0 0
      %6593 = vmatpush1.bf16.msra.mxu0 0
      %6594 = vmatprep.subr.bf16.mxu0 0
      %6595 = vmatpush1.bf16.msra.mxu0 0
      %6596 = vmatprep.subr.bf16.mxu0 0
      %6597 = vmatpush1.bf16.msra.mxu0 0
      %6598 = vmatprep.subr.bf16.mxu0 0
      %6599 = vmatpush1.bf16.msra.mxu0 0
      %6600 = vmatprep.mubr.bf16.mxu0 0
      %6601 = vmatmul.mubr.bf16.gmra.mrb[0].mxu0 %v6554
      %v6602 = vpop.f32.mrb[0].mxu0
      %v6603 = vadd.f32 0.0, %v6602
      %v6604 = vpop.f32.mrb[0].mxu0
      %v6605 = vadd.f32 0.0, %v6604
      %v6606 = vpop.f32.mrb[0].mxu0
      %v6607 = vadd.f32 0.0, %v6606
      %v6608 = vpop.f32.mrb[0].mxu0
      %v6609 = vadd.f32 0.0, %v6608
      %6610 = vmatprep.mubr.bf16.mxu0 0
      %6611 = vmatmul.mubr.bf16.gmra.mrb[0].mxu0 %v6557
      %v6612 = vpop.f32.mrb[0].mxu0
      %v6613 = vadd.f32 0.0, %v6612
      %v6614 = vpop.f32.mrb[0].mxu0
      %v6615 = vadd.f32 0.0, %v6614
      %v6616 = vpop.f32.mrb[0].mxu0
      %v6617 = vadd.f32 0.0, %v6616
      %v6618 = vpop.f32.mrb[0].mxu0
      %v6619 = vadd.f32 0.0, %v6618
      %6620 = vmatprep.mubr.bf16.mxu0 0
      %6621 = vmatmul.mubr.bf16.gmra.mrb[0].mxu0 %v6560
      %v6622 = vpop.f32.mrb[0].mxu0
      %v6623 = vadd.f32 0.0, %v6622
      %v6624 = vpop.f32.mrb[0].mxu0
      %v6625 = vadd.f32 0.0, %v6624
      %v6626 = vpop.f32.mrb[0].mxu0
      %v6627 = vadd.f32 0.0, %v6626
      %v6628 = vpop.f32.mrb[0].mxu0
      %v6629 = vadd.f32 0.0, %v6628
      %6630 = vmatprep.mubr.bf16.mxu0 0
      %6631 = vmatmul.mubr.bf16.gmra.mrb[0].mxu0 %v6563
      %v6632 = vpop.f32.mrb[0].mxu0
      %v6633 = vadd.f32 0.0, %v6632
      %v6634 = vpop.f32.mrb[0].mxu0
      %v6635 = vadd.f32 0.0, %v6634
      %v6636 = vpop.f32.mrb[0].mxu0
      %v6637 = vadd.f32 0.0, %v6636
      %v6638 = vpop.f32.mrb[0].mxu0
      %v6639 = vadd.f32 0.0, %v6638
      %6640 = vmatprep.mubr.bf16.mxu0 0
      %6641 = vmatmul.mubr.bf16.gmra.mrb[0].mxu0 %v6566
      %v6642 = vpop.f32.mrb[0].mxu0
      %v6643 = vadd.f32 0.0, %v6642
      %v6644 = vpop.f32.mrb[0].mxu0
      %v6645 = vadd.f32 0.0, %v6644
      %v6646 = vpop.f32.mrb[0].mxu0
      %v6647 = vadd.f32 0.0, %v6646
      %v6648 = vpop.f32.mrb[0].mxu0
      %v6649 = vadd.f32 0.0, %v6648
      %6650 = vdwg.mxu0
      %v6661 = vunpack.c.l.b16 %v6292
      %v6662 = vunpack.c.l.b16 %v6293
      %v6663 = vunpack.c.l.b16 %v6294
      %v6664 = vunpack.c.l.b16 %v6295
      %v6665 = vunpack.c.l.b16 %v6296
      %v6666 = vunpack.c.l.b16 %v6297
      %v6667 = vunpack.c.l.b16 %v6298
      %v6668 = vunpack.c.l.b16 %v6299
      %v6669 = vunpack.c.l.b16 %v6300
      %v6670 = vunpack.c.l.b16 %v6301
      %v6671 = vpack.c.b16 %v6662, %v6661
      %v6672 = vpack.c.b16 %v6664, %v6663
      %v6673 = vpack.c.b16 %v6666, %v6665
      %v6674 = vpack.c.b16 %v6668, %v6667
      %v6675 = vpack.c.b16 %v6670, %v6669
      %v6677 = vsel %vm2706, %v6671, 0
      %v6680 = vsel %vm2706, %v6672, 0
      %v6683 = vsel %vm2706, %v6673, 0
      %v6686 = vsel %vm2706, %v6674, 0
      %v6689 = vsel %vm2706, %v6675, 0
      %6691 = vmatprep.subr.bf16.mxu0 %v6433
      %6692 = vmatpush1.bf16.msra.mxu0 %v6444
      %6693 = vmatprep.subr.bf16.mxu0 %v6434
      %6694 = vmatpush1.bf16.msra.mxu0 %v6447
      %6695 = vmatprep.subr.bf16.mxu0 %v6435
      %6696 = vmatpush1.bf16.msra.mxu0 %v6450
      %6697 = vmatprep.subr.bf16.mxu0 %v6436
      %6698 = vmatpush1.bf16.msra.mxu0 %v6453
      %6699 = vmatprep.subr.bf16.mxu0 %v6437
      %6700 = vmatpush1.bf16.msra.mxu0 %v6456
      %6701 = vmatprep.subr.bf16.mxu0 0
      %6702 = vmatpush1.bf16.msra.mxu0 0
      %6703 = vmatprep.subr.bf16.mxu0 0
      %6704 = vmatpush1.bf16.msra.mxu0 0
      %6705 = vmatprep.subr.bf16.mxu0 0
      %6706 = vmatpush1.bf16.msra.mxu0 0
      %6707 = vmatprep.subr.bf16.mxu0 0
      %6708 = vmatpush1.bf16.msra.mxu0 0
      %6709 = vmatprep.subr.bf16.mxu0 0
      %6710 = vmatpush1.bf16.msra.mxu0 0
      %6711 = vmatprep.subr.bf16.mxu0 0
      %6712 = vmatpush1.bf16.msra.mxu0 0
      %6713 = vmatprep.subr.bf16.mxu0 0
      %6714 = vmatpush1.bf16.msra.mxu0 0
      %6715 = vmatprep.subr.bf16.mxu0 0
      %6716 = vmatpush1.bf16.msra.mxu0 0
      %6717 = vmatprep.subr.bf16.mxu0 0
      %6718 = vmatpush1.bf16.msra.mxu0 0
      %6719 = vmatprep.subr.bf16.mxu0 0
      %6720 = vmatpush1.bf16.msra.mxu0 0
      %6721 = vmatprep.subr.bf16.mxu0 0
      %6722 = vmatpush1.bf16.msra.mxu0 0
      %6723 = vmatprep.mubr.bf16.mxu0 0
      %6724 = vmatmul.mubr.bf16.gmra.mrb[0].mxu0 %v6677
      %v6725 = vpop.f32.mrb[0].mxu0
      %v6726 = vadd.f32 %v6603, %v6725
      %v6727 = vpop.f32.mrb[0].mxu0
      %v6728 = vadd.f32 %v6605, %v6727
      %v6729 = vpop.f32.mrb[0].mxu0
      %v6730 = vadd.f32 %v6607, %v6729
      %v6731 = vpop.f32.mrb[0].mxu0
      %v6732 = vadd.f32 %v6609, %v6731
      %6733 = vmatprep.mubr.bf16.mxu0 0
      %6734 = vmatmul.mubr.bf16.gmra.mrb[0].mxu0 %v6680
      %v6735 = vpop.f32.mrb[0].mxu0
      %v6736 = vadd.f32 %v6613, %v6735
      %v6737 = vpop.f32.mrb[0].mxu0
      %v6738 = vadd.f32 %v6615, %v6737
      %v6739 = vpop.f32.mrb[0].mxu0
      %v6740 = vadd.f32 %v6617, %v6739
      %v6741 = vpop.f32.mrb[0].mxu0
      %v6742 = vadd.f32 %v6619, %v6741
      %6743 = vmatprep.mubr.bf16.mxu0 0
      %6744 = vmatmul.mubr.bf16.gmra.mrb[0].mxu0 %v6683
      %v6745 = vpop.f32.mrb[0].mxu0
      %v6746 = vadd.f32 %v6623, %v6745
      %v6747 = vpop.f32.mrb[0].mxu0
      %v6748 = vadd.f32 %v6625, %v6747
      %v6749 = vpop.f32.mrb[0].mxu0
      %v6750 = vadd.f32 %v6627, %v6749
      %v6751 = vpop.f32.mrb[0].mxu0
      %v6752 = vadd.f32 %v6629, %v6751
      %6753 = vmatprep.mubr.bf16.mxu0 0
      %6754 = vmatmul.mubr.bf16.gmra.mrb[0].mxu0 %v6686
      %v6755 = vpop.f32.mrb[0].mxu0
      %v6756 = vadd.f32 %v6633, %v6755
      %v6757 = vpop.f32.mrb[0].mxu0
      %v6758 = vadd.f32 %v6635, %v6757
      %v6759 = vpop.f32.mrb[0].mxu0
      %v6760 = vadd.f32 %v6637, %v6759
      %v6761 = vpop.f32.mrb[0].mxu0
      %v6762 = vadd.f32 %v6639, %v6761
      %6763 = vmatprep.mubr.bf16.mxu0 0
      %6764 = vmatmul.mubr.bf16.gmra.mrb[0].mxu0 %v6689
      %v6765 = vpop.f32.mrb[0].mxu0
      %v6766 = vadd.f32 %v6643, %v6765
      %v6767 = vpop.f32.mrb[0].mxu0
      %v6768 = vadd.f32 %v6645, %v6767
      %v6769 = vpop.f32.mrb[0].mxu0
      %v6770 = vadd.f32 %v6647, %v6769
      %v6771 = vpop.f32.mrb[0].mxu0
      %v6772 = vadd.f32 %v6649, %v6771
      %6773 = vdwg.mxu0
      %v6784 = vunpack.c.l.b16 %v6352
      %v6785 = vunpack.c.l.b16 %v6353
      %v6786 = vunpack.c.l.b16 %v6354
      %v6787 = vunpack.c.l.b16 %v6355
      %v6788 = vunpack.c.l.b16 %v6356
      %v6789 = vunpack.c.l.b16 %v6357
      %v6790 = vunpack.c.l.b16 %v6358
      %v6791 = vunpack.c.l.b16 %v6359
      %v6792 = vunpack.c.l.b16 %v6360
      %v6793 = vunpack.c.l.b16 %v6361
      %v6794 = vpack.c.b16 %v6785, %v6784
      %v6795 = vpack.c.b16 %v6787, %v6786
      %v6796 = vpack.c.b16 %v6789, %v6788
      %v6797 = vpack.c.b16 %v6791, %v6790
      %v6798 = vpack.c.b16 %v6793, %v6792
      %6799 = vrot.lane.b32.xlu0 %v6444, 96
      %v6800 = vpop.permute.xlu0 %6799
      %6801 = vrot.lane.b32.xlu0 %v6433, 96
      %v6802 = vpop.permute.xlu0 %6801
      %6803 = vrot.lane.b32.xlu0 %v6459, 96
      %v6804 = vpop.permute.xlu0 %6803
      %6805 = vrot.lane.b32.xlu0 %v6447, 96
      %v6806 = vpop.permute.xlu0 %6805
      %6807 = vrot.lane.b32.xlu0 %v6434, 96
      %v6808 = vpop.permute.xlu0 %6807
      %6809 = vrot.lane.b32.xlu0 %v6461, 96
      %v6810 = vpop.permute.xlu0 %6809
      %6811 = vrot.lane.b32.xlu0 %v6450, 96
      %v6812 = vpop.permute.xlu0 %6811
      %6813 = vrot.lane.b32.xlu0 %v6435, 96
      %v6814 = vpop.permute.xlu0 %6813
      %6815 = vrot.lane.b32.xlu0 %v6463, 96
      %v6816 = vpop.permute.xlu0 %6815
      %6817 = vrot.lane.b32.xlu0 %v6453, 96
      %v6818 = vpop.permute.xlu0 %6817
      %6819 = vrot.lane.b32.xlu0 %v6436, 96
      %v6820 = vpop.permute.xlu0 %6819
      %6821 = vrot.lane.b32.xlu0 %v6465, 96
      %v6822 = vpop.permute.xlu0 %6821
      %6823 = vrot.lane.b32.xlu0 %v6456, 96
      %v6824 = vpop.permute.xlu0 %6823
      %6825 = vrot.lane.b32.xlu0 %v6437, 96
      %v6826 = vpop.permute.xlu0 %6825
      %6827 = vrot.lane.b32.xlu0 %v6467, 96
      %v6828 = vpop.permute.xlu0 %6827
      %v6829 = vsel %vm656, %v6800, %v6802
      %v6830 = vsel %vm656, %v6802, %v6804
      %v6831 = vsel %vm656, %v6806, %v6808
      %v6832 = vsel %vm656, %v6808, %v6810
      %v6833 = vsel %vm656, %v6812, %v6814
      %v6834 = vsel %vm656, %v6814, %v6816
      %v6835 = vsel %vm656, %v6818, %v6820
      %v6836 = vsel %vm656, %v6820, %v6822
      %v6837 = vsel %vm656, %v6824, %v6826
      %v6838 = vsel %vm656, %v6826, %v6828
      %v6850 = vsel %vm2706, %v6794, 0
      %v6853 = vsel %vm2706, %v6795, 0
      %v6856 = vsel %vm2706, %v6796, 0
      %v6859 = vsel %vm2706, %v6797, 0
      %v6862 = vsel %vm2706, %v6798, 0
      %6864 = vmatprep.subr.bf16.mxu0 %v6830
      %6865 = vmatpush1.bf16.msra.mxu0 %v6829
      %6866 = vmatprep.subr.bf16.mxu0 %v6832
      %6867 = vmatpush1.bf16.msra.mxu0 %v6831
      %6868 = vmatprep.subr.bf16.mxu0 %v6834
      %6869 = vmatpush1.bf16.msra.mxu0 %v6833
      %6870 = vmatprep.subr.bf16.mxu0 %v6836
      %6871 = vmatpush1.bf16.msra.mxu0 %v6835
      %6872 = vmatprep.subr.bf16.mxu0 %v6838
      %6873 = vmatpush1.bf16.msra.mxu0 %v6837
      %6874 = vmatprep.subr.bf16.mxu0 0
      %6875 = vmatpush1.bf16.msra.mxu0 0
      %6876 = vmatprep.subr.bf16.mxu0 0
      %6877 = vmatpush1.bf16.msra.mxu0 0
      %6878 = vmatprep.subr.bf16.mxu0 0
      %6879 = vmatpush1.bf16.msra.mxu0 0
      %6880 = vmatprep.subr.bf16.mxu0 0
      %6881 = vmatpush1.bf16.msra.mxu0 0
      %6882 = vmatprep.subr.bf16.mxu0 0
      %6883 = vmatpush1.bf16.msra.mxu0 0
      %6884 = vmatprep.subr.bf16.mxu0 0
      %6885 = vmatpush1.bf16.msra.mxu0 0
      %6886 = vmatprep.subr.bf16.mxu0 0
      %6887 = vmatpush1.bf16.msra.mxu0 0
      %6888 = vmatprep.subr.bf16.mxu0 0
      %6889 = vmatpush1.bf16.msra.mxu0 0
      %6890 = vmatprep.subr.bf16.mxu0 0
      %6891 = vmatpush1.bf16.msra.mxu0 0
      %6892 = vmatprep.subr.bf16.mxu0 0
      %6893 = vmatpush1.bf16.msra.mxu0 0
      %6894 = vmatprep.subr.bf16.mxu0 0
      %6895 = vmatpush1.bf16.msra.mxu0 0
      %6896 = vmatprep.mubr.bf16.mxu0 0
      %6897 = vmatmul.mubr.bf16.gmra.mrb[0].mxu0 %v6850
      %v6898 = vpop.f32.mrb[0].mxu0
      %v6899 = vadd.f32 0.0, %v6898
      %v6900 = vpop.f32.mrb[0].mxu0
      %v6901 = vadd.f32 0.0, %v6900
      %v6902 = vpop.f32.mrb[0].mxu0
      %v6903 = vadd.f32 0.0, %v6902
      %v6904 = vpop.f32.mrb[0].mxu0
      %v6905 = vadd.f32 0.0, %v6904
      %6906 = vmatprep.mubr.bf16.mxu0 0
      %6907 = vmatmul.mubr.bf16.gmra.mrb[0].mxu0 %v6853
      %v6908 = vpop.f32.mrb[0].mxu0
      %v6909 = vadd.f32 0.0, %v6908
      %v6910 = vpop.f32.mrb[0].mxu0
      %v6911 = vadd.f32 0.0, %v6910
      %v6912 = vpop.f32.mrb[0].mxu0
      %v6913 = vadd.f32 0.0, %v6912
      %v6914 = vpop.f32.mrb[0].mxu0
      %v6915 = vadd.f32 0.0, %v6914
      %6916 = vmatprep.mubr.bf16.mxu0 0
      %6917 = vmatmul.mubr.bf16.gmra.mrb[0].mxu0 %v6856
      %v6918 = vpop.f32.mrb[0].mxu0
      %v6919 = vadd.f32 0.0, %v6918
      %v6920 = vpop.f32.mrb[0].mxu0
      %v6921 = vadd.f32 0.0, %v6920
      %v6922 = vpop.f32.mrb[0].mxu0
      %v6923 = vadd.f32 0.0, %v6922
      %v6924 = vpop.f32.mrb[0].mxu0
      %v6925 = vadd.f32 0.0, %v6924
      %6926 = vmatprep.mubr.bf16.mxu0 0
      %6927 = vmatmul.mubr.bf16.gmra.mrb[0].mxu0 %v6859
      %v6928 = vpop.f32.mrb[0].mxu0
      %v6929 = vadd.f32 0.0, %v6928
      %v6930 = vpop.f32.mrb[0].mxu0
      %v6931 = vadd.f32 0.0, %v6930
      %v6932 = vpop.f32.mrb[0].mxu0
      %v6933 = vadd.f32 0.0, %v6932
      %v6934 = vpop.f32.mrb[0].mxu0
      %v6935 = vadd.f32 0.0, %v6934
      %6936 = vmatprep.mubr.bf16.mxu0 0
      %6937 = vmatmul.mubr.bf16.gmra.mrb[0].mxu0 %v6862
      %v6938 = vpop.f32.mrb[0].mxu0
      %v6939 = vadd.f32 0.0, %v6938
      %v6940 = vpop.f32.mrb[0].mxu0
      %v6941 = vadd.f32 0.0, %v6940
      %v6942 = vpop.f32.mrb[0].mxu0
      %v6943 = vadd.f32 0.0, %v6942
      %v6944 = vpop.f32.mrb[0].mxu0
      %v6945 = vadd.f32 0.0, %v6944
      %6946 = vdwg.mxu0
      %v6947 = vadd.f32 %v6726, %v6899
      %v6948 = vadd.f32 %v6728, %v6901
      %v6949 = vadd.f32 %v6730, %v6903
      %v6950 = vadd.f32 %v6732, %v6905
      %v6951 = vadd.f32 %v6736, %v6909
      %v6952 = vadd.f32 %v6738, %v6911
      %v6953 = vadd.f32 %v6740, %v6913
      %v6954 = vadd.f32 %v6742, %v6915
      %v6955 = vadd.f32 %v6746, %v6919
      %v6956 = vadd.f32 %v6748, %v6921
      %v6957 = vadd.f32 %v6750, %v6923
      %v6958 = vadd.f32 %v6752, %v6925
      %v6959 = vadd.f32 %v6756, %v6929
      %v6960 = vadd.f32 %v6758, %v6931
      %v6961 = vadd.f32 %v6760, %v6933
      %v6962 = vadd.f32 %v6762, %v6935
      %v6963 = vadd.f32 %v6766, %v6939
      %v6964 = vadd.f32 %v6768, %v6941
      %v6965 = vadd.f32 %v6770, %v6943
      %v6966 = vadd.f32 %v6772, %v6945
      %v6967 = vmul.f32 %v6947, %v466
      %v6968 = vmul.f32 %v6948, %v467
      %v6969 = vmul.f32 %v6949, %v466
      %v6970 = vmul.f32 %v6950, %v467
      %v6971 = vmul.f32 %v6951, %v466
      %v6972 = vmul.f32 %v6952, %v467
      %v6973 = vmul.f32 %v6953, %v466
      %v6974 = vmul.f32 %v6954, %v467
      %v6975 = vmul.f32 %v6955, %v466
      %v6976 = vmul.f32 %v6956, %v467
      %v6977 = vmul.f32 %v6957, %v466
      %v6978 = vmul.f32 %v6958, %v467
      %v6979 = vmul.f32 %v6959, %v466
      %v6980 = vmul.f32 %v6960, %v467
      %v6981 = vmul.f32 %v6961, %v466
      %v6982 = vmul.f32 %v6962, %v467
      %v6983 = vmul.f32 %v6963, %v466
      %v6984 = vmul.f32 %v6964, %v467
      %v6985 = vmul.f32 %v6965, %v466
      %v6986 = vmul.f32 %v6966, %v467
      %v6997 = vunpack.c.l.b16 %v6332
      %v6998 = vunpack.c.l.b16 %v6333
      %v6999 = vunpack.c.l.b16 %v6334
      %v7000 = vunpack.c.l.b16 %v6335
      %v7001 = vunpack.c.l.b16 %v6336
      %v7002 = vunpack.c.l.b16 %v6337
      %v7003 = vunpack.c.l.b16 %v6338
      %v7004 = vunpack.c.l.b16 %v6339
      %v7005 = vunpack.c.l.b16 %v6340
      %v7006 = vunpack.c.l.b16 %v6341
      %v7007 = vpack.c.b16 %v6998, %v6997
      %v7008 = vpack.c.b16 %v7000, %v6999
      %v7009 = vpack.c.b16 %v7002, %v7001
      %v7010 = vpack.c.b16 %v7004, %v7003
      %v7011 = vpack.c.b16 %v7006, %v7005
      %7012 = vrot.lane.b32.xlu0 %v6444, 111
      %v7013 = vpop.permute.xlu0 %7012
      %7014 = vrot.lane.b32.xlu0 %v6433, 111
      %v7015 = vpop.permute.xlu0 %7014
      %7016 = vrot.lane.b32.xlu0 %v6459, 111
      %v7017 = vpop.permute.xlu0 %7016
      %7018 = vrot.lane.b32.xlu0 %v6447, 111
      %v7019 = vpop.permute.xlu0 %7018
      %7020 = vrot.lane.b32.xlu0 %v6434, 111
      %v7021 = vpop.permute.xlu0 %7020
      %7022 = vrot.lane.b32.xlu0 %v6461, 111
      %v7023 = vpop.permute.xlu0 %7022
      %7024 = vrot.lane.b32.xlu0 %v6450, 111
      %v7025 = vpop.permute.xlu0 %7024
      %7026 = vrot.lane.b32.xlu0 %v6435, 111
      %v7027 = vpop.permute.xlu0 %7026
      %7028 = vrot.lane.b32.xlu0 %v6463, 111
      %v7029 = vpop.permute.xlu0 %7028
      %7030 = vrot.lane.b32.xlu0 %v6453, 111
      %v7031 = vpop.permute.xlu0 %7030
      %7032 = vrot.lane.b32.xlu0 %v6436, 111
      %v7033 = vpop.permute.xlu0 %7032
      %7034 = vrot.lane.b32.xlu0 %v6465, 111
      %v7035 = vpop.permute.xlu0 %7034
      %7036 = vrot.lane.b32.xlu0 %v6456, 111
      %v7037 = vpop.permute.xlu0 %7036
      %7038 = vrot.lane.b32.xlu0 %v6437, 111
      %v7039 = vpop.permute.xlu0 %7038
      %7040 = vrot.lane.b32.xlu0 %v6467, 111
      %v7041 = vpop.permute.xlu0 %7040
      %v7042 = vsel %vm730, %v7013, %v7015
      %v7043 = vsel %vm730, %v7015, %v7017
      %v7044 = vsel %vm730, %v7019, %v7021
      %v7045 = vsel %vm730, %v7021, %v7023
      %v7046 = vsel %vm730, %v7025, %v7027
      %v7047 = vsel %vm730, %v7027, %v7029
      %v7048 = vsel %vm730, %v7031, %v7033
      %v7049 = vsel %vm730, %v7033, %v7035
      %v7050 = vsel %vm730, %v7037, %v7039
      %v7051 = vsel %vm730, %v7039, %v7041
      %v7063 = vsel %vm2706, %v7007, 0
      %v7066 = vsel %vm2706, %v7008, 0
      %v7069 = vsel %vm2706, %v7009, 0
      %v7072 = vsel %vm2706, %v7010, 0
      %v7075 = vsel %vm2706, %v7011, 0
      %7077 = vmatprep.subr.bf16.mxu0 %v7043
      %7078 = vmatpush1.bf16.msra.mxu0 %v7042
      %7079 = vmatprep.subr.bf16.mxu0 %v7045
      %7080 = vmatpush1.bf16.msra.mxu0 %v7044
      %7081 = vmatprep.subr.bf16.mxu0 %v7047
      %7082 = vmatpush1.bf16.msra.mxu0 %v7046
      %7083 = vmatprep.subr.bf16.mxu0 %v7049
      %7084 = vmatpush1.bf16.msra.mxu0 %v7048
      %7085 = vmatprep.subr.bf16.mxu0 %v7051
      %7086 = vmatpush1.bf16.msra.mxu0 %v7050
      %7087 = vmatprep.subr.bf16.mxu0 0
      %7088 = vmatpush1.bf16.msra.mxu0 0
      %7089 = vmatprep.subr.bf16.mxu0 0
      %7090 = vmatpush1.bf16.msra.mxu0 0
      %7091 = vmatprep.subr.bf16.mxu0 0
      %7092 = vmatpush1.bf16.msra.mxu0 0
      %7093 = vmatprep.subr.bf16.mxu0 0
      %7094 = vmatpush1.bf16.msra.mxu0 0
      %7095 = vmatprep.subr.bf16.mxu0 0
      %7096 = vmatpush1.bf16.msra.mxu0 0
      %7097 = vmatprep.subr.bf16.mxu0 0
      %7098 = vmatpush1.bf16.msra.mxu0 0
      %7099 = vmatprep.subr.bf16.mxu0 0
      %7100 = vmatpush1.bf16.msra.mxu0 0
      %7101 = vmatprep.subr.bf16.mxu0 0
      %7102 = vmatpush1.bf16.msra.mxu0 0
      %7103 = vmatprep.subr.bf16.mxu0 0
      %7104 = vmatpush1.bf16.msra.mxu0 0
      %7105 = vmatprep.subr.bf16.mxu0 0
      %7106 = vmatpush1.bf16.msra.mxu0 0
      %7107 = vmatprep.subr.bf16.mxu0 0
      %7108 = vmatpush1.bf16.msra.mxu0 0
      %7109 = vmatprep.mubr.bf16.mxu0 0
      %7110 = vmatmul.mubr.bf16.gmra.mrb[0].mxu0 %v7063
      %v7111 = vpop.f32.mrb[0].mxu0
      %v7112 = vadd.f32 0.0, %v7111
      %v7113 = vpop.f32.mrb[0].mxu0
      %v7114 = vadd.f32 0.0, %v7113
      %v7115 = vpop.f32.mrb[0].mxu0
      %v7116 = vadd.f32 0.0, %v7115
      %v7117 = vpop.f32.mrb[0].mxu0
      %v7118 = vadd.f32 0.0, %v7117
      %7119 = vmatprep.mubr.bf16.mxu0 0
      %7120 = vmatmul.mubr.bf16.gmra.mrb[0].mxu0 %v7066
      %v7121 = vpop.f32.mrb[0].mxu0
      %v7122 = vadd.f32 0.0, %v7121
      %v7123 = vpop.f32.mrb[0].mxu0
      %v7124 = vadd.f32 0.0, %v7123
      %v7125 = vpop.f32.mrb[0].mxu0
      %v7126 = vadd.f32 0.0, %v7125
      %v7127 = vpop.f32.mrb[0].mxu0
      %v7128 = vadd.f32 0.0, %v7127
      %7129 = vmatprep.mubr.bf16.mxu0 0
      %7130 = vmatmul.mubr.bf16.gmra.mrb[0].mxu0 %v7069
      %v7131 = vpop.f32.mrb[0].mxu0
      %v7132 = vadd.f32 0.0, %v7131
      %v7133 = vpop.f32.mrb[0].mxu0
      %v7134 = vadd.f32 0.0, %v7133
      %v7135 = vpop.f32.mrb[0].mxu0
      %v7136 = vadd.f32 0.0, %v7135
      %v7137 = vpop.f32.mrb[0].mxu0
      %v7138 = vadd.f32 0.0, %v7137
      %7139 = vmatprep.mubr.bf16.mxu0 0
      %7140 = vmatmul.mubr.bf16.gmra.mrb[0].mxu0 %v7072
      %v7141 = vpop.f32.mrb[0].mxu0
      %v7142 = vadd.f32 0.0, %v7141
      %v7143 = vpop.f32.mrb[0].mxu0
      %v7144 = vadd.f32 0.0, %v7143
      %v7145 = vpop.f32.mrb[0].mxu0
      %v7146 = vadd.f32 0.0, %v7145
      %v7147 = vpop.f32.mrb[0].mxu0
      %v7148 = vadd.f32 0.0, %v7147
      %7149 = vmatprep.mubr.bf16.mxu0 0
      %7150 = vmatmul.mubr.bf16.gmra.mrb[0].mxu0 %v7075
      %v7151 = vpop.f32.mrb[0].mxu0
      %v7152 = vadd.f32 0.0, %v7151
      %v7153 = vpop.f32.mrb[0].mxu0
      %v7154 = vadd.f32 0.0, %v7153
      %v7155 = vpop.f32.mrb[0].mxu0
      %v7156 = vadd.f32 0.0, %v7155
      %v7157 = vpop.f32.mrb[0].mxu0
      %v7158 = vadd.f32 0.0, %v7157
      %7159 = vdwg.mxu0
      %v7170 = vunpack.c.l.b16 %v6302
      %v7171 = vunpack.c.l.b16 %v6303
      %v7172 = vunpack.c.l.b16 %v6304
      %v7173 = vunpack.c.l.b16 %v6305
      %v7174 = vunpack.c.l.b16 %v6306
      %v7175 = vunpack.c.l.b16 %v6307
      %v7176 = vunpack.c.l.b16 %v6308
      %v7177 = vunpack.c.l.b16 %v6309
      %v7178 = vunpack.c.l.b16 %v6310
      %v7179 = vunpack.c.l.b16 %v6311
      %v7180 = vpack.c.b16 %v7171, %v7170
      %v7181 = vpack.c.b16 %v7173, %v7172
      %v7182 = vpack.c.b16 %v7175, %v7174
      %v7183 = vpack.c.b16 %v7177, %v7176
      %v7184 = vpack.c.b16 %v7179, %v7178
      %7185 = vrot.lane.b32.xlu0 %v6444, 127
      %v7186 = vpop.permute.xlu0 %7185
      %7187 = vrot.lane.b32.xlu0 %v6433, 127
      %v7188 = vpop.permute.xlu0 %7187
      %7189 = vrot.lane.b32.xlu0 %v6459, 127
      %v7190 = vpop.permute.xlu0 %7189
      %7191 = vrot.lane.b32.xlu0 %v6447, 127
      %v7192 = vpop.permute.xlu0 %7191
      %7193 = vrot.lane.b32.xlu0 %v6434, 127
      %v7194 = vpop.permute.xlu0 %7193
      %7195 = vrot.lane.b32.xlu0 %v6461, 127
      %v7196 = vpop.permute.xlu0 %7195
      %7197 = vrot.lane.b32.xlu0 %v6450, 127
      %v7198 = vpop.permute.xlu0 %7197
      %7199 = vrot.lane.b32.xlu0 %v6435, 127
      %v7200 = vpop.permute.xlu0 %7199
      %7201 = vrot.lane.b32.xlu0 %v6463, 127
      %v7202 = vpop.permute.xlu0 %7201
      %7203 = vrot.lane.b32.xlu0 %v6453, 127
      %v7204 = vpop.permute.xlu0 %7203
      %7205 = vrot.lane.b32.xlu0 %v6436, 127
      %v7206 = vpop.permute.xlu0 %7205
      %7207 = vrot.lane.b32.xlu0 %v6465, 127
      %v7208 = vpop.permute.xlu0 %7207
      %7209 = vrot.lane.b32.xlu0 %v6456, 127
      %v7210 = vpop.permute.xlu0 %7209
      %7211 = vrot.lane.b32.xlu0 %v6437, 127
      %v7212 = vpop.permute.xlu0 %7211
      %7213 = vrot.lane.b32.xlu0 %v6467, 127
      %v7214 = vpop.permute.xlu0 %7213
      %v7215 = vsel %vm796, %v7186, %v7188
      %v7216 = vsel %vm796, %v7188, %v7190
      %v7217 = vsel %vm796, %v7192, %v7194
      %v7218 = vsel %vm796, %v7194, %v7196
      %v7219 = vsel %vm796, %v7198, %v7200
      %v7220 = vsel %vm796, %v7200, %v7202
      %v7221 = vsel %vm796, %v7204, %v7206
      %v7222 = vsel %vm796, %v7206, %v7208
      %v7223 = vsel %vm796, %v7210, %v7212
      %v7224 = vsel %vm796, %v7212, %v7214
      %v7236 = vsel %vm2706, %v7180, 0
      %v7239 = vsel %vm2706, %v7181, 0
      %v7242 = vsel %vm2706, %v7182, 0
      %v7245 = vsel %vm2706, %v7183, 0
      %v7248 = vsel %vm2706, %v7184, 0
      %7250 = vmatprep.subr.bf16.mxu0 %v7216
      %7251 = vmatpush1.bf16.msra.mxu0 %v7215
      %7252 = vmatprep.subr.bf16.mxu0 %v7218
      %7253 = vmatpush1.bf16.msra.mxu0 %v7217
      %7254 = vmatprep.subr.bf16.mxu0 %v7220
      %7255 = vmatpush1.bf16.msra.mxu0 %v7219
      %7256 = vmatprep.subr.bf16.mxu0 %v7222
      %7257 = vmatpush1.bf16.msra.mxu0 %v7221
      %7258 = vmatprep.subr.bf16.mxu0 %v7224
      %7259 = vmatpush1.bf16.msra.mxu0 %v7223
      %7260 = vmatprep.subr.bf16.mxu0 0
      %7261 = vmatpush1.bf16.msra.mxu0 0
      %7262 = vmatprep.subr.bf16.mxu0 0
      %7263 = vmatpush1.bf16.msra.mxu0 0
      %7264 = vmatprep.subr.bf16.mxu0 0
      %7265 = vmatpush1.bf16.msra.mxu0 0
      %7266 = vmatprep.subr.bf16.mxu0 0
      %7267 = vmatpush1.bf16.msra.mxu0 0
      %7268 = vmatprep.subr.bf16.mxu0 0
      %7269 = vmatpush1.bf16.msra.mxu0 0
      %7270 = vmatprep.subr.bf16.mxu0 0
      %7271 = vmatpush1.bf16.msra.mxu0 0
      %7272 = vmatprep.subr.bf16.mxu0 0
      %7273 = vmatpush1.bf16.msra.mxu0 0
      %7274 = vmatprep.subr.bf16.mxu0 0
      %7275 = vmatpush1.bf16.msra.mxu0 0
      %7276 = vmatprep.subr.bf16.mxu0 0
      %7277 = vmatpush1.bf16.msra.mxu0 0
      %7278 = vmatprep.subr.bf16.mxu0 0
      %7279 = vmatpush1.bf16.msra.mxu0 0
      %7280 = vmatprep.subr.bf16.mxu0 0
      %7281 = vmatpush1.bf16.msra.mxu0 0
      %7282 = vmatprep.mubr.bf16.mxu0 0
      %7283 = vmatmul.mubr.bf16.gmra.mrb[0].mxu0 %v7236
      %v7284 = vpop.f32.mrb[0].mxu0
      %v7285 = vadd.f32 %v7112, %v7284
      %v7286 = vpop.f32.mrb[0].mxu0
      %v7287 = vadd.f32 %v7114, %v7286
      %v7288 = vpop.f32.mrb[0].mxu0
      %v7289 = vadd.f32 %v7116, %v7288
      %v7290 = vpop.f32.mrb[0].mxu0
      %v7291 = vadd.f32 %v7118, %v7290
      %7292 = vmatprep.mubr.bf16.mxu0 0
      %7293 = vmatmul.mubr.bf16.gmra.mrb[0].mxu0 %v7239
      %v7294 = vpop.f32.mrb[0].mxu0
      %v7295 = vadd.f32 %v7122, %v7294
      %v7296 = vpop.f32.mrb[0].mxu0
      %v7297 = vadd.f32 %v7124, %v7296
      %v7298 = vpop.f32.mrb[0].mxu0
      %v7299 = vadd.f32 %v7126, %v7298
      %v7300 = vpop.f32.mrb[0].mxu0
      %v7301 = vadd.f32 %v7128, %v7300
      %7302 = vmatprep.mubr.bf16.mxu0 0
      %7303 = vmatmul.mubr.bf16.gmra.mrb[0].mxu0 %v7242
      %v7304 = vpop.f32.mrb[0].mxu0
      %v7305 = vadd.f32 %v7132, %v7304
      %v7306 = vpop.f32.mrb[0].mxu0
      %v7307 = vadd.f32 %v7134, %v7306
      %v7308 = vpop.f32.mrb[0].mxu0
      %v7309 = vadd.f32 %v7136, %v7308
      %v7310 = vpop.f32.mrb[0].mxu0
      %v7311 = vadd.f32 %v7138, %v7310
      %7312 = vmatprep.mubr.bf16.mxu0 0
      %7313 = vmatmul.mubr.bf16.gmra.mrb[0].mxu0 %v7245
      %v7314 = vpop.f32.mrb[0].mxu0
      %v7315 = vadd.f32 %v7142, %v7314
      %v7316 = vpop.f32.mrb[0].mxu0
      %v7317 = vadd.f32 %v7144, %v7316
      %v7318 = vpop.f32.mrb[0].mxu0
      %v7319 = vadd.f32 %v7146, %v7318
      %v7320 = vpop.f32.mrb[0].mxu0
      %v7321 = vadd.f32 %v7148, %v7320
      %7322 = vmatprep.mubr.bf16.mxu0 0
      %7323 = vmatmul.mubr.bf16.gmra.mrb[0].mxu0 %v7248
      %v7324 = vpop.f32.mrb[0].mxu0
      %v7325 = vadd.f32 %v7152, %v7324
      %v7326 = vpop.f32.mrb[0].mxu0
      %v7327 = vadd.f32 %v7154, %v7326
      %v7328 = vpop.f32.mrb[0].mxu0
      %v7329 = vadd.f32 %v7156, %v7328
      %v7330 = vpop.f32.mrb[0].mxu0
      %v7331 = vadd.f32 %v7158, %v7330
      %7332 = vdwg.mxu0
      %v7343 = vunpack.c.l.b16 %v6362
      %v7344 = vunpack.c.l.b16 %v6363
      %v7345 = vunpack.c.l.b16 %v6364
      %v7346 = vunpack.c.l.b16 %v6365
      %v7347 = vunpack.c.l.b16 %v6366
      %v7348 = vunpack.c.l.b16 %v6367
      %v7349 = vunpack.c.l.b16 %v6368
      %v7350 = vunpack.c.l.b16 %v6369
      %v7351 = vunpack.c.l.b16 %v6370
      %v7352 = vunpack.c.l.b16 %v6371
      %v7353 = vpack.c.b16 %v7344, %v7343
      %v7354 = vpack.c.b16 %v7346, %v7345
      %v7355 = vpack.c.b16 %v7348, %v7347
      %v7356 = vpack.c.b16 %v7350, %v7349
      %v7357 = vpack.c.b16 %v7352, %v7351
      %7358 = vrot.lane.b32.xlu0 %v6444, 95
      %v7359 = vpop.permute.xlu0 %7358
      %7360 = vrot.lane.b32.xlu0 %v6433, 95
      %v7361 = vpop.permute.xlu0 %7360
      %7362 = vrot.lane.b32.xlu0 %v6459, 95
      %v7363 = vpop.permute.xlu0 %7362
      %7364 = vrot.lane.b32.xlu0 %v6447, 95
      %v7365 = vpop.permute.xlu0 %7364
      %7366 = vrot.lane.b32.xlu0 %v6434, 95
      %v7367 = vpop.permute.xlu0 %7366
      %7368 = vrot.lane.b32.xlu0 %v6461, 95
      %v7369 = vpop.permute.xlu0 %7368
      %7370 = vrot.lane.b32.xlu0 %v6450, 95
      %v7371 = vpop.permute.xlu0 %7370
      %7372 = vrot.lane.b32.xlu0 %v6435, 95
      %v7373 = vpop.permute.xlu0 %7372
      %7374 = vrot.lane.b32.xlu0 %v6463, 95
      %v7375 = vpop.permute.xlu0 %7374
      %7376 = vrot.lane.b32.xlu0 %v6453, 95
      %v7377 = vpop.permute.xlu0 %7376
      %7378 = vrot.lane.b32.xlu0 %v6436, 95
      %v7379 = vpop.permute.xlu0 %7378
      %7380 = vrot.lane.b32.xlu0 %v6465, 95
      %v7381 = vpop.permute.xlu0 %7380
      %7382 = vrot.lane.b32.xlu0 %v6456, 95
      %v7383 = vpop.permute.xlu0 %7382
      %7384 = vrot.lane.b32.xlu0 %v6437, 95
      %v7385 = vpop.permute.xlu0 %7384
      %7386 = vrot.lane.b32.xlu0 %v6467, 95
      %v7387 = vpop.permute.xlu0 %7386
      %v7388 = vsel %vm862, %v7359, %v7361
      %v7389 = vsel %vm862, %v7361, %v7363
      %v7390 = vsel %vm862, %v7365, %v7367
      %v7391 = vsel %vm862, %v7367, %v7369
      %v7392 = vsel %vm862, %v7371, %v7373
      %v7393 = vsel %vm862, %v7373, %v7375
      %v7394 = vsel %vm862, %v7377, %v7379
      %v7395 = vsel %vm862, %v7379, %v7381
      %v7396 = vsel %vm862, %v7383, %v7385
      %v7397 = vsel %vm862, %v7385, %v7387
      %v7409 = vsel %vm2706, %v7353, 0
      %v7412 = vsel %vm2706, %v7354, 0
      %v7415 = vsel %vm2706, %v7355, 0
      %v7418 = vsel %vm2706, %v7356, 0
      %v7421 = vsel %vm2706, %v7357, 0
      %7423 = vmatprep.subr.bf16.mxu0 %v7389
      %7424 = vmatpush1.bf16.msra.mxu0 %v7388
      %7425 = vmatprep.subr.bf16.mxu0 %v7391
      %7426 = vmatpush1.bf16.msra.mxu0 %v7390
      %7427 = vmatprep.subr.bf16.mxu0 %v7393
      %7428 = vmatpush1.bf16.msra.mxu0 %v7392
      %7429 = vmatprep.subr.bf16.mxu0 %v7395
      %7430 = vmatpush1.bf16.msra.mxu0 %v7394
      %7431 = vmatprep.subr.bf16.mxu0 %v7397
      %7432 = vmatpush1.bf16.msra.mxu0 %v7396
      %7433 = vmatprep.subr.bf16.mxu0 0
      %7434 = vmatpush1.bf16.msra.mxu0 0
      %7435 = vmatprep.subr.bf16.mxu0 0
      %7436 = vmatpush1.bf16.msra.mxu0 0
      %7437 = vmatprep.subr.bf16.mxu0 0
      %7438 = vmatpush1.bf16.msra.mxu0 0
      %7439 = vmatprep.subr.bf16.mxu0 0
      %7440 = vmatpush1.bf16.msra.mxu0 0
      %7441 = vmatprep.subr.bf16.mxu0 0
      %7442 = vmatpush1.bf16.msra.mxu0 0
      %7443 = vmatprep.subr.bf16.mxu0 0
      %7444 = vmatpush1.bf16.msra.mxu0 0
      %7445 = vmatprep.subr.bf16.mxu0 0
      %7446 = vmatpush1.bf16.msra.mxu0 0
      %7447 = vmatprep.subr.bf16.mxu0 0
      %7448 = vmatpush1.bf16.msra.mxu0 0
      %7449 = vmatprep.subr.bf16.mxu0 0
      %7450 = vmatpush1.bf16.msra.mxu0 0
      %7451 = vmatprep.subr.bf16.mxu0 0
      %7452 = vmatpush1.bf16.msra.mxu0 0
      %7453 = vmatprep.subr.bf16.mxu0 0
      %7454 = vmatpush1.bf16.msra.mxu0 0
      %7455 = vmatprep.mubr.bf16.mxu0 0
      %7456 = vmatmul.mubr.bf16.gmra.mrb[0].mxu0 %v7409
      %v7457 = vpop.f32.mrb[0].mxu0
      %v7458 = vadd.f32 0.0, %v7457
      %v7459 = vpop.f32.mrb[0].mxu0
      %v7460 = vadd.f32 0.0, %v7459
      %v7461 = vpop.f32.mrb[0].mxu0
      %v7462 = vadd.f32 0.0, %v7461
      %v7463 = vpop.f32.mrb[0].mxu0
      %v7464 = vadd.f32 0.0, %v7463
      %7465 = vmatprep.mubr.bf16.mxu0 0
      %7466 = vmatmul.mubr.bf16.gmra.mrb[0].mxu0 %v7412
      %v7467 = vpop.f32.mrb[0].mxu0
      %v7468 = vadd.f32 0.0, %v7467
      %v7469 = vpop.f32.mrb[0].mxu0
      %v7470 = vadd.f32 0.0, %v7469
      %v7471 = vpop.f32.mrb[0].mxu0
      %v7472 = vadd.f32 0.0, %v7471
      %v7473 = vpop.f32.mrb[0].mxu0
      %v7474 = vadd.f32 0.0, %v7473
      %7475 = vmatprep.mubr.bf16.mxu0 0
      %7476 = vmatmul.mubr.bf16.gmra.mrb[0].mxu0 %v7415
      %v7477 = vpop.f32.mrb[0].mxu0
      %v7478 = vadd.f32 0.0, %v7477
      %v7479 = vpop.f32.mrb[0].mxu0
      %v7480 = vadd.f32 0.0, %v7479
      %v7481 = vpop.f32.mrb[0].mxu0
      %v7482 = vadd.f32 0.0, %v7481
      %v7483 = vpop.f32.mrb[0].mxu0
      %v7484 = vadd.f32 0.0, %v7483
      %7485 = vmatprep.mubr.bf16.mxu0 0
      %7486 = vmatmul.mubr.bf16.gmra.mrb[0].mxu0 %v7418
      %v7487 = vpop.f32.mrb[0].mxu0
      %v7488 = vadd.f32 0.0, %v7487
      %v7489 = vpop.f32.mrb[0].mxu0
      %v7490 = vadd.f32 0.0, %v7489
      %v7491 = vpop.f32.mrb[0].mxu0
      %v7492 = vadd.f32 0.0, %v7491
      %v7493 = vpop.f32.mrb[0].mxu0
      %v7494 = vadd.f32 0.0, %v7493
      %7495 = vmatprep.mubr.bf16.mxu0 0
      %7496 = vmatmul.mubr.bf16.gmra.mrb[0].mxu0 %v7421
      %v7497 = vpop.f32.mrb[0].mxu0
      %v7498 = vadd.f32 0.0, %v7497
      %v7499 = vpop.f32.mrb[0].mxu0
      %v7500 = vadd.f32 0.0, %v7499
      %v7501 = vpop.f32.mrb[0].mxu0
      %v7502 = vadd.f32 0.0, %v7501
      %v7503 = vpop.f32.mrb[0].mxu0
      %v7504 = vadd.f32 0.0, %v7503
      %7505 = vdwg.mxu0
      %v7506 = vadd.f32 %v7285, %v7458
      %v7507 = vadd.f32 %v7287, %v7460
      %v7508 = vadd.f32 %v7289, %v7462
      %v7509 = vadd.f32 %v7291, %v7464
      %v7510 = vadd.f32 %v7295, %v7468
      %v7511 = vadd.f32 %v7297, %v7470
      %v7512 = vadd.f32 %v7299, %v7472
      %v7513 = vadd.f32 %v7301, %v7474
      %v7514 = vadd.f32 %v7305, %v7478
      %v7515 = vadd.f32 %v7307, %v7480
      %v7516 = vadd.f32 %v7309, %v7482
      %v7517 = vadd.f32 %v7311, %v7484
      %v7518 = vadd.f32 %v7315, %v7488
      %v7519 = vadd.f32 %v7317, %v7490
      %v7520 = vadd.f32 %v7319, %v7492
      %v7521 = vadd.f32 %v7321, %v7494
      %v7522 = vadd.f32 %v7325, %v7498
      %v7523 = vadd.f32 %v7327, %v7500
      %v7524 = vadd.f32 %v7329, %v7502
      %v7525 = vadd.f32 %v7331, %v7504
      %v7526 = vadd.f32 %v6967, %v7506
      %v7527 = vadd.f32 %v6968, %v7507
      %v7528 = vadd.f32 %v6969, %v7508
      %v7529 = vadd.f32 %v6970, %v7509
      %v7530 = vadd.f32 %v6971, %v7510
      %v7531 = vadd.f32 %v6972, %v7511
      %v7532 = vadd.f32 %v6973, %v7512
      %v7533 = vadd.f32 %v6974, %v7513
      %v7534 = vadd.f32 %v6975, %v7514
      %v7535 = vadd.f32 %v6976, %v7515
      %v7536 = vadd.f32 %v6977, %v7516
      %v7537 = vadd.f32 %v6978, %v7517
      %v7538 = vadd.f32 %v6979, %v7518
      %v7539 = vadd.f32 %v6980, %v7519
      %v7540 = vadd.f32 %v6981, %v7520
      %v7541 = vadd.f32 %v6982, %v7521
      %v7542 = vadd.f32 %v6983, %v7522
      %v7543 = vadd.f32 %v6984, %v7523
      %v7544 = vadd.f32 %v6985, %v7524
      %v7545 = vadd.f32 %v6986, %v7525
      %v7556 = vunpack.c.l.b16 %v6342
      %v7557 = vunpack.c.l.b16 %v6343
      %v7558 = vunpack.c.l.b16 %v6344
      %v7559 = vunpack.c.l.b16 %v6345
      %v7560 = vunpack.c.l.b16 %v6346
      %v7561 = vunpack.c.l.b16 %v6347
      %v7562 = vunpack.c.l.b16 %v6348
      %v7563 = vunpack.c.l.b16 %v6349
      %v7564 = vunpack.c.l.b16 %v6350
      %v7565 = vunpack.c.l.b16 %v6351
      %v7566 = vpack.c.b16 %v7557, %v7556
      %v7567 = vpack.c.b16 %v7559, %v7558
      %v7568 = vpack.c.b16 %v7561, %v7560
      %v7569 = vpack.c.b16 %v7563, %v7562
      %v7570 = vpack.c.b16 %v7565, %v7564
      %7571 = vrot.lane.b32.xlu0 %v6444, 110
      %v7572 = vpop.permute.xlu0 %7571
      %7573 = vrot.lane.b32.xlu0 %v6433, 110
      %v7574 = vpop.permute.xlu0 %7573
      %7575 = vrot.lane.b32.xlu0 %v6459, 110
      %v7576 = vpop.permute.xlu0 %7575
      %7577 = vrot.lane.b32.xlu0 %v6447, 110
      %v7578 = vpop.permute.xlu0 %7577
      %7579 = vrot.lane.b32.xlu0 %v6434, 110
      %v7580 = vpop.permute.xlu0 %7579
      %7581 = vrot.lane.b32.xlu0 %v6461, 110
      %v7582 = vpop.permute.xlu0 %7581
      %7583 = vrot.lane.b32.xlu0 %v6450, 110
      %v7584 = vpop.permute.xlu0 %7583
      %7585 = vrot.lane.b32.xlu0 %v6435, 110
      %v7586 = vpop.permute.xlu0 %7585
      %7587 = vrot.lane.b32.xlu0 %v6463, 110
      %v7588 = vpop.permute.xlu0 %7587
      %7589 = vrot.lane.b32.xlu0 %v6453, 110
      %v7590 = vpop.permute.xlu0 %7589
      %7591 = vrot.lane.b32.xlu0 %v6436, 110
      %v7592 = vpop.permute.xlu0 %7591
      %7593 = vrot.lane.b32.xlu0 %v6465, 110
      %v7594 = vpop.permute.xlu0 %7593
      %7595 = vrot.lane.b32.xlu0 %v6456, 110
      %v7596 = vpop.permute.xlu0 %7595
      %7597 = vrot.lane.b32.xlu0 %v6437, 110
      %v7598 = vpop.permute.xlu0 %7597
      %7599 = vrot.lane.b32.xlu0 %v6467, 110
      %v7600 = vpop.permute.xlu0 %7599
      %v7601 = vsel %vm936, %v7572, %v7574
      %v7602 = vsel %vm936, %v7574, %v7576
      %v7603 = vsel %vm936, %v7578, %v7580
      %v7604 = vsel %vm936, %v7580, %v7582
      %v7605 = vsel %vm936, %v7584, %v7586
      %v7606 = vsel %vm936, %v7586, %v7588
      %v7607 = vsel %vm936, %v7590, %v7592
      %v7608 = vsel %vm936, %v7592, %v7594
      %v7609 = vsel %vm936, %v7596, %v7598
      %v7610 = vsel %vm936, %v7598, %v7600
      %v7622 = vsel %vm2706, %v7566, 0
      %v7625 = vsel %vm2706, %v7567, 0
      %v7628 = vsel %vm2706, %v7568, 0
      %v7631 = vsel %vm2706, %v7569, 0
      %v7634 = vsel %vm2706, %v7570, 0
      %7636 = vmatprep.subr.bf16.mxu0 %v7602
      %7637 = vmatpush1.bf16.msra.mxu0 %v7601
      %7638 = vmatprep.subr.bf16.mxu0 %v7604
      %7639 = vmatpush1.bf16.msra.mxu0 %v7603
      %7640 = vmatprep.subr.bf16.mxu0 %v7606
      %7641 = vmatpush1.bf16.msra.mxu0 %v7605
      %7642 = vmatprep.subr.bf16.mxu0 %v7608
      %7643 = vmatpush1.bf16.msra.mxu0 %v7607
      %7644 = vmatprep.subr.bf16.mxu0 %v7610
      %7645 = vmatpush1.bf16.msra.mxu0 %v7609
      %7646 = vmatprep.subr.bf16.mxu0 0
      %7647 = vmatpush1.bf16.msra.mxu0 0
      %7648 = vmatprep.subr.bf16.mxu0 0
      %7649 = vmatpush1.bf16.msra.mxu0 0
      %7650 = vmatprep.subr.bf16.mxu0 0
      %7651 = vmatpush1.bf16.msra.mxu0 0
      %7652 = vmatprep.subr.bf16.mxu0 0
      %7653 = vmatpush1.bf16.msra.mxu0 0
      %7654 = vmatprep.subr.bf16.mxu0 0
      %7655 = vmatpush1.bf16.msra.mxu0 0
      %7656 = vmatprep.subr.bf16.mxu0 0
      %7657 = vmatpush1.bf16.msra.mxu0 0
      %7658 = vmatprep.subr.bf16.mxu0 0
      %7659 = vmatpush1.bf16.msra.mxu0 0
      %7660 = vmatprep.subr.bf16.mxu0 0
      %7661 = vmatpush1.bf16.msra.mxu0 0
      %7662 = vmatprep.subr.bf16.mxu0 0
      %7663 = vmatpush1.bf16.msra.mxu0 0
      %7664 = vmatprep.subr.bf16.mxu0 0
      %7665 = vmatpush1.bf16.msra.mxu0 0
      %7666 = vmatprep.subr.bf16.mxu0 0
      %7667 = vmatpush1.bf16.msra.mxu0 0
      %7668 = vmatprep.mubr.bf16.mxu0 0
      %7669 = vmatmul.mubr.bf16.gmra.mrb[0].mxu0 %v7622
      %v7670 = vpop.f32.mrb[0].mxu0
      %v7671 = vadd.f32 0.0, %v7670
      %v7672 = vpop.f32.mrb[0].mxu0
      %v7673 = vadd.f32 0.0, %v7672
      %v7674 = vpop.f32.mrb[0].mxu0
      %v7675 = vadd.f32 0.0, %v7674
      %v7676 = vpop.f32.mrb[0].mxu0
      %v7677 = vadd.f32 0.0, %v7676
      %7678 = vmatprep.mubr.bf16.mxu0 0
      %7679 = vmatmul.mubr.bf16.gmra.mrb[0].mxu0 %v7625
      %v7680 = vpop.f32.mrb[0].mxu0
      %v7681 = vadd.f32 0.0, %v7680
      %v7682 = vpop.f32.mrb[0].mxu0
      %v7683 = vadd.f32 0.0, %v7682
      %v7684 = vpop.f32.mrb[0].mxu0
      %v7685 = vadd.f32 0.0, %v7684
      %v7686 = vpop.f32.mrb[0].mxu0
      %v7687 = vadd.f32 0.0, %v7686
      %7688 = vmatprep.mubr.bf16.mxu0 0
      %7689 = vmatmul.mubr.bf16.gmra.mrb[0].mxu0 %v7628
      %v7690 = vpop.f32.mrb[0].mxu0
      %v7691 = vadd.f32 0.0, %v7690
      %v7692 = vpop.f32.mrb[0].mxu0
      %v7693 = vadd.f32 0.0, %v7692
      %v7694 = vpop.f32.mrb[0].mxu0
      %v7695 = vadd.f32 0.0, %v7694
      %v7696 = vpop.f32.mrb[0].mxu0
      %v7697 = vadd.f32 0.0, %v7696
      %7698 = vmatprep.mubr.bf16.mxu0 0
      %7699 = vmatmul.mubr.bf16.gmra.mrb[0].mxu0 %v7631
      %v7700 = vpop.f32.mrb[0].mxu0
      %v7701 = vadd.f32 0.0, %v7700
      %v7702 = vpop.f32.mrb[0].mxu0
      %v7703 = vadd.f32 0.0, %v7702
      %v7704 = vpop.f32.mrb[0].mxu0
      %v7705 = vadd.f32 0.0, %v7704
      %v7706 = vpop.f32.mrb[0].mxu0
      %v7707 = vadd.f32 0.0, %v7706
      %7708 = vmatprep.mubr.bf16.mxu0 0
      %7709 = vmatmul.mubr.bf16.gmra.mrb[0].mxu0 %v7634
      %v7710 = vpop.f32.mrb[0].mxu0
      %v7711 = vadd.f32 0.0, %v7710
      %v7712 = vpop.f32.mrb[0].mxu0
      %v7713 = vadd.f32 0.0, %v7712
      %v7714 = vpop.f32.mrb[0].mxu0
      %v7715 = vadd.f32 0.0, %v7714
      %v7716 = vpop.f32.mrb[0].mxu0
      %v7717 = vadd.f32 0.0, %v7716
      %7718 = vdwg.mxu0
      %v7729 = vunpack.c.l.b16 %v6312
      %v7730 = vunpack.c.l.b16 %v6313
      %v7731 = vunpack.c.l.b16 %v6314
      %v7732 = vunpack.c.l.b16 %v6315
      %v7733 = vunpack.c.l.b16 %v6316
      %v7734 = vunpack.c.l.b16 %v6317
      %v7735 = vunpack.c.l.b16 %v6318
      %v7736 = vunpack.c.l.b16 %v6319
      %v7737 = vunpack.c.l.b16 %v6320
      %v7738 = vunpack.c.l.b16 %v6321
      %v7739 = vpack.c.b16 %v7730, %v7729
      %v7740 = vpack.c.b16 %v7732, %v7731
      %v7741 = vpack.c.b16 %v7734, %v7733
      %v7742 = vpack.c.b16 %v7736, %v7735
      %v7743 = vpack.c.b16 %v7738, %v7737
      %7744 = vrot.lane.b32.xlu0 %v6444, 126
      %v7745 = vpop.permute.xlu0 %7744
      %7746 = vrot.lane.b32.xlu0 %v6433, 126
      %v7747 = vpop.permute.xlu0 %7746
      %7748 = vrot.lane.b32.xlu0 %v6459, 126
      %v7749 = vpop.permute.xlu0 %7748
      %7750 = vrot.lane.b32.xlu0 %v6447, 126
      %v7751 = vpop.permute.xlu0 %7750
      %7752 = vrot.lane.b32.xlu0 %v6434, 126
      %v7753 = vpop.permute.xlu0 %7752
      %7754 = vrot.lane.b32.xlu0 %v6461, 126
      %v7755 = vpop.permute.xlu0 %7754
      %7756 = vrot.lane.b32.xlu0 %v6450, 126
      %v7757 = vpop.permute.xlu0 %7756
      %7758 = vrot.lane.b32.xlu0 %v6435, 126
      %v7759 = vpop.permute.xlu0 %7758
      %7760 = vrot.lane.b32.xlu0 %v6463, 126
      %v7761 = vpop.permute.xlu0 %7760
      %7762 = vrot.lane.b32.xlu0 %v6453, 126
      %v7763 = vpop.permute.xlu0 %7762
      %7764 = vrot.lane.b32.xlu0 %v6436, 126
      %v7765 = vpop.permute.xlu0 %7764
      %7766 = vrot.lane.b32.xlu0 %v6465, 126
      %v7767 = vpop.permute.xlu0 %7766
      %7768 = vrot.lane.b32.xlu0 %v6456, 126
      %v7769 = vpop.permute.xlu0 %7768
      %7770 = vrot.lane.b32.xlu0 %v6437, 126
      %v7771 = vpop.permute.xlu0 %7770
      %7772 = vrot.lane.b32.xlu0 %v6467, 126
      %v7773 = vpop.permute.xlu0 %7772
      %v7774 = vsel %vm1002, %v7745, %v7747
      %v7775 = vsel %vm1002, %v7747, %v7749
      %v7776 = vsel %vm1002, %v7751, %v7753
      %v7777 = vsel %vm1002, %v7753, %v7755
      %v7778 = vsel %vm1002, %v7757, %v7759
      %v7779 = vsel %vm1002, %v7759, %v7761
      %v7780 = vsel %vm1002, %v7763, %v7765
      %v7781 = vsel %vm1002, %v7765, %v7767
      %v7782 = vsel %vm1002, %v7769, %v7771
      %v7783 = vsel %vm1002, %v7771, %v7773
      %v7795 = vsel %vm2706, %v7739, 0
      %v7798 = vsel %vm2706, %v7740, 0
      %v7801 = vsel %vm2706, %v7741, 0
      %v7804 = vsel %vm2706, %v7742, 0
      %v7807 = vsel %vm2706, %v7743, 0
      %7809 = vmatprep.subr.bf16.mxu0 %v7775
      %7810 = vmatpush1.bf16.msra.mxu0 %v7774
      %7811 = vmatprep.subr.bf16.mxu0 %v7777
      %7812 = vmatpush1.bf16.msra.mxu0 %v7776
      %7813 = vmatprep.subr.bf16.mxu0 %v7779
      %7814 = vmatpush1.bf16.msra.mxu0 %v7778
      %7815 = vmatprep.subr.bf16.mxu0 %v7781
      %7816 = vmatpush1.bf16.msra.mxu0 %v7780
      %7817 = vmatprep.subr.bf16.mxu0 %v7783
      %7818 = vmatpush1.bf16.msra.mxu0 %v7782
      %7819 = vmatprep.subr.bf16.mxu0 0
      %7820 = vmatpush1.bf16.msra.mxu0 0
      %7821 = vmatprep.subr.bf16.mxu0 0
      %7822 = vmatpush1.bf16.msra.mxu0 0
      %7823 = vmatprep.subr.bf16.mxu0 0
      %7824 = vmatpush1.bf16.msra.mxu0 0
      %7825 = vmatprep.subr.bf16.mxu0 0
      %7826 = vmatpush1.bf16.msra.mxu0 0
      %7827 = vmatprep.subr.bf16.mxu0 0
      %7828 = vmatpush1.bf16.msra.mxu0 0
      %7829 = vmatprep.subr.bf16.mxu0 0
      %7830 = vmatpush1.bf16.msra.mxu0 0
      %7831 = vmatprep.subr.bf16.mxu0 0
      %7832 = vmatpush1.bf16.msra.mxu0 0
      %7833 = vmatprep.subr.bf16.mxu0 0
      %7834 = vmatpush1.bf16.msra.mxu0 0
      %7835 = vmatprep.subr.bf16.mxu0 0
      %7836 = vmatpush1.bf16.msra.mxu0 0
      %7837 = vmatprep.subr.bf16.mxu0 0
      %7838 = vmatpush1.bf16.msra.mxu0 0
      %7839 = vmatprep.subr.bf16.mxu0 0
      %7840 = vmatpush1.bf16.msra.mxu0 0
      %7841 = vmatprep.mubr.bf16.mxu0 0
      %7842 = vmatmul.mubr.bf16.gmra.mrb[0].mxu0 %v7795
      %v7843 = vpop.f32.mrb[0].mxu0
      %v7844 = vadd.f32 %v7671, %v7843
      %v7845 = vpop.f32.mrb[0].mxu0
      %v7846 = vadd.f32 %v7673, %v7845
      %v7847 = vpop.f32.mrb[0].mxu0
      %v7848 = vadd.f32 %v7675, %v7847
      %v7849 = vpop.f32.mrb[0].mxu0
      %v7850 = vadd.f32 %v7677, %v7849
      %7851 = vmatprep.mubr.bf16.mxu0 0
      %7852 = vmatmul.mubr.bf16.gmra.mrb[0].mxu0 %v7798
      %v7853 = vpop.f32.mrb[0].mxu0
      %v7854 = vadd.f32 %v7681, %v7853
      %v7855 = vpop.f32.mrb[0].mxu0
      %v7856 = vadd.f32 %v7683, %v7855
      %v7857 = vpop.f32.mrb[0].mxu0
      %v7858 = vadd.f32 %v7685, %v7857
      %v7859 = vpop.f32.mrb[0].mxu0
      %v7860 = vadd.f32 %v7687, %v7859
      %7861 = vmatprep.mubr.bf16.mxu0 0
      %7862 = vmatmul.mubr.bf16.gmra.mrb[0].mxu0 %v7801
      %v7863 = vpop.f32.mrb[0].mxu0
      %v7864 = vadd.f32 %v7691, %v7863
      %v7865 = vpop.f32.mrb[0].mxu0
      %v7866 = vadd.f32 %v7693, %v7865
      %v7867 = vpop.f32.mrb[0].mxu0
      %v7868 = vadd.f32 %v7695, %v7867
      %v7869 = vpop.f32.mrb[0].mxu0
      %v7870 = vadd.f32 %v7697, %v7869
      %7871 = vmatprep.mubr.bf16.mxu0 0
      %7872 = vmatmul.mubr.bf16.gmra.mrb[0].mxu0 %v7804
      %v7873 = vpop.f32.mrb[0].mxu0
      %v7874 = vadd.f32 %v7701, %v7873
      %v7875 = vpop.f32.mrb[0].mxu0
      %v7876 = vadd.f32 %v7703, %v7875
      %v7877 = vpop.f32.mrb[0].mxu0
      %v7878 = vadd.f32 %v7705, %v7877
      %v7879 = vpop.f32.mrb[0].mxu0
      %v7880 = vadd.f32 %v7707, %v7879
      %7881 = vmatprep.mubr.bf16.mxu0 0
      %7882 = vmatmul.mubr.bf16.gmra.mrb[0].mxu0 %v7807
      %v7883 = vpop.f32.mrb[0].mxu0
      %v7884 = vadd.f32 %v7711, %v7883
      %v7885 = vpop.f32.mrb[0].mxu0
      %v7886 = vadd.f32 %v7713, %v7885
      %v7887 = vpop.f32.mrb[0].mxu0
      %v7888 = vadd.f32 %v7715, %v7887
      %v7889 = vpop.f32.mrb[0].mxu0
      %v7890 = vadd.f32 %v7717, %v7889
      %7891 = vdwg.mxu0
      %v7902 = vunpack.c.l.b16 %v6372
      %v7903 = vunpack.c.l.b16 %v6373
      %v7904 = vunpack.c.l.b16 %v6374
      %v7905 = vunpack.c.l.b16 %v6375
      %v7906 = vunpack.c.l.b16 %v6376
      %v7907 = vunpack.c.l.b16 %v6377
      %v7908 = vunpack.c.l.b16 %v6378
      %v7909 = vunpack.c.l.b16 %v6379
      %v7910 = vunpack.c.l.b16 %v6380
      %v7911 = vunpack.c.l.b16 %v6381
      %v7912 = vpack.c.b16 %v7903, %v7902
      %v7913 = vpack.c.b16 %v7905, %v7904
      %v7914 = vpack.c.b16 %v7907, %v7906
      %v7915 = vpack.c.b16 %v7909, %v7908
      %v7916 = vpack.c.b16 %v7911, %v7910
      %7917 = vrot.lane.b32.xlu0 %v6444, 94
      %v7918 = vpop.permute.xlu0 %7917
      %7919 = vrot.lane.b32.xlu0 %v6433, 94
      %v7920 = vpop.permute.xlu0 %7919
      %7921 = vrot.lane.b32.xlu0 %v6459, 94
      %v7922 = vpop.permute.xlu0 %7921
      %7923 = vrot.lane.b32.xlu0 %v6447, 94
      %v7924 = vpop.permute.xlu0 %7923
      %7925 = vrot.lane.b32.xlu0 %v6434, 94
      %v7926 = vpop.permute.xlu0 %7925
      %7927 = vrot.lane.b32.xlu0 %v6461, 94
      %v7928 = vpop.permute.xlu0 %7927
      %7929 = vrot.lane.b32.xlu0 %v6450, 94
      %v7930 = vpop.permute.xlu0 %7929
      %7931 = vrot.lane.b32.xlu0 %v6435, 94
      %v7932 = vpop.permute.xlu0 %7931
      %7933 = vrot.lane.b32.xlu0 %v6463, 94
      %v7934 = vpop.permute.xlu0 %7933
      %7935 = vrot.lane.b32.xlu0 %v6453, 94
      %v7936 = vpop.permute.xlu0 %7935
      %7937 = vrot.lane.b32.xlu0 %v6436, 94
      %v7938 = vpop.permute.xlu0 %7937
      %7939 = vrot.lane.b32.xlu0 %v6465, 94
      %v7940 = vpop.permute.xlu0 %7939
      %7941 = vrot.lane.b32.xlu0 %v6456, 94
      %v7942 = vpop.permute.xlu0 %7941
      %7943 = vrot.lane.b32.xlu0 %v6437, 94
      %v7944 = vpop.permute.xlu0 %7943
      %7945 = vrot.lane.b32.xlu0 %v6467, 94
      %v7946 = vpop.permute.xlu0 %7945
      %v7947 = vsel %vm1068, %v7918, %v7920
      %v7948 = vsel %vm1068, %v7920, %v7922
      %v7949 = vsel %vm1068, %v7924, %v7926
      %v7950 = vsel %vm1068, %v7926, %v7928
      %v7951 = vsel %vm1068, %v7930, %v7932
      %v7952 = vsel %vm1068, %v7932, %v7934
      %v7953 = vsel %vm1068, %v7936, %v7938
      %v7954 = vsel %vm1068, %v7938, %v7940
      %v7955 = vsel %vm1068, %v7942, %v7944
      %v7956 = vsel %vm1068, %v7944, %v7946
      %v7968 = vsel %vm2706, %v7912, 0
      %v7971 = vsel %vm2706, %v7913, 0
      %v7974 = vsel %vm2706, %v7914, 0
      %v7977 = vsel %vm2706, %v7915, 0
      %v7980 = vsel %vm2706, %v7916, 0
      %7982 = vmatprep.subr.bf16.mxu0 %v7948
      %7983 = vmatpush1.bf16.msra.mxu0 %v7947
      %7984 = vmatprep.subr.bf16.mxu0 %v7950
      %7985 = vmatpush1.bf16.msra.mxu0 %v7949
      %7986 = vmatprep.subr.bf16.mxu0 %v7952
      %7987 = vmatpush1.bf16.msra.mxu0 %v7951
      %7988 = vmatprep.subr.bf16.mxu0 %v7954
      %7989 = vmatpush1.bf16.msra.mxu0 %v7953
      %7990 = vmatprep.subr.bf16.mxu0 %v7956
      %7991 = vmatpush1.bf16.msra.mxu0 %v7955
      %7992 = vmatprep.subr.bf16.mxu0 0
      %7993 = vmatpush1.bf16.msra.mxu0 0
      %7994 = vmatprep.subr.bf16.mxu0 0
      %7995 = vmatpush1.bf16.msra.mxu0 0
      %7996 = vmatprep.subr.bf16.mxu0 0
      %7997 = vmatpush1.bf16.msra.mxu0 0
      %7998 = vmatprep.subr.bf16.mxu0 0
      %7999 = vmatpush1.bf16.msra.mxu0 0
      %8000 = vmatprep.subr.bf16.mxu0 0
      %8001 = vmatpush1.bf16.msra.mxu0 0
      %8002 = vmatprep.subr.bf16.mxu0 0
      %8003 = vmatpush1.bf16.msra.mxu0 0
      %8004 = vmatprep.subr.bf16.mxu0 0
      %8005 = vmatpush1.bf16.msra.mxu0 0
      %8006 = vmatprep.subr.bf16.mxu0 0
      %8007 = vmatpush1.bf16.msra.mxu0 0
      %8008 = vmatprep.subr.bf16.mxu0 0
      %8009 = vmatpush1.bf16.msra.mxu0 0
      %8010 = vmatprep.subr.bf16.mxu0 0
      %8011 = vmatpush1.bf16.msra.mxu0 0
      %8012 = vmatprep.subr.bf16.mxu0 0
      %8013 = vmatpush1.bf16.msra.mxu0 0
      %8014 = vmatprep.mubr.bf16.mxu0 0
      %8015 = vmatmul.mubr.bf16.gmra.mrb[0].mxu0 %v7968
      %v8016 = vpop.f32.mrb[0].mxu0
      %v8017 = vadd.f32 0.0, %v8016
      %v8018 = vpop.f32.mrb[0].mxu0
      %v8019 = vadd.f32 0.0, %v8018
      %v8020 = vpop.f32.mrb[0].mxu0
      %v8021 = vadd.f32 0.0, %v8020
      %v8022 = vpop.f32.mrb[0].mxu0
      %v8023 = vadd.f32 0.0, %v8022
      %8024 = vmatprep.mubr.bf16.mxu0 0
      %8025 = vmatmul.mubr.bf16.gmra.mrb[0].mxu0 %v7971
      %v8026 = vpop.f32.mrb[0].mxu0
      %v8027 = vadd.f32 0.0, %v8026
      %v8028 = vpop.f32.mrb[0].mxu0
      %v8029 = vadd.f32 0.0, %v8028
      %v8030 = vpop.f32.mrb[0].mxu0
      %v8031 = vadd.f32 0.0, %v8030
      %v8032 = vpop.f32.mrb[0].mxu0
      %v8033 = vadd.f32 0.0, %v8032
      %8034 = vmatprep.mubr.bf16.mxu0 0
      %8035 = vmatmul.mubr.bf16.gmra.mrb[0].mxu0 %v7974
      %v8036 = vpop.f32.mrb[0].mxu0
      %v8037 = vadd.f32 0.0, %v8036
      %v8038 = vpop.f32.mrb[0].mxu0
      %v8039 = vadd.f32 0.0, %v8038
      %v8040 = vpop.f32.mrb[0].mxu0
      %v8041 = vadd.f32 0.0, %v8040
      %v8042 = vpop.f32.mrb[0].mxu0
      %v8043 = vadd.f32 0.0, %v8042
      %8044 = vmatprep.mubr.bf16.mxu0 0
      %8045 = vmatmul.mubr.bf16.gmra.mrb[0].mxu0 %v7977
      %v8046 = vpop.f32.mrb[0].mxu0
      %v8047 = vadd.f32 0.0, %v8046
      %v8048 = vpop.f32.mrb[0].mxu0
      %v8049 = vadd.f32 0.0, %v8048
      %v8050 = vpop.f32.mrb[0].mxu0
      %v8051 = vadd.f32 0.0, %v8050
      %v8052 = vpop.f32.mrb[0].mxu0
      %v8053 = vadd.f32 0.0, %v8052
      %8054 = vmatprep.mubr.bf16.mxu0 0
      %8055 = vmatmul.mubr.bf16.gmra.mrb[0].mxu0 %v7980
      %v8056 = vpop.f32.mrb[0].mxu0
      %v8057 = vadd.f32 0.0, %v8056
      %v8058 = vpop.f32.mrb[0].mxu0
      %v8059 = vadd.f32 0.0, %v8058
      %v8060 = vpop.f32.mrb[0].mxu0
      %v8061 = vadd.f32 0.0, %v8060
      %v8062 = vpop.f32.mrb[0].mxu0
      %v8063 = vadd.f32 0.0, %v8062
      %8064 = vdwg.mxu0
      %v8065 = vadd.f32 %v7844, %v8017
      %v8066 = vadd.f32 %v7846, %v8019
      %v8067 = vadd.f32 %v7848, %v8021
      %v8068 = vadd.f32 %v7850, %v8023
      %v8069 = vadd.f32 %v7854, %v8027
      %v8070 = vadd.f32 %v7856, %v8029
      %v8071 = vadd.f32 %v7858, %v8031
      %v8072 = vadd.f32 %v7860, %v8033
      %v8073 = vadd.f32 %v7864, %v8037
      %v8074 = vadd.f32 %v7866, %v8039
      %v8075 = vadd.f32 %v7868, %v8041
      %v8076 = vadd.f32 %v7870, %v8043
      %v8077 = vadd.f32 %v7874, %v8047
      %v8078 = vadd.f32 %v7876, %v8049
      %v8079 = vadd.f32 %v7878, %v8051
      %v8080 = vadd.f32 %v7880, %v8053
      %v8081 = vadd.f32 %v7884, %v8057
      %v8082 = vadd.f32 %v7886, %v8059
      %v8083 = vadd.f32 %v7888, %v8061
      %v8084 = vadd.f32 %v7890, %v8063
      %v8085 = vmul.f32 %v8065, %v472
      %v8086 = vmul.f32 %v8066, %v473
      %v8087 = vmul.f32 %v8067, %v472
      %v8088 = vmul.f32 %v8068, %v473
      %v8089 = vmul.f32 %v8069, %v472
      %v8090 = vmul.f32 %v8070, %v473
      %v8091 = vmul.f32 %v8071, %v472
      %v8092 = vmul.f32 %v8072, %v473
      %v8093 = vmul.f32 %v8073, %v472
      %v8094 = vmul.f32 %v8074, %v473
      %v8095 = vmul.f32 %v8075, %v472
      %v8096 = vmul.f32 %v8076, %v473
      %v8097 = vmul.f32 %v8077, %v472
      %v8098 = vmul.f32 %v8078, %v473
      %v8099 = vmul.f32 %v8079, %v472
      %v8100 = vmul.f32 %v8080, %v473
      %v8101 = vmul.f32 %v8081, %v472
      %v8102 = vmul.f32 %v8082, %v473
      %v8103 = vmul.f32 %v8083, %v472
      %v8104 = vmul.f32 %v8084, %v473
      %v8105 = vadd.f32 %v7526, %v8085
      %v8106 = vadd.f32 %v7527, %v8086
      %v8107 = vadd.f32 %v7528, %v8087
      %v8108 = vadd.f32 %v7529, %v8088
      %v8109 = vadd.f32 %v7530, %v8089
      %v8110 = vadd.f32 %v7531, %v8090
      %v8111 = vadd.f32 %v7532, %v8091
      %v8112 = vadd.f32 %v7533, %v8092
      %v8113 = vadd.f32 %v7534, %v8093
      %v8114 = vadd.f32 %v7535, %v8094
      %v8115 = vadd.f32 %v7536, %v8095
      %v8116 = vadd.f32 %v7537, %v8096
      %v8117 = vadd.f32 %v7538, %v8097
      %v8118 = vadd.f32 %v7539, %v8098
      %v8119 = vadd.f32 %v7540, %v8099
      %v8120 = vadd.f32 %v7541, %v8100
      %v8121 = vadd.f32 %v7542, %v8101
      %v8122 = vadd.f32 %v7543, %v8102
      %v8123 = vadd.f32 %v7544, %v8103
      %v8124 = vadd.f32 %v7545, %v8104
      %8126 = vset.pattern.permute.xlu0 0
      %8127 = vperm.xlu0 %8126, %v6383
      %v8128 = vpop.permute.xlu0 %8127
      %8131 = vset.pattern.permute.xlu0 0
      %8132 = vperm.xlu0 %8131, %v6384
      %v8133 = vpop.permute.xlu0 %8132
      %8136 = vset.pattern.permute.xlu0 0
      %8137 = vperm.xlu0 %8136, %v6385
      %v8138 = vpop.permute.xlu0 %8137
      %8141 = vset.pattern.permute.xlu0 0
      %8142 = vperm.xlu0 %8141, %v6386
      %v8143 = vpop.permute.xlu0 %8142
      %8146 = vset.pattern.permute.xlu0 0
      %8147 = vperm.xlu0 %8146, %v6387
      %v8148 = vpop.permute.xlu0 %8147
      %8151 = vset.pattern.permute.xlu0 0
      %8152 = vperm.xlu0 %8151, %v6388
      %v8153 = vpop.permute.xlu0 %8152
      %8156 = vset.pattern.permute.xlu0 0
      %8157 = vperm.xlu0 %8156, %v6389
      %v8158 = vpop.permute.xlu0 %8157
      %8161 = vset.pattern.permute.xlu0 0
      %8162 = vperm.xlu0 %8161, %v6390
      %v8163 = vpop.permute.xlu0 %8162
      %8166 = vset.pattern.permute.xlu0 0
      %8167 = vperm.xlu0 %8166, %v6391
      %v8168 = vpop.permute.xlu0 %8167
      %8171 = vset.pattern.permute.xlu0 0
      %8172 = vperm.xlu0 %8171, %v6392
      %v8173 = vpop.permute.xlu0 %8172
      %v8175 = vadd.f32 %v8105, %v8128
      %v8176 = vadd.f32 %v8106, %v8128
      %v8177 = vadd.f32 %v8107, %v8133
      %v8178 = vadd.f32 %v8108, %v8133
      %v8179 = vadd.f32 %v8109, %v8138
      %v8180 = vadd.f32 %v8110, %v8138
      %v8181 = vadd.f32 %v8111, %v8143
      %v8182 = vadd.f32 %v8112, %v8143
      %v8183 = vadd.f32 %v8113, %v8148
      %v8184 = vadd.f32 %v8114, %v8148
      %v8185 = vadd.f32 %v8115, %v8153
      %v8186 = vadd.f32 %v8116, %v8153
      %v8187 = vadd.f32 %v8117, %v8158
      %v8188 = vadd.f32 %v8118, %v8158
      %v8189 = vadd.f32 %v8119, %v8163
      %v8190 = vadd.f32 %v8120, %v8163
      %v8191 = vadd.f32 %v8121, %v8168
      %v8192 = vadd.f32 %v8122, %v8168
      %v8193 = vadd.f32 %v8123, %v8173
      %v8194 = vadd.f32 %v8124, %v8173
      %v8195 = vmax.f32 %v8175, 0.0
      %v8196 = vmax.f32 %v8176, 0.0
      %v8197 = vmax.f32 %v8177, 0.0
      %v8198 = vmax.f32 %v8178, 0.0
      %v8199 = vmax.f32 %v8179, 0.0
      %v8200 = vmax.f32 %v8180, 0.0
      %v8201 = vmax.f32 %v8181, 0.0
      %v8202 = vmax.f32 %v8182, 0.0
      %v8203 = vmax.f32 %v8183, 0.0
      %v8204 = vmax.f32 %v8184, 0.0
      %v8205 = vmax.f32 %v8185, 0.0
      %v8206 = vmax.f32 %v8186, 0.0
      %v8207 = vmax.f32 %v8187, 0.0
      %v8208 = vmax.f32 %v8188, 0.0
      %v8209 = vmax.f32 %v8189, 0.0
      %v8210 = vmax.f32 %v8190, 0.0
      %v8211 = vmax.f32 %v8191, 0.0
      %v8212 = vmax.f32 %v8192, 0.0
      %v8213 = vmax.f32 %v8193, 0.0
      %v8214 = vmax.f32 %v8194, 0.0
      %s8215 = scalar_lea.vmem %s8, 360
      %v8216 = vld [vmem:[%s8215] sm:$0xf]
      %v8217 = vld [vmem:[%s8215 + $0x4] sm:$0xf]
      %v8218 = vld [vmem:[%s8215 + $0x8] sm:$0xf]
      %v8219 = vld [vmem:[%s8215 + $0xc] sm:$0xf]
      %v8220 = vld [vmem:[%s8215 + $0x10] sm:$0xf]
      %v8221 = vld [vmem:[%s8215 + $0x14] sm:$0xf]
      %v8222 = vld [vmem:[%s8215 + $0x18] sm:$0xf]
      %v8223 = vld [vmem:[%s8215 + $0x1c] sm:$0xf]
      %v8224 = vld [vmem:[%s8215 + $0x20] sm:$0xf]
      %v8225 = vld [vmem:[%s8215 + $0x24] sm:$0xf]
      %v8226 = vld [vmem:[%s8215 + $0x28] sm:$0xf]
      %v8227 = vld [vmem:[%s8215 + $0x2c] sm:$0xf]
      %v8228 = vld [vmem:[%s8215 + $0x30] sm:$0xf]
      %v8229 = vld [vmem:[%s8215 + $0x34] sm:$0xf]
      %v8230 = vld [vmem:[%s8215 + $0x38] sm:$0xf]
      %v8231 = vld [vmem:[%s8215 + $0x3c] sm:$0xf]
      %v8232 = vld [vmem:[%s8215 + $0x40] sm:$0xf]
      %v8233 = vld [vmem:[%s8215 + $0x44] sm:$0xf]
      %v8234 = vld [vmem:[%s8215 + $0x48] sm:$0xf]
      %v8235 = vld [vmem:[%s8215 + $0x4c] sm:$0xf]
      %v8236 = vld [vmem:[%s8215 + $0x50] sm:$0xf]
      %v8237 = vld [vmem:[%s8215 + $0x54] sm:$0xf]
      %v8238 = vld [vmem:[%s8215 + $0x58] sm:$0xf]
      %v8239 = vld [vmem:[%s8215 + $0x5c] sm:$0xf]
      %v8240 = vld [vmem:[%s8215 + $0x60] sm:$0xf]
      %v8241 = vld [vmem:[%s8215 + $0x64] sm:$0xf]
      %v8242 = vld [vmem:[%s8215 + $0x68] sm:$0xf]
      %v8243 = vld [vmem:[%s8215 + $0x6c] sm:$0xf]
      %v8244 = vld [vmem:[%s8215 + $0x70] sm:$0xf]
      %v8245 = vld [vmem:[%s8215 + $0x74] sm:$0xf]
      %v8246 = vld [vmem:[%s8215 + $0x78] sm:$0xf]
      %v8247 = vld [vmem:[%s8215 + $0x7c] sm:$0xf]
      %v8248 = vld [vmem:[%s8215 + $0x80] sm:$0xf]
      %v8249 = vld [vmem:[%s8215 + $0x84] sm:$0xf]
      %v8250 = vld [vmem:[%s8215 + $0x88] sm:$0xf]
      %v8251 = vld [vmem:[%s8215 + $0x8c] sm:$0xf]
      %v8252 = vld [vmem:[%s8215 + $0x90] sm:$0xf]
      %v8253 = vld [vmem:[%s8215 + $0x94] sm:$0xf]
      %v8254 = vld [vmem:[%s8215 + $0x98] sm:$0xf]
      %v8255 = vld [vmem:[%s8215 + $0x9c] sm:$0xf]
      %v8256 = vld [vmem:[%s8215 + $0xa0] sm:$0xf]
      %v8257 = vld [vmem:[%s8215 + $0xa4] sm:$0xf]
      %v8258 = vld [vmem:[%s8215 + $0xa8] sm:$0xf]
      %v8259 = vld [vmem:[%s8215 + $0xac] sm:$0xf]
      %v8260 = vld [vmem:[%s8215 + $0xb0] sm:$0xf]
      %v8261 = vld [vmem:[%s8215 + $0xb4] sm:$0xf]
      %v8262 = vld [vmem:[%s8215 + $0xb8] sm:$0xf]
      %v8263 = vld [vmem:[%s8215 + $0xbc] sm:$0xf]
      %v8264 = vld [vmem:[%s8215 + $0xc0] sm:$0xf]
      %v8265 = vld [vmem:[%s8215 + $0xc4] sm:$0xf]
      %v8266 = vld [vmem:[%s8215 + $0xc8] sm:$0xf]
      %v8267 = vld [vmem:[%s8215 + $0xcc] sm:$0xf]
      %v8268 = vld [vmem:[%s8215 + $0xd0] sm:$0xf]
      %v8269 = vld [vmem:[%s8215 + $0xd4] sm:$0xf]
      %v8270 = vld [vmem:[%s8215 + $0xd8] sm:$0xf]
      %v8271 = vld [vmem:[%s8215 + $0xdc] sm:$0xf]
      %v8272 = vld [vmem:[%s8215 + $0xe0] sm:$0xf]
      %v8273 = vld [vmem:[%s8215 + $0xe4] sm:$0xf]
      %v8274 = vld [vmem:[%s8215 + $0xe8] sm:$0xf]
      %v8275 = vld [vmem:[%s8215 + $0xec] sm:$0xf]
      %v8276 = vld [vmem:[%s8215 + $0xf0] sm:$0xf]
      %v8277 = vld [vmem:[%s8215 + $0xf4] sm:$0xf]
      %v8278 = vld [vmem:[%s8215 + $0xf8] sm:$0xf]
      %v8279 = vld [vmem:[%s8215 + $0xfc] sm:$0xf]
      %v8280 = vld [vmem:[%s8215 + $0x100] sm:$0xf]
      %v8281 = vld [vmem:[%s8215 + $0x104] sm:$0xf]
      %v8282 = vld [vmem:[%s8215 + $0x108] sm:$0xf]
      %v8283 = vld [vmem:[%s8215 + $0x10c] sm:$0xf]
      %v8284 = vld [vmem:[%s8215 + $0x110] sm:$0xf]
      %v8285 = vld [vmem:[%s8215 + $0x114] sm:$0xf]
      %v8286 = vld [vmem:[%s8215 + $0x118] sm:$0xf]
      %v8287 = vld [vmem:[%s8215 + $0x11c] sm:$0xf]
      %v8288 = vld [vmem:[%s8215 + $0x120] sm:$0xf]
      %v8289 = vld [vmem:[%s8215 + $0x124] sm:$0xf]
      %v8290 = vld [vmem:[%s8215 + $0x128] sm:$0xf]
      %v8291 = vld [vmem:[%s8215 + $0x12c] sm:$0xf]
      %v8292 = vld [vmem:[%s8215 + $0x130] sm:$0xf]
      %v8293 = vld [vmem:[%s8215 + $0x134] sm:$0xf]
      %v8294 = vld [vmem:[%s8215 + $0x138] sm:$0xf]
      %v8295 = vld [vmem:[%s8215 + $0x13c] sm:$0xf]
      %v8296 = vld [vmem:[%s8215 + $0x140] sm:$0xf]
      %v8297 = vld [vmem:[%s8215 + $0x144] sm:$0xf]
      %v8298 = vld [vmem:[%s8215 + $0x148] sm:$0xf]
      %v8299 = vld [vmem:[%s8215 + $0x14c] sm:$0xf]
      %v8300 = vld [vmem:[%s8215 + $0x150] sm:$0xf]
      %v8301 = vld [vmem:[%s8215 + $0x154] sm:$0xf]
      %v8302 = vld [vmem:[%s8215 + $0x158] sm:$0xf]
      %v8303 = vld [vmem:[%s8215 + $0x15c] sm:$0xf]
      %v8304 = vld [vmem:[%s8215 + $0x160] sm:$0xf]
      %v8305 = vld [vmem:[%s8215 + $0x164] sm:$0xf]
      %s8306 = scalar_lea.vmem %s9, 80
      %v8307 = vld [vmem:[%s8306] sm:$0xff]
      %v8308 = vld [vmem:[%s8306 + $0x8] sm:$0xff]
      %v8309 = vld [vmem:[%s8306 + $0x10] sm:$0xff]
      %v8310 = vld [vmem:[%s8306 + $0x18] sm:$0xff]
      %v8311 = vld [vmem:[%s8306 + $0x20] sm:$0xff]
      %v8312 = vld [vmem:[%s8306 + $0x28] sm:$0xff]
      %v8313 = vld [vmem:[%s8306 + $0x30] sm:$0xff]
      %v8314 = vld [vmem:[%s8306 + $0x38] sm:$0xff]
      %v8315 = vld [vmem:[%s8306 + $0x40] sm:$0xff]
      %v8316 = vld [vmem:[%s8306 + $0x48] sm:$0xff]
      %v8317 = vpack.c.bf16 %v8197, %v8195
      %v8318 = vpack.c.bf16 %v8198, %v8196
      %v8319 = vpack.c.bf16 %v8201, %v8199
      %v8320 = vpack.c.bf16 %v8202, %v8200
      %v8321 = vpack.c.bf16 %v8205, %v8203
      %v8322 = vpack.c.bf16 %v8206, %v8204
      %v8323 = vpack.c.bf16 %v8209, %v8207
      %v8324 = vpack.c.bf16 %v8210, %v8208
      %v8325 = vpack.c.bf16 %v8213, %v8211
      %v8326 = vpack.c.bf16 %v8214, %v8212
      %8337 = vrot.lane.b32.xlu0 %v8317, 17
      %v8338 = vpop.permute.xlu0 %8337
      %8339 = vrot.lane.b32.xlu0 %v8318, 17
      %v8340 = vpop.permute.xlu0 %8339
      %8341 = vrot.lane.b32.xlu0 %v8319, 17
      %v8342 = vpop.permute.xlu0 %8341
      %8343 = vrot.lane.b32.xlu0 %v8320, 17
      %v8344 = vpop.permute.xlu0 %8343
      %8345 = vrot.lane.b32.xlu0 %v8321, 17
      %v8346 = vpop.permute.xlu0 %8345
      %8347 = vrot.lane.b32.xlu0 %v8322, 17
      %v8348 = vpop.permute.xlu0 %8347
      %8349 = vrot.lane.b32.xlu0 %v8323, 17
      %v8350 = vpop.permute.xlu0 %8349
      %8351 = vrot.lane.b32.xlu0 %v8324, 17
      %v8352 = vpop.permute.xlu0 %8351
      %8353 = vrot.lane.b32.xlu0 %v8325, 17
      %v8354 = vpop.permute.xlu0 %8353
      %8355 = vrot.lane.b32.xlu0 %v8326, 17
      %v8356 = vpop.permute.xlu0 %8355
      %v8357 = vsel %vm508, %v8338, %v8340
      %v8358 = vsel %vm508, %v8342, %v8344
      %v8359 = vsel %vm508, %v8346, %v8348
      %v8360 = vsel %vm508, %v8350, %v8352
      %v8361 = vsel %vm508, %v8354, %v8356
      %v8368 = vsel %vm510, 0, %v8338
      %v8371 = vsel %vm510, 0, %v8342
      %v8374 = vsel %vm510, 0, %v8346
      %v8377 = vsel %vm510, 0, %v8350
      %v8380 = vsel %vm510, 0, %v8354
      %v8383 = vsel %vm510, %v8340, 0
      %v8385 = vsel %vm510, %v8344, 0
      %v8387 = vsel %vm510, %v8348, 0
      %v8389 = vsel %vm510, %v8352, 0
      %v8391 = vsel %vm510, %v8356, 0
      %v8402 = vunpack.c.l.b16 %v8246
      %v8403 = vunpack.c.l.b16 %v8247
      %v8404 = vunpack.c.l.b16 %v8248
      %v8405 = vunpack.c.l.b16 %v8249
      %v8406 = vunpack.c.l.b16 %v8250
      %v8407 = vunpack.c.l.b16 %v8251
      %v8408 = vunpack.c.l.b16 %v8252
      %v8409 = vunpack.c.l.b16 %v8253
      %v8410 = vunpack.c.l.b16 %v8254
      %v8411 = vunpack.c.l.b16 %v8255
      %v8412 = vpack.c.b16 %v8403, %v8402
      %v8413 = vpack.c.b16 %v8405, %v8404
      %v8414 = vpack.c.b16 %v8407, %v8406
      %v8415 = vpack.c.b16 %v8409, %v8408
      %v8416 = vpack.c.b16 %v8411, %v8410
      %8427 = vrot.lane.b32.xlu0 %v8368, 112
      %v8428 = vpop.permute.xlu0 %8427
      %8429 = vrot.lane.b32.xlu0 %v8357, 112
      %v8430 = vpop.permute.xlu0 %8429
      %8431 = vrot.lane.b32.xlu0 %v8383, 112
      %v8432 = vpop.permute.xlu0 %8431
      %8433 = vrot.lane.b32.xlu0 %v8371, 112
      %v8434 = vpop.permute.xlu0 %8433
      %8435 = vrot.lane.b32.xlu0 %v8358, 112
      %v8436 = vpop.permute.xlu0 %8435
      %8437 = vrot.lane.b32.xlu0 %v8385, 112
      %v8438 = vpop.permute.xlu0 %8437
      %8439 = vrot.lane.b32.xlu0 %v8374, 112
      %v8440 = vpop.permute.xlu0 %8439
      %8441 = vrot.lane.b32.xlu0 %v8359, 112
      %v8442 = vpop.permute.xlu0 %8441
      %8443 = vrot.lane.b32.xlu0 %v8387, 112
      %v8444 = vpop.permute.xlu0 %8443
      %8445 = vrot.lane.b32.xlu0 %v8377, 112
      %v8446 = vpop.permute.xlu0 %8445
      %8447 = vrot.lane.b32.xlu0 %v8360, 112
      %v8448 = vpop.permute.xlu0 %8447
      %8449 = vrot.lane.b32.xlu0 %v8389, 112
      %v8450 = vpop.permute.xlu0 %8449
      %8451 = vrot.lane.b32.xlu0 %v8380, 112
      %v8452 = vpop.permute.xlu0 %8451
      %8453 = vrot.lane.b32.xlu0 %v8361, 112
      %v8454 = vpop.permute.xlu0 %8453
      %8455 = vrot.lane.b32.xlu0 %v8391, 112
      %v8456 = vpop.permute.xlu0 %8455
      %v8457 = vsel %vm529, %v8428, %v8430
      %v8458 = vsel %vm529, %v8430, %v8432
      %v8459 = vsel %vm529, %v8434, %v8436
      %v8460 = vsel %vm529, %v8436, %v8438
      %v8461 = vsel %vm529, %v8440, %v8442
      %v8462 = vsel %vm529, %v8442, %v8444
      %v8463 = vsel %vm529, %v8446, %v8448
      %v8464 = vsel %vm529, %v8448, %v8450
      %v8465 = vsel %vm529, %v8452, %v8454
      %v8466 = vsel %vm529, %v8454, %v8456
      %v8478 = vsel %vm2706, %v8412, 0
      %v8481 = vsel %vm2706, %v8413, 0
      %v8484 = vsel %vm2706, %v8414, 0
      %v8487 = vsel %vm2706, %v8415, 0
      %v8490 = vsel %vm2706, %v8416, 0
      %8492 = vmatprep.subr.bf16.mxu0 %v8458
      %8493 = vmatpush1.bf16.msra.mxu0 %v8457
      %8494 = vmatprep.subr.bf16.mxu0 %v8460
      %8495 = vmatpush1.bf16.msra.mxu0 %v8459
      %8496 = vmatprep.subr.bf16.mxu0 %v8462
      %8497 = vmatpush1.bf16.msra.mxu0 %v8461
      %8498 = vmatprep.subr.bf16.mxu0 %v8464
      %8499 = vmatpush1.bf16.msra.mxu0 %v8463
      %8500 = vmatprep.subr.bf16.mxu0 %v8466
      %8501 = vmatpush1.bf16.msra.mxu0 %v8465
      %8502 = vmatprep.subr.bf16.mxu0 0
      %8503 = vmatpush1.bf16.msra.mxu0 0
      %8504 = vmatprep.subr.bf16.mxu0 0
      %8505 = vmatpush1.bf16.msra.mxu0 0
      %8506 = vmatprep.subr.bf16.mxu0 0
      %8507 = vmatpush1.bf16.msra.mxu0 0
      %8508 = vmatprep.subr.bf16.mxu0 0
      %8509 = vmatpush1.bf16.msra.mxu0 0
      %8510 = vmatprep.subr.bf16.mxu0 0
      %8511 = vmatpush1.bf16.msra.mxu0 0
      %8512 = vmatprep.subr.bf16.mxu0 0
      %8513 = vmatpush1.bf16.msra.mxu0 0
      %8514 = vmatprep.subr.bf16.mxu0 0
      %8515 = vmatpush1.bf16.msra.mxu0 0
      %8516 = vmatprep.subr.bf16.mxu0 0
      %8517 = vmatpush1.bf16.msra.mxu0 0
      %8518 = vmatprep.subr.bf16.mxu0 0
      %8519 = vmatpush1.bf16.msra.mxu0 0
      %8520 = vmatprep.subr.bf16.mxu0 0
      %8521 = vmatpush1.bf16.msra.mxu0 0
      %8522 = vmatprep.subr.bf16.mxu0 0
      %8523 = vmatpush1.bf16.msra.mxu0 0
      %8524 = vmatprep.mubr.bf16.mxu0 0
      %8525 = vmatmul.mubr.bf16.gmra.mrb[0].mxu0 %v8478
      %v8526 = vpop.f32.mrb[0].mxu0
      %v8527 = vadd.f32 0.0, %v8526
      %v8528 = vpop.f32.mrb[0].mxu0
      %v8529 = vadd.f32 0.0, %v8528
      %v8530 = vpop.f32.mrb[0].mxu0
      %v8531 = vadd.f32 0.0, %v8530
      %v8532 = vpop.f32.mrb[0].mxu0
      %v8533 = vadd.f32 0.0, %v8532
      %8534 = vmatprep.mubr.bf16.mxu0 0
      %8535 = vmatmul.mubr.bf16.gmra.mrb[0].mxu0 %v8481
      %v8536 = vpop.f32.mrb[0].mxu0
      %v8537 = vadd.f32 0.0, %v8536
      %v8538 = vpop.f32.mrb[0].mxu0
      %v8539 = vadd.f32 0.0, %v8538
      %v8540 = vpop.f32.mrb[0].mxu0
      %v8541 = vadd.f32 0.0, %v8540
      %v8542 = vpop.f32.mrb[0].mxu0
      %v8543 = vadd.f32 0.0, %v8542
      %8544 = vmatprep.mubr.bf16.mxu0 0
      %8545 = vmatmul.mubr.bf16.gmra.mrb[0].mxu0 %v8484
      %v8546 = vpop.f32.mrb[0].mxu0
      %v8547 = vadd.f32 0.0, %v8546
      %v8548 = vpop.f32.mrb[0].mxu0
      %v8549 = vadd.f32 0.0, %v8548
      %v8550 = vpop.f32.mrb[0].mxu0
      %v8551 = vadd.f32 0.0, %v8550
      %v8552 = vpop.f32.mrb[0].mxu0
      %v8553 = vadd.f32 0.0, %v8552
      %8554 = vmatprep.mubr.bf16.mxu0 0
      %8555 = vmatmul.mubr.bf16.gmra.mrb[0].mxu0 %v8487
      %v8556 = vpop.f32.mrb[0].mxu0
      %v8557 = vadd.f32 0.0, %v8556
      %v8558 = vpop.f32.mrb[0].mxu0
      %v8559 = vadd.f32 0.0, %v8558
      %v8560 = vpop.f32.mrb[0].mxu0
      %v8561 = vadd.f32 0.0, %v8560
      %v8562 = vpop.f32.mrb[0].mxu0
      %v8563 = vadd.f32 0.0, %v8562
      %8564 = vmatprep.mubr.bf16.mxu0 0
      %8565 = vmatmul.mubr.bf16.gmra.mrb[0].mxu0 %v8490
      %v8566 = vpop.f32.mrb[0].mxu0
      %v8567 = vadd.f32 0.0, %v8566
      %v8568 = vpop.f32.mrb[0].mxu0
      %v8569 = vadd.f32 0.0, %v8568
      %v8570 = vpop.f32.mrb[0].mxu0
      %v8571 = vadd.f32 0.0, %v8570
      %v8572 = vpop.f32.mrb[0].mxu0
      %v8573 = vadd.f32 0.0, %v8572
      %8574 = vdwg.mxu0
      %v8585 = vunpack.c.l.b16 %v8216
      %v8586 = vunpack.c.l.b16 %v8217
      %v8587 = vunpack.c.l.b16 %v8218
      %v8588 = vunpack.c.l.b16 %v8219
      %v8589 = vunpack.c.l.b16 %v8220
      %v8590 = vunpack.c.l.b16 %v8221
      %v8591 = vunpack.c.l.b16 %v8222
      %v8592 = vunpack.c.l.b16 %v8223
      %v8593 = vunpack.c.l.b16 %v8224
      %v8594 = vunpack.c.l.b16 %v8225
      %v8595 = vpack.c.b16 %v8586, %v8585
      %v8596 = vpack.c.b16 %v8588, %v8587
      %v8597 = vpack.c.b16 %v8590, %v8589
      %v8598 = vpack.c.b16 %v8592, %v8591
      %v8599 = vpack.c.b16 %v8594, %v8593
      %v8601 = vsel %vm2706, %v8595, 0
      %v8604 = vsel %vm2706, %v8596, 0
      %v8607 = vsel %vm2706, %v8597, 0
      %v8610 = vsel %vm2706, %v8598, 0
      %v8613 = vsel %vm2706, %v8599, 0
      %8615 = vmatprep.subr.bf16.mxu0 %v8357
      %8616 = vmatpush1.bf16.msra.mxu0 %v8368
      %8617 = vmatprep.subr.bf16.mxu0 %v8358
      %8618 = vmatpush1.bf16.msra.mxu0 %v8371
      %8619 = vmatprep.subr.bf16.mxu0 %v8359
      %8620 = vmatpush1.bf16.msra.mxu0 %v8374
      %8621 = vmatprep.subr.bf16.mxu0 %v8360
      %8622 = vmatpush1.bf16.msra.mxu0 %v8377
      %8623 = vmatprep.subr.bf16.mxu0 %v8361
      %8624 = vmatpush1.bf16.msra.mxu0 %v8380
      %8625 = vmatprep.subr.bf16.mxu0 0
      %8626 = vmatpush1.bf16.msra.mxu0 0
      %8627 = vmatprep.subr.bf16.mxu0 0
      %8628 = vmatpush1.bf16.msra.mxu0 0
      %8629 = vmatprep.subr.bf16.mxu0 0
      %8630 = vmatpush1.bf16.msra.mxu0 0
      %8631 = vmatprep.subr.bf16.mxu0 0
      %8632 = vmatpush1.bf16.msra.mxu0 0
      %8633 = vmatprep.subr.bf16.mxu0 0
      %8634 = vmatpush1.bf16.msra.mxu0 0
      %8635 = vmatprep.subr.bf16.mxu0 0
      %8636 = vmatpush1.bf16.msra.mxu0 0
      %8637 = vmatprep.subr.bf16.mxu0 0
      %8638 = vmatpush1.bf16.msra.mxu0 0
      %8639 = vmatprep.subr.bf16.mxu0 0
      %8640 = vmatpush1.bf16.msra.mxu0 0
      %8641 = vmatprep.subr.bf16.mxu0 0
      %8642 = vmatpush1.bf16.msra.mxu0 0
      %8643 = vmatprep.subr.bf16.mxu0 0
      %8644 = vmatpush1.bf16.msra.mxu0 0
      %8645 = vmatprep.subr.bf16.mxu0 0
      %8646 = vmatpush1.bf16.msra.mxu0 0
      %8647 = vmatprep.mubr.bf16.mxu0 0
      %8648 = vmatmul.mubr.bf16.gmra.mrb[0].mxu0 %v8601
      %v8649 = vpop.f32.mrb[0].mxu0
      %v8650 = vadd.f32 %v8527, %v8649
      %v8651 = vpop.f32.mrb[0].mxu0
      %v8652 = vadd.f32 %v8529, %v8651
      %v8653 = vpop.f32.mrb[0].mxu0
      %v8654 = vadd.f32 %v8531, %v8653
      %v8655 = vpop.f32.mrb[0].mxu0
      %v8656 = vadd.f32 %v8533, %v8655
      %8657 = vmatprep.mubr.bf16.mxu0 0
      %8658 = vmatmul.mubr.bf16.gmra.mrb[0].mxu0 %v8604
      %v8659 = vpop.f32.mrb[0].mxu0
      %v8660 = vadd.f32 %v8537, %v8659
      %v8661 = vpop.f32.mrb[0].mxu0
      %v8662 = vadd.f32 %v8539, %v8661
      %v8663 = vpop.f32.mrb[0].mxu0
      %v8664 = vadd.f32 %v8541, %v8663
      %v8665 = vpop.f32.mrb[0].mxu0
      %v8666 = vadd.f32 %v8543, %v8665
      %8667 = vmatprep.mubr.bf16.mxu0 0
      %8668 = vmatmul.mubr.bf16.gmra.mrb[0].mxu0 %v8607
      %v8669 = vpop.f32.mrb[0].mxu0
      %v8670 = vadd.f32 %v8547, %v8669
      %v8671 = vpop.f32.mrb[0].mxu0
      %v8672 = vadd.f32 %v8549, %v8671
      %v8673 = vpop.f32.mrb[0].mxu0
      %v8674 = vadd.f32 %v8551, %v8673
      %v8675 = vpop.f32.mrb[0].mxu0
      %v8676 = vadd.f32 %v8553, %v8675
      %8677 = vmatprep.mubr.bf16.mxu0 0
      %8678 = vmatmul.mubr.bf16.gmra.mrb[0].mxu0 %v8610
      %v8679 = vpop.f32.mrb[0].mxu0
      %v8680 = vadd.f32 %v8557, %v8679
      %v8681 = vpop.f32.mrb[0].mxu0
      %v8682 = vadd.f32 %v8559, %v8681
      %v8683 = vpop.f32.mrb[0].mxu0
      %v8684 = vadd.f32 %v8561, %v8683
      %v8685 = vpop.f32.mrb[0].mxu0
      %v8686 = vadd.f32 %v8563, %v8685
      %8687 = vmatprep.mubr.bf16.mxu0 0
      %8688 = vmatmul.mubr.bf16.gmra.mrb[0].mxu0 %v8613
      %v8689 = vpop.f32.mrb[0].mxu0
      %v8690 = vadd.f32 %v8567, %v8689
      %v8691 = vpop.f32.mrb[0].mxu0
      %v8692 = vadd.f32 %v8569, %v8691
      %v8693 = vpop.f32.mrb[0].mxu0
      %v8694 = vadd.f32 %v8571, %v8693
      %v8695 = vpop.f32.mrb[0].mxu0
      %v8696 = vadd.f32 %v8573, %v8695
      %8697 = vdwg.mxu0
      %v8708 = vunpack.c.l.b16 %v8276
      %v8709 = vunpack.c.l.b16 %v8277
      %v8710 = vunpack.c.l.b16 %v8278
      %v8711 = vunpack.c.l.b16 %v8279
      %v8712 = vunpack.c.l.b16 %v8280
      %v8713 = vunpack.c.l.b16 %v8281
      %v8714 = vunpack.c.l.b16 %v8282
      %v8715 = vunpack.c.l.b16 %v8283
      %v8716 = vunpack.c.l.b16 %v8284
      %v8717 = vunpack.c.l.b16 %v8285
      %v8718 = vpack.c.b16 %v8709, %v8708
      %v8719 = vpack.c.b16 %v8711, %v8710
      %v8720 = vpack.c.b16 %v8713, %v8712
      %v8721 = vpack.c.b16 %v8715, %v8714
      %v8722 = vpack.c.b16 %v8717, %v8716
      %8723 = vrot.lane.b32.xlu0 %v8368, 96
      %v8724 = vpop.permute.xlu0 %8723
      %8725 = vrot.lane.b32.xlu0 %v8357, 96
      %v8726 = vpop.permute.xlu0 %8725
      %8727 = vrot.lane.b32.xlu0 %v8383, 96
      %v8728 = vpop.permute.xlu0 %8727
      %8729 = vrot.lane.b32.xlu0 %v8371, 96
      %v8730 = vpop.permute.xlu0 %8729
      %8731 = vrot.lane.b32.xlu0 %v8358, 96
      %v8732 = vpop.permute.xlu0 %8731
      %8733 = vrot.lane.b32.xlu0 %v8385, 96
      %v8734 = vpop.permute.xlu0 %8733
      %8735 = vrot.lane.b32.xlu0 %v8374, 96
      %v8736 = vpop.permute.xlu0 %8735
      %8737 = vrot.lane.b32.xlu0 %v8359, 96
      %v8738 = vpop.permute.xlu0 %8737
      %8739 = vrot.lane.b32.xlu0 %v8387, 96
      %v8740 = vpop.permute.xlu0 %8739
      %8741 = vrot.lane.b32.xlu0 %v8377, 96
      %v8742 = vpop.permute.xlu0 %8741
      %8743 = vrot.lane.b32.xlu0 %v8360, 96
      %v8744 = vpop.permute.xlu0 %8743
      %8745 = vrot.lane.b32.xlu0 %v8389, 96
      %v8746 = vpop.permute.xlu0 %8745
      %8747 = vrot.lane.b32.xlu0 %v8380, 96
      %v8748 = vpop.permute.xlu0 %8747
      %8749 = vrot.lane.b32.xlu0 %v8361, 96
      %v8750 = vpop.permute.xlu0 %8749
      %8751 = vrot.lane.b32.xlu0 %v8391, 96
      %v8752 = vpop.permute.xlu0 %8751
      %v8753 = vsel %vm656, %v8724, %v8726
      %v8754 = vsel %vm656, %v8726, %v8728
      %v8755 = vsel %vm656, %v8730, %v8732
      %v8756 = vsel %vm656, %v8732, %v8734
      %v8757 = vsel %vm656, %v8736, %v8738
      %v8758 = vsel %vm656, %v8738, %v8740
      %v8759 = vsel %vm656, %v8742, %v8744
      %v8760 = vsel %vm656, %v8744, %v8746
      %v8761 = vsel %vm656, %v8748, %v8750
      %v8762 = vsel %vm656, %v8750, %v8752
      %v8774 = vsel %vm2706, %v8718, 0
      %v8777 = vsel %vm2706, %v8719, 0
      %v8780 = vsel %vm2706, %v8720, 0
      %v8783 = vsel %vm2706, %v8721, 0
      %v8786 = vsel %vm2706, %v8722, 0
      %8788 = vmatprep.subr.bf16.mxu0 %v8754
      %8789 = vmatpush1.bf16.msra.mxu0 %v8753
      %8790 = vmatprep.subr.bf16.mxu0 %v8756
      %8791 = vmatpush1.bf16.msra.mxu0 %v8755
      %8792 = vmatprep.subr.bf16.mxu0 %v8758
      %8793 = vmatpush1.bf16.msra.mxu0 %v8757
      %8794 = vmatprep.subr.bf16.mxu0 %v8760
      %8795 = vmatpush1.bf16.msra.mxu0 %v8759
      %8796 = vmatprep.subr.bf16.mxu0 %v8762
      %8797 = vmatpush1.bf16.msra.mxu0 %v8761
      %8798 = vmatprep.subr.bf16.mxu0 0
      %8799 = vmatpush1.bf16.msra.mxu0 0
      %8800 = vmatprep.subr.bf16.mxu0 0
      %8801 = vmatpush1.bf16.msra.mxu0 0
      %8802 = vmatprep.subr.bf16.mxu0 0
      %8803 = vmatpush1.bf16.msra.mxu0 0
      %8804 = vmatprep.subr.bf16.mxu0 0
      %8805 = vmatpush1.bf16.msra.mxu0 0
      %8806 = vmatprep.subr.bf16.mxu0 0
      %8807 = vmatpush1.bf16.msra.mxu0 0
      %8808 = vmatprep.subr.bf16.mxu0 0
      %8809 = vmatpush1.bf16.msra.mxu0 0
      %8810 = vmatprep.subr.bf16.mxu0 0
      %8811 = vmatpush1.bf16.msra.mxu0 0
      %8812 = vmatprep.subr.bf16.mxu0 0
      %8813 = vmatpush1.bf16.msra.mxu0 0
      %8814 = vmatprep.subr.bf16.mxu0 0
      %8815 = vmatpush1.bf16.msra.mxu0 0
      %8816 = vmatprep.subr.bf16.mxu0 0
      %8817 = vmatpush1.bf16.msra.mxu0 0
      %8818 = vmatprep.subr.bf16.mxu0 0
      %8819 = vmatpush1.bf16.msra.mxu0 0
      %8820 = vmatprep.mubr.bf16.mxu0 0
      %8821 = vmatmul.mubr.bf16.gmra.mrb[0].mxu0 %v8774
      %v8822 = vpop.f32.mrb[0].mxu0
      %v8823 = vadd.f32 0.0, %v8822
      %v8824 = vpop.f32.mrb[0].mxu0
      %v8825 = vadd.f32 0.0, %v8824
      %v8826 = vpop.f32.mrb[0].mxu0
      %v8827 = vadd.f32 0.0, %v8826
      %v8828 = vpop.f32.mrb[0].mxu0
      %v8829 = vadd.f32 0.0, %v8828
      %8830 = vmatprep.mubr.bf16.mxu0 0
      %8831 = vmatmul.mubr.bf16.gmra.mrb[0].mxu0 %v8777
      %v8832 = vpop.f32.mrb[0].mxu0
      %v8833 = vadd.f32 0.0, %v8832
      %v8834 = vpop.f32.mrb[0].mxu0
      %v8835 = vadd.f32 0.0, %v8834
      %v8836 = vpop.f32.mrb[0].mxu0
      %v8837 = vadd.f32 0.0, %v8836
      %v8838 = vpop.f32.mrb[0].mxu0
      %v8839 = vadd.f32 0.0, %v8838
      %8840 = vmatprep.mubr.bf16.mxu0 0
      %8841 = vmatmul.mubr.bf16.gmra.mrb[0].mxu0 %v8780
      %v8842 = vpop.f32.mrb[0].mxu0
      %v8843 = vadd.f32 0.0, %v8842
      %v8844 = vpop.f32.mrb[0].mxu0
      %v8845 = vadd.f32 0.0, %v8844
      %v8846 = vpop.f32.mrb[0].mxu0
      %v8847 = vadd.f32 0.0, %v8846
      %v8848 = vpop.f32.mrb[0].mxu0
      %v8849 = vadd.f32 0.0, %v8848
      %8850 = vmatprep.mubr.bf16.mxu0 0
      %8851 = vmatmul.mubr.bf16.gmra.mrb[0].mxu0 %v8783
      %v8852 = vpop.f32.mrb[0].mxu0
      %v8853 = vadd.f32 0.0, %v8852
      %v8854 = vpop.f32.mrb[0].mxu0
      %v8855 = vadd.f32 0.0, %v8854
      %v8856 = vpop.f32.mrb[0].mxu0
      %v8857 = vadd.f32 0.0, %v8856
      %v8858 = vpop.f32.mrb[0].mxu0
      %v8859 = vadd.f32 0.0, %v8858
      %8860 = vmatprep.mubr.bf16.mxu0 0
      %8861 = vmatmul.mubr.bf16.gmra.mrb[0].mxu0 %v8786
      %v8862 = vpop.f32.mrb[0].mxu0
      %v8863 = vadd.f32 0.0, %v8862
      %v8864 = vpop.f32.mrb[0].mxu0
      %v8865 = vadd.f32 0.0, %v8864
      %v8866 = vpop.f32.mrb[0].mxu0
      %v8867 = vadd.f32 0.0, %v8866
      %v8868 = vpop.f32.mrb[0].mxu0
      %v8869 = vadd.f32 0.0, %v8868
      %8870 = vdwg.mxu0
      %v8871 = vadd.f32 %v8650, %v8823
      %v8872 = vadd.f32 %v8652, %v8825
      %v8873 = vadd.f32 %v8654, %v8827
      %v8874 = vadd.f32 %v8656, %v8829
      %v8875 = vadd.f32 %v8660, %v8833
      %v8876 = vadd.f32 %v8662, %v8835
      %v8877 = vadd.f32 %v8664, %v8837
      %v8878 = vadd.f32 %v8666, %v8839
      %v8879 = vadd.f32 %v8670, %v8843
      %v8880 = vadd.f32 %v8672, %v8845
      %v8881 = vadd.f32 %v8674, %v8847
      %v8882 = vadd.f32 %v8676, %v8849
      %v8883 = vadd.f32 %v8680, %v8853
      %v8884 = vadd.f32 %v8682, %v8855
      %v8885 = vadd.f32 %v8684, %v8857
      %v8886 = vadd.f32 %v8686, %v8859
      %v8887 = vadd.f32 %v8690, %v8863
      %v8888 = vadd.f32 %v8692, %v8865
      %v8889 = vadd.f32 %v8694, %v8867
      %v8890 = vadd.f32 %v8696, %v8869
      %v8891 = vmul.f32 %v8871, %v466
      %v8892 = vmul.f32 %v8872, %v467
      %v8893 = vmul.f32 %v8873, %v466
      %v8894 = vmul.f32 %v8874, %v467
      %v8895 = vmul.f32 %v8875, %v466
      %v8896 = vmul.f32 %v8876, %v467
      %v8897 = vmul.f32 %v8877, %v466
      %v8898 = vmul.f32 %v8878, %v467
      %v8899 = vmul.f32 %v8879, %v466
      %v8900 = vmul.f32 %v8880, %v467
      %v8901 = vmul.f32 %v8881, %v466
      %v8902 = vmul.f32 %v8882, %v467
      %v8903 = vmul.f32 %v8883, %v466
      %v8904 = vmul.f32 %v8884, %v467
      %v8905 = vmul.f32 %v8885, %v466
      %v8906 = vmul.f32 %v8886, %v467
      %v8907 = vmul.f32 %v8887, %v466
      %v8908 = vmul.f32 %v8888, %v467
      %v8909 = vmul.f32 %v8889, %v466
      %v8910 = vmul.f32 %v8890, %v467
      %v8921 = vunpack.c.l.b16 %v8256
      %v8922 = vunpack.c.l.b16 %v8257
      %v8923 = vunpack.c.l.b16 %v8258
      %v8924 = vunpack.c.l.b16 %v8259
      %v8925 = vunpack.c.l.b16 %v8260
      %v8926 = vunpack.c.l.b16 %v8261
      %v8927 = vunpack.c.l.b16 %v8262
      %v8928 = vunpack.c.l.b16 %v8263
      %v8929 = vunpack.c.l.b16 %v8264
      %v8930 = vunpack.c.l.b16 %v8265
      %v8931 = vpack.c.b16 %v8922, %v8921
      %v8932 = vpack.c.b16 %v8924, %v8923
      %v8933 = vpack.c.b16 %v8926, %v8925
      %v8934 = vpack.c.b16 %v8928, %v8927
      %v8935 = vpack.c.b16 %v8930, %v8929
      %8936 = vrot.lane.b32.xlu0 %v8368, 111
      %v8937 = vpop.permute.xlu0 %8936
      %8938 = vrot.lane.b32.xlu0 %v8357, 111
      %v8939 = vpop.permute.xlu0 %8938
      %8940 = vrot.lane.b32.xlu0 %v8383, 111
      %v8941 = vpop.permute.xlu0 %8940
      %8942 = vrot.lane.b32.xlu0 %v8371, 111
      %v8943 = vpop.permute.xlu0 %8942
      %8944 = vrot.lane.b32.xlu0 %v8358, 111
      %v8945 = vpop.permute.xlu0 %8944
      %8946 = vrot.lane.b32.xlu0 %v8385, 111
      %v8947 = vpop.permute.xlu0 %8946
      %8948 = vrot.lane.b32.xlu0 %v8374, 111
      %v8949 = vpop.permute.xlu0 %8948
      %8950 = vrot.lane.b32.xlu0 %v8359, 111
      %v8951 = vpop.permute.xlu0 %8950
      %8952 = vrot.lane.b32.xlu0 %v8387, 111
      %v8953 = vpop.permute.xlu0 %8952
      %8954 = vrot.lane.b32.xlu0 %v8377, 111
      %v8955 = vpop.permute.xlu0 %8954
      %8956 = vrot.lane.b32.xlu0 %v8360, 111
      %v8957 = vpop.permute.xlu0 %8956
      %8958 = vrot.lane.b32.xlu0 %v8389, 111
      %v8959 = vpop.permute.xlu0 %8958
      %8960 = vrot.lane.b32.xlu0 %v8380, 111
      %v8961 = vpop.permute.xlu0 %8960
      %8962 = vrot.lane.b32.xlu0 %v8361, 111
      %v8963 = vpop.permute.xlu0 %8962
      %8964 = vrot.lane.b32.xlu0 %v8391, 111
      %v8965 = vpop.permute.xlu0 %8964
      %v8966 = vsel %vm730, %v8937, %v8939
      %v8967 = vsel %vm730, %v8939, %v8941
      %v8968 = vsel %vm730, %v8943, %v8945
      %v8969 = vsel %vm730, %v8945, %v8947
      %v8970 = vsel %vm730, %v8949, %v8951
      %v8971 = vsel %vm730, %v8951, %v8953
      %v8972 = vsel %vm730, %v8955, %v8957
      %v8973 = vsel %vm730, %v8957, %v8959
      %v8974 = vsel %vm730, %v8961, %v8963
      %v8975 = vsel %vm730, %v8963, %v8965
      %v8987 = vsel %vm2706, %v8931, 0
      %v8990 = vsel %vm2706, %v8932, 0
      %v8993 = vsel %vm2706, %v8933, 0
      %v8996 = vsel %vm2706, %v8934, 0
      %v8999 = vsel %vm2706, %v8935, 0
      %9001 = vmatprep.subr.bf16.mxu0 %v8967
      %9002 = vmatpush1.bf16.msra.mxu0 %v8966
      %9003 = vmatprep.subr.bf16.mxu0 %v8969
      %9004 = vmatpush1.bf16.msra.mxu0 %v8968
      %9005 = vmatprep.subr.bf16.mxu0 %v8971
      %9006 = vmatpush1.bf16.msra.mxu0 %v8970
      %9007 = vmatprep.subr.bf16.mxu0 %v8973
      %9008 = vmatpush1.bf16.msra.mxu0 %v8972
      %9009 = vmatprep.subr.bf16.mxu0 %v8975
      %9010 = vmatpush1.bf16.msra.mxu0 %v8974
      %9011 = vmatprep.subr.bf16.mxu0 0
      %9012 = vmatpush1.bf16.msra.mxu0 0
      %9013 = vmatprep.subr.bf16.mxu0 0
      %9014 = vmatpush1.bf16.msra.mxu0 0
      %9015 = vmatprep.subr.bf16.mxu0 0
      %9016 = vmatpush1.bf16.msra.mxu0 0
      %9017 = vmatprep.subr.bf16.mxu0 0
      %9018 = vmatpush1.bf16.msra.mxu0 0
      %9019 = vmatprep.subr.bf16.mxu0 0
      %9020 = vmatpush1.bf16.msra.mxu0 0
      %9021 = vmatprep.subr.bf16.mxu0 0
      %9022 = vmatpush1.bf16.msra.mxu0 0
      %9023 = vmatprep.subr.bf16.mxu0 0
      %9024 = vmatpush1.bf16.msra.mxu0 0
      %9025 = vmatprep.subr.bf16.mxu0 0
      %9026 = vmatpush1.bf16.msra.mxu0 0
      %9027 = vmatprep.subr.bf16.mxu0 0
      %9028 = vmatpush1.bf16.msra.mxu0 0
      %9029 = vmatprep.subr.bf16.mxu0 0
      %9030 = vmatpush1.bf16.msra.mxu0 0
      %9031 = vmatprep.subr.bf16.mxu0 0
      %9032 = vmatpush1.bf16.msra.mxu0 0
      %9033 = vmatprep.mubr.bf16.mxu0 0
      %9034 = vmatmul.mubr.bf16.gmra.mrb[0].mxu0 %v8987
      %v9035 = vpop.f32.mrb[0].mxu0
      %v9036 = vadd.f32 0.0, %v9035
      %v9037 = vpop.f32.mrb[0].mxu0
      %v9038 = vadd.f32 0.0, %v9037
      %v9039 = vpop.f32.mrb[0].mxu0
      %v9040 = vadd.f32 0.0, %v9039
      %v9041 = vpop.f32.mrb[0].mxu0
      %v9042 = vadd.f32 0.0, %v9041
      %9043 = vmatprep.mubr.bf16.mxu0 0
      %9044 = vmatmul.mubr.bf16.gmra.mrb[0].mxu0 %v8990
      %v9045 = vpop.f32.mrb[0].mxu0
      %v9046 = vadd.f32 0.0, %v9045
      %v9047 = vpop.f32.mrb[0].mxu0
      %v9048 = vadd.f32 0.0, %v9047
      %v9049 = vpop.f32.mrb[0].mxu0
      %v9050 = vadd.f32 0.0, %v9049
      %v9051 = vpop.f32.mrb[0].mxu0
      %v9052 = vadd.f32 0.0, %v9051
      %9053 = vmatprep.mubr.bf16.mxu0 0
      %9054 = vmatmul.mubr.bf16.gmra.mrb[0].mxu0 %v8993
      %v9055 = vpop.f32.mrb[0].mxu0
      %v9056 = vadd.f32 0.0, %v9055
      %v9057 = vpop.f32.mrb[0].mxu0
      %v9058 = vadd.f32 0.0, %v9057
      %v9059 = vpop.f32.mrb[0].mxu0
      %v9060 = vadd.f32 0.0, %v9059
      %v9061 = vpop.f32.mrb[0].mxu0
      %v9062 = vadd.f32 0.0, %v9061
      %9063 = vmatprep.mubr.bf16.mxu0 0
      %9064 = vmatmul.mubr.bf16.gmra.mrb[0].mxu0 %v8996
      %v9065 = vpop.f32.mrb[0].mxu0
      %v9066 = vadd.f32 0.0, %v9065
      %v9067 = vpop.f32.mrb[0].mxu0
      %v9068 = vadd.f32 0.0, %v9067
      %v9069 = vpop.f32.mrb[0].mxu0
      %v9070 = vadd.f32 0.0, %v9069
      %v9071 = vpop.f32.mrb[0].mxu0
      %v9072 = vadd.f32 0.0, %v9071
      %9073 = vmatprep.mubr.bf16.mxu0 0
      %9074 = vmatmul.mubr.bf16.gmra.mrb[0].mxu0 %v8999
      %v9075 = vpop.f32.mrb[0].mxu0
      %v9076 = vadd.f32 0.0, %v9075
      %v9077 = vpop.f32.mrb[0].mxu0
      %v9078 = vadd.f32 0.0, %v9077
      %v9079 = vpop.f32.mrb[0].mxu0
      %v9080 = vadd.f32 0.0, %v9079
      %v9081 = vpop.f32.mrb[0].mxu0
      %v9082 = vadd.f32 0.0, %v9081
      %9083 = vdwg.mxu0
      %v9094 = vunpack.c.l.b16 %v8226
      %v9095 = vunpack.c.l.b16 %v8227
      %v9096 = vunpack.c.l.b16 %v8228
      %v9097 = vunpack.c.l.b16 %v8229
      %v9098 = vunpack.c.l.b16 %v8230
      %v9099 = vunpack.c.l.b16 %v8231
      %v9100 = vunpack.c.l.b16 %v8232
      %v9101 = vunpack.c.l.b16 %v8233
      %v9102 = vunpack.c.l.b16 %v8234
      %v9103 = vunpack.c.l.b16 %v8235
      %v9104 = vpack.c.b16 %v9095, %v9094
      %v9105 = vpack.c.b16 %v9097, %v9096
      %v9106 = vpack.c.b16 %v9099, %v9098
      %v9107 = vpack.c.b16 %v9101, %v9100
      %v9108 = vpack.c.b16 %v9103, %v9102
      %9109 = vrot.lane.b32.xlu0 %v8368, 127
      %v9110 = vpop.permute.xlu0 %9109
      %9111 = vrot.lane.b32.xlu0 %v8357, 127
      %v9112 = vpop.permute.xlu0 %9111
      %9113 = vrot.lane.b32.xlu0 %v8383, 127
      %v9114 = vpop.permute.xlu0 %9113
      %9115 = vrot.lane.b32.xlu0 %v8371, 127
      %v9116 = vpop.permute.xlu0 %9115
      %9117 = vrot.lane.b32.xlu0 %v8358, 127
      %v9118 = vpop.permute.xlu0 %9117
      %9119 = vrot.lane.b32.xlu0 %v8385, 127
      %v9120 = vpop.permute.xlu0 %9119
      %9121 = vrot.lane.b32.xlu0 %v8374, 127
      %v9122 = vpop.permute.xlu0 %9121
      %9123 = vrot.lane.b32.xlu0 %v8359, 127
      %v9124 = vpop.permute.xlu0 %9123
      %9125 = vrot.lane.b32.xlu0 %v8387, 127
      %v9126 = vpop.permute.xlu0 %9125
      %9127 = vrot.lane.b32.xlu0 %v8377, 127
      %v9128 = vpop.permute.xlu0 %9127
      %9129 = vrot.lane.b32.xlu0 %v8360, 127
      %v9130 = vpop.permute.xlu0 %9129
      %9131 = vrot.lane.b32.xlu0 %v8389, 127
      %v9132 = vpop.permute.xlu0 %9131
      %9133 = vrot.lane.b32.xlu0 %v8380, 127
      %v9134 = vpop.permute.xlu0 %9133
      %9135 = vrot.lane.b32.xlu0 %v8361, 127
      %v9136 = vpop.permute.xlu0 %9135
      %9137 = vrot.lane.b32.xlu0 %v8391, 127
      %v9138 = vpop.permute.xlu0 %9137
      %v9139 = vsel %vm796, %v9110, %v9112
      %v9140 = vsel %vm796, %v9112, %v9114
      %v9141 = vsel %vm796, %v9116, %v9118
      %v9142 = vsel %vm796, %v9118, %v9120
      %v9143 = vsel %vm796, %v9122, %v9124
      %v9144 = vsel %vm796, %v9124, %v9126
      %v9145 = vsel %vm796, %v9128, %v9130
      %v9146 = vsel %vm796, %v9130, %v9132
      %v9147 = vsel %vm796, %v9134, %v9136
      %v9148 = vsel %vm796, %v9136, %v9138
      %v9160 = vsel %vm2706, %v9104, 0
      %v9163 = vsel %vm2706, %v9105, 0
      %v9166 = vsel %vm2706, %v9106, 0
      %v9169 = vsel %vm2706, %v9107, 0
      %v9172 = vsel %vm2706, %v9108, 0
      %9174 = vmatprep.subr.bf16.mxu0 %v9140
      %9175 = vmatpush1.bf16.msra.mxu0 %v9139
      %9176 = vmatprep.subr.bf16.mxu0 %v9142
      %9177 = vmatpush1.bf16.msra.mxu0 %v9141
      %9178 = vmatprep.subr.bf16.mxu0 %v9144
      %9179 = vmatpush1.bf16.msra.mxu0 %v9143
      %9180 = vmatprep.subr.bf16.mxu0 %v9146
      %9181 = vmatpush1.bf16.msra.mxu0 %v9145
      %9182 = vmatprep.subr.bf16.mxu0 %v9148
      %9183 = vmatpush1.bf16.msra.mxu0 %v9147
      %9184 = vmatprep.subr.bf16.mxu0 0
      %9185 = vmatpush1.bf16.msra.mxu0 0
      %9186 = vmatprep.subr.bf16.mxu0 0
      %9187 = vmatpush1.bf16.msra.mxu0 0
      %9188 = vmatprep.subr.bf16.mxu0 0
      %9189 = vmatpush1.bf16.msra.mxu0 0
      %9190 = vmatprep.subr.bf16.mxu0 0
      %9191 = vmatpush1.bf16.msra.mxu0 0
      %9192 = vmatprep.subr.bf16.mxu0 0
      %9193 = vmatpush1.bf16.msra.mxu0 0
      %9194 = vmatprep.subr.bf16.mxu0 0
      %9195 = vmatpush1.bf16.msra.mxu0 0
      %9196 = vmatprep.subr.bf16.mxu0 0
      %9197 = vmatpush1.bf16.msra.mxu0 0
      %9198 = vmatprep.subr.bf16.mxu0 0
      %9199 = vmatpush1.bf16.msra.mxu0 0
      %9200 = vmatprep.subr.bf16.mxu0 0
      %9201 = vmatpush1.bf16.msra.mxu0 0
      %9202 = vmatprep.subr.bf16.mxu0 0
      %9203 = vmatpush1.bf16.msra.mxu0 0
      %9204 = vmatprep.subr.bf16.mxu0 0
      %9205 = vmatpush1.bf16.msra.mxu0 0
      %9206 = vmatprep.mubr.bf16.mxu0 0
      %9207 = vmatmul.mubr.bf16.gmra.mrb[0].mxu0 %v9160
      %v9208 = vpop.f32.mrb[0].mxu0
      %v9209 = vadd.f32 %v9036, %v9208
      %v9210 = vpop.f32.mrb[0].mxu0
      %v9211 = vadd.f32 %v9038, %v9210
      %v9212 = vpop.f32.mrb[0].mxu0
      %v9213 = vadd.f32 %v9040, %v9212
      %v9214 = vpop.f32.mrb[0].mxu0
      %v9215 = vadd.f32 %v9042, %v9214
      %9216 = vmatprep.mubr.bf16.mxu0 0
      %9217 = vmatmul.mubr.bf16.gmra.mrb[0].mxu0 %v9163
      %v9218 = vpop.f32.mrb[0].mxu0
      %v9219 = vadd.f32 %v9046, %v9218
      %v9220 = vpop.f32.mrb[0].mxu0
      %v9221 = vadd.f32 %v9048, %v9220
      %v9222 = vpop.f32.mrb[0].mxu0
      %v9223 = vadd.f32 %v9050, %v9222
      %v9224 = vpop.f32.mrb[0].mxu0
      %v9225 = vadd.f32 %v9052, %v9224
      %9226 = vmatprep.mubr.bf16.mxu0 0
      %9227 = vmatmul.mubr.bf16.gmra.mrb[0].mxu0 %v9166
      %v9228 = vpop.f32.mrb[0].mxu0
      %v9229 = vadd.f32 %v9056, %v9228
      %v9230 = vpop.f32.mrb[0].mxu0
      %v9231 = vadd.f32 %v9058, %v9230
      %v9232 = vpop.f32.mrb[0].mxu0
      %v9233 = vadd.f32 %v9060, %v9232
      %v9234 = vpop.f32.mrb[0].mxu0
      %v9235 = vadd.f32 %v9062, %v9234
      %9236 = vmatprep.mubr.bf16.mxu0 0
      %9237 = vmatmul.mubr.bf16.gmra.mrb[0].mxu0 %v9169
      %v9238 = vpop.f32.mrb[0].mxu0
      %v9239 = vadd.f32 %v9066, %v9238
      %v9240 = vpop.f32.mrb[0].mxu0
      %v9241 = vadd.f32 %v9068, %v9240
      %v9242 = vpop.f32.mrb[0].mxu0
      %v9243 = vadd.f32 %v9070, %v9242
      %v9244 = vpop.f32.mrb[0].mxu0
      %v9245 = vadd.f32 %v9072, %v9244
      %9246 = vmatprep.mubr.bf16.mxu0 0
      %9247 = vmatmul.mubr.bf16.gmra.mrb[0].mxu0 %v9172
      %v9248 = vpop.f32.mrb[0].mxu0
      %v9249 = vadd.f32 %v9076, %v9248
      %v9250 = vpop.f32.mrb[0].mxu0
      %v9251 = vadd.f32 %v9078, %v9250
      %v9252 = vpop.f32.mrb[0].mxu0
      %v9253 = vadd.f32 %v9080, %v9252
      %v9254 = vpop.f32.mrb[0].mxu0
      %v9255 = vadd.f32 %v9082, %v9254
      %9256 = vdwg.mxu0
      %v9267 = vunpack.c.l.b16 %v8286
      %v9268 = vunpack.c.l.b16 %v8287
      %v9269 = vunpack.c.l.b16 %v8288
      %v9270 = vunpack.c.l.b16 %v8289
      %v9271 = vunpack.c.l.b16 %v8290
      %v9272 = vunpack.c.l.b16 %v8291
      %v9273 = vunpack.c.l.b16 %v8292
      %v9274 = vunpack.c.l.b16 %v8293
      %v9275 = vunpack.c.l.b16 %v8294
      %v9276 = vunpack.c.l.b16 %v8295
      %v9277 = vpack.c.b16 %v9268, %v9267
      %v9278 = vpack.c.b16 %v9270, %v9269
      %v9279 = vpack.c.b16 %v9272, %v9271
      %v9280 = vpack.c.b16 %v9274, %v9273
      %v9281 = vpack.c.b16 %v9276, %v9275
      %9282 = vrot.lane.b32.xlu0 %v8368, 95
      %v9283 = vpop.permute.xlu0 %9282
      %9284 = vrot.lane.b32.xlu0 %v8357, 95
      %v9285 = vpop.permute.xlu0 %9284
      %9286 = vrot.lane.b32.xlu0 %v8383, 95
      %v9287 = vpop.permute.xlu0 %9286
      %9288 = vrot.lane.b32.xlu0 %v8371, 95
      %v9289 = vpop.permute.xlu0 %9288
      %9290 = vrot.lane.b32.xlu0 %v8358, 95
      %v9291 = vpop.permute.xlu0 %9290
      %9292 = vrot.lane.b32.xlu0 %v8385, 95
      %v9293 = vpop.permute.xlu0 %9292
      %9294 = vrot.lane.b32.xlu0 %v8374, 95
      %v9295 = vpop.permute.xlu0 %9294
      %9296 = vrot.lane.b32.xlu0 %v8359, 95
      %v9297 = vpop.permute.xlu0 %9296
      %9298 = vrot.lane.b32.xlu0 %v8387, 95
      %v9299 = vpop.permute.xlu0 %9298
      %9300 = vrot.lane.b32.xlu0 %v8377, 95
      %v9301 = vpop.permute.xlu0 %9300
      %9302 = vrot.lane.b32.xlu0 %v8360, 95
      %v9303 = vpop.permute.xlu0 %9302
      %9304 = vrot.lane.b32.xlu0 %v8389, 95
      %v9305 = vpop.permute.xlu0 %9304
      %9306 = vrot.lane.b32.xlu0 %v8380, 95
      %v9307 = vpop.permute.xlu0 %9306
      %9308 = vrot.lane.b32.xlu0 %v8361, 95
      %v9309 = vpop.permute.xlu0 %9308
      %9310 = vrot.lane.b32.xlu0 %v8391, 95
      %v9311 = vpop.permute.xlu0 %9310
      %v9312 = vsel %vm862, %v9283, %v9285
      %v9313 = vsel %vm862, %v9285, %v9287
      %v9314 = vsel %vm862, %v9289, %v9291
      %v9315 = vsel %vm862, %v9291, %v9293
      %v9316 = vsel %vm862, %v9295, %v9297
      %v9317 = vsel %vm862, %v9297, %v9299
      %v9318 = vsel %vm862, %v9301, %v9303
      %v9319 = vsel %vm862, %v9303, %v9305
      %v9320 = vsel %vm862, %v9307, %v9309
      %v9321 = vsel %vm862, %v9309, %v9311
      %v9333 = vsel %vm2706, %v9277, 0
      %v9336 = vsel %vm2706, %v9278, 0
      %v9339 = vsel %vm2706, %v9279, 0
      %v9342 = vsel %vm2706, %v9280, 0
      %v9345 = vsel %vm2706, %v9281, 0
      %9347 = vmatprep.subr.bf16.mxu0 %v9313
      %9348 = vmatpush1.bf16.msra.mxu0 %v9312
      %9349 = vmatprep.subr.bf16.mxu0 %v9315
      %9350 = vmatpush1.bf16.msra.mxu0 %v9314
      %9351 = vmatprep.subr.bf16.mxu0 %v9317
      %9352 = vmatpush1.bf16.msra.mxu0 %v9316
      %9353 = vmatprep.subr.bf16.mxu0 %v9319
      %9354 = vmatpush1.bf16.msra.mxu0 %v9318
      %9355 = vmatprep.subr.bf16.mxu0 %v9321
      %9356 = vmatpush1.bf16.msra.mxu0 %v9320
      %9357 = vmatprep.subr.bf16.mxu0 0
      %9358 = vmatpush1.bf16.msra.mxu0 0
      %9359 = vmatprep.subr.bf16.mxu0 0
      %9360 = vmatpush1.bf16.msra.mxu0 0
      %9361 = vmatprep.subr.bf16.mxu0 0
      %9362 = vmatpush1.bf16.msra.mxu0 0
      %9363 = vmatprep.subr.bf16.mxu0 0
      %9364 = vmatpush1.bf16.msra.mxu0 0
      %9365 = vmatprep.subr.bf16.mxu0 0
      %9366 = vmatpush1.bf16.msra.mxu0 0
      %9367 = vmatprep.subr.bf16.mxu0 0
      %9368 = vmatpush1.bf16.msra.mxu0 0
      %9369 = vmatprep.subr.bf16.mxu0 0
      %9370 = vmatpush1.bf16.msra.mxu0 0
      %9371 = vmatprep.subr.bf16.mxu0 0
      %9372 = vmatpush1.bf16.msra.mxu0 0
      %9373 = vmatprep.subr.bf16.mxu0 0
      %9374 = vmatpush1.bf16.msra.mxu0 0
      %9375 = vmatprep.subr.bf16.mxu0 0
      %9376 = vmatpush1.bf16.msra.mxu0 0
      %9377 = vmatprep.subr.bf16.mxu0 0
      %9378 = vmatpush1.bf16.msra.mxu0 0
      %9379 = vmatprep.mubr.bf16.mxu0 0
      %9380 = vmatmul.mubr.bf16.gmra.mrb[0].mxu0 %v9333
      %v9381 = vpop.f32.mrb[0].mxu0
      %v9382 = vadd.f32 0.0, %v9381
      %v9383 = vpop.f32.mrb[0].mxu0
      %v9384 = vadd.f32 0.0, %v9383
      %v9385 = vpop.f32.mrb[0].mxu0
      %v9386 = vadd.f32 0.0, %v9385
      %v9387 = vpop.f32.mrb[0].mxu0
      %v9388 = vadd.f32 0.0, %v9387
      %9389 = vmatprep.mubr.bf16.mxu0 0
      %9390 = vmatmul.mubr.bf16.gmra.mrb[0].mxu0 %v9336
      %v9391 = vpop.f32.mrb[0].mxu0
      %v9392 = vadd.f32 0.0, %v9391
      %v9393 = vpop.f32.mrb[0].mxu0
      %v9394 = vadd.f32 0.0, %v9393
      %v9395 = vpop.f32.mrb[0].mxu0
      %v9396 = vadd.f32 0.0, %v9395
      %v9397 = vpop.f32.mrb[0].mxu0
      %v9398 = vadd.f32 0.0, %v9397
      %9399 = vmatprep.mubr.bf16.mxu0 0
      %9400 = vmatmul.mubr.bf16.gmra.mrb[0].mxu0 %v9339
      %v9401 = vpop.f32.mrb[0].mxu0
      %v9402 = vadd.f32 0.0, %v9401
      %v9403 = vpop.f32.mrb[0].mxu0
      %v9404 = vadd.f32 0.0, %v9403
      %v9405 = vpop.f32.mrb[0].mxu0
      %v9406 = vadd.f32 0.0, %v9405
      %v9407 = vpop.f32.mrb[0].mxu0
      %v9408 = vadd.f32 0.0, %v9407
      %9409 = vmatprep.mubr.bf16.mxu0 0
      %9410 = vmatmul.mubr.bf16.gmra.mrb[0].mxu0 %v9342
      %v9411 = vpop.f32.mrb[0].mxu0
      %v9412 = vadd.f32 0.0, %v9411
      %v9413 = vpop.f32.mrb[0].mxu0
      %v9414 = vadd.f32 0.0, %v9413
      %v9415 = vpop.f32.mrb[0].mxu0
      %v9416 = vadd.f32 0.0, %v9415
      %v9417 = vpop.f32.mrb[0].mxu0
      %v9418 = vadd.f32 0.0, %v9417
      %9419 = vmatprep.mubr.bf16.mxu0 0
      %9420 = vmatmul.mubr.bf16.gmra.mrb[0].mxu0 %v9345
      %v9421 = vpop.f32.mrb[0].mxu0
      %v9422 = vadd.f32 0.0, %v9421
      %v9423 = vpop.f32.mrb[0].mxu0
      %v9424 = vadd.f32 0.0, %v9423
      %v9425 = vpop.f32.mrb[0].mxu0
      %v9426 = vadd.f32 0.0, %v9425
      %v9427 = vpop.f32.mrb[0].mxu0
      %v9428 = vadd.f32 0.0, %v9427
      %9429 = vdwg.mxu0
      %v9430 = vadd.f32 %v9209, %v9382
      %v9431 = vadd.f32 %v9211, %v9384
      %v9432 = vadd.f32 %v9213, %v9386
      %v9433 = vadd.f32 %v9215, %v9388
      %v9434 = vadd.f32 %v9219, %v9392
      %v9435 = vadd.f32 %v9221, %v9394
      %v9436 = vadd.f32 %v9223, %v9396
      %v9437 = vadd.f32 %v9225, %v9398
      %v9438 = vadd.f32 %v9229, %v9402
      %v9439 = vadd.f32 %v9231, %v9404
      %v9440 = vadd.f32 %v9233, %v9406
      %v9441 = vadd.f32 %v9235, %v9408
      %v9442 = vadd.f32 %v9239, %v9412
      %v9443 = vadd.f32 %v9241, %v9414
      %v9444 = vadd.f32 %v9243, %v9416
      %v9445 = vadd.f32 %v9245, %v9418
      %v9446 = vadd.f32 %v9249, %v9422
      %v9447 = vadd.f32 %v9251, %v9424
      %v9448 = vadd.f32 %v9253, %v9426
      %v9449 = vadd.f32 %v9255, %v9428
      %v9450 = vadd.f32 %v8891, %v9430
      %v9451 = vadd.f32 %v8892, %v9431
      %v9452 = vadd.f32 %v8893, %v9432
      %v9453 = vadd.f32 %v8894, %v9433
      %v9454 = vadd.f32 %v8895, %v9434
      %v9455 = vadd.f32 %v8896, %v9435
      %v9456 = vadd.f32 %v8897, %v9436
      %v9457 = vadd.f32 %v8898, %v9437
      %v9458 = vadd.f32 %v8899, %v9438
      %v9459 = vadd.f32 %v8900, %v9439
      %v9460 = vadd.f32 %v8901, %v9440
      %v9461 = vadd.f32 %v8902, %v9441
      %v9462 = vadd.f32 %v8903, %v9442
      %v9463 = vadd.f32 %v8904, %v9443
      %v9464 = vadd.f32 %v8905, %v9444
      %v9465 = vadd.f32 %v8906, %v9445
      %v9466 = vadd.f32 %v8907, %v9446
      %v9467 = vadd.f32 %v8908, %v9447
      %v9468 = vadd.f32 %v8909, %v9448
      %v9469 = vadd.f32 %v8910, %v9449
      %v9480 = vunpack.c.l.b16 %v8266
      %v9481 = vunpack.c.l.b16 %v8267
      %v9482 = vunpack.c.l.b16 %v8268
      %v9483 = vunpack.c.l.b16 %v8269
      %v9484 = vunpack.c.l.b16 %v8270
      %v9485 = vunpack.c.l.b16 %v8271
      %v9486 = vunpack.c.l.b16 %v8272
      %v9487 = vunpack.c.l.b16 %v8273
      %v9488 = vunpack.c.l.b16 %v8274
      %v9489 = vunpack.c.l.b16 %v8275
      %v9490 = vpack.c.b16 %v9481, %v9480
      %v9491 = vpack.c.b16 %v9483, %v9482
      %v9492 = vpack.c.b16 %v9485, %v9484
      %v9493 = vpack.c.b16 %v9487, %v9486
      %v9494 = vpack.c.b16 %v9489, %v9488
      %9495 = vrot.lane.b32.xlu0 %v8368, 110
      %v9496 = vpop.permute.xlu0 %9495
      %9497 = vrot.lane.b32.xlu0 %v8357, 110
      %v9498 = vpop.permute.xlu0 %9497
      %9499 = vrot.lane.b32.xlu0 %v8383, 110
      %v9500 = vpop.permute.xlu0 %9499
      %9501 = vrot.lane.b32.xlu0 %v8371, 110
      %v9502 = vpop.permute.xlu0 %9501
      %9503 = vrot.lane.b32.xlu0 %v8358, 110
      %v9504 = vpop.permute.xlu0 %9503
      %9505 = vrot.lane.b32.xlu0 %v8385, 110
      %v9506 = vpop.permute.xlu0 %9505
      %9507 = vrot.lane.b32.xlu0 %v8374, 110
      %v9508 = vpop.permute.xlu0 %9507
      %9509 = vrot.lane.b32.xlu0 %v8359, 110
      %v9510 = vpop.permute.xlu0 %9509
      %9511 = vrot.lane.b32.xlu0 %v8387, 110
      %v9512 = vpop.permute.xlu0 %9511
      %9513 = vrot.lane.b32.xlu0 %v8377, 110
      %v9514 = vpop.permute.xlu0 %9513
      %9515 = vrot.lane.b32.xlu0 %v8360, 110
      %v9516 = vpop.permute.xlu0 %9515
      %9517 = vrot.lane.b32.xlu0 %v8389, 110
      %v9518 = vpop.permute.xlu0 %9517
      %9519 = vrot.lane.b32.xlu0 %v8380, 110
      %v9520 = vpop.permute.xlu0 %9519
      %9521 = vrot.lane.b32.xlu0 %v8361, 110
      %v9522 = vpop.permute.xlu0 %9521
      %9523 = vrot.lane.b32.xlu0 %v8391, 110
      %v9524 = vpop.permute.xlu0 %9523
      %v9525 = vsel %vm936, %v9496, %v9498
      %v9526 = vsel %vm936, %v9498, %v9500
      %v9527 = vsel %vm936, %v9502, %v9504
      %v9528 = vsel %vm936, %v9504, %v9506
      %v9529 = vsel %vm936, %v9508, %v9510
      %v9530 = vsel %vm936, %v9510, %v9512
      %v9531 = vsel %vm936, %v9514, %v9516
      %v9532 = vsel %vm936, %v9516, %v9518
      %v9533 = vsel %vm936, %v9520, %v9522
      %v9534 = vsel %vm936, %v9522, %v9524
      %v9546 = vsel %vm2706, %v9490, 0
      %v9549 = vsel %vm2706, %v9491, 0
      %v9552 = vsel %vm2706, %v9492, 0
      %v9555 = vsel %vm2706, %v9493, 0
      %v9558 = vsel %vm2706, %v9494, 0
      %9560 = vmatprep.subr.bf16.mxu0 %v9526
      %9561 = vmatpush1.bf16.msra.mxu0 %v9525
      %9562 = vmatprep.subr.bf16.mxu0 %v9528
      %9563 = vmatpush1.bf16.msra.mxu0 %v9527
      %9564 = vmatprep.subr.bf16.mxu0 %v9530
      %9565 = vmatpush1.bf16.msra.mxu0 %v9529
      %9566 = vmatprep.subr.bf16.mxu0 %v9532
      %9567 = vmatpush1.bf16.msra.mxu0 %v9531
      %9568 = vmatprep.subr.bf16.mxu0 %v9534
      %9569 = vmatpush1.bf16.msra.mxu0 %v9533
      %9570 = vmatprep.subr.bf16.mxu0 0
      %9571 = vmatpush1.bf16.msra.mxu0 0
      %9572 = vmatprep.subr.bf16.mxu0 0
      %9573 = vmatpush1.bf16.msra.mxu0 0
      %9574 = vmatprep.subr.bf16.mxu0 0
      %9575 = vmatpush1.bf16.msra.mxu0 0
      %9576 = vmatprep.subr.bf16.mxu0 0
      %9577 = vmatpush1.bf16.msra.mxu0 0
      %9578 = vmatprep.subr.bf16.mxu0 0
      %9579 = vmatpush1.bf16.msra.mxu0 0
      %9580 = vmatprep.subr.bf16.mxu0 0
      %9581 = vmatpush1.bf16.msra.mxu0 0
      %9582 = vmatprep.subr.bf16.mxu0 0
      %9583 = vmatpush1.bf16.msra.mxu0 0
      %9584 = vmatprep.subr.bf16.mxu0 0
      %9585 = vmatpush1.bf16.msra.mxu0 0
      %9586 = vmatprep.subr.bf16.mxu0 0
      %9587 = vmatpush1.bf16.msra.mxu0 0
      %9588 = vmatprep.subr.bf16.mxu0 0
      %9589 = vmatpush1.bf16.msra.mxu0 0
      %9590 = vmatprep.subr.bf16.mxu0 0
      %9591 = vmatpush1.bf16.msra.mxu0 0
      %9592 = vmatprep.mubr.bf16.mxu0 0
      %9593 = vmatmul.mubr.bf16.gmra.mrb[0].mxu0 %v9546
      %v9594 = vpop.f32.mrb[0].mxu0
      %v9595 = vadd.f32 0.0, %v9594
      %v9596 = vpop.f32.mrb[0].mxu0
      %v9597 = vadd.f32 0.0, %v9596
      %v9598 = vpop.f32.mrb[0].mxu0
      %v9599 = vadd.f32 0.0, %v9598
      %v9600 = vpop.f32.mrb[0].mxu0
      %v9601 = vadd.f32 0.0, %v9600
      %9602 = vmatprep.mubr.bf16.mxu0 0
      %9603 = vmatmul.mubr.bf16.gmra.mrb[0].mxu0 %v9549
      %v9604 = vpop.f32.mrb[0].mxu0
      %v9605 = vadd.f32 0.0, %v9604
      %v9606 = vpop.f32.mrb[0].mxu0
      %v9607 = vadd.f32 0.0, %v9606
      %v9608 = vpop.f32.mrb[0].mxu0
      %v9609 = vadd.f32 0.0, %v9608
      %v9610 = vpop.f32.mrb[0].mxu0
      %v9611 = vadd.f32 0.0, %v9610
      %9612 = vmatprep.mubr.bf16.mxu0 0
      %9613 = vmatmul.mubr.bf16.gmra.mrb[0].mxu0 %v9552
      %v9614 = vpop.f32.mrb[0].mxu0
      %v9615 = vadd.f32 0.0, %v9614
      %v9616 = vpop.f32.mrb[0].mxu0
      %v9617 = vadd.f32 0.0, %v9616
      %v9618 = vpop.f32.mrb[0].mxu0
      %v9619 = vadd.f32 0.0, %v9618
      %v9620 = vpop.f32.mrb[0].mxu0
      %v9621 = vadd.f32 0.0, %v9620
      %9622 = vmatprep.mubr.bf16.mxu0 0
      %9623 = vmatmul.mubr.bf16.gmra.mrb[0].mxu0 %v9555
      %v9624 = vpop.f32.mrb[0].mxu0
      %v9625 = vadd.f32 0.0, %v9624
      %v9626 = vpop.f32.mrb[0].mxu0
      %v9627 = vadd.f32 0.0, %v9626
      %v9628 = vpop.f32.mrb[0].mxu0
      %v9629 = vadd.f32 0.0, %v9628
      %v9630 = vpop.f32.mrb[0].mxu0
      %v9631 = vadd.f32 0.0, %v9630
      %9632 = vmatprep.mubr.bf16.mxu0 0
      %9633 = vmatmul.mubr.bf16.gmra.mrb[0].mxu0 %v9558
      %v9634 = vpop.f32.mrb[0].mxu0
      %v9635 = vadd.f32 0.0, %v9634
      %v9636 = vpop.f32.mrb[0].mxu0
      %v9637 = vadd.f32 0.0, %v9636
      %v9638 = vpop.f32.mrb[0].mxu0
      %v9639 = vadd.f32 0.0, %v9638
      %v9640 = vpop.f32.mrb[0].mxu0
      %v9641 = vadd.f32 0.0, %v9640
      %9642 = vdwg.mxu0
      %v9653 = vunpack.c.l.b16 %v8236
      %v9654 = vunpack.c.l.b16 %v8237
      %v9655 = vunpack.c.l.b16 %v8238
      %v9656 = vunpack.c.l.b16 %v8239
      %v9657 = vunpack.c.l.b16 %v8240
      %v9658 = vunpack.c.l.b16 %v8241
      %v9659 = vunpack.c.l.b16 %v8242
      %v9660 = vunpack.c.l.b16 %v8243
      %v9661 = vunpack.c.l.b16 %v8244
      %v9662 = vunpack.c.l.b16 %v8245
      %v9663 = vpack.c.b16 %v9654, %v9653
      %v9664 = vpack.c.b16 %v9656, %v9655
      %v9665 = vpack.c.b16 %v9658, %v9657
      %v9666 = vpack.c.b16 %v9660, %v9659
      %v9667 = vpack.c.b16 %v9662, %v9661
      %9668 = vrot.lane.b32.xlu0 %v8368, 126
      %v9669 = vpop.permute.xlu0 %9668
      %9670 = vrot.lane.b32.xlu0 %v8357, 126
      %v9671 = vpop.permute.xlu0 %9670
      %9672 = vrot.lane.b32.xlu0 %v8383, 126
      %v9673 = vpop.permute.xlu0 %9672
      %9674 = vrot.lane.b32.xlu0 %v8371, 126
      %v9675 = vpop.permute.xlu0 %9674
      %9676 = vrot.lane.b32.xlu0 %v8358, 126
      %v9677 = vpop.permute.xlu0 %9676
      %9678 = vrot.lane.b32.xlu0 %v8385, 126
      %v9679 = vpop.permute.xlu0 %9678
      %9680 = vrot.lane.b32.xlu0 %v8374, 126
      %v9681 = vpop.permute.xlu0 %9680
      %9682 = vrot.lane.b32.xlu0 %v8359, 126
      %v9683 = vpop.permute.xlu0 %9682
      %9684 = vrot.lane.b32.xlu0 %v8387, 126
      %v9685 = vpop.permute.xlu0 %9684
      %9686 = vrot.lane.b32.xlu0 %v8377, 126
      %v9687 = vpop.permute.xlu0 %9686
      %9688 = vrot.lane.b32.xlu0 %v8360, 126
      %v9689 = vpop.permute.xlu0 %9688
      %9690 = vrot.lane.b32.xlu0 %v8389, 126
      %v9691 = vpop.permute.xlu0 %9690
      %9692 = vrot.lane.b32.xlu0 %v8380, 126
      %v9693 = vpop.permute.xlu0 %9692
      %9694 = vrot.lane.b32.xlu0 %v8361, 126
      %v9695 = vpop.permute.xlu0 %9694
      %9696 = vrot.lane.b32.xlu0 %v8391, 126
      %v9697 = vpop.permute.xlu0 %9696
      %v9698 = vsel %vm1002, %v9669, %v9671
      %v9699 = vsel %vm1002, %v9671, %v9673
      %v9700 = vsel %vm1002, %v9675, %v9677
      %v9701 = vsel %vm1002, %v9677, %v9679
      %v9702 = vsel %vm1002, %v9681, %v9683
      %v9703 = vsel %vm1002, %v9683, %v9685
      %v9704 = vsel %vm1002, %v9687, %v9689
      %v9705 = vsel %vm1002, %v9689, %v9691
      %v9706 = vsel %vm1002, %v9693, %v9695
      %v9707 = vsel %vm1002, %v9695, %v9697
      %v9719 = vsel %vm2706, %v9663, 0
      %v9722 = vsel %vm2706, %v9664, 0
      %v9725 = vsel %vm2706, %v9665, 0
      %v9728 = vsel %vm2706, %v9666, 0
      %v9731 = vsel %vm2706, %v9667, 0
      %9733 = vmatprep.subr.bf16.mxu0 %v9699
      %9734 = vmatpush1.bf16.msra.mxu0 %v9698
      %9735 = vmatprep.subr.bf16.mxu0 %v9701
      %9736 = vmatpush1.bf16.msra.mxu0 %v9700
      %9737 = vmatprep.subr.bf16.mxu0 %v9703
      %9738 = vmatpush1.bf16.msra.mxu0 %v9702
      %9739 = vmatprep.subr.bf16.mxu0 %v9705
      %9740 = vmatpush1.bf16.msra.mxu0 %v9704
      %9741 = vmatprep.subr.bf16.mxu0 %v9707
      %9742 = vmatpush1.bf16.msra.mxu0 %v9706
      %9743 = vmatprep.subr.bf16.mxu0 0
      %9744 = vmatpush1.bf16.msra.mxu0 0
      %9745 = vmatprep.subr.bf16.mxu0 0
      %9746 = vmatpush1.bf16.msra.mxu0 0
      %9747 = vmatprep.subr.bf16.mxu0 0
      %9748 = vmatpush1.bf16.msra.mxu0 0
      %9749 = vmatprep.subr.bf16.mxu0 0
      %9750 = vmatpush1.bf16.msra.mxu0 0
      %9751 = vmatprep.subr.bf16.mxu0 0
      %9752 = vmatpush1.bf16.msra.mxu0 0
      %9753 = vmatprep.subr.bf16.mxu0 0
      %9754 = vmatpush1.bf16.msra.mxu0 0
      %9755 = vmatprep.subr.bf16.mxu0 0
      %9756 = vmatpush1.bf16.msra.mxu0 0
      %9757 = vmatprep.subr.bf16.mxu0 0
      %9758 = vmatpush1.bf16.msra.mxu0 0
      %9759 = vmatprep.subr.bf16.mxu0 0
      %9760 = vmatpush1.bf16.msra.mxu0 0
      %9761 = vmatprep.subr.bf16.mxu0 0
      %9762 = vmatpush1.bf16.msra.mxu0 0
      %9763 = vmatprep.subr.bf16.mxu0 0
      %9764 = vmatpush1.bf16.msra.mxu0 0
      %9765 = vmatprep.mubr.bf16.mxu0 0
      %9766 = vmatmul.mubr.bf16.gmra.mrb[0].mxu0 %v9719
      %v9767 = vpop.f32.mrb[0].mxu0
      %v9768 = vadd.f32 %v9595, %v9767
      %v9769 = vpop.f32.mrb[0].mxu0
      %v9770 = vadd.f32 %v9597, %v9769
      %v9771 = vpop.f32.mrb[0].mxu0
      %v9772 = vadd.f32 %v9599, %v9771
      %v9773 = vpop.f32.mrb[0].mxu0
      %v9774 = vadd.f32 %v9601, %v9773
      %9775 = vmatprep.mubr.bf16.mxu0 0
      %9776 = vmatmul.mubr.bf16.gmra.mrb[0].mxu0 %v9722
      %v9777 = vpop.f32.mrb[0].mxu0
      %v9778 = vadd.f32 %v9605, %v9777
      %v9779 = vpop.f32.mrb[0].mxu0
      %v9780 = vadd.f32 %v9607, %v9779
      %v9781 = vpop.f32.mrb[0].mxu0
      %v9782 = vadd.f32 %v9609, %v9781
      %v9783 = vpop.f32.mrb[0].mxu0
      %v9784 = vadd.f32 %v9611, %v9783
      %9785 = vmatprep.mubr.bf16.mxu0 0
      %9786 = vmatmul.mubr.bf16.gmra.mrb[0].mxu0 %v9725
      %v9787 = vpop.f32.mrb[0].mxu0
      %v9788 = vadd.f32 %v9615, %v9787
      %v9789 = vpop.f32.mrb[0].mxu0
      %v9790 = vadd.f32 %v9617, %v9789
      %v9791 = vpop.f32.mrb[0].mxu0
      %v9792 = vadd.f32 %v9619, %v9791
      %v9793 = vpop.f32.mrb[0].mxu0
      %v9794 = vadd.f32 %v9621, %v9793
      %9795 = vmatprep.mubr.bf16.mxu0 0
      %9796 = vmatmul.mubr.bf16.gmra.mrb[0].mxu0 %v9728
      %v9797 = vpop.f32.mrb[0].mxu0
      %v9798 = vadd.f32 %v9625, %v9797
      %v9799 = vpop.f32.mrb[0].mxu0
      %v9800 = vadd.f32 %v9627, %v9799
      %v9801 = vpop.f32.mrb[0].mxu0
      %v9802 = vadd.f32 %v9629, %v9801
      %v9803 = vpop.f32.mrb[0].mxu0
      %v9804 = vadd.f32 %v9631, %v9803
      %9805 = vmatprep.mubr.bf16.mxu0 0
      %9806 = vmatmul.mubr.bf16.gmra.mrb[0].mxu0 %v9731
      %v9807 = vpop.f32.mrb[0].mxu0
      %v9808 = vadd.f32 %v9635, %v9807
      %v9809 = vpop.f32.mrb[0].mxu0
      %v9810 = vadd.f32 %v9637, %v9809
      %v9811 = vpop.f32.mrb[0].mxu0
      %v9812 = vadd.f32 %v9639, %v9811
      %v9813 = vpop.f32.mrb[0].mxu0
      %v9814 = vadd.f32 %v9641, %v9813
      %9815 = vdwg.mxu0
      %v9826 = vunpack.c.l.b16 %v8296
      %v9827 = vunpack.c.l.b16 %v8297
      %v9828 = vunpack.c.l.b16 %v8298
      %v9829 = vunpack.c.l.b16 %v8299
      %v9830 = vunpack.c.l.b16 %v8300
      %v9831 = vunpack.c.l.b16 %v8301
      %v9832 = vunpack.c.l.b16 %v8302
      %v9833 = vunpack.c.l.b16 %v8303
      %v9834 = vunpack.c.l.b16 %v8304
      %v9835 = vunpack.c.l.b16 %v8305
      %v9836 = vpack.c.b16 %v9827, %v9826
      %v9837 = vpack.c.b16 %v9829, %v9828
      %v9838 = vpack.c.b16 %v9831, %v9830
      %v9839 = vpack.c.b16 %v9833, %v9832
      %v9840 = vpack.c.b16 %v9835, %v9834
      %9841 = vrot.lane.b32.xlu0 %v8368, 94
      %v9842 = vpop.permute.xlu0 %9841
      %9843 = vrot.lane.b32.xlu0 %v8357, 94
      %v9844 = vpop.permute.xlu0 %9843
      %9845 = vrot.lane.b32.xlu0 %v8383, 94
      %v9846 = vpop.permute.xlu0 %9845
      %9847 = vrot.lane.b32.xlu0 %v8371, 94
      %v9848 = vpop.permute.xlu0 %9847
      %9849 = vrot.lane.b32.xlu0 %v8358, 94
      %v9850 = vpop.permute.xlu0 %9849
      %9851 = vrot.lane.b32.xlu0 %v8385, 94
      %v9852 = vpop.permute.xlu0 %9851
      %9853 = vrot.lane.b32.xlu0 %v8374, 94
      %v9854 = vpop.permute.xlu0 %9853
      %9855 = vrot.lane.b32.xlu0 %v8359, 94
      %v9856 = vpop.permute.xlu0 %9855
      %9857 = vrot.lane.b32.xlu0 %v8387, 94
      %v9858 = vpop.permute.xlu0 %9857
      %9859 = vrot.lane.b32.xlu0 %v8377, 94
      %v9860 = vpop.permute.xlu0 %9859
      %9861 = vrot.lane.b32.xlu0 %v8360, 94
      %v9862 = vpop.permute.xlu0 %9861
      %9863 = vrot.lane.b32.xlu0 %v8389, 94
      %v9864 = vpop.permute.xlu0 %9863
      %9865 = vrot.lane.b32.xlu0 %v8380, 94
      %v9866 = vpop.permute.xlu0 %9865
      %9867 = vrot.lane.b32.xlu0 %v8361, 94
      %v9868 = vpop.permute.xlu0 %9867
      %9869 = vrot.lane.b32.xlu0 %v8391, 94
      %v9870 = vpop.permute.xlu0 %9869
      %v9871 = vsel %vm1068, %v9842, %v9844
      %v9872 = vsel %vm1068, %v9844, %v9846
      %v9873 = vsel %vm1068, %v9848, %v9850
      %v9874 = vsel %vm1068, %v9850, %v9852
      %v9875 = vsel %vm1068, %v9854, %v9856
      %v9876 = vsel %vm1068, %v9856, %v9858
      %v9877 = vsel %vm1068, %v9860, %v9862
      %v9878 = vsel %vm1068, %v9862, %v9864
      %v9879 = vsel %vm1068, %v9866, %v9868
      %v9880 = vsel %vm1068, %v9868, %v9870
      %v9892 = vsel %vm2706, %v9836, 0
      %v9895 = vsel %vm2706, %v9837, 0
      %v9898 = vsel %vm2706, %v9838, 0
      %v9901 = vsel %vm2706, %v9839, 0
      %v9904 = vsel %vm2706, %v9840, 0
      %9906 = vmatprep.subr.bf16.mxu0 %v9872
      %9907 = vmatpush1.bf16.msra.mxu0 %v9871
      %9908 = vmatprep.subr.bf16.mxu0 %v9874
      %9909 = vmatpush1.bf16.msra.mxu0 %v9873
      %9910 = vmatprep.subr.bf16.mxu0 %v9876
      %9911 = vmatpush1.bf16.msra.mxu0 %v9875
      %9912 = vmatprep.subr.bf16.mxu0 %v9878
      %9913 = vmatpush1.bf16.msra.mxu0 %v9877
      %9914 = vmatprep.subr.bf16.mxu0 %v9880
      %9915 = vmatpush1.bf16.msra.mxu0 %v9879
      %9916 = vmatprep.subr.bf16.mxu0 0
      %9917 = vmatpush1.bf16.msra.mxu0 0
      %9918 = vmatprep.subr.bf16.mxu0 0
      %9919 = vmatpush1.bf16.msra.mxu0 0
      %9920 = vmatprep.subr.bf16.mxu0 0
      %9921 = vmatpush1.bf16.msra.mxu0 0
      %9922 = vmatprep.subr.bf16.mxu0 0
      %9923 = vmatpush1.bf16.msra.mxu0 0
      %9924 = vmatprep.subr.bf16.mxu0 0
      %9925 = vmatpush1.bf16.msra.mxu0 0
      %9926 = vmatprep.subr.bf16.mxu0 0
      %9927 = vmatpush1.bf16.msra.mxu0 0
      %9928 = vmatprep.subr.bf16.mxu0 0
      %9929 = vmatpush1.bf16.msra.mxu0 0
      %9930 = vmatprep.subr.bf16.mxu0 0
      %9931 = vmatpush1.bf16.msra.mxu0 0
      %9932 = vmatprep.subr.bf16.mxu0 0
      %9933 = vmatpush1.bf16.msra.mxu0 0
      %9934 = vmatprep.subr.bf16.mxu0 0
      %9935 = vmatpush1.bf16.msra.mxu0 0
      %9936 = vmatprep.subr.bf16.mxu0 0
      %9937 = vmatpush1.bf16.msra.mxu0 0
      %9938 = vmatprep.mubr.bf16.mxu0 0
      %9939 = vmatmul.mubr.bf16.gmra.mrb[0].mxu0 %v9892
      %v9940 = vpop.f32.mrb[0].mxu0
      %v9941 = vadd.f32 0.0, %v9940
      %v9942 = vpop.f32.mrb[0].mxu0
      %v9943 = vadd.f32 0.0, %v9942
      %v9944 = vpop.f32.mrb[0].mxu0
      %v9945 = vadd.f32 0.0, %v9944
      %v9946 = vpop.f32.mrb[0].mxu0
      %v9947 = vadd.f32 0.0, %v9946
      %9948 = vmatprep.mubr.bf16.mxu0 0
      %9949 = vmatmul.mubr.bf16.gmra.mrb[0].mxu0 %v9895
      %v9950 = vpop.f32.mrb[0].mxu0
      %v9951 = vadd.f32 0.0, %v9950
      %v9952 = vpop.f32.mrb[0].mxu0
      %v9953 = vadd.f32 0.0, %v9952
      %v9954 = vpop.f32.mrb[0].mxu0
      %v9955 = vadd.f32 0.0, %v9954
      %v9956 = vpop.f32.mrb[0].mxu0
      %v9957 = vadd.f32 0.0, %v9956
      %9958 = vmatprep.mubr.bf16.mxu0 0
      %9959 = vmatmul.mubr.bf16.gmra.mrb[0].mxu0 %v9898
      %v9960 = vpop.f32.mrb[0].mxu0
      %v9961 = vadd.f32 0.0, %v9960
      %v9962 = vpop.f32.mrb[0].mxu0
      %v9963 = vadd.f32 0.0, %v9962
      %v9964 = vpop.f32.mrb[0].mxu0
      %v9965 = vadd.f32 0.0, %v9964
      %v9966 = vpop.f32.mrb[0].mxu0
      %v9967 = vadd.f32 0.0, %v9966
      %9968 = vmatprep.mubr.bf16.mxu0 0
      %9969 = vmatmul.mubr.bf16.gmra.mrb[0].mxu0 %v9901
      %v9970 = vpop.f32.mrb[0].mxu0
      %v9971 = vadd.f32 0.0, %v9970
      %v9972 = vpop.f32.mrb[0].mxu0
      %v9973 = vadd.f32 0.0, %v9972
      %v9974 = vpop.f32.mrb[0].mxu0
      %v9975 = vadd.f32 0.0, %v9974
      %v9976 = vpop.f32.mrb[0].mxu0
      %v9977 = vadd.f32 0.0, %v9976
      %9978 = vmatprep.mubr.bf16.mxu0 0
      %9979 = vmatmul.mubr.bf16.gmra.mrb[0].mxu0 %v9904
      %v9980 = vpop.f32.mrb[0].mxu0
      %v9981 = vadd.f32 0.0, %v9980
      %v9982 = vpop.f32.mrb[0].mxu0
      %v9983 = vadd.f32 0.0, %v9982
      %v9984 = vpop.f32.mrb[0].mxu0
      %v9985 = vadd.f32 0.0, %v9984
      %v9986 = vpop.f32.mrb[0].mxu0
      %v9987 = vadd.f32 0.0, %v9986
      %9988 = vdwg.mxu0
      %v9989 = vadd.f32 %v9768, %v9941
      %v9990 = vadd.f32 %v9770, %v9943
      %v9991 = vadd.f32 %v9772, %v9945
      %v9992 = vadd.f32 %v9774, %v9947
      %v9993 = vadd.f32 %v9778, %v9951
      %v9994 = vadd.f32 %v9780, %v9953
      %v9995 = vadd.f32 %v9782, %v9955
      %v9996 = vadd.f32 %v9784, %v9957
      %v9997 = vadd.f32 %v9788, %v9961
      %v9998 = vadd.f32 %v9790, %v9963
      %v9999 = vadd.f32 %v9792, %v9965
      %v10000 = vadd.f32 %v9794, %v9967
      %v10001 = vadd.f32 %v9798, %v9971
      %v10002 = vadd.f32 %v9800, %v9973
      %v10003 = vadd.f32 %v9802, %v9975
      %v10004 = vadd.f32 %v9804, %v9977
      %v10005 = vadd.f32 %v9808, %v9981
      %v10006 = vadd.f32 %v9810, %v9983
      %v10007 = vadd.f32 %v9812, %v9985
      %v10008 = vadd.f32 %v9814, %v9987
      %v10009 = vmul.f32 %v9989, %v472
      %v10010 = vmul.f32 %v9990, %v473
      %v10011 = vmul.f32 %v9991, %v472
      %v10012 = vmul.f32 %v9992, %v473
      %v10013 = vmul.f32 %v9993, %v472
      %v10014 = vmul.f32 %v9994, %v473
      %v10015 = vmul.f32 %v9995, %v472
      %v10016 = vmul.f32 %v9996, %v473
      %v10017 = vmul.f32 %v9997, %v472
      %v10018 = vmul.f32 %v9998, %v473
      %v10019 = vmul.f32 %v9999, %v472
      %v10020 = vmul.f32 %v10000, %v473
      %v10021 = vmul.f32 %v10001, %v472
      %v10022 = vmul.f32 %v10002, %v473
      %v10023 = vmul.f32 %v10003, %v472
      %v10024 = vmul.f32 %v10004, %v473
      %v10025 = vmul.f32 %v10005, %v472
      %v10026 = vmul.f32 %v10006, %v473
      %v10027 = vmul.f32 %v10007, %v472
      %v10028 = vmul.f32 %v10008, %v473
      %v10029 = vadd.f32 %v9450, %v10009
      %v10030 = vadd.f32 %v9451, %v10010
      %v10031 = vadd.f32 %v9452, %v10011
      %v10032 = vadd.f32 %v9453, %v10012
      %v10033 = vadd.f32 %v9454, %v10013
      %v10034 = vadd.f32 %v9455, %v10014
      %v10035 = vadd.f32 %v9456, %v10015
      %v10036 = vadd.f32 %v9457, %v10016
      %v10037 = vadd.f32 %v9458, %v10017
      %v10038 = vadd.f32 %v9459, %v10018
      %v10039 = vadd.f32 %v9460, %v10019
      %v10040 = vadd.f32 %v9461, %v10020
      %v10041 = vadd.f32 %v9462, %v10021
      %v10042 = vadd.f32 %v9463, %v10022
      %v10043 = vadd.f32 %v9464, %v10023
      %v10044 = vadd.f32 %v9465, %v10024
      %v10045 = vadd.f32 %v9466, %v10025
      %v10046 = vadd.f32 %v9467, %v10026
      %v10047 = vadd.f32 %v9468, %v10027
      %v10048 = vadd.f32 %v9469, %v10028
      %10050 = vset.pattern.permute.xlu0 0
      %10051 = vperm.xlu0 %10050, %v8307
      %v10052 = vpop.permute.xlu0 %10051
      %10055 = vset.pattern.permute.xlu0 0
      %10056 = vperm.xlu0 %10055, %v8308
      %v10057 = vpop.permute.xlu0 %10056
      %10060 = vset.pattern.permute.xlu0 0
      %10061 = vperm.xlu0 %10060, %v8309
      %v10062 = vpop.permute.xlu0 %10061
      %10065 = vset.pattern.permute.xlu0 0
      %10066 = vperm.xlu0 %10065, %v8310
      %v10067 = vpop.permute.xlu0 %10066
      %10070 = vset.pattern.permute.xlu0 0
      %10071 = vperm.xlu0 %10070, %v8311
      %v10072 = vpop.permute.xlu0 %10071
      %10075 = vset.pattern.permute.xlu0 0
      %10076 = vperm.xlu0 %10075, %v8312
      %v10077 = vpop.permute.xlu0 %10076
      %10080 = vset.pattern.permute.xlu0 0
      %10081 = vperm.xlu0 %10080, %v8313
      %v10082 = vpop.permute.xlu0 %10081
      %10085 = vset.pattern.permute.xlu0 0
      %10086 = vperm.xlu0 %10085, %v8314
      %v10087 = vpop.permute.xlu0 %10086
      %10090 = vset.pattern.permute.xlu0 0
      %10091 = vperm.xlu0 %10090, %v8315
      %v10092 = vpop.permute.xlu0 %10091
      %10095 = vset.pattern.permute.xlu0 0
      %10096 = vperm.xlu0 %10095, %v8316
      %v10097 = vpop.permute.xlu0 %10096
      %v10099 = vadd.f32 %v10029, %v10052
      %v10100 = vadd.f32 %v10030, %v10052
      %v10101 = vadd.f32 %v10031, %v10057
      %v10102 = vadd.f32 %v10032, %v10057
      %v10103 = vadd.f32 %v10033, %v10062
      %v10104 = vadd.f32 %v10034, %v10062
      %v10105 = vadd.f32 %v10035, %v10067
      %v10106 = vadd.f32 %v10036, %v10067
      %v10107 = vadd.f32 %v10037, %v10072
      %v10108 = vadd.f32 %v10038, %v10072
      %v10109 = vadd.f32 %v10039, %v10077
      %v10110 = vadd.f32 %v10040, %v10077
      %v10111 = vadd.f32 %v10041, %v10082
      %v10112 = vadd.f32 %v10042, %v10082
      %v10113 = vadd.f32 %v10043, %v10087
      %v10114 = vadd.f32 %v10044, %v10087
      %v10115 = vadd.f32 %v10045, %v10092
      %v10116 = vadd.f32 %v10046, %v10092
      %v10117 = vadd.f32 %v10047, %v10097
      %v10118 = vadd.f32 %v10048, %v10097
      %v10119 = vadd.f32 %v6271, %v10099
      %v10120 = vadd.f32 %v6272, %v10100
      %v10121 = vadd.f32 %v6273, %v10101
      %v10122 = vadd.f32 %v6274, %v10102
      %v10123 = vadd.f32 %v6275, %v10103
      %v10124 = vadd.f32 %v6276, %v10104
      %v10125 = vadd.f32 %v6277, %v10105
      %v10126 = vadd.f32 %v6278, %v10106
      %v10127 = vadd.f32 %v6279, %v10107
      %v10128 = vadd.f32 %v6280, %v10108
      %v10129 = vadd.f32 %v6281, %v10109
      %v10130 = vadd.f32 %v6282, %v10110
      %v10131 = vadd.f32 %v6283, %v10111
      %v10132 = vadd.f32 %v6284, %v10112
      %v10133 = vadd.f32 %v6285, %v10113
      %v10134 = vadd.f32 %v6286, %v10114
      %v10135 = vadd.f32 %v6287, %v10115
      %v10136 = vadd.f32 %v6288, %v10116
      %v10137 = vadd.f32 %v6289, %v10117
      %v10138 = vadd.f32 %v6290, %v10118
      %v10139 = vld [vmem:[%s10] sm:$0xf]
      %v10140 = vld [vmem:[%s10 + $0x4] sm:$0x3]
      %v10141 = vld [vmem:[%s10 + $0x8] sm:$0xf]
      %v10142 = vld [vmem:[%s10 + $0xc] sm:$0x3]
      %v10143 = vld [vmem:[%s10 + $0x10] sm:$0xf]
      %v10144 = vld [vmem:[%s10 + $0x14] sm:$0x3]
      %v10145 = vld [vmem:[%s10 + $0x18] sm:$0xf]
      %v10146 = vld [vmem:[%s10 + $0x1c] sm:$0x3]
      %v10147 = vld [vmem:[%s10 + $0x20] sm:$0xf]
      %v10148 = vld [vmem:[%s10 + $0x24] sm:$0x3]
      %v10149 = vld [vmem:[%s10 + $0x28] sm:$0xf]
      %v10150 = vld [vmem:[%s10 + $0x2c] sm:$0x3]
      %v10151 = vld [vmem:[%s10 + $0x30] sm:$0xf]
      %v10152 = vld [vmem:[%s10 + $0x34] sm:$0x3]
      %v10153 = vld [vmem:[%s10 + $0x38] sm:$0xf]
      %v10154 = vld [vmem:[%s10 + $0x3c] sm:$0x3]
      %v10155 = vld [vmem:[%s10 + $0x40] sm:$0xf]
      %v10156 = vld [vmem:[%s10 + $0x44] sm:$0x3]
      %v10157 = vld [vmem:[%s11] sm:$0xff]
      %v10158 = vld [vmem:[%s11 + $0x8] sm:$0xf]
      %v10159 = vpack.c.bf16 %v10121, %v10119
      %v10160 = vpack.c.bf16 %v10122, %v10120
      %v10161 = vpack.c.bf16 %v10125, %v10123
      %v10162 = vpack.c.bf16 %v10126, %v10124
      %v10163 = vpack.c.bf16 %v10129, %v10127
      %v10164 = vpack.c.bf16 %v10130, %v10128
      %v10165 = vpack.c.bf16 %v10133, %v10131
      %v10166 = vpack.c.bf16 %v10134, %v10132
      %v10167 = vpack.c.bf16 %v10137, %v10135
      %v10168 = vpack.c.bf16 %v10138, %v10136
      %10179 = vrot.lane.b32.xlu0 %v10159, 17
      %v10180 = vpop.permute.xlu0 %10179
      %10181 = vrot.lane.b32.xlu0 %v10160, 17
      %v10182 = vpop.permute.xlu0 %10181
      %10183 = vrot.lane.b32.xlu0 %v10161, 17
      %v10184 = vpop.permute.xlu0 %10183
      %10185 = vrot.lane.b32.xlu0 %v10162, 17
      %v10186 = vpop.permute.xlu0 %10185
      %10187 = vrot.lane.b32.xlu0 %v10163, 17
      %v10188 = vpop.permute.xlu0 %10187
      %10189 = vrot.lane.b32.xlu0 %v10164, 17
      %v10190 = vpop.permute.xlu0 %10189
      %10191 = vrot.lane.b32.xlu0 %v10165, 17
      %v10192 = vpop.permute.xlu0 %10191
      %10193 = vrot.lane.b32.xlu0 %v10166, 17
      %v10194 = vpop.permute.xlu0 %10193
      %10195 = vrot.lane.b32.xlu0 %v10167, 17
      %v10196 = vpop.permute.xlu0 %10195
      %10197 = vrot.lane.b32.xlu0 %v10168, 17
      %v10198 = vpop.permute.xlu0 %10197
      %v10199 = vsel %vm508, %v10180, %v10182
      %v10200 = vsel %vm508, %v10184, %v10186
      %v10201 = vsel %vm508, %v10188, %v10190
      %v10202 = vsel %vm508, %v10192, %v10194
      %v10203 = vsel %vm508, %v10196, %v10198
      %v10210 = vsel %vm510, 0, %v10180
      %v10213 = vsel %vm510, 0, %v10184
      %v10216 = vsel %vm510, 0, %v10188
      %v10219 = vsel %vm510, 0, %v10192
      %v10222 = vsel %vm510, 0, %v10196
      %v10225 = vsel %vm510, %v10182, 0
      %v10227 = vsel %vm510, %v10186, 0
      %v10229 = vsel %vm510, %v10190, 0
      %v10231 = vsel %vm510, %v10194, 0
      %v10233 = vsel %vm510, %v10198, 0
      %v10236 = vunpack.c.l.b16 %v10145
      %v10237 = vunpack.c.l.b16 %v10146
      %v10238 = vpack.c.b16 %v10237, %v10236
      %10249 = vrot.lane.b32.xlu0 %v10210, 112
      %v10250 = vpop.permute.xlu0 %10249
      %10251 = vrot.lane.b32.xlu0 %v10199, 112
      %v10252 = vpop.permute.xlu0 %10251
      %10253 = vrot.lane.b32.xlu0 %v10225, 112
      %v10254 = vpop.permute.xlu0 %10253
      %10255 = vrot.lane.b32.xlu0 %v10213, 112
      %v10256 = vpop.permute.xlu0 %10255
      %10257 = vrot.lane.b32.xlu0 %v10200, 112
      %v10258 = vpop.permute.xlu0 %10257
      %10259 = vrot.lane.b32.xlu0 %v10227, 112
      %v10260 = vpop.permute.xlu0 %10259
      %10261 = vrot.lane.b32.xlu0 %v10216, 112
      %v10262 = vpop.permute.xlu0 %10261
      %10263 = vrot.lane.b32.xlu0 %v10201, 112
      %v10264 = vpop.permute.xlu0 %10263
      %10265 = vrot.lane.b32.xlu0 %v10229, 112
      %v10266 = vpop.permute.xlu0 %10265
      %10267 = vrot.lane.b32.xlu0 %v10219, 112
      %v10268 = vpop.permute.xlu0 %10267
      %10269 = vrot.lane.b32.xlu0 %v10202, 112
      %v10270 = vpop.permute.xlu0 %10269
      %10271 = vrot.lane.b32.xlu0 %v10231, 112
      %v10272 = vpop.permute.xlu0 %10271
      %10273 = vrot.lane.b32.xlu0 %v10222, 112
      %v10274 = vpop.permute.xlu0 %10273
      %10275 = vrot.lane.b32.xlu0 %v10203, 112
      %v10276 = vpop.permute.xlu0 %10275
      %10277 = vrot.lane.b32.xlu0 %v10233, 112
      %v10278 = vpop.permute.xlu0 %10277
      %v10279 = vsel %vm529, %v10250, %v10252
      %v10280 = vsel %vm529, %v10252, %v10254
      %v10281 = vsel %vm529, %v10256, %v10258
      %v10282 = vsel %vm529, %v10258, %v10260
      %v10283 = vsel %vm529, %v10262, %v10264
      %v10284 = vsel %vm529, %v10264, %v10266
      %v10285 = vsel %vm529, %v10268, %v10270
      %v10286 = vsel %vm529, %v10270, %v10272
      %v10287 = vsel %vm529, %v10274, %v10276
      %v10288 = vsel %vm529, %v10276, %v10278
      %v10300 = vsel %vm2706, %v10238, 0
      %10302 = vmatprep.subr.bf16.mxu0 %v10280
      %10303 = vmatpush1.bf16.msra.mxu0 %v10279
      %10304 = vmatprep.subr.bf16.mxu0 %v10282
      %10305 = vmatpush1.bf16.msra.mxu0 %v10281
      %10306 = vmatprep.subr.bf16.mxu0 %v10284
      %10307 = vmatpush1.bf16.msra.mxu0 %v10283
      %10308 = vmatprep.subr.bf16.mxu0 %v10286
      %10309 = vmatpush1.bf16.msra.mxu0 %v10285
      %10310 = vmatprep.subr.bf16.mxu0 %v10288
      %10311 = vmatpush1.bf16.msra.mxu0 %v10287
      %10312 = vmatprep.subr.bf16.mxu0 0
      %10313 = vmatpush1.bf16.msra.mxu0 0
      %10314 = vmatprep.subr.bf16.mxu0 0
      %10315 = vmatpush1.bf16.msra.mxu0 0
      %10316 = vmatprep.subr.bf16.mxu0 0
      %10317 = vmatpush1.bf16.msra.mxu0 0
      %10318 = vmatprep.subr.bf16.mxu0 0
      %10319 = vmatpush1.bf16.msra.mxu0 0
      %10320 = vmatprep.subr.bf16.mxu0 0
      %10321 = vmatpush1.bf16.msra.mxu0 0
      %10322 = vmatprep.subr.bf16.mxu0 0
      %10323 = vmatpush1.bf16.msra.mxu0 0
      %10324 = vmatprep.subr.bf16.mxu0 0
      %10325 = vmatpush1.bf16.msra.mxu0 0
      %10326 = vmatprep.subr.bf16.mxu0 0
      %10327 = vmatpush1.bf16.msra.mxu0 0
      %10328 = vmatprep.subr.bf16.mxu0 0
      %10329 = vmatpush1.bf16.msra.mxu0 0
      %10330 = vmatprep.subr.bf16.mxu0 0
      %10331 = vmatpush1.bf16.msra.mxu0 0
      %10332 = vmatprep.subr.bf16.mxu0 0
      %10333 = vmatpush1.bf16.msra.mxu0 0
      %10334 = vmatprep.mubr.bf16.mxu0 0
      %10335 = vmatmul.mubr.bf16.gmra.mrb[0].mxu0 %v10300
      %v10336 = vpop.f32.mrb[0].mxu0
      %v10337 = vadd.f32 0.0, %v10336
      %v10338 = vpop.f32.mrb[0].mxu0
      %v10339 = vadd.f32 0.0, %v10338
      %v10340 = vpop.f32.mrb[0].mxu0
      %v10341 = vadd.f32 0.0, %v10340
      %v10342 = vpop.f32.mrb[0].mxu0
      %v10343 = vadd.f32 0.0, %v10342
      %10344 = vdwg.mxu0
      %v10347 = vunpack.c.l.b16 %v10139
      %v10348 = vunpack.c.l.b16 %v10140
      %v10349 = vpack.c.b16 %v10348, %v10347
      %v10351 = vsel %vm2706, %v10349, 0
      %10353 = vmatprep.subr.bf16.mxu0 %v10199
      %10354 = vmatpush1.bf16.msra.mxu0 %v10210
      %10355 = vmatprep.subr.bf16.mxu0 %v10200
      %10356 = vmatpush1.bf16.msra.mxu0 %v10213
      %10357 = vmatprep.subr.bf16.mxu0 %v10201
      %10358 = vmatpush1.bf16.msra.mxu0 %v10216
      %10359 = vmatprep.subr.bf16.mxu0 %v10202
      %10360 = vmatpush1.bf16.msra.mxu0 %v10219
      %10361 = vmatprep.subr.bf16.mxu0 %v10203
      %10362 = vmatpush1.bf16.msra.mxu0 %v10222
      %10363 = vmatprep.subr.bf16.mxu0 0
      %10364 = vmatpush1.bf16.msra.mxu0 0
      %10365 = vmatprep.subr.bf16.mxu0 0
      %10366 = vmatpush1.bf16.msra.mxu0 0
      %10367 = vmatprep.subr.bf16.mxu0 0
      %10368 = vmatpush1.bf16.msra.mxu0 0
      %10369 = vmatprep.subr.bf16.mxu0 0
      %10370 = vmatpush1.bf16.msra.mxu0 0
      %10371 = vmatprep.subr.bf16.mxu0 0
      %10372 = vmatpush1.bf16.msra.mxu0 0
      %10373 = vmatprep.subr.bf16.mxu0 0
      %10374 = vmatpush1.bf16.msra.mxu0 0
      %10375 = vmatprep.subr.bf16.mxu0 0
      %10376 = vmatpush1.bf16.msra.mxu0 0
      %10377 = vmatprep.subr.bf16.mxu0 0
      %10378 = vmatpush1.bf16.msra.mxu0 0
      %10379 = vmatprep.subr.bf16.mxu0 0
      %10380 = vmatpush1.bf16.msra.mxu0 0
      %10381 = vmatprep.subr.bf16.mxu0 0
      %10382 = vmatpush1.bf16.msra.mxu0 0
      %10383 = vmatprep.subr.bf16.mxu0 0
      %10384 = vmatpush1.bf16.msra.mxu0 0
      %10385 = vmatprep.mubr.bf16.mxu0 0
      %10386 = vmatmul.mubr.bf16.gmra.mrb[0].mxu0 %v10351
      %v10387 = vpop.f32.mrb[0].mxu0
      %v10388 = vadd.f32 %v10337, %v10387
      %v10389 = vpop.f32.mrb[0].mxu0
      %v10390 = vadd.f32 %v10339, %v10389
      %v10391 = vpop.f32.mrb[0].mxu0
      %v10392 = vadd.f32 %v10341, %v10391
      %v10393 = vpop.f32.mrb[0].mxu0
      %v10394 = vadd.f32 %v10343, %v10393
      %10395 = vdwg.mxu0
      %v10398 = vunpack.c.l.b16 %v10151
      %v10399 = vunpack.c.l.b16 %v10152
      %v10400 = vpack.c.b16 %v10399, %v10398
      %10401 = vrot.lane.b32.xlu0 %v10210, 96
      %v10402 = vpop.permute.xlu0 %10401
      %10403 = vrot.lane.b32.xlu0 %v10199, 96
      %v10404 = vpop.permute.xlu0 %10403
      %10405 = vrot.lane.b32.xlu0 %v10225, 96
      %v10406 = vpop.permute.xlu0 %10405
      %10407 = vrot.lane.b32.xlu0 %v10213, 96
      %v10408 = vpop.permute.xlu0 %10407
      %10409 = vrot.lane.b32.xlu0 %v10200, 96
      %v10410 = vpop.permute.xlu0 %10409
      %10411 = vrot.lane.b32.xlu0 %v10227, 96
      %v10412 = vpop.permute.xlu0 %10411
      %10413 = vrot.lane.b32.xlu0 %v10216, 96
      %v10414 = vpop.permute.xlu0 %10413
      %10415 = vrot.lane.b32.xlu0 %v10201, 96
      %v10416 = vpop.permute.xlu0 %10415
      %10417 = vrot.lane.b32.xlu0 %v10229, 96
      %v10418 = vpop.permute.xlu0 %10417
      %10419 = vrot.lane.b32.xlu0 %v10219, 96
      %v10420 = vpop.permute.xlu0 %10419
      %10421 = vrot.lane.b32.xlu0 %v10202, 96
      %v10422 = vpop.permute.xlu0 %10421
      %10423 = vrot.lane.b32.xlu0 %v10231, 96
      %v10424 = vpop.permute.xlu0 %10423
      %10425 = vrot.lane.b32.xlu0 %v10222, 96
      %v10426 = vpop.permute.xlu0 %10425
      %10427 = vrot.lane.b32.xlu0 %v10203, 96
      %v10428 = vpop.permute.xlu0 %10427
      %10429 = vrot.lane.b32.xlu0 %v10233, 96
      %v10430 = vpop.permute.xlu0 %10429
      %v10431 = vsel %vm656, %v10402, %v10404
      %v10432 = vsel %vm656, %v10404, %v10406
      %v10433 = vsel %vm656, %v10408, %v10410
      %v10434 = vsel %vm656, %v10410, %v10412
      %v10435 = vsel %vm656, %v10414, %v10416
      %v10436 = vsel %vm656, %v10416, %v10418
      %v10437 = vsel %vm656, %v10420, %v10422
      %v10438 = vsel %vm656, %v10422, %v10424
      %v10439 = vsel %vm656, %v10426, %v10428
      %v10440 = vsel %vm656, %v10428, %v10430
      %v10452 = vsel %vm2706, %v10400, 0
      %10454 = vmatprep.subr.bf16.mxu0 %v10432
      %10455 = vmatpush1.bf16.msra.mxu0 %v10431
      %10456 = vmatprep.subr.bf16.mxu0 %v10434
      %10457 = vmatpush1.bf16.msra.mxu0 %v10433
      %10458 = vmatprep.subr.bf16.mxu0 %v10436
      %10459 = vmatpush1.bf16.msra.mxu0 %v10435
      %10460 = vmatprep.subr.bf16.mxu0 %v10438
      %10461 = vmatpush1.bf16.msra.mxu0 %v10437
      %10462 = vmatprep.subr.bf16.mxu0 %v10440
      %10463 = vmatpush1.bf16.msra.mxu0 %v10439
      %10464 = vmatprep.subr.bf16.mxu0 0
      %10465 = vmatpush1.bf16.msra.mxu0 0
      %10466 = vmatprep.subr.bf16.mxu0 0
      %10467 = vmatpush1.bf16.msra.mxu0 0
      %10468 = vmatprep.subr.bf16.mxu0 0
      %10469 = vmatpush1.bf16.msra.mxu0 0
      %10470 = vmatprep.subr.bf16.mxu0 0
      %10471 = vmatpush1.bf16.msra.mxu0 0
      %10472 = vmatprep.subr.bf16.mxu0 0
      %10473 = vmatpush1.bf16.msra.mxu0 0
      %10474 = vmatprep.subr.bf16.mxu0 0
      %10475 = vmatpush1.bf16.msra.mxu0 0
      %10476 = vmatprep.subr.bf16.mxu0 0
      %10477 = vmatpush1.bf16.msra.mxu0 0
      %10478 = vmatprep.subr.bf16.mxu0 0
      %10479 = vmatpush1.bf16.msra.mxu0 0
      %10480 = vmatprep.subr.bf16.mxu0 0
      %10481 = vmatpush1.bf16.msra.mxu0 0
      %10482 = vmatprep.subr.bf16.mxu0 0
      %10483 = vmatpush1.bf16.msra.mxu0 0
      %10484 = vmatprep.subr.bf16.mxu0 0
      %10485 = vmatpush1.bf16.msra.mxu0 0
      %10486 = vmatprep.mubr.bf16.mxu0 0
      %10487 = vmatmul.mubr.bf16.gmra.mrb[0].mxu0 %v10452
      %v10488 = vpop.f32.mrb[0].mxu0
      %v10489 = vadd.f32 0.0, %v10488
      %v10490 = vpop.f32.mrb[0].mxu0
      %v10491 = vadd.f32 0.0, %v10490
      %v10492 = vpop.f32.mrb[0].mxu0
      %v10493 = vadd.f32 0.0, %v10492
      %v10494 = vpop.f32.mrb[0].mxu0
      %v10495 = vadd.f32 0.0, %v10494
      %10496 = vdwg.mxu0
      %v10497 = vadd.f32 %v10388, %v10489
      %v10498 = vadd.f32 %v10390, %v10491
      %v10499 = vadd.f32 %v10392, %v10493
      %v10500 = vadd.f32 %v10394, %v10495
      %v10501 = vmul.f32 %v10497, %v466
      %v10502 = vmul.f32 %v10498, %v467
      %v10503 = vmul.f32 %v10499, %v466
      %v10504 = vmul.f32 %v10500, %v467
      %v10507 = vunpack.c.l.b16 %v10147
      %v10508 = vunpack.c.l.b16 %v10148
      %v10509 = vpack.c.b16 %v10508, %v10507
      %10510 = vrot.lane.b32.xlu0 %v10210, 111
      %v10511 = vpop.permute.xlu0 %10510
      %10512 = vrot.lane.b32.xlu0 %v10199, 111
      %v10513 = vpop.permute.xlu0 %10512
      %10514 = vrot.lane.b32.xlu0 %v10225, 111
      %v10515 = vpop.permute.xlu0 %10514
      %10516 = vrot.lane.b32.xlu0 %v10213, 111
      %v10517 = vpop.permute.xlu0 %10516
      %10518 = vrot.lane.b32.xlu0 %v10200, 111
      %v10519 = vpop.permute.xlu0 %10518
      %10520 = vrot.lane.b32.xlu0 %v10227, 111
      %v10521 = vpop.permute.xlu0 %10520
      %10522 = vrot.lane.b32.xlu0 %v10216, 111
      %v10523 = vpop.permute.xlu0 %10522
      %10524 = vrot.lane.b32.xlu0 %v10201, 111
      %v10525 = vpop.permute.xlu0 %10524
      %10526 = vrot.lane.b32.xlu0 %v10229, 111
      %v10527 = vpop.permute.xlu0 %10526
      %10528 = vrot.lane.b32.xlu0 %v10219, 111
      %v10529 = vpop.permute.xlu0 %10528
      %10530 = vrot.lane.b32.xlu0 %v10202, 111
      %v10531 = vpop.permute.xlu0 %10530
      %10532 = vrot.lane.b32.xlu0 %v10231, 111
      %v10533 = vpop.permute.xlu0 %10532
      %10534 = vrot.lane.b32.xlu0 %v10222, 111
      %v10535 = vpop.permute.xlu0 %10534
      %10536 = vrot.lane.b32.xlu0 %v10203, 111
      %v10537 = vpop.permute.xlu0 %10536
      %10538 = vrot.lane.b32.xlu0 %v10233, 111
      %v10539 = vpop.permute.xlu0 %10538
      %v10540 = vsel %vm730, %v10511, %v10513
      %v10541 = vsel %vm730, %v10513, %v10515
      %v10542 = vsel %vm730, %v10517, %v10519
      %v10543 = vsel %vm730, %v10519, %v10521
      %v10544 = vsel %vm730, %v10523, %v10525
      %v10545 = vsel %vm730, %v10525, %v10527
      %v10546 = vsel %vm730, %v10529, %v10531
      %v10547 = vsel %vm730, %v10531, %v10533
      %v10548 = vsel %vm730, %v10535, %v10537
      %v10549 = vsel %vm730, %v10537, %v10539
      %v10561 = vsel %vm2706, %v10509, 0
      %10563 = vmatprep.subr.bf16.mxu0 %v10541
      %10564 = vmatpush1.bf16.msra.mxu0 %v10540
      %10565 = vmatprep.subr.bf16.mxu0 %v10543
      %10566 = vmatpush1.bf16.msra.mxu0 %v10542
      %10567 = vmatprep.subr.bf16.mxu0 %v10545
      %10568 = vmatpush1.bf16.msra.mxu0 %v10544
      %10569 = vmatprep.subr.bf16.mxu0 %v10547
      %10570 = vmatpush1.bf16.msra.mxu0 %v10546
      %10571 = vmatprep.subr.bf16.mxu0 %v10549
      %10572 = vmatpush1.bf16.msra.mxu0 %v10548
      %10573 = vmatprep.subr.bf16.mxu0 0
      %10574 = vmatpush1.bf16.msra.mxu0 0
      %10575 = vmatprep.subr.bf16.mxu0 0
      %10576 = vmatpush1.bf16.msra.mxu0 0
      %10577 = vmatprep.subr.bf16.mxu0 0
      %10578 = vmatpush1.bf16.msra.mxu0 0
      %10579 = vmatprep.subr.bf16.mxu0 0
      %10580 = vmatpush1.bf16.msra.mxu0 0
      %10581 = vmatprep.subr.bf16.mxu0 0
      %10582 = vmatpush1.bf16.msra.mxu0 0
      %10583 = vmatprep.subr.bf16.mxu0 0
      %10584 = vmatpush1.bf16.msra.mxu0 0
      %10585 = vmatprep.subr.bf16.mxu0 0
      %10586 = vmatpush1.bf16.msra.mxu0 0
      %10587 = vmatprep.subr.bf16.mxu0 0
      %10588 = vmatpush1.bf16.msra.mxu0 0
      %10589 = vmatprep.subr.bf16.mxu0 0
      %10590 = vmatpush1.bf16.msra.mxu0 0
      %10591 = vmatprep.subr.bf16.mxu0 0
      %10592 = vmatpush1.bf16.msra.mxu0 0
      %10593 = vmatprep.subr.bf16.mxu0 0
      %10594 = vmatpush1.bf16.msra.mxu0 0
      %10595 = vmatprep.mubr.bf16.mxu0 0
      %10596 = vmatmul.mubr.bf16.gmra.mrb[0].mxu0 %v10561
      %v10597 = vpop.f32.mrb[0].mxu0
      %v10598 = vadd.f32 0.0, %v10597
      %v10599 = vpop.f32.mrb[0].mxu0
      %v10600 = vadd.f32 0.0, %v10599
      %v10601 = vpop.f32.mrb[0].mxu0
      %v10602 = vadd.f32 0.0, %v10601
      %v10603 = vpop.f32.mrb[0].mxu0
      %v10604 = vadd.f32 0.0, %v10603
      %10605 = vdwg.mxu0
      %v10608 = vunpack.c.l.b16 %v10141
      %v10609 = vunpack.c.l.b16 %v10142
      %v10610 = vpack.c.b16 %v10609, %v10608
      %10611 = vrot.lane.b32.xlu0 %v10210, 127
      %v10612 = vpop.permute.xlu0 %10611
      %10613 = vrot.lane.b32.xlu0 %v10199, 127
      %v10614 = vpop.permute.xlu0 %10613
      %10615 = vrot.lane.b32.xlu0 %v10225, 127
      %v10616 = vpop.permute.xlu0 %10615
      %10617 = vrot.lane.b32.xlu0 %v10213, 127
      %v10618 = vpop.permute.xlu0 %10617
      %10619 = vrot.lane.b32.xlu0 %v10200, 127
      %v10620 = vpop.permute.xlu0 %10619
      %10621 = vrot.lane.b32.xlu0 %v10227, 127
      %v10622 = vpop.permute.xlu0 %10621
      %10623 = vrot.lane.b32.xlu0 %v10216, 127
      %v10624 = vpop.permute.xlu0 %10623
      %10625 = vrot.lane.b32.xlu0 %v10201, 127
      %v10626 = vpop.permute.xlu0 %10625
      %10627 = vrot.lane.b32.xlu0 %v10229, 127
      %v10628 = vpop.permute.xlu0 %10627
      %10629 = vrot.lane.b32.xlu0 %v10219, 127
      %v10630 = vpop.permute.xlu0 %10629
      %10631 = vrot.lane.b32.xlu0 %v10202, 127
      %v10632 = vpop.permute.xlu0 %10631
      %10633 = vrot.lane.b32.xlu0 %v10231, 127
      %v10634 = vpop.permute.xlu0 %10633
      %10635 = vrot.lane.b32.xlu0 %v10222, 127
      %v10636 = vpop.permute.xlu0 %10635
      %10637 = vrot.lane.b32.xlu0 %v10203, 127
      %v10638 = vpop.permute.xlu0 %10637
      %10639 = vrot.lane.b32.xlu0 %v10233, 127
      %v10640 = vpop.permute.xlu0 %10639
      %v10641 = vsel %vm796, %v10612, %v10614
      %v10642 = vsel %vm796, %v10614, %v10616
      %v10643 = vsel %vm796, %v10618, %v10620
      %v10644 = vsel %vm796, %v10620, %v10622
      %v10645 = vsel %vm796, %v10624, %v10626
      %v10646 = vsel %vm796, %v10626, %v10628
      %v10647 = vsel %vm796, %v10630, %v10632
      %v10648 = vsel %vm796, %v10632, %v10634
      %v10649 = vsel %vm796, %v10636, %v10638
      %v10650 = vsel %vm796, %v10638, %v10640
      %v10662 = vsel %vm2706, %v10610, 0
      %10664 = vmatprep.subr.bf16.mxu0 %v10642
      %10665 = vmatpush1.bf16.msra.mxu0 %v10641
      %10666 = vmatprep.subr.bf16.mxu0 %v10644
      %10667 = vmatpush1.bf16.msra.mxu0 %v10643
      %10668 = vmatprep.subr.bf16.mxu0 %v10646
      %10669 = vmatpush1.bf16.msra.mxu0 %v10645
      %10670 = vmatprep.subr.bf16.mxu0 %v10648
      %10671 = vmatpush1.bf16.msra.mxu0 %v10647
      %10672 = vmatprep.subr.bf16.mxu0 %v10650
      %10673 = vmatpush1.bf16.msra.mxu0 %v10649
      %10674 = vmatprep.subr.bf16.mxu0 0
      %10675 = vmatpush1.bf16.msra.mxu0 0
      %10676 = vmatprep.subr.bf16.mxu0 0
      %10677 = vmatpush1.bf16.msra.mxu0 0
      %10678 = vmatprep.subr.bf16.mxu0 0
      %10679 = vmatpush1.bf16.msra.mxu0 0
      %10680 = vmatprep.subr.bf16.mxu0 0
      %10681 = vmatpush1.bf16.msra.mxu0 0
      %10682 = vmatprep.subr.bf16.mxu0 0
      %10683 = vmatpush1.bf16.msra.mxu0 0
      %10684 = vmatprep.subr.bf16.mxu0 0
      %10685 = vmatpush1.bf16.msra.mxu0 0
      %10686 = vmatprep.subr.bf16.mxu0 0
      %10687 = vmatpush1.bf16.msra.mxu0 0
      %10688 = vmatprep.subr.bf16.mxu0 0
      %10689 = vmatpush1.bf16.msra.mxu0 0
      %10690 = vmatprep.subr.bf16.mxu0 0
      %10691 = vmatpush1.bf16.msra.mxu0 0
      %10692 = vmatprep.subr.bf16.mxu0 0
      %10693 = vmatpush1.bf16.msra.mxu0 0
      %10694 = vmatprep.subr.bf16.mxu0 0
      %10695 = vmatpush1.bf16.msra.mxu0 0
      %10696 = vmatprep.mubr.bf16.mxu0 0
      %10697 = vmatmul.mubr.bf16.gmra.mrb[0].mxu0 %v10662
      %v10698 = vpop.f32.mrb[0].mxu0
      %v10699 = vadd.f32 %v10598, %v10698
      %v10700 = vpop.f32.mrb[0].mxu0
      %v10701 = vadd.f32 %v10600, %v10700
      %v10702 = vpop.f32.mrb[0].mxu0
      %v10703 = vadd.f32 %v10602, %v10702
      %v10704 = vpop.f32.mrb[0].mxu0
      %v10705 = vadd.f32 %v10604, %v10704
      %10706 = vdwg.mxu0
      %v10709 = vunpack.c.l.b16 %v10153
      %v10710 = vunpack.c.l.b16 %v10154
      %v10711 = vpack.c.b16 %v10710, %v10709
      %10712 = vrot.lane.b32.xlu0 %v10210, 95
      %v10713 = vpop.permute.xlu0 %10712
      %10714 = vrot.lane.b32.xlu0 %v10199, 95
      %v10715 = vpop.permute.xlu0 %10714
      %10716 = vrot.lane.b32.xlu0 %v10225, 95
      %v10717 = vpop.permute.xlu0 %10716
      %10718 = vrot.lane.b32.xlu0 %v10213, 95
      %v10719 = vpop.permute.xlu0 %10718
      %10720 = vrot.lane.b32.xlu0 %v10200, 95
      %v10721 = vpop.permute.xlu0 %10720
      %10722 = vrot.lane.b32.xlu0 %v10227, 95
      %v10723 = vpop.permute.xlu0 %10722
      %10724 = vrot.lane.b32.xlu0 %v10216, 95
      %v10725 = vpop.permute.xlu0 %10724
      %10726 = vrot.lane.b32.xlu0 %v10201, 95
      %v10727 = vpop.permute.xlu0 %10726
      %10728 = vrot.lane.b32.xlu0 %v10229, 95
      %v10729 = vpop.permute.xlu0 %10728
      %10730 = vrot.lane.b32.xlu0 %v10219, 95
      %v10731 = vpop.permute.xlu0 %10730
      %10732 = vrot.lane.b32.xlu0 %v10202, 95
      %v10733 = vpop.permute.xlu0 %10732
      %10734 = vrot.lane.b32.xlu0 %v10231, 95
      %v10735 = vpop.permute.xlu0 %10734
      %10736 = vrot.lane.b32.xlu0 %v10222, 95
      %v10737 = vpop.permute.xlu0 %10736
      %10738 = vrot.lane.b32.xlu0 %v10203, 95
      %v10739 = vpop.permute.xlu0 %10738
      %10740 = vrot.lane.b32.xlu0 %v10233, 95
      %v10741 = vpop.permute.xlu0 %10740
      %v10742 = vsel %vm862, %v10713, %v10715
      %v10743 = vsel %vm862, %v10715, %v10717
      %v10744 = vsel %vm862, %v10719, %v10721
      %v10745 = vsel %vm862, %v10721, %v10723
      %v10746 = vsel %vm862, %v10725, %v10727
      %v10747 = vsel %vm862, %v10727, %v10729
      %v10748 = vsel %vm862, %v10731, %v10733
      %v10749 = vsel %vm862, %v10733, %v10735
      %v10750 = vsel %vm862, %v10737, %v10739
      %v10751 = vsel %vm862, %v10739, %v10741
      %v10763 = vsel %vm2706, %v10711, 0
      %10765 = vmatprep.subr.bf16.mxu0 %v10743
      %10766 = vmatpush1.bf16.msra.mxu0 %v10742
      %10767 = vmatprep.subr.bf16.mxu0 %v10745
      %10768 = vmatpush1.bf16.msra.mxu0 %v10744
      %10769 = vmatprep.subr.bf16.mxu0 %v10747
      %10770 = vmatpush1.bf16.msra.mxu0 %v10746
      %10771 = vmatprep.subr.bf16.mxu0 %v10749
      %10772 = vmatpush1.bf16.msra.mxu0 %v10748
      %10773 = vmatprep.subr.bf16.mxu0 %v10751
      %10774 = vmatpush1.bf16.msra.mxu0 %v10750
      %10775 = vmatprep.subr.bf16.mxu0 0
      %10776 = vmatpush1.bf16.msra.mxu0 0
      %10777 = vmatprep.subr.bf16.mxu0 0
      %10778 = vmatpush1.bf16.msra.mxu0 0
      %10779 = vmatprep.subr.bf16.mxu0 0
      %10780 = vmatpush1.bf16.msra.mxu0 0
      %10781 = vmatprep.subr.bf16.mxu0 0
      %10782 = vmatpush1.bf16.msra.mxu0 0
      %10783 = vmatprep.subr.bf16.mxu0 0
      %10784 = vmatpush1.bf16.msra.mxu0 0
      %10785 = vmatprep.subr.bf16.mxu0 0
      %10786 = vmatpush1.bf16.msra.mxu0 0
      %10787 = vmatprep.subr.bf16.mxu0 0
      %10788 = vmatpush1.bf16.msra.mxu0 0
      %10789 = vmatprep.subr.bf16.mxu0 0
      %10790 = vmatpush1.bf16.msra.mxu0 0
      %10791 = vmatprep.subr.bf16.mxu0 0
      %10792 = vmatpush1.bf16.msra.mxu0 0
      %10793 = vmatprep.subr.bf16.mxu0 0
      %10794 = vmatpush1.bf16.msra.mxu0 0
      %10795 = vmatprep.subr.bf16.mxu0 0
      %10796 = vmatpush1.bf16.msra.mxu0 0
      %10797 = vmatprep.mubr.bf16.mxu0 0
      %10798 = vmatmul.mubr.bf16.gmra.mrb[0].mxu0 %v10763
      %v10799 = vpop.f32.mrb[0].mxu0
      %v10800 = vadd.f32 0.0, %v10799
      %v10801 = vpop.f32.mrb[0].mxu0
      %v10802 = vadd.f32 0.0, %v10801
      %v10803 = vpop.f32.mrb[0].mxu0
      %v10804 = vadd.f32 0.0, %v10803
      %v10805 = vpop.f32.mrb[0].mxu0
      %v10806 = vadd.f32 0.0, %v10805
      %10807 = vdwg.mxu0
      %v10808 = vadd.f32 %v10699, %v10800
      %v10809 = vadd.f32 %v10701, %v10802
      %v10810 = vadd.f32 %v10703, %v10804
      %v10811 = vadd.f32 %v10705, %v10806
      %v10812 = vadd.f32 %v10501, %v10808
      %v10813 = vadd.f32 %v10502, %v10809
      %v10814 = vadd.f32 %v10503, %v10810
      %v10815 = vadd.f32 %v10504, %v10811
      %v10818 = vunpack.c.l.b16 %v10149
      %v10819 = vunpack.c.l.b16 %v10150
      %v10820 = vpack.c.b16 %v10819, %v10818
      %10821 = vrot.lane.b32.xlu0 %v10210, 110
      %v10822 = vpop.permute.xlu0 %10821
      %10823 = vrot.lane.b32.xlu0 %v10199, 110
      %v10824 = vpop.permute.xlu0 %10823
      %10825 = vrot.lane.b32.xlu0 %v10225, 110
      %v10826 = vpop.permute.xlu0 %10825
      %10827 = vrot.lane.b32.xlu0 %v10213, 110
      %v10828 = vpop.permute.xlu0 %10827
      %10829 = vrot.lane.b32.xlu0 %v10200, 110
      %v10830 = vpop.permute.xlu0 %10829
      %10831 = vrot.lane.b32.xlu0 %v10227, 110
      %v10832 = vpop.permute.xlu0 %10831
      %10833 = vrot.lane.b32.xlu0 %v10216, 110
      %v10834 = vpop.permute.xlu0 %10833
      %10835 = vrot.lane.b32.xlu0 %v10201, 110
      %v10836 = vpop.permute.xlu0 %10835
      %10837 = vrot.lane.b32.xlu0 %v10229, 110
      %v10838 = vpop.permute.xlu0 %10837
      %10839 = vrot.lane.b32.xlu0 %v10219, 110
      %v10840 = vpop.permute.xlu0 %10839
      %10841 = vrot.lane.b32.xlu0 %v10202, 110
      %v10842 = vpop.permute.xlu0 %10841
      %10843 = vrot.lane.b32.xlu0 %v10231, 110
      %v10844 = vpop.permute.xlu0 %10843
      %10845 = vrot.lane.b32.xlu0 %v10222, 110
      %v10846 = vpop.permute.xlu0 %10845
      %10847 = vrot.lane.b32.xlu0 %v10203, 110
      %v10848 = vpop.permute.xlu0 %10847
      %10849 = vrot.lane.b32.xlu0 %v10233, 110
      %v10850 = vpop.permute.xlu0 %10849
      %v10851 = vsel %vm936, %v10822, %v10824
      %v10852 = vsel %vm936, %v10824, %v10826
      %v10853 = vsel %vm936, %v10828, %v10830
      %v10854 = vsel %vm936, %v10830, %v10832
      %v10855 = vsel %vm936, %v10834, %v10836
      %v10856 = vsel %vm936, %v10836, %v10838
      %v10857 = vsel %vm936, %v10840, %v10842
      %v10858 = vsel %vm936, %v10842, %v10844
      %v10859 = vsel %vm936, %v10846, %v10848
      %v10860 = vsel %vm936, %v10848, %v10850
      %v10872 = vsel %vm2706, %v10820, 0
      %10874 = vmatprep.subr.bf16.mxu0 %v10852
      %10875 = vmatpush1.bf16.msra.mxu0 %v10851
      %10876 = vmatprep.subr.bf16.mxu0 %v10854
      %10877 = vmatpush1.bf16.msra.mxu0 %v10853
      %10878 = vmatprep.subr.bf16.mxu0 %v10856
      %10879 = vmatpush1.bf16.msra.mxu0 %v10855
      %10880 = vmatprep.subr.bf16.mxu0 %v10858
      %10881 = vmatpush1.bf16.msra.mxu0 %v10857
      %10882 = vmatprep.subr.bf16.mxu0 %v10860
      %10883 = vmatpush1.bf16.msra.mxu0 %v10859
      %10884 = vmatprep.subr.bf16.mxu0 0
      %10885 = vmatpush1.bf16.msra.mxu0 0
      %10886 = vmatprep.subr.bf16.mxu0 0
      %10887 = vmatpush1.bf16.msra.mxu0 0
      %10888 = vmatprep.subr.bf16.mxu0 0
      %10889 = vmatpush1.bf16.msra.mxu0 0
      %10890 = vmatprep.subr.bf16.mxu0 0
      %10891 = vmatpush1.bf16.msra.mxu0 0
      %10892 = vmatprep.subr.bf16.mxu0 0
      %10893 = vmatpush1.bf16.msra.mxu0 0
      %10894 = vmatprep.subr.bf16.mxu0 0
      %10895 = vmatpush1.bf16.msra.mxu0 0
      %10896 = vmatprep.subr.bf16.mxu0 0
      %10897 = vmatpush1.bf16.msra.mxu0 0
      %10898 = vmatprep.subr.bf16.mxu0 0
      %10899 = vmatpush1.bf16.msra.mxu0 0
      %10900 = vmatprep.subr.bf16.mxu0 0
      %10901 = vmatpush1.bf16.msra.mxu0 0
      %10902 = vmatprep.subr.bf16.mxu0 0
      %10903 = vmatpush1.bf16.msra.mxu0 0
      %10904 = vmatprep.subr.bf16.mxu0 0
      %10905 = vmatpush1.bf16.msra.mxu0 0
      %10906 = vmatprep.mubr.bf16.mxu0 0
      %10907 = vmatmul.mubr.bf16.gmra.mrb[0].mxu0 %v10872
      %v10908 = vpop.f32.mrb[0].mxu0
      %v10909 = vadd.f32 0.0, %v10908
      %v10910 = vpop.f32.mrb[0].mxu0
      %v10911 = vadd.f32 0.0, %v10910
      %v10912 = vpop.f32.mrb[0].mxu0
      %v10913 = vadd.f32 0.0, %v10912
      %v10914 = vpop.f32.mrb[0].mxu0
      %v10915 = vadd.f32 0.0, %v10914
      %10916 = vdwg.mxu0
      %v10919 = vunpack.c.l.b16 %v10143
      %v10920 = vunpack.c.l.b16 %v10144
      %v10921 = vpack.c.b16 %v10920, %v10919
      %10922 = vrot.lane.b32.xlu0 %v10210, 126
      %v10923 = vpop.permute.xlu0 %10922
      %10924 = vrot.lane.b32.xlu0 %v10199, 126
      %v10925 = vpop.permute.xlu0 %10924
      %10926 = vrot.lane.b32.xlu0 %v10225, 126
      %v10927 = vpop.permute.xlu0 %10926
      %10928 = vrot.lane.b32.xlu0 %v10213, 126
      %v10929 = vpop.permute.xlu0 %10928
      %10930 = vrot.lane.b32.xlu0 %v10200, 126
      %v10931 = vpop.permute.xlu0 %10930
      %10932 = vrot.lane.b32.xlu0 %v10227, 126
      %v10933 = vpop.permute.xlu0 %10932
      %10934 = vrot.lane.b32.xlu0 %v10216, 126
      %v10935 = vpop.permute.xlu0 %10934
      %10936 = vrot.lane.b32.xlu0 %v10201, 126
      %v10937 = vpop.permute.xlu0 %10936
      %10938 = vrot.lane.b32.xlu0 %v10229, 126
      %v10939 = vpop.permute.xlu0 %10938
      %10940 = vrot.lane.b32.xlu0 %v10219, 126
      %v10941 = vpop.permute.xlu0 %10940
      %10942 = vrot.lane.b32.xlu0 %v10202, 126
      %v10943 = vpop.permute.xlu0 %10942
      %10944 = vrot.lane.b32.xlu0 %v10231, 126
      %v10945 = vpop.permute.xlu0 %10944
      %10946 = vrot.lane.b32.xlu0 %v10222, 126
      %v10947 = vpop.permute.xlu0 %10946
      %10948 = vrot.lane.b32.xlu0 %v10203, 126
      %v10949 = vpop.permute.xlu0 %10948
      %10950 = vrot.lane.b32.xlu0 %v10233, 126
      %v10951 = vpop.permute.xlu0 %10950
      %v10952 = vsel %vm1002, %v10923, %v10925
      %v10953 = vsel %vm1002, %v10925, %v10927
      %v10954 = vsel %vm1002, %v10929, %v10931
      %v10955 = vsel %vm1002, %v10931, %v10933
      %v10956 = vsel %vm1002, %v10935, %v10937
      %v10957 = vsel %vm1002, %v10937, %v10939
      %v10958 = vsel %vm1002, %v10941, %v10943
      %v10959 = vsel %vm1002, %v10943, %v10945
      %v10960 = vsel %vm1002, %v10947, %v10949
      %v10961 = vsel %vm1002, %v10949, %v10951
      %v10973 = vsel %vm2706, %v10921, 0
      %10975 = vmatprep.subr.bf16.mxu0 %v10953
      %10976 = vmatpush1.bf16.msra.mxu0 %v10952
      %10977 = vmatprep.subr.bf16.mxu0 %v10955
      %10978 = vmatpush1.bf16.msra.mxu0 %v10954
      %10979 = vmatprep.subr.bf16.mxu0 %v10957
      %10980 = vmatpush1.bf16.msra.mxu0 %v10956
      %10981 = vmatprep.subr.bf16.mxu0 %v10959
      %10982 = vmatpush1.bf16.msra.mxu0 %v10958
      %10983 = vmatprep.subr.bf16.mxu0 %v10961
      %10984 = vmatpush1.bf16.msra.mxu0 %v10960
      %10985 = vmatprep.subr.bf16.mxu0 0
      %10986 = vmatpush1.bf16.msra.mxu0 0
      %10987 = vmatprep.subr.bf16.mxu0 0
      %10988 = vmatpush1.bf16.msra.mxu0 0
      %10989 = vmatprep.subr.bf16.mxu0 0
      %10990 = vmatpush1.bf16.msra.mxu0 0
      %10991 = vmatprep.subr.bf16.mxu0 0
      %10992 = vmatpush1.bf16.msra.mxu0 0
      %10993 = vmatprep.subr.bf16.mxu0 0
      %10994 = vmatpush1.bf16.msra.mxu0 0
      %10995 = vmatprep.subr.bf16.mxu0 0
      %10996 = vmatpush1.bf16.msra.mxu0 0
      %10997 = vmatprep.subr.bf16.mxu0 0
      %10998 = vmatpush1.bf16.msra.mxu0 0
      %10999 = vmatprep.subr.bf16.mxu0 0
      %11000 = vmatpush1.bf16.msra.mxu0 0
      %11001 = vmatprep.subr.bf16.mxu0 0
      %11002 = vmatpush1.bf16.msra.mxu0 0
      %11003 = vmatprep.subr.bf16.mxu0 0
      %11004 = vmatpush1.bf16.msra.mxu0 0
      %11005 = vmatprep.subr.bf16.mxu0 0
      %11006 = vmatpush1.bf16.msra.mxu0 0
      %11007 = vmatprep.mubr.bf16.mxu0 0
      %11008 = vmatmul.mubr.bf16.gmra.mrb[0].mxu0 %v10973
      %v11009 = vpop.f32.mrb[0].mxu0
      %v11010 = vadd.f32 %v10909, %v11009
      %v11011 = vpop.f32.mrb[0].mxu0
      %v11012 = vadd.f32 %v10911, %v11011
      %v11013 = vpop.f32.mrb[0].mxu0
      %v11014 = vadd.f32 %v10913, %v11013
      %v11015 = vpop.f32.mrb[0].mxu0
      %v11016 = vadd.f32 %v10915, %v11015
      %11017 = vdwg.mxu0
      %v11020 = vunpack.c.l.b16 %v10155
      %v11021 = vunpack.c.l.b16 %v10156
      %v11022 = vpack.c.b16 %v11021, %v11020
      %11023 = vrot.lane.b32.xlu0 %v10210, 94
      %v11024 = vpop.permute.xlu0 %11023
      %11025 = vrot.lane.b32.xlu0 %v10199, 94
      %v11026 = vpop.permute.xlu0 %11025
      %11027 = vrot.lane.b32.xlu0 %v10225, 94
      %v11028 = vpop.permute.xlu0 %11027
      %11029 = vrot.lane.b32.xlu0 %v10213, 94
      %v11030 = vpop.permute.xlu0 %11029
      %11031 = vrot.lane.b32.xlu0 %v10200, 94
      %v11032 = vpop.permute.xlu0 %11031
      %11033 = vrot.lane.b32.xlu0 %v10227, 94
      %v11034 = vpop.permute.xlu0 %11033
      %11035 = vrot.lane.b32.xlu0 %v10216, 94
      %v11036 = vpop.permute.xlu0 %11035
      %11037 = vrot.lane.b32.xlu0 %v10201, 94
      %v11038 = vpop.permute.xlu0 %11037
      %11039 = vrot.lane.b32.xlu0 %v10229, 94
      %v11040 = vpop.permute.xlu0 %11039
      %11041 = vrot.lane.b32.xlu0 %v10219, 94
      %v11042 = vpop.permute.xlu0 %11041
      %11043 = vrot.lane.b32.xlu0 %v10202, 94
      %v11044 = vpop.permute.xlu0 %11043
      %11045 = vrot.lane.b32.xlu0 %v10231, 94
      %v11046 = vpop.permute.xlu0 %11045
      %11047 = vrot.lane.b32.xlu0 %v10222, 94
      %v11048 = vpop.permute.xlu0 %11047
      %11049 = vrot.lane.b32.xlu0 %v10203, 94
      %v11050 = vpop.permute.xlu0 %11049
      %11051 = vrot.lane.b32.xlu0 %v10233, 94
      %v11052 = vpop.permute.xlu0 %11051
      %v11053 = vsel %vm1068, %v11024, %v11026
      %v11054 = vsel %vm1068, %v11026, %v11028
      %v11055 = vsel %vm1068, %v11030, %v11032
      %v11056 = vsel %vm1068, %v11032, %v11034
      %v11057 = vsel %vm1068, %v11036, %v11038
      %v11058 = vsel %vm1068, %v11038, %v11040
      %v11059 = vsel %vm1068, %v11042, %v11044
      %v11060 = vsel %vm1068, %v11044, %v11046
      %v11061 = vsel %vm1068, %v11048, %v11050
      %v11062 = vsel %vm1068, %v11050, %v11052
      %v11074 = vsel %vm2706, %v11022, 0
      %11076 = vmatprep.subr.bf16.mxu0 %v11054
      %11077 = vmatpush1.bf16.msra.mxu0 %v11053
      %11078 = vmatprep.subr.bf16.mxu0 %v11056
      %11079 = vmatpush1.bf16.msra.mxu0 %v11055
      %11080 = vmatprep.subr.bf16.mxu0 %v11058
      %11081 = vmatpush1.bf16.msra.mxu0 %v11057
      %11082 = vmatprep.subr.bf16.mxu0 %v11060
      %11083 = vmatpush1.bf16.msra.mxu0 %v11059
      %11084 = vmatprep.subr.bf16.mxu0 %v11062
      %11085 = vmatpush1.bf16.msra.mxu0 %v11061
      %11086 = vmatprep.subr.bf16.mxu0 0
      %11087 = vmatpush1.bf16.msra.mxu0 0
      %11088 = vmatprep.subr.bf16.mxu0 0
      %11089 = vmatpush1.bf16.msra.mxu0 0
      %11090 = vmatprep.subr.bf16.mxu0 0
      %11091 = vmatpush1.bf16.msra.mxu0 0
      %11092 = vmatprep.subr.bf16.mxu0 0
      %11093 = vmatpush1.bf16.msra.mxu0 0
      %11094 = vmatprep.subr.bf16.mxu0 0
      %11095 = vmatpush1.bf16.msra.mxu0 0
      %11096 = vmatprep.subr.bf16.mxu0 0
      %11097 = vmatpush1.bf16.msra.mxu0 0
      %11098 = vmatprep.subr.bf16.mxu0 0
      %11099 = vmatpush1.bf16.msra.mxu0 0
      %11100 = vmatprep.subr.bf16.mxu0 0
      %11101 = vmatpush1.bf16.msra.mxu0 0
      %11102 = vmatprep.subr.bf16.mxu0 0
      %11103 = vmatpush1.bf16.msra.mxu0 0
      %11104 = vmatprep.subr.bf16.mxu0 0
      %11105 = vmatpush1.bf16.msra.mxu0 0
      %11106 = vmatprep.subr.bf16.mxu0 0
      %11107 = vmatpush1.bf16.msra.mxu0 0
      %11108 = vmatprep.mubr.bf16.mxu0 0
      %11109 = vmatmul.mubr.bf16.gmra.mrb[0].mxu0 %v11074
      %v11110 = vpop.f32.mrb[0].mxu0
      %v11111 = vadd.f32 0.0, %v11110
      %v11112 = vpop.f32.mrb[0].mxu0
      %v11113 = vadd.f32 0.0, %v11112
      %v11114 = vpop.f32.mrb[0].mxu0
      %v11115 = vadd.f32 0.0, %v11114
      %v11116 = vpop.f32.mrb[0].mxu0
      %v11117 = vadd.f32 0.0, %v11116
      %11118 = vdwg.mxu0
      %v11119 = vadd.f32 %v11010, %v11111
      %v11120 = vadd.f32 %v11012, %v11113
      %v11121 = vadd.f32 %v11014, %v11115
      %v11122 = vadd.f32 %v11016, %v11117
      %v11123 = vmul.f32 %v11119, %v472
      %v11124 = vmul.f32 %v11120, %v473
      %v11125 = vmul.f32 %v11121, %v472
      %v11126 = vmul.f32 %v11122, %v473
      %v11127 = vadd.f32 %v10812, %v11123
      %v11128 = vadd.f32 %v10813, %v11124
      %v11129 = vadd.f32 %v10814, %v11125
      %v11130 = vadd.f32 %v10815, %v11126
      %11132 = vset.pattern.permute.xlu0 0
      %11133 = vperm.xlu0 %11132, %v10157
      %v11134 = vpop.permute.xlu0 %11133
      %11137 = vset.pattern.permute.xlu0 0
      %11138 = vperm.xlu0 %11137, %v10158
      %v11139 = vpop.permute.xlu0 %11138
      %v11141 = vadd.f32 %v11127, %v11134
      %v11142 = vadd.f32 %v11128, %v11134
      %v11143 = vadd.f32 %v11129, %v11139
      %v11144 = vadd.f32 %v11130, %v11139
      %11145 = vst [vmem:[%s433] sm:$0xff] %v11141
      %11146 = vst [vmem:[%s433 + $0x8] sm:$0xff] %v11142
      %11147 = vst [vmem:[%s433 + $0x10] sm:$0xf] %v11143
      %11148 = vst [vmem:[%s433 + $0x18] sm:$0xf] %v11144
      %p11149 = scmp.lt.s32.totalorder %s23, 1
      %s11150 = scalar_select %p11149, %s23, 1
      %s11151 = smul.addr %s11150, 4
      %s11152 = smul.addr %s11151, 8
      %s11153 = scalar_lea.vmem %s12, %s11152
      // Predicated region
      $region69: #{nhr_res32_forward.1} parent=67 // pred_check
        %p11154 = pneg %p303
      $region70: #{nhr_res32_forward.1} parent=67 // pred_check_branch
        %11156 = sbr.rel (%p11154) target = $region72
      $region71: #{nhr_res32_forward.1} parent=67 // pred_region
        _
      $region72: #{nhr_res32_forward.1} parent=67 // pred_fallthru
        _
    $region68: #{nhr_res32_forward.1} parent=5 // pred_fallthru
      _
    %p11157 = scmp.le.s32.totalorder 2, %s18
    // Predicated region
    $region73: #{nhr_res32_forward.1} parent=5 // pred_check
      %p11158 = pneg %p11157
    $region74: #{nhr_res32_forward.1} parent=5 // pred_check_branch
      %11160 = sbr.rel (%p11158) target = $region76
    $region75: #{nhr_res32_forward.1} parent=5 // pred_region
      %s11161 = ssub.s32 %s18, 2
      // Predicated region
      $region77: #{nhr_res32_forward.1} parent=75 // pred_check
        %p11162 = pneg %p309
      $region78: #{nhr_res32_forward.1} parent=75 // pred_check_branch
        %11164 = sbr.rel (%p11162) target = $region80
      $region79: #{nhr_res32_forward.1} parent=75 // pred_region
        %p11165 = scmp.lt.s32.totalorder %s24, 1
        %s11166 = scalar_select %p11165, %s24, 1
        %s11167 = smul.addr %s11166, 4
        %s11168 = smul.addr %s11167, 8
        %s11169 = scalar_lea.vmem %s12, %s11168
      $region80: #{nhr_res32_forward.1} parent=75 // pred_fallthru
        _
    $region76: #{nhr_res32_forward.1} parent=5 // pred_fallthru
      _
  $region6: #{nhr_res32_forward.1} parent=0 // loop_footer
    %s22 = sadd.s32 1, %s18
  $region7: #{nhr_res32_forward.1} parent=0 // loop_footer_branch
    %17 = sbr.rel target = $region3
  $region8: #{nhr_res32_forward.1} parent=0 // loop_exit
    _

</llo_original>
